<compile_context>
chip_gen: v5e
topology: v5e:2x2
jax: 0.10.0
libtpu: 0.0.40
codegen_flags: <defaults>
</compile_context>

<pallas_src>
import functools

import jax
import jax.numpy as jnp
from jax.experimental import pallas as pl
from jax.experimental.pallas import tpu as pltpu

_EPS = 1e-12                      # F.normalize clamp_min eps
_BLOCK_ROWS = 256                 # default row tile (sublane/lane aligned)
_VMEM_LIMIT = 48 * 1024 * 1024    # safe scoped-VMEM budget on v5e/v6e/v7x


def _pick_row_tile(n, block_rows=_BLOCK_ROWS):
    """Row tile: as big as allowed, but keep >= 2 grid steps for megacore."""
    tm = min(block_rows, n)
    if tm == n and n % 2 == 0 and (n // 2) % 8 == 0 and n >= 16:
        tm = n // 2
    assert n % tm == 0, "row count must divide by the row tile"
    return tm


# --------------------------------------------------------------------------
# Kernel 1: fused dual 2-layer MLP
#   zx = tanh(x @ Wx1 + bx1) @ Wx2 + bx2
#   za = tanh(adj @ Wa1 + ba1) @ Wa2 + ba2
# Inputs / weights arrive pre-cast to bf16; biases and accumulation are f32.
# --------------------------------------------------------------------------
def _dual_mlp_kernel(x_ref, a_ref,
                     wx1_ref, bx1_ref, wx2_ref, bx2_ref,
                     wa1_ref, ba1_ref, wa2_ref, ba2_ref,
                     zx_ref, za_ref):
    # TODO(synk): training-mode dropout (torch.dropout before each Linear) is
    # omitted — eval forward makes it the identity.
    def mlp(x, w1, b1, w2, b2):
        h = jnp.tanh(jnp.dot(x, w1, preferred_element_type=jnp.float32) + b1)
        return jnp.dot(h.astype(jnp.bfloat16), w2,
                       preferred_element_type=jnp.float32) + b2

    zx_ref[...] = mlp(x_ref[...], wx1_ref[...], bx1_ref[...],
                      wx2_ref[...], bx2_ref[...]).astype(zx_ref.dtype)
    za_ref[...] = mlp(a_ref[...], wa1_ref[...], ba1_ref[...],
                      wa2_ref[...], ba2_ref[...]).astype(za_ref.dtype)


def dual_mlp(x_bf16, adj_bf16, params_x, params_a, *, block_rows=_BLOCK_ROWS):
    n, dinx = x_bf16.shape
    _, dina = adj_bf16.shape
    wx1, bx1, wx2, bx2 = params_x
    wa1, ba1, wa2, ba2 = params_a
    hidx, doutx = wx1.shape[1], wx2.shape[1]
    hida, douta = wa1.shape[1], wa2.shape[1]
    tm = _pick_row_tile(n, block_rows)
    return pl.pallas_call(
        _dual_mlp_kernel,
        out_shape=(jax.ShapeDtypeStruct((n, doutx), jnp.float32),
                   jax.ShapeDtypeStruct((n, douta), jnp.float32)),
        grid=(n // tm,),
        in_specs=[
            pl.BlockSpec((tm, dinx), lambda i: (i, 0)),
            pl.BlockSpec((tm, dina), lambda i: (i, 0)),
            pl.BlockSpec((dinx, hidx), lambda i: (0, 0)),   # resident weights
            pl.BlockSpec((1, hidx), lambda i: (0, 0)),
            pl.BlockSpec((hidx, doutx), lambda i: (0, 0)),
            pl.BlockSpec((1, doutx), lambda i: (0, 0)),
            pl.BlockSpec((dina, hida), lambda i: (0, 0)),
            pl.BlockSpec((1, hida), lambda i: (0, 0)),
            pl.BlockSpec((hida, douta), lambda i: (0, 0)),
            pl.BlockSpec((1, douta), lambda i: (0, 0)),
        ],
        out_specs=(pl.BlockSpec((tm, doutx), lambda i: (i, 0)),
                   pl.BlockSpec((tm, douta), lambda i: (i, 0))),
        compiler_params=pltpu.CompilerParams(
            dimension_semantics=("parallel",),
            vmem_limit_bytes=_VMEM_LIMIT),
    )(x_bf16, adj_bf16, wx1, bx1, wx2, bx2, wa1, ba1, wa2, ba2)


# --------------------------------------------------------------------------
# Kernel 2: fused dual gram + norms.
#   homo = z @ z.T   (row block x resident bf16 z, full (tm, N) per step)
#   z_norm = l2-normalize(z)  (exact f32)
#   inv    = 1 / max(||homo row||_2, eps)   (normalized homo never stored)
# --------------------------------------------------------------------------
def _dual_gram_kernel(zx_ref, za_ref, zxb_ref, zab_ref,
                      zxn_ref, zan_ref, hx_ref, ha_ref, ivx_ref, iva_ref):
    def one(z_ref, zall_bf16_ref, zn_ref, h_ref, iv_ref):
        z = z_ref[...]                                         # (tm, d) f32
        nrm = jnp.sqrt(jnp.sum(z * z, axis=1, keepdims=True))
        zn_ref[...] = (z / jnp.maximum(nrm, _EPS)).astype(zn_ref.dtype)

        # (tm, d) @ (N, d)^T on the MXU, bf16 operands / f32 accumulate.
        h = jax.lax.dot_general(
            z.astype(jnp.bfloat16), zall_bf16_ref[...],
            (((1,), (1,)), ((), ())), preferred_element_type=jnp.float32)
        h_ref[...] = h
        hn = jnp.sqrt(jnp.sum(h * h, axis=1, keepdims=True))
        iv_ref[...] = 1.0 / jnp.maximum(hn, _EPS)

    one(zx_ref, zxb_ref, zxn_ref, hx_ref, ivx_ref)
    one(za_ref, zab_ref, zan_ref, ha_ref, iva_ref)


def dual_gram(zx, za, zx_bf16, za_bf16, *, block_rows=_BLOCK_ROWS):
    n, dx = zx.shape
    _, da = za.shape
    tm = _pick_row_tile(n, block_rows)
    return pl.pallas_call(
        _dual_gram_kernel,
        out_shape=(
            jax.ShapeDtypeStruct((n, dx), jnp.float32),   # zx_norm
            jax.ShapeDtypeStruct((n, da), jnp.float32),   # za_norm
            jax.ShapeDtypeStruct((n, n), jnp.float32),    # homo_x
            jax.ShapeDtypeStruct((n, n), jnp.float32),    # homo_a
            jax.ShapeDtypeStruct((n, 1), jnp.float32),    # 1/||homo_x row||
            jax.ShapeDtypeStruct((n, 1), jnp.float32),    # 1/||homo_a row||
        ),
        grid=(n // tm,),
        in_specs=[
            pl.BlockSpec((tm, dx), lambda i: (i, 0)),     # f32 row tiles
            pl.BlockSpec((tm, da), lambda i: (i, 0)),
            pl.BlockSpec((n, dx), lambda i: (0, 0)),      # resident bf16 z
            pl.BlockSpec((n, da), lambda i: (0, 0)),
        ],
        out_specs=(
            pl.BlockSpec((tm, dx), lambda i: (i, 0)),
            pl.BlockSpec((tm, da), lambda i: (i, 0)),
            pl.BlockSpec((tm, n), lambda i: (i, 0)),
            pl.BlockSpec((tm, n), lambda i: (i, 0)),
            pl.BlockSpec((tm, 1), lambda i: (i, 0)),
            pl.BlockSpec((tm, 1), lambda i: (i, 0)),
        ),
        compiler_params=pltpu.CompilerParams(
            dimension_semantics=("parallel",),
            vmem_limit_bytes=_VMEM_LIMIT),
    )(zx, za, zx_bf16, za_bf16)


# --------------------------------------------------------------------------
# Kernel 3: combine + top-k + identity.
#   S_val = homo_x * (w0/||hx row||) + homo_a * (w1/||ha row||)
#           (the weights are pre-folded into the (N,1) inverse-norm vectors)
#   S     = (S_val >= kth_largest_per_row) + eye
# --------------------------------------------------------------------------
def _combine_topk_kernel(hx_ref, ivx_ref, ha_ref, iva_ref, s_ref, *, k):
    s = hx_ref[...] * ivx_ref[...] + ha_ref[...] * iva_ref[...]   # (tm, N) f32

    # k-th largest per row via k rounds of (row-max, mask); k is static.
    # TODO(synk): torch.topk selects exactly k on ties; this threshold mask
    # selects all entries tied with the k-th value (exact ties are measure-zero
    # for these float inputs).
    cur = s
    kth = None
    for _ in range(k):
        kth = jnp.max(cur, axis=-1, keepdims=True)
        cur = jnp.where(cur >= kth, -jnp.inf, cur)
    s_dis = (s >= kth).astype(jnp.float32)

    tm, n = s.shape
    row = jax.lax.broadcasted_iota(jnp.int32, (tm, n), 0) + pl.program_id(0) * tm
    col = jax.lax.broadcasted_iota(jnp.int32, (tm, n), 1)
    s_ref[...] = jnp.where(col == row, s_dis + 1.0, s_dis).astype(s_ref.dtype)


def combine_topk(homo_x, inv_x_w, homo_a, inv_a_w, *, k,
                 block_rows=_BLOCK_ROWS):
    n = homo_x.shape[0]
    tm = _pick_row_tile(n, block_rows)
    kernel = functools.partial(_combine_topk_kernel, k=k)
    return pl.pallas_call(
        kernel,
        out_shape=jax.ShapeDtypeStruct((n, n), jnp.float32),
        grid=(n // tm,),
        in_specs=[
            pl.BlockSpec((tm, n), lambda i: (i, 0)),
            pl.BlockSpec((tm, 1), lambda i: (i, 0)),
            pl.BlockSpec((tm, n), lambda i: (i, 0)),
            pl.BlockSpec((tm, 1), lambda i: (i, 0)),
        ],
        out_specs=pl.BlockSpec((tm, n), lambda i: (i, 0)),
        compiler_params=pltpu.CompilerParams(
            dimension_semantics=("parallel",),
            vmem_limit_bytes=_VMEM_LIMIT),
    )(homo_x, inv_x_w, homo_a, inv_a_w)


# --------------------------------------------------------------------------
# Full forward (SimInfoExtror.forward)
# --------------------------------------------------------------------------
@functools.partial(jax.jit, static_argnames=("k",))
def sim_info_forward(x, adj, weights_a, params, k):
    (wx1, bx1, wx2, bx2), (wa1, ba1, wa2, ba2) = params
    bf = lambda t: t.astype(jnp.bfloat16)

    # Pre-cast all MXU operands to bf16 once outside the kernels (weights,
    # x, 0/1 adjacency — the latter is lossless).  Biases stay f32.
    zx, za = dual_mlp(bf(x), bf(adj),
                      (bf(wx1), bx1, bf(wx2), bx2),
                      (bf(wa1), ba1, bf(wa2), ba2))

    zx_norm, za_norm, homo_x, homo_a, inv_x, inv_a = dual_gram(
        zx, za, bf(zx), bf(za))

    # Fold the normalized mixing weights into the (N,1) inverse-norm vectors
    # (scalar glue, removes in-kernel scalar plumbing).
    w_norm = weights_a / jnp.sum(weights_a)
    S = combine_topk(homo_x, inv_x * w_norm[0], homo_a, inv_a * w_norm[1], k=k)
    return zx_norm, homo_x, za_norm, homo_a, S


# --------------------------------------------------------------------------
# Pure-JAX reference (same bf16-operand / f32-accumulate matmul precision as
# the kernels; everything else f32; torch.topk via lax.top_k + scatter).
# --------------------------------------------------------------------------
def _reference(x, adj, weights_a, params, k):
    (wx1, bx1, wx2, bx2), (wa1, ba1, wa2, ba2) = params

    def mm(a, b):
        return jnp.dot(a.astype(jnp.bfloat16), b.astype(jnp.bfloat16),
                       preferred_element_type=jnp.float32)

    def l2n(v):
        nrm = jnp.sqrt(jnp.sum(v * v, axis=-1, keepdims=True))
        return v / jnp.maximum(nrm, _EPS)

    zx = mm(jnp.tanh(mm(x, wx1) + bx1), wx2) + bx2
    za = mm(jnp.tanh(mm(adj, wa1) + ba1), wa2) + ba2
    zx_norm, za_norm = l2n(zx), l2n(za)
    homo_x, homo_a = mm(zx, zx.T), mm(za, za.T)
    S = (weights_a[0] * l2n(homo_x) + weights_a[1] * l2n(homo_a)) / jnp.sum(weights_a)
    _, idx = jax.lax.top_k(S, k)
    S_dis = jnp.zeros_like(S).at[jnp.arange(S.shape[0])[:, None], idx].set(1.0)
    return zx_norm, homo_x, za_norm, homo_a, S_dis + jnp.eye(S.shape[0], dtype=S.dtype)


if __name__ == "__main__":
    key = jax.random.PRNGKey(0)
    ks = jax.random.split(key, 8)

    N, DIN_X, HID, DOUT, K = 256, 128, 128, 128, 10

    x = jax.random.normal(ks[0], (N, DIN_X), dtype=jnp.float32)
    adj = (jax.random.uniform(ks[1], (N, N)) > 0.7).astype(jnp.float32)
    adj = jnp.maximum(adj, adj.T)                    # symmetric 0/1 adjacency

    def init_linear(kk, din, dout):
        bound = 1.0 / (din ** 0.5)
        w = jax.random.uniform(kk, (din, dout), jnp.float32, -bound, bound)
        b = jnp.zeros((1, dout), jnp.float32)
        return w, b

    wx1, bx1 = init_linear(ks[2], DIN_X, HID)
    wx2, bx2 = init_linear(ks[3], HID, DOUT)
    wa1, ba1 = init_linear(ks[4], N, HID)
    wa2, ba2 = init_linear(ks[5], HID, DOUT)
    params = ((wx1, bx1, wx2, bx2), (wa1, ba1, wa2, ba2))
    weights_a = jnp.asarray([0.6, 0.4], jnp.float32)

    outs = sim_info_forward(x, adj, weights_a, params, k=K)
    outs = jax.block_until_ready(outs)
    zx_norm, homo_x, za_norm, homo_a, S = outs

    r_zxn, r_hx, r_zan, r_ha, r_S = _reference(x, adj, weights_a, params, K)

    assert zx_norm.shape == (N, DOUT) and za_norm.shape == (N, DOUT)
    assert homo_x.shape == (N, N) and homo_a.shape == (N, N) and S.shape == (N, N)
    for got, ref in ((zx_norm, r_zxn), (homo_x, r_hx),
                     (za_norm, r_zan), (homo_a, r_ha)):
        assert jnp.allclose(got, ref, rtol=1e-2, atol=1e-2), "mismatch vs reference"

    # S structural invariants: entries in {0,1,2}, exactly k selected per row
    # plus the identity, diagonal set (test data has no exact ties).
    assert bool(jnp.all((S == 0.0) | (S == 1.0) | (S == 2.0)))
    assert bool(jnp.all(jnp.sum(S, axis=-1) == float(K + 1)))
    assert bool(jnp.all(jnp.diagonal(S) >= 1.0))
    # Allow a tiny fraction of top-k boundary flips from accumulation-order
    # differences vs the reference selection.
    mismatch = float(jnp.mean((S != r_S).astype(jnp.float32)))
    assert mismatch < 0.01, f"S mismatch fraction {mismatch}"

    print("KERNEL_OK")
</pallas_src>

<mosaic_0001>
module attributes {stable_mosaic.version = 11 : i64} {
  func.func @_dual_mlp_kernel(%arg0: i32, %arg1: memref<128x128xbf16, #tpu.memory_space<vmem>>, %arg2: memref<128x256xbf16, #tpu.memory_space<vmem>>, %arg3: memref<128x128xbf16, #tpu.memory_space<vmem>>, %arg4: memref<1x128xf32, #tpu.memory_space<vmem>>, %arg5: memref<128x128xbf16, #tpu.memory_space<vmem>>, %arg6: memref<1x128xf32, #tpu.memory_space<vmem>>, %arg7: memref<256x128xbf16, #tpu.memory_space<vmem>>, %arg8: memref<1x128xf32, #tpu.memory_space<vmem>>, %arg9: memref<128x128xbf16, #tpu.memory_space<vmem>>, %arg10: memref<1x128xf32, #tpu.memory_space<vmem>>, %arg11: memref<128x128xf32, #tpu.memory_space<vmem>>, %arg12: memref<128x128xf32, #tpu.memory_space<vmem>>) attributes {dimension_semantics = [#tpu.dimension_semantics<parallel>], iteration_bounds = array<i64: 2>, scalar_prefetch = 0 : i64, scratch_operands = 0 : i64, tpu.core_type = #tpu.core_type<tc>, window_params = [{transform_indices = @transform_0, window_bounds = array<i64: 128, 128>}, {transform_indices = @transform_1, window_bounds = array<i64: 128, 256>}, {pipeline_mode = #tpu.pipeline_mode<synchronous>, transform_indices = @transform_2, window_bounds = array<i64: 128, 128>}, {pipeline_mode = #tpu.pipeline_mode<synchronous>, transform_indices = @transform_3, window_bounds = array<i64: 1, 128>}, {pipeline_mode = #tpu.pipeline_mode<synchronous>, transform_indices = @transform_4, window_bounds = array<i64: 128, 128>}, {pipeline_mode = #tpu.pipeline_mode<synchronous>, transform_indices = @transform_5, window_bounds = array<i64: 1, 128>}, {pipeline_mode = #tpu.pipeline_mode<synchronous>, transform_indices = @transform_6, window_bounds = array<i64: 256, 128>}, {pipeline_mode = #tpu.pipeline_mode<synchronous>, transform_indices = @transform_7, window_bounds = array<i64: 1, 128>}, {pipeline_mode = #tpu.pipeline_mode<synchronous>, transform_indices = @transform_8, window_bounds = array<i64: 128, 128>}, {pipeline_mode = #tpu.pipeline_mode<synchronous>, transform_indices = @transform_9, window_bounds = array<i64: 1, 128>}, {transform_indices = @transform_10, window_bounds = array<i64: 128, 128>}, {transform_indices = @transform_11, window_bounds = array<i64: 128, 128>}]} {
    %c0 = arith.constant 0 : index
    %c0_0 = arith.constant 0 : index
    %0 = vector.load %arg1[%c0, %c0_0] : memref<128x128xbf16, #tpu.memory_space<vmem>>, vector<128x128xbf16>
    %c0_1 = arith.constant 0 : index
    %c0_2 = arith.constant 0 : index
    %1 = vector.load %arg3[%c0_1, %c0_2] : memref<128x128xbf16, #tpu.memory_space<vmem>>, vector<128x128xbf16>
    %c0_3 = arith.constant 0 : index
    %c0_4 = arith.constant 0 : index
    %2 = vector.load %arg4[%c0_3, %c0_4] : memref<1x128xf32, #tpu.memory_space<vmem>>, vector<1x128xf32>
    %c0_5 = arith.constant 0 : index
    %c0_6 = arith.constant 0 : index
    %3 = vector.load %arg5[%c0_5, %c0_6] : memref<128x128xbf16, #tpu.memory_space<vmem>>, vector<128x128xbf16>
    %c0_7 = arith.constant 0 : index
    %c0_8 = arith.constant 0 : index
    %4 = vector.load %arg6[%c0_7, %c0_8] : memref<1x128xf32, #tpu.memory_space<vmem>>, vector<1x128xf32>
    %cst = arith.constant dense<0.000000e+00> : vector<128x128xf32>
    %5 = tpu.matmul %0, %1, %cst {dimension_numbers = #tpu.dot_dimension_numbers<[1], [0], [0], [1], [0, 0, 1, 1], [], []>} : vector<128x128xbf16>, vector<128x128xbf16>, vector<128x128xf32> -> vector<128x128xf32>
    %6 = vector.broadcast %2 : vector<1x128xf32> to vector<128x128xf32>
    %7 = arith.addf %5, %6 : vector<128x128xf32>
    %8 = math.tanh %7 : vector<128x128xf32>
    %9 = arith.truncf %8 : vector<128x128xf32> to vector<128x128xbf16>
    %cst_9 = arith.constant dense<0.000000e+00> : vector<128x128xf32>
    %10 = tpu.matmul %9, %3, %cst_9 {dimension_numbers = #tpu.dot_dimension_numbers<[1], [0], [0], [1], [0, 0, 1, 1], [], []>} : vector<128x128xbf16>, vector<128x128xbf16>, vector<128x128xf32> -> vector<128x128xf32>
    %11 = vector.broadcast %4 : vector<1x128xf32> to vector<128x128xf32>
    %12 = arith.addf %10, %11 : vector<128x128xf32>
    %c0_10 = arith.constant 0 : index
    %c0_11 = arith.constant 0 : index
    %13 = vector.load %arg11[%c0_10, %c0_11] : memref<128x128xf32, #tpu.memory_space<vmem>>, vector<128x128xf32>
    tpu.vector_store %arg11[%c0_10, %c0_11], %12 {strides = array<i32>} : memref<128x128xf32, #tpu.memory_space<vmem>>, vector<128x128xf32>,
    %c0_12 = arith.constant 0 : index
    %c0_13 = arith.constant 0 : index
    %14 = vector.load %arg2[%c0_12, %c0_13] : memref<128x256xbf16, #tpu.memory_space<vmem>>, vector<128x256xbf16>
    %c0_14 = arith.constant 0 : index
    %c0_15 = arith.constant 0 : index
    %15 = vector.load %arg7[%c0_14, %c0_15] : memref<256x128xbf16, #tpu.memory_space<vmem>>, vector<256x128xbf16>
    %c0_16 = arith.constant 0 : index
    %c0_17 = arith.constant 0 : index
    %16 = vector.load %arg8[%c0_16, %c0_17] : memref<1x128xf32, #tpu.memory_space<vmem>>, vector<1x128xf32>
    %c0_18 = arith.constant 0 : index
    %c0_19 = arith.constant 0 : index
    %17 = vector.load %arg9[%c0_18, %c0_19] : memref<128x128xbf16, #tpu.memory_space<vmem>>, vector<128x128xbf16>
    %c0_20 = arith.constant 0 : index
    %c0_21 = arith.constant 0 : index
    %18 = vector.load %arg10[%c0_20, %c0_21] : memref<1x128xf32, #tpu.memory_space<vmem>>, vector<1x128xf32>
    %cst_22 = arith.constant dense<0.000000e+00> : vector<128x128xf32>
    %19 = tpu.matmul %14, %15, %cst_22 {dimension_numbers = #tpu.dot_dimension_numbers<[1], [0], [0], [1], [0, 0, 1, 1], [], []>} : vector<128x256xbf16>, vector<256x128xbf16>, vector<128x128xf32> -> vector<128x128xf32>
    %20 = vector.broadcast %16 : vector<1x128xf32> to vector<128x128xf32>
    %21 = arith.addf %19, %20 : vector<128x128xf32>
    %22 = math.tanh %21 : vector<128x128xf32>
    %23 = arith.truncf %22 : vector<128x128xf32> to vector<128x128xbf16>
    %cst_23 = arith.constant dense<0.000000e+00> : vector<128x128xf32>
    %24 = tpu.matmul %23, %17, %cst_23 {dimension_numbers = #tpu.dot_dimension_numbers<[1], [0], [0], [1], [0, 0, 1, 1], [], []>} : vector<128x128xbf16>, vector<128x128xbf16>, vector<128x128xf32> -> vector<128x128xf32>
    %25 = vector.broadcast %18 : vector<1x128xf32> to vector<128x128xf32>
    %26 = arith.addf %24, %25 : vector<128x128xf32>
    %c0_24 = arith.constant 0 : index
    %c0_25 = arith.constant 0 : index
    %27 = vector.load %arg12[%c0_24, %c0_25] : memref<128x128xf32, #tpu.memory_space<vmem>>, vector<128x128xf32>
    tpu.vector_store %arg12[%c0_24, %c0_25], %26 {strides = array<i32>} : memref<128x128xf32, #tpu.memory_space<vmem>>, vector<128x128xf32>,
    return
  }
  func.func @transform_0(%arg0: i32) -> (i32, i32) {
    %c0_i32 = arith.constant 0 : i32
    %c0_i32_0 = arith.constant 0 : i32
    return %arg0, %c0_i32 : i32, i32
  }
  func.func @transform_1(%arg0: i32) -> (i32, i32) {
    %c0_i32 = arith.constant 0 : i32
    %c0_i32_0 = arith.constant 0 : i32
    return %arg0, %c0_i32 : i32, i32
  }
  func.func @transform_2(%arg0: i32) -> (i32, i32) {
    %c0_i32 = arith.constant 0 : i32
    %c0_i32_0 = arith.constant 0 : i32
    %c0_i32_1 = arith.constant 0 : i32
    return %c0_i32, %c0_i32_0 : i32, i32
  }
  func.func @transform_3(%arg0: i32) -> (i32, i32) {
    %c0_i32 = arith.constant 0 : i32
    %c0_i32_0 = arith.constant 0 : i32
    %c0_i32_1 = arith.constant 0 : i32
    return %c0_i32, %c0_i32_0 : i32, i32
  }
  func.func @transform_4(%arg0: i32) -> (i32, i32) {
    %c0_i32 = arith.constant 0 : i32
    %c0_i32_0 = arith.constant 0 : i32
    %c0_i32_1 = arith.constant 0 : i32
    return %c0_i32, %c0_i32_0 : i32, i32
  }
  func.func @transform_5(%arg0: i32) -> (i32, i32) {
    %c0_i32 = arith.constant 0 : i32
    %c0_i32_0 = arith.constant 0 : i32
    %c0_i32_1 = arith.constant 0 : i32
    return %c0_i32, %c0_i32_0 : i32, i32
  }
  func.func @transform_6(%arg0: i32) -> (i32, i32) {
    %c0_i32 = arith.constant 0 : i32
    %c0_i32_0 = arith.constant 0 : i32
    %c0_i32_1 = arith.constant 0 : i32
    return %c0_i32, %c0_i32_0 : i32, i32
  }
  func.func @transform_7(%arg0: i32) -> (i32, i32) {
    %c0_i32 = arith.constant 0 : i32
    %c0_i32_0 = arith.constant 0 : i32
    %c0_i32_1 = arith.constant 0 : i32
    return %c0_i32, %c0_i32_0 : i32, i32
  }
  func.func @transform_8(%arg0: i32) -> (i32, i32) {
    %c0_i32 = arith.constant 0 : i32
    %c0_i32_0 = arith.constant 0 : i32
    %c0_i32_1 = arith.constant 0 : i32
    return %c0_i32, %c0_i32_0 : i32, i32
  }
  func.func @transform_9(%arg0: i32) -> (i32, i32) {
    %c0_i32 = arith.constant 0 : i32
    %c0_i32_0 = arith.constant 0 : i32
    %c0_i32_1 = arith.constant 0 : i32
    return %c0_i32, %c0_i32_0 : i32, i32
  }
  func.func @transform_10(%arg0: i32) -> (i32, i32) {
    %c0_i32 = arith.constant 0 : i32
    %c0_i32_0 = arith.constant 0 : i32
    return %arg0, %c0_i32 : i32, i32
  }
  func.func @transform_11(%arg0: i32) -> (i32, i32) {
    %c0_i32 = arith.constant 0 : i32
    %c0_i32_0 = arith.constant 0 : i32
    return %arg0, %c0_i32 : i32, i32
  }
}

module attributes {stable_mosaic.version = 11 : i64} {
  func.func @_dual_gram_kernel(%arg0: i32, %arg1: memref<128x128xf32, #tpu.memory_space<vmem>>, %arg2: memref<128x128xf32, #tpu.memory_space<vmem>>, %arg3: memref<256x128xbf16, #tpu.memory_space<vmem>>, %arg4: memref<256x128xbf16, #tpu.memory_space<vmem>>, %arg5: memref<128x128xf32, #tpu.memory_space<vmem>>, %arg6: memref<128x128xf32, #tpu.memory_space<vmem>>, %arg7: memref<128x256xf32, #tpu.memory_space<vmem>>, %arg8: memref<128x256xf32, #tpu.memory_space<vmem>>, %arg9: memref<128x1xf32, #tpu.memory_space<vmem>>, %arg10: memref<128x1xf32, #tpu.memory_space<vmem>>) attributes {dimension_semantics = [#tpu.dimension_semantics<parallel>], iteration_bounds = array<i64: 2>, scalar_prefetch = 0 : i64, scratch_operands = 0 : i64, tpu.core_type = #tpu.core_type<tc>, window_params = [{transform_indices = @transform_0, window_bounds = array<i64: 128, 128>}, {transform_indices = @transform_1, window_bounds = array<i64: 128, 128>}, {pipeline_mode = #tpu.pipeline_mode<synchronous>, transform_indices = @transform_2, window_bounds = array<i64: 256, 128>}, {pipeline_mode = #tpu.pipeline_mode<synchronous>, transform_indices = @transform_3, window_bounds = array<i64: 256, 128>}, {transform_indices = @transform_4, window_bounds = array<i64: 128, 128>}, {transform_indices = @transform_5, window_bounds = array<i64: 128, 128>}, {transform_indices = @transform_6, window_bounds = array<i64: 128, 256>}, {transform_indices = @transform_7, window_bounds = array<i64: 128, 256>}, {transform_indices = @transform_8, window_bounds = array<i64: 128, 1>}, {transform_indices = @transform_9, window_bounds = array<i64: 128, 1>}]} {
    %c0 = arith.constant 0 : index
    %c0_0 = arith.constant 0 : index
    %0 = vector.load %arg1[%c0, %c0_0] : memref<128x128xf32, #tpu.memory_space<vmem>>, vector<128x128xf32>
    %1 = arith.mulf %0, %0 : vector<128x128xf32>
    %cst = arith.constant dense<0.000000e+00> : vector<128xf32>
    %2 = vector.multi_reduction <add>, %1, %cst [1] : vector<128x128xf32> to vector<128xf32>
    %3 = vector.shape_cast %2 : vector<128xf32> to vector<128x1xf32>
    %4 = math.sqrt %3 : vector<128x1xf32>
    %cst_1 = arith.constant 9.99999996E-13 : f32
    %5 = vector.broadcast %cst_1 : f32 to vector<128x1xf32>
    %6 = arith.maximumf %4, %5 : vector<128x1xf32>
    %7 = vector.broadcast %6 : vector<128x1xf32> to vector<128x128xf32>
    %8 = arith.divf %0, %7 : vector<128x128xf32>
    %c0_2 = arith.constant 0 : index
    %c0_3 = arith.constant 0 : index
    %9 = vector.load %arg5[%c0_2, %c0_3] : memref<128x128xf32, #tpu.memory_space<vmem>>, vector<128x128xf32>
    tpu.vector_store %arg5[%c0_2, %c0_3], %8 {strides = array<i32>} : memref<128x128xf32, #tpu.memory_space<vmem>>, vector<128x128xf32>,
    %10 = arith.truncf %0 : vector<128x128xf32> to vector<128x128xbf16>
    %c0_4 = arith.constant 0 : index
    %c0_5 = arith.constant 0 : index
    %11 = vector.load %arg3[%c0_4, %c0_5] : memref<256x128xbf16, #tpu.memory_space<vmem>>, vector<256x128xbf16>
    %cst_6 = arith.constant dense<0.000000e+00> : vector<128x256xf32>
    %12 = tpu.matmul %10, %11, %cst_6 {dimension_numbers = #tpu.dot_dimension_numbers<[1], [1], [0], [0], [0, 0, 1, 0], [], []>} : vector<128x128xbf16>, vector<256x128xbf16>, vector<128x256xf32> -> vector<128x256xf32>
    %c0_7 = arith.constant 0 : index
    %c0_8 = arith.constant 0 : index
    %13 = vector.load %arg7[%c0_7, %c0_8] : memref<128x256xf32, #tpu.memory_space<vmem>>, vector<128x256xf32>
    tpu.vector_store %arg7[%c0_7, %c0_8], %12 {strides = array<i32>} : memref<128x256xf32, #tpu.memory_space<vmem>>, vector<128x256xf32>,
    %14 = arith.mulf %12, %12 : vector<128x256xf32>
    %cst_9 = arith.constant dense<0.000000e+00> : vector<128xf32>
    %15 = vector.multi_reduction <add>, %14, %cst_9 [1] : vector<128x256xf32> to vector<128xf32>
    %16 = vector.shape_cast %15 : vector<128xf32> to vector<128x1xf32>
    %17 = math.sqrt %16 : vector<128x1xf32>
    %cst_10 = arith.constant 9.99999996E-13 : f32
    %18 = vector.broadcast %cst_10 : f32 to vector<128x1xf32>
    %19 = arith.maximumf %17, %18 : vector<128x1xf32>
    %cst_11 = arith.constant 1.000000e+00 : f32
    %20 = vector.broadcast %cst_11 : f32 to vector<128x1xf32>
    %21 = arith.divf %20, %19 : vector<128x1xf32>
    %c0_12 = arith.constant 0 : index
    %c0_13 = arith.constant 0 : index
    %22 = vector.load %arg9[%c0_12, %c0_13] : memref<128x1xf32, #tpu.memory_space<vmem>>, vector<128x1xf32>
    tpu.vector_store %arg9[%c0_12, %c0_13], %21 {strides = array<i32>} : memref<128x1xf32, #tpu.memory_space<vmem>>, vector<128x1xf32>,
    %c0_14 = arith.constant 0 : index
    %c0_15 = arith.constant 0 : index
    %23 = vector.load %arg2[%c0_14, %c0_15] : memref<128x128xf32, #tpu.memory_space<vmem>>, vector<128x128xf32>
    %24 = arith.mulf %23, %23 : vector<128x128xf32>
    %cst_16 = arith.constant dense<0.000000e+00> : vector<128xf32>
    %25 = vector.multi_reduction <add>, %24, %cst_16 [1] : vector<128x128xf32> to vector<128xf32>
    %26 = vector.shape_cast %25 : vector<128xf32> to vector<128x1xf32>
    %27 = math.sqrt %26 : vector<128x1xf32>
    %cst_17 = arith.constant 9.99999996E-13 : f32
    %28 = vector.broadcast %cst_17 : f32 to vector<128x1xf32>
    %29 = arith.maximumf %27, %28 : vector<128x1xf32>
    %30 = vector.broadcast %29 : vector<128x1xf32> to vector<128x128xf32>
    %31 = arith.divf %23, %30 : vector<128x128xf32>
    %c0_18 = arith.constant 0 : index
    %c0_19 = arith.constant 0 : index
    %32 = vector.load %arg6[%c0_18, %c0_19] : memref<128x128xf32, #tpu.memory_space<vmem>>, vector<128x128xf32>
    tpu.vector_store %arg6[%c0_18, %c0_19], %31 {strides = array<i32>} : memref<128x128xf32, #tpu.memory_space<vmem>>, vector<128x128xf32>,
    %33 = arith.truncf %23 : vector<128x128xf32> to vector<128x128xbf16>
    %c0_20 = arith.constant 0 : index
    %c0_21 = arith.constant 0 : index
    %34 = vector.load %arg4[%c0_20, %c0_21] : memref<256x128xbf16, #tpu.memory_space<vmem>>, vector<256x128xbf16>
    %cst_22 = arith.constant dense<0.000000e+00> : vector<128x256xf32>
    %35 = tpu.matmul %33, %34, %cst_22 {dimension_numbers = #tpu.dot_dimension_numbers<[1], [1], [0], [0], [0, 0, 1, 0], [], []>} : vector<128x128xbf16>, vector<256x128xbf16>, vector<128x256xf32> -> vector<128x256xf32>
    %c0_23 = arith.constant 0 : index
    %c0_24 = arith.constant 0 : index
    %36 = vector.load %arg8[%c0_23, %c0_24] : memref<128x256xf32, #tpu.memory_space<vmem>>, vector<128x256xf32>
    tpu.vector_store %arg8[%c0_23, %c0_24], %35 {strides = array<i32>} : memref<128x256xf32, #tpu.memory_space<vmem>>, vector<128x256xf32>,
    %37 = arith.mulf %35, %35 : vector<128x256xf32>
    %cst_25 = arith.constant dense<0.000000e+00> : vector<128xf32>
    %38 = vector.multi_reduction <add>, %37, %cst_25 [1] : vector<128x256xf32> to vector<128xf32>
    %39 = vector.shape_cast %38 : vector<128xf32> to vector<128x1xf32>
    %40 = math.sqrt %39 : vector<128x1xf32>
    %cst_26 = arith.constant 9.99999996E-13 : f32
    %41 = vector.broadcast %cst_26 : f32 to vector<128x1xf32>
    %42 = arith.maximumf %40, %41 : vector<128x1xf32>
    %cst_27 = arith.constant 1.000000e+00 : f32
    %43 = vector.broadcast %cst_27 : f32 to vector<128x1xf32>
    %44 = arith.divf %43, %42 : vector<128x1xf32>
    %c0_28 = arith.constant 0 : index
    %c0_29 = arith.constant 0 : index
    %45 = vector.load %arg10[%c0_28, %c0_29] : memref<128x1xf32, #tpu.memory_space<vmem>>, vector<128x1xf32>
    tpu.vector_store %arg10[%c0_28, %c0_29], %44 {strides = array<i32>} : memref<128x1xf32, #tpu.memory_space<vmem>>, vector<128x1xf32>,
    return
  }
  func.func @transform_0(%arg0: i32) -> (i32, i32) {
    %c0_i32 = arith.constant 0 : i32
    %c0_i32_0 = arith.constant 0 : i32
    return %arg0, %c0_i32 : i32, i32
  }
  func.func @transform_1(%arg0: i32) -> (i32, i32) {
    %c0_i32 = arith.constant 0 : i32
    %c0_i32_0 = arith.constant 0 : i32
    return %arg0, %c0_i32 : i32, i32
  }
  func.func @transform_2(%arg0: i32) -> (i32, i32) {
    %c0_i32 = arith.constant 0 : i32
    %c0_i32_0 = arith.constant 0 : i32
    %c0_i32_1 = arith.constant 0 : i32
    return %c0_i32, %c0_i32_0 : i32, i32
  }
  func.func @transform_3(%arg0: i32) -> (i32, i32) {
    %c0_i32 = arith.constant 0 : i32
    %c0_i32_0 = arith.constant 0 : i32
    %c0_i32_1 = arith.constant 0 : i32
    return %c0_i32, %c0_i32_0 : i32, i32
  }
  func.func @transform_4(%arg0: i32) -> (i32, i32) {
    %c0_i32 = arith.constant 0 : i32
    %c0_i32_0 = arith.constant 0 : i32
    return %arg0, %c0_i32 : i32, i32
  }
  func.func @transform_5(%arg0: i32) -> (i32, i32) {
    %c0_i32 = arith.constant 0 : i32
    %c0_i32_0 = arith.constant 0 : i32
    return %arg0, %c0_i32 : i32, i32
  }
  func.func @transform_6(%arg0: i32) -> (i32, i32) {
    %c0_i32 = arith.constant 0 : i32
    %c0_i32_0 = arith.constant 0 : i32
    return %arg0, %c0_i32 : i32, i32
  }
  func.func @transform_7(%arg0: i32) -> (i32, i32) {
    %c0_i32 = arith.constant 0 : i32
    %c0_i32_0 = arith.constant 0 : i32
    return %arg0, %c0_i32 : i32, i32
  }
  func.func @transform_8(%arg0: i32) -> (i32, i32) {
    %c0_i32 = arith.constant 0 : i32
    %c0_i32_0 = arith.constant 0 : i32
    return %arg0, %c0_i32 : i32, i32
  }
  func.func @transform_9(%arg0: i32) -> (i32, i32) {
    %c0_i32 = arith.constant 0 : i32
    %c0_i32_0 = arith.constant 0 : i32
    return %arg0, %c0_i32 : i32, i32
  }
}

module attributes {stable_mosaic.version = 11 : i64} {
  func.func @_combine_topk_kernel(%arg0: i32, %arg1: memref<128x256xf32, #tpu.memory_space<vmem>>, %arg2: memref<128x1xf32, #tpu.memory_space<vmem>>, %arg3: memref<128x256xf32, #tpu.memory_space<vmem>>, %arg4: memref<128x1xf32, #tpu.memory_space<vmem>>, %arg5: memref<128x256xf32, #tpu.memory_space<vmem>>) attributes {dimension_semantics = [#tpu.dimension_semantics<parallel>], iteration_bounds = array<i64: 2>, scalar_prefetch = 0 : i64, scratch_operands = 0 : i64, tpu.core_type = #tpu.core_type<tc>, window_params = [{transform_indices = @transform_0, window_bounds = array<i64: 128, 256>}, {transform_indices = @transform_1, window_bounds = array<i64: 128, 1>}, {transform_indices = @transform_2, window_bounds = array<i64: 128, 256>}, {transform_indices = @transform_3, window_bounds = array<i64: 128, 1>}, {transform_indices = @transform_4, window_bounds = array<i64: 128, 256>}]} {
    %c0 = arith.constant 0 : index
    %c0_0 = arith.constant 0 : index
    %0 = vector.load %arg1[%c0, %c0_0] : memref<128x256xf32, #tpu.memory_space<vmem>>, vector<128x256xf32>
    %c0_1 = arith.constant 0 : index
    %c0_2 = arith.constant 0 : index
    %1 = vector.load %arg2[%c0_1, %c0_2] : memref<128x1xf32, #tpu.memory_space<vmem>>, vector<128x1xf32>
    %2 = vector.broadcast %1 : vector<128x1xf32> to vector<128x256xf32>
    %3 = arith.mulf %0, %2 : vector<128x256xf32>
    %c0_3 = arith.constant 0 : index
    %c0_4 = arith.constant 0 : index
    %4 = vector.load %arg3[%c0_3, %c0_4] : memref<128x256xf32, #tpu.memory_space<vmem>>, vector<128x256xf32>
    %c0_5 = arith.constant 0 : index
    %c0_6 = arith.constant 0 : index
    %5 = vector.load %arg4[%c0_5, %c0_6] : memref<128x1xf32, #tpu.memory_space<vmem>>, vector<128x1xf32>
    %6 = vector.broadcast %5 : vector<128x1xf32> to vector<128x256xf32>
    %7 = arith.mulf %4, %6 : vector<128x256xf32>
    %8 = arith.addf %3, %7 : vector<128x256xf32>
    %cst = arith.constant dense<0xFF800000> : vector<128xf32>
    %9 = vector.multi_reduction <maximumf>, %8, %cst [1] : vector<128x256xf32> to vector<128xf32>
    %10 = vector.shape_cast %9 : vector<128xf32> to vector<128x1xf32>
    %11 = vector.broadcast %10 : vector<128x1xf32> to vector<128x256xf32>
    %12 = arith.cmpf oge, %8, %11 : vector<128x256xf32>
    %cst_7 = arith.constant 0xFF800000 : f32
    %13 = vector.broadcast %cst_7 : f32 to vector<128x256xf32>
    %14 = arith.select %12, %13, %8 : vector<128x256xi1>, vector<128x256xf32>
    %cst_8 = arith.constant dense<0xFF800000> : vector<128xf32>
    %15 = vector.multi_reduction <maximumf>, %14, %cst_8 [1] : vector<128x256xf32> to vector<128xf32>
    %16 = vector.shape_cast %15 : vector<128xf32> to vector<128x1xf32>
    %17 = vector.broadcast %16 : vector<128x1xf32> to vector<128x256xf32>
    %18 = arith.cmpf oge, %14, %17 : vector<128x256xf32>
    %cst_9 = arith.constant 0xFF800000 : f32
    %19 = vector.broadcast %cst_9 : f32 to vector<128x256xf32>
    %20 = arith.select %18, %19, %14 : vector<128x256xi1>, vector<128x256xf32>
    %cst_10 = arith.constant dense<0xFF800000> : vector<128xf32>
    %21 = vector.multi_reduction <maximumf>, %20, %cst_10 [1] : vector<128x256xf32> to vector<128xf32>
    %22 = vector.shape_cast %21 : vector<128xf32> to vector<128x1xf32>
    %23 = vector.broadcast %22 : vector<128x1xf32> to vector<128x256xf32>
    %24 = arith.cmpf oge, %20, %23 : vector<128x256xf32>
    %cst_11 = arith.constant 0xFF800000 : f32
    %25 = vector.broadcast %cst_11 : f32 to vector<128x256xf32>
    %26 = arith.select %24, %25, %20 : vector<128x256xi1>, vector<128x256xf32>
    %cst_12 = arith.constant dense<0xFF800000> : vector<128xf32>
    %27 = vector.multi_reduction <maximumf>, %26, %cst_12 [1] : vector<128x256xf32> to vector<128xf32>
    %28 = vector.shape_cast %27 : vector<128xf32> to vector<128x1xf32>
    %29 = vector.broadcast %28 : vector<128x1xf32> to vector<128x256xf32>
    %30 = arith.cmpf oge, %26, %29 : vector<128x256xf32>
    %cst_13 = arith.constant 0xFF800000 : f32
    %31 = vector.broadcast %cst_13 : f32 to vector<128x256xf32>
    %32 = arith.select %30, %31, %26 : vector<128x256xi1>, vector<128x256xf32>
    %cst_14 = arith.constant dense<0xFF800000> : vector<128xf32>
    %33 = vector.multi_reduction <maximumf>, %32, %cst_14 [1] : vector<128x256xf32> to vector<128xf32>
    %34 = vector.shape_cast %33 : vector<128xf32> to vector<128x1xf32>
    %35 = vector.broadcast %34 : vector<128x1xf32> to vector<128x256xf32>
    %36 = arith.cmpf oge, %32, %35 : vector<128x256xf32>
    %cst_15 = arith.constant 0xFF800000 : f32
    %37 = vector.broadcast %cst_15 : f32 to vector<128x256xf32>
    %38 = arith.select %36, %37, %32 : vector<128x256xi1>, vector<128x256xf32>
    %cst_16 = arith.constant dense<0xFF800000> : vector<128xf32>
    %39 = vector.multi_reduction <maximumf>, %38, %cst_16 [1] : vector<128x256xf32> to vector<128xf32>
    %40 = vector.shape_cast %39 : vector<128xf32> to vector<128x1xf32>
    %41 = vector.broadcast %40 : vector<128x1xf32> to vector<128x256xf32>
    %42 = arith.cmpf oge, %38, %41 : vector<128x256xf32>
    %cst_17 = arith.constant 0xFF800000 : f32
    %43 = vector.broadcast %cst_17 : f32 to vector<128x256xf32>
    %44 = arith.select %42, %43, %38 : vector<128x256xi1>, vector<128x256xf32>
    %cst_18 = arith.constant dense<0xFF800000> : vector<128xf32>
    %45 = vector.multi_reduction <maximumf>, %44, %cst_18 [1] : vector<128x256xf32> to vector<128xf32>
    %46 = vector.shape_cast %45 : vector<128xf32> to vector<128x1xf32>
    %47 = vector.broadcast %46 : vector<128x1xf32> to vector<128x256xf32>
    %48 = arith.cmpf oge, %44, %47 : vector<128x256xf32>
    %cst_19 = arith.constant 0xFF800000 : f32
    %49 = vector.broadcast %cst_19 : f32 to vector<128x256xf32>
    %50 = arith.select %48, %49, %44 : vector<128x256xi1>, vector<128x256xf32>
    %cst_20 = arith.constant dense<0xFF800000> : vector<128xf32>
    %51 = vector.multi_reduction <maximumf>, %50, %cst_20 [1] : vector<128x256xf32> to vector<128xf32>
    %52 = vector.shape_cast %51 : vector<128xf32> to vector<128x1xf32>
    %53 = vector.broadcast %52 : vector<128x1xf32> to vector<128x256xf32>
    %54 = arith.cmpf oge, %50, %53 : vector<128x256xf32>
    %cst_21 = arith.constant 0xFF800000 : f32
    %55 = vector.broadcast %cst_21 : f32 to vector<128x256xf32>
    %56 = arith.select %54, %55, %50 : vector<128x256xi1>, vector<128x256xf32>
    %cst_22 = arith.constant dense<0xFF800000> : vector<128xf32>
    %57 = vector.multi_reduction <maximumf>, %56, %cst_22 [1] : vector<128x256xf32> to vector<128xf32>
    %58 = vector.shape_cast %57 : vector<128xf32> to vector<128x1xf32>
    %59 = vector.broadcast %58 : vector<128x1xf32> to vector<128x256xf32>
    %60 = arith.cmpf oge, %56, %59 : vector<128x256xf32>
    %cst_23 = arith.constant 0xFF800000 : f32
    %61 = vector.broadcast %cst_23 : f32 to vector<128x256xf32>
    %62 = arith.select %60, %61, %56 : vector<128x256xi1>, vector<128x256xf32>
    %cst_24 = arith.constant dense<0xFF800000> : vector<128xf32>
    %63 = vector.multi_reduction <maximumf>, %62, %cst_24 [1] : vector<128x256xf32> to vector<128xf32>
    %64 = vector.shape_cast %63 : vector<128xf32> to vector<128x1xf32>
    %65 = vector.broadcast %64 : vector<128x1xf32> to vector<128x256xf32>
    %66 = arith.cmpf oge, %8, %65 : vector<128x256xf32>
    %67 = arith.extui %66 : vector<128x256xi1> to vector<128x256xi32>
    %68 = arith.sitofp %67 : vector<128x256xi32> to vector<128x256xf32>
    %69 = tpu.iota {dimensions = array<i32: 0>} : vector<128x256xi32>
    %c128_i32 = arith.constant 128 : i32
    %70 = arith.muli %arg0, %c128_i32 : i32
    %71 = vector.broadcast %70 : i32 to vector<128x256xi32>
    %72 = arith.addi %69, %71 : vector<128x256xi32>
    %73 = tpu.iota {dimensions = array<i32: 1>} : vector<128x256xi32>
    %74 = arith.cmpi eq, %73, %72 : vector<128x256xi32>
    %cst_25 = arith.constant 1.000000e+00 : f32
    %75 = vector.broadcast %cst_25 : f32 to vector<128x256xf32>
    %76 = arith.addf %68, %75 : vector<128x256xf32>
    %77 = arith.select %74, %76, %68 : vector<128x256xi1>, vector<128x256xf32>
    %c0_26 = arith.constant 0 : index
    %c0_27 = arith.constant 0 : index
    %78 = vector.load %arg5[%c0_26, %c0_27] : memref<128x256xf32, #tpu.memory_space<vmem>>, vector<128x256xf32>
    tpu.vector_store %arg5[%c0_26, %c0_27], %77 {strides = array<i32>} : memref<128x256xf32, #tpu.memory_space<vmem>>, vector<128x256xf32>,
    return
  }
  func.func @transform_0(%arg0: i32) -> (i32, i32) {
    %c0_i32 = arith.constant 0 : i32
    %c0_i32_0 = arith.constant 0 : i32
    return %arg0, %c0_i32 : i32, i32
  }
  func.func @transform_1(%arg0: i32) -> (i32, i32) {
    %c0_i32 = arith.constant 0 : i32
    %c0_i32_0 = arith.constant 0 : i32
    return %arg0, %c0_i32 : i32, i32
  }
  func.func @transform_2(%arg0: i32) -> (i32, i32) {
    %c0_i32 = arith.constant 0 : i32
    %c0_i32_0 = arith.constant 0 : i32
    return %arg0, %c0_i32 : i32, i32
  }
  func.func @transform_3(%arg0: i32) -> (i32, i32) {
    %c0_i32 = arith.constant 0 : i32
    %c0_i32_0 = arith.constant 0 : i32
    return %arg0, %c0_i32 : i32, i32
  }
  func.func @transform_4(%arg0: i32) -> (i32, i32) {
    %c0_i32 = arith.constant 0 : i32
    %c0_i32_0 = arith.constant 0 : i32
    return %arg0, %c0_i32 : i32, i32
  }
}

</mosaic_0001>

<llo_original>
// kernel: sim_info_forward.3
$region0: #{sim_info_forward.3}
  #allocation0 [shape = 'u32[]', space=smem, size = 0x4, offset = 0x4, fixed_abs, tag = 'smem constant byte address 0x4 - core index']
  #allocation1 [shape = 'u32[72,128]{1,0:T(1,128)}', space=vmem, size = 0x9000, scoped, tag = 'internal scratch']
  %s0 = inlined_call_operand.vmem [shape: bf16[256,128], index: 0, kind: input, shape index: {}]
  %s1 = inlined_call_operand.vmem [shape: bf16[256,256], index: 1, kind: input, shape index: {}]
  %s2 = inlined_call_operand.vmem [shape: bf16[128,128], index: 2, kind: input, shape index: {}]
  %s3 = inlined_call_operand.vmem [shape: f32[1,128], index: 3, kind: input, shape index: {}]
  %s4 = inlined_call_operand.vmem [shape: bf16[128,128], index: 4, kind: input, shape index: {}]
  %s5 = inlined_call_operand.vmem [shape: f32[1,128], index: 5, kind: input, shape index: {}]
  %s6 = inlined_call_operand.vmem [shape: bf16[256,128], index: 6, kind: input, shape index: {}]
  %s7 = inlined_call_operand.vmem [shape: f32[1,128], index: 7, kind: input, shape index: {}]
  %s8 = inlined_call_operand.vmem [shape: bf16[128,128], index: 8, kind: input, shape index: {}]
  %s9 = inlined_call_operand.vmem [shape: f32[1,128], index: 9, kind: input, shape index: {}]
  %s10 = inlined_call_operand.vmem [shape: f32[256,128], index: 10, kind: output, shape index: {0}]
  %s11 = inlined_call_operand.vmem [shape: f32[256,128], index: 11, kind: output, shape index: {1}]
  %12 = xla_tuple %s10, %s11
  %s13 = sld [smem:[#allocation0]]
  $region81: #{sim_info_forward.3} parent=0
    _
  %s15 = ssub.s32 1, %s13
  %s16 = scalar_select 0, %s15, %s13
  loop: start=0, step=1, limit=4
  $region2: #{sim_info_forward.3} parent=0 // loop_pre_header
    _
  $region3: #{sim_info_forward.3} parent=0 // loop_header
    %s18 = sphi 0, %s22
    %p19 = scmp.ge.s32.totalorder %s18, 4
    %s28 = sphi 0, %s30
    %s31 = sphi 0, %s28
    %s32 = sphi 0, %s31
    %s48 = sphi 0, %s32
    %s54 = sphi 0, %s56
    %s57 = sphi 0, %s54
    %s58 = sphi 0, %s57
    %s74 = sphi 0, %s58
    %s78 = sphi 0, %s78
    %s80 = sphi 0, %s78
    %s81 = sphi 0, %s80
    %s95 = sphi 0, %s81
    %s99 = sphi 0, %s99
    %s101 = sphi 0, %s99
    %s102 = sphi 0, %s101
    %s116 = sphi 0, %s102
    %s120 = sphi 0, %s120
    %s122 = sphi 0, %s120
    %s123 = sphi 0, %s122
    %s137 = sphi 0, %s123
    %s141 = sphi 0, %s141
    %s143 = sphi 0, %s141
    %s144 = sphi 0, %s143
    %s158 = sphi 0, %s144
    %s162 = sphi 0, %s162
    %s164 = sphi 0, %s162
    %s165 = sphi 0, %s164
    %s179 = sphi 0, %s165
    %s183 = sphi 0, %s183
    %s185 = sphi 0, %s183
    %s186 = sphi 0, %s185
    %s200 = sphi 0, %s186
    %s204 = sphi 0, %s204
    %s206 = sphi 0, %s204
    %s207 = sphi 0, %s206
    %s221 = sphi 0, %s207
    %s225 = sphi 0, %s225
    %s227 = sphi 0, %s225
    %s228 = sphi 0, %s227
    %s242 = sphi 0, %s228
    %s248 = sphi 0, %s250
    %s251 = sphi 0, %s248
    %s252 = sphi 0, %s251
    %s268 = sphi 0, %s252
    %s274 = sphi 0, %s276
    %s277 = sphi 0, %s274
    %s278 = sphi 0, %s277
    %s294 = sphi 0, %s278
  $region4: #{sim_info_forward.3} parent=0 // loop_header_branch
    %21 = sbr.rel (%p19) target = $region8
  $region5: #{sim_info_forward.3} parent=0 // loop_body
    %s23 = ssub.s32 %s18, 1
    %s24 = ssub.s32 %s18, 2
    %s25 = sadd.s32 %s18, 1
    %s26 = ssub.s32 %s18, %s25
    %p27 = scmp.eq.s32.totalorder %s26, 0
    %s29 = sadd.s32 %s28, 1
    %s30 = scalar_select %p27, %s28, %s29
    %p33 = pneg %p27
    %p34 = scmp.eq.s32.totalorder %s18, 1
    %p35 = por %p33, %p34
    %p36 = scmp.ne.s32.totalorder %s28, %s31
    %p37 = scmp.eq.s32.totalorder %s18, 0
    %p38 = por %p36, %p37
    %p39 = scmp.ne.s32.totalorder %s28, %s31
    %p40 = scmp.eq.s32.totalorder %s23, 1
    %p41 = por %p39, %p40
    %p42 = scmp.ne.s32.totalorder %s31, %s32
    %p43 = scmp.eq.s32.totalorder %s23, 0
    %p44 = por %p42, %p43
    %p45 = scmp.ne.s32.totalorder %s31, %s32
    %p46 = scmp.eq.s32.totalorder %s24, 1
    %p47 = por %p45, %p46
    %p49 = scmp.ne.s32.totalorder %s32, %s48
    %p50 = scmp.eq.s32.totalorder %s24, 0
    %p51 = por %p49, %p50
    %s52 = ssub.s32 %s18, %s25
    %p53 = scmp.eq.s32.totalorder %s52, 0
    %s55 = sadd.s32 %s54, 1
    %s56 = scalar_select %p53, %s54, %s55
    %p59 = pneg %p53
    %p60 = scmp.eq.s32.totalorder %s18, 1
    %p61 = por %p59, %p60
    %p62 = scmp.ne.s32.totalorder %s54, %s57
    %p63 = scmp.eq.s32.totalorder %s18, 0
    %p64 = por %p62, %p63
    %p65 = scmp.ne.s32.totalorder %s54, %s57
    %p66 = scmp.eq.s32.totalorder %s23, 1
    %p67 = por %p65, %p66
    %p68 = scmp.ne.s32.totalorder %s57, %s58
    %p69 = scmp.eq.s32.totalorder %s23, 0
    %p70 = por %p68, %p69
    %p71 = scmp.ne.s32.totalorder %s57, %s58
    %p72 = scmp.eq.s32.totalorder %s24, 1
    %p73 = por %p71, %p72
    %p75 = scmp.ne.s32.totalorder %s58, %s74
    %p76 = scmp.eq.s32.totalorder %s24, 0
    %p77 = por %p75, %p76
    %s79 = sadd.s32 %s78, 1
    %p82 = scmp.eq.s32.totalorder %s18, 1
    %p83 = scmp.ne.s32.totalorder %s78, %s80
    %p84 = scmp.eq.s32.totalorder %s18, 0
    %p85 = por %p83, %p84
    %p86 = scmp.ne.s32.totalorder %s78, %s80
    %p87 = scmp.eq.s32.totalorder %s23, 1
    %p88 = por %p86, %p87
    %p89 = scmp.ne.s32.totalorder %s80, %s81
    %p90 = scmp.eq.s32.totalorder %s23, 0
    %p91 = por %p89, %p90
    %p92 = scmp.ne.s32.totalorder %s80, %s81
    %p93 = scmp.eq.s32.totalorder %s24, 1
    %p94 = por %p92, %p93
    %p96 = scmp.ne.s32.totalorder %s81, %s95
    %p97 = scmp.eq.s32.totalorder %s24, 0
    %p98 = por %p96, %p97
    %s100 = sadd.s32 %s99, 1
    %p103 = scmp.eq.s32.totalorder %s18, 1
    %p104 = scmp.ne.s32.totalorder %s99, %s101
    %p105 = scmp.eq.s32.totalorder %s18, 0
    %p106 = por %p104, %p105
    %p107 = scmp.ne.s32.totalorder %s99, %s101
    %p108 = scmp.eq.s32.totalorder %s23, 1
    %p109 = por %p107, %p108
    %p110 = scmp.ne.s32.totalorder %s101, %s102
    %p111 = scmp.eq.s32.totalorder %s23, 0
    %p112 = por %p110, %p111
    %p113 = scmp.ne.s32.totalorder %s101, %s102
    %p114 = scmp.eq.s32.totalorder %s24, 1
    %p115 = por %p113, %p114
    %p117 = scmp.ne.s32.totalorder %s102, %s116
    %p118 = scmp.eq.s32.totalorder %s24, 0
    %p119 = por %p117, %p118
    %s121 = sadd.s32 %s120, 1
    %p124 = scmp.eq.s32.totalorder %s18, 1
    %p125 = scmp.ne.s32.totalorder %s120, %s122
    %p126 = scmp.eq.s32.totalorder %s18, 0
    %p127 = por %p125, %p126
    %p128 = scmp.ne.s32.totalorder %s120, %s122
    %p129 = scmp.eq.s32.totalorder %s23, 1
    %p130 = por %p128, %p129
    %p131 = scmp.ne.s32.totalorder %s122, %s123
    %p132 = scmp.eq.s32.totalorder %s23, 0
    %p133 = por %p131, %p132
    %p134 = scmp.ne.s32.totalorder %s122, %s123
    %p135 = scmp.eq.s32.totalorder %s24, 1
    %p136 = por %p134, %p135
    %p138 = scmp.ne.s32.totalorder %s123, %s137
    %p139 = scmp.eq.s32.totalorder %s24, 0
    %p140 = por %p138, %p139
    %s142 = sadd.s32 %s141, 1
    %p145 = scmp.eq.s32.totalorder %s18, 1
    %p146 = scmp.ne.s32.totalorder %s141, %s143
    %p147 = scmp.eq.s32.totalorder %s18, 0
    %p148 = por %p146, %p147
    %p149 = scmp.ne.s32.totalorder %s141, %s143
    %p150 = scmp.eq.s32.totalorder %s23, 1
    %p151 = por %p149, %p150
    %p152 = scmp.ne.s32.totalorder %s143, %s144
    %p153 = scmp.eq.s32.totalorder %s23, 0
    %p154 = por %p152, %p153
    %p155 = scmp.ne.s32.totalorder %s143, %s144
    %p156 = scmp.eq.s32.totalorder %s24, 1
    %p157 = por %p155, %p156
    %p159 = scmp.ne.s32.totalorder %s144, %s158
    %p160 = scmp.eq.s32.totalorder %s24, 0
    %p161 = por %p159, %p160
    %s163 = sadd.s32 %s162, 1
    %p166 = scmp.eq.s32.totalorder %s18, 1
    %p167 = scmp.ne.s32.totalorder %s162, %s164
    %p168 = scmp.eq.s32.totalorder %s18, 0
    %p169 = por %p167, %p168
    %p170 = scmp.ne.s32.totalorder %s162, %s164
    %p171 = scmp.eq.s32.totalorder %s23, 1
    %p172 = por %p170, %p171
    %p173 = scmp.ne.s32.totalorder %s164, %s165
    %p174 = scmp.eq.s32.totalorder %s23, 0
    %p175 = por %p173, %p174
    %p176 = scmp.ne.s32.totalorder %s164, %s165
    %p177 = scmp.eq.s32.totalorder %s24, 1
    %p178 = por %p176, %p177
    %p180 = scmp.ne.s32.totalorder %s165, %s179
    %p181 = scmp.eq.s32.totalorder %s24, 0
    %p182 = por %p180, %p181
    %s184 = sadd.s32 %s183, 1
    %p187 = scmp.eq.s32.totalorder %s18, 1
    %p188 = scmp.ne.s32.totalorder %s183, %s185
    %p189 = scmp.eq.s32.totalorder %s18, 0
    %p190 = por %p188, %p189
    %p191 = scmp.ne.s32.totalorder %s183, %s185
    %p192 = scmp.eq.s32.totalorder %s23, 1
    %p193 = por %p191, %p192
    %p194 = scmp.ne.s32.totalorder %s185, %s186
    %p195 = scmp.eq.s32.totalorder %s23, 0
    %p196 = por %p194, %p195
    %p197 = scmp.ne.s32.totalorder %s185, %s186
    %p198 = scmp.eq.s32.totalorder %s24, 1
    %p199 = por %p197, %p198
    %p201 = scmp.ne.s32.totalorder %s186, %s200
    %p202 = scmp.eq.s32.totalorder %s24, 0
    %p203 = por %p201, %p202
    %s205 = sadd.s32 %s204, 1
    %p208 = scmp.eq.s32.totalorder %s18, 1
    %p209 = scmp.ne.s32.totalorder %s204, %s206
    %p210 = scmp.eq.s32.totalorder %s18, 0
    %p211 = por %p209, %p210
    %p212 = scmp.ne.s32.totalorder %s204, %s206
    %p213 = scmp.eq.s32.totalorder %s23, 1
    %p214 = por %p212, %p213
    %p215 = scmp.ne.s32.totalorder %s206, %s207
    %p216 = scmp.eq.s32.totalorder %s23, 0
    %p217 = por %p215, %p216
    %p218 = scmp.ne.s32.totalorder %s206, %s207
    %p219 = scmp.eq.s32.totalorder %s24, 1
    %p220 = por %p218, %p219
    %p222 = scmp.ne.s32.totalorder %s207, %s221
    %p223 = scmp.eq.s32.totalorder %s24, 0
    %p224 = por %p222, %p223
    %s226 = sadd.s32 %s225, 1
    %p229 = scmp.eq.s32.totalorder %s18, 1
    %p230 = scmp.ne.s32.totalorder %s225, %s227
    %p231 = scmp.eq.s32.totalorder %s18, 0
    %p232 = por %p230, %p231
    %p233 = scmp.ne.s32.totalorder %s225, %s227
    %p234 = scmp.eq.s32.totalorder %s23, 1
    %p235 = por %p233, %p234
    %p236 = scmp.ne.s32.totalorder %s227, %s228
    %p237 = scmp.eq.s32.totalorder %s23, 0
    %p238 = por %p236, %p237
    %p239 = scmp.ne.s32.totalorder %s227, %s228
    %p240 = scmp.eq.s32.totalorder %s24, 1
    %p241 = por %p239, %p240
    %p243 = scmp.ne.s32.totalorder %s228, %s242
    %p244 = scmp.eq.s32.totalorder %s24, 0
    %p245 = por %p243, %p244
    %s246 = ssub.s32 %s18, %s25
    %p247 = scmp.eq.s32.totalorder %s246, 0
    %s249 = sadd.s32 %s248, 1
    %s250 = scalar_select %p247, %s248, %s249
    %p253 = pneg %p247
    %p254 = scmp.eq.s32.totalorder %s18, 1
    %p255 = por %p253, %p254
    %p256 = scmp.ne.s32.totalorder %s248, %s251
    %p257 = scmp.eq.s32.totalorder %s18, 0
    %p258 = por %p256, %p257
    %p259 = scmp.ne.s32.totalorder %s248, %s251
    %p260 = scmp.eq.s32.totalorder %s23, 1
    %p261 = por %p259, %p260
    %p262 = scmp.ne.s32.totalorder %s251, %s252
    %p263 = scmp.eq.s32.totalorder %s23, 0
    %p264 = por %p262, %p263
    %p265 = scmp.ne.s32.totalorder %s251, %s252
    %p266 = scmp.eq.s32.totalorder %s24, 1
    %p267 = por %p265, %p266
    %p269 = scmp.ne.s32.totalorder %s252, %s268
    %p270 = scmp.eq.s32.totalorder %s24, 0
    %p271 = por %p269, %p270
    %s272 = ssub.s32 %s18, %s25
    %p273 = scmp.eq.s32.totalorder %s272, 0
    %s275 = sadd.s32 %s274, 1
    %s276 = scalar_select %p273, %s274, %s275
    %p279 = pneg %p273
    %p280 = scmp.eq.s32.totalorder %s18, 1
    %p281 = por %p279, %p280
    %p282 = scmp.ne.s32.totalorder %s274, %s277
    %p283 = scmp.eq.s32.totalorder %s18, 0
    %p284 = por %p282, %p283
    %p285 = scmp.ne.s32.totalorder %s274, %s277
    %p286 = scmp.eq.s32.totalorder %s23, 1
    %p287 = por %p285, %p286
    %p288 = scmp.ne.s32.totalorder %s277, %s278
    %p289 = scmp.eq.s32.totalorder %s23, 0
    %p290 = por %p288, %p289
    %p291 = scmp.ne.s32.totalorder %s277, %s278
    %p292 = scmp.eq.s32.totalorder %s24, 1
    %p293 = por %p291, %p292
    %p295 = scmp.ne.s32.totalorder %s278, %s294
    %p296 = scmp.eq.s32.totalorder %s24, 0
    %p297 = por %p295, %p296
    %p298 = scmp.le.s32.totalorder 1, %s18
    %p299 = scmp.lt.s32.totalorder %s18, 3
    %p300 = pnand %p298, %p299
    %p301 = pneg %p300
    // Predicated region
    $region9: #{sim_info_forward.3} parent=5 // pred_check
      _
    $region10: #{sim_info_forward.3} parent=5 // pred_check_branch
      %303 = sbr.rel (%p300) target = $region12
    $region11: #{sim_info_forward.3} parent=5 // pred_region
      %s304 = ssub.s32 %s18, 1
      // Predicated region
      $region13: #{sim_info_forward.3} parent=11 // pred_check
        %p305 = pneg %p91
      $region14: #{sim_info_forward.3} parent=11 // pred_check_branch
        %307 = sbr.rel (%p305) target = $region16
      $region15: #{sim_info_forward.3} parent=11 // pred_region
        _
      $region16: #{sim_info_forward.3} parent=11 // pred_fallthru
        _
      // Predicated region
      $region17: #{sim_info_forward.3} parent=11 // pred_check
        %p308 = pneg %p112
      $region18: #{sim_info_forward.3} parent=11 // pred_check_branch
        %310 = sbr.rel (%p308) target = $region20
      $region19: #{sim_info_forward.3} parent=11 // pred_region
        _
      $region20: #{sim_info_forward.3} parent=11 // pred_fallthru
        _
      // Predicated region
      $region21: #{sim_info_forward.3} parent=11 // pred_check
        %p311 = pneg %p133
      $region22: #{sim_info_forward.3} parent=11 // pred_check_branch
        %313 = sbr.rel (%p311) target = $region24
      $region23: #{sim_info_forward.3} parent=11 // pred_region
        _
      $region24: #{sim_info_forward.3} parent=11 // pred_fallthru
        _
      // Predicated region
      $region25: #{sim_info_forward.3} parent=11 // pred_check
        %p314 = pneg %p154
      $region26: #{sim_info_forward.3} parent=11 // pred_check_branch
        %316 = sbr.rel (%p314) target = $region28
      $region27: #{sim_info_forward.3} parent=11 // pred_region
        _
      $region28: #{sim_info_forward.3} parent=11 // pred_fallthru
        _
      // Predicated region
      $region29: #{sim_info_forward.3} parent=11 // pred_check
        %p317 = pneg %p175
      $region30: #{sim_info_forward.3} parent=11 // pred_check_branch
        %319 = sbr.rel (%p317) target = $region32
      $region31: #{sim_info_forward.3} parent=11 // pred_region
        _
      $region32: #{sim_info_forward.3} parent=11 // pred_fallthru
        _
      // Predicated region
      $region33: #{sim_info_forward.3} parent=11 // pred_check
        %p320 = pneg %p196
      $region34: #{sim_info_forward.3} parent=11 // pred_check_branch
        %322 = sbr.rel (%p320) target = $region36
      $region35: #{sim_info_forward.3} parent=11 // pred_region
        _
      $region36: #{sim_info_forward.3} parent=11 // pred_fallthru
        _
      // Predicated region
      $region37: #{sim_info_forward.3} parent=11 // pred_check
        %p323 = pneg %p217
      $region38: #{sim_info_forward.3} parent=11 // pred_check_branch
        %325 = sbr.rel (%p323) target = $region40
      $region39: #{sim_info_forward.3} parent=11 // pred_region
        _
      $region40: #{sim_info_forward.3} parent=11 // pred_fallthru
        _
      // Predicated region
      $region41: #{sim_info_forward.3} parent=11 // pred_check
        %p326 = pneg %p238
      $region42: #{sim_info_forward.3} parent=11 // pred_check_branch
        %328 = sbr.rel (%p326) target = $region44
      $region43: #{sim_info_forward.3} parent=11 // pred_region
        _
      $region44: #{sim_info_forward.3} parent=11 // pred_fallthru
        _
    $region12: #{sim_info_forward.3} parent=5 // pred_fallthru
      _
    %p329 = scmp.lt.s32.totalorder %s18, 2
    // Predicated region
    $region45: #{sim_info_forward.3} parent=5 // pred_check
      %p330 = pneg %p329
    $region46: #{sim_info_forward.3} parent=5 // pred_check_branch
      %332 = sbr.rel (%p330) target = $region48
    $region47: #{sim_info_forward.3} parent=5 // pred_region
      // Predicated region
      $region49: #{sim_info_forward.3} parent=47 // pred_check
        %p333 = pneg %p38
      $region50: #{sim_info_forward.3} parent=47 // pred_check_branch
        %335 = sbr.rel (%p333) target = $region52
      $region51: #{sim_info_forward.3} parent=47 // pred_region
        %s336 = smul.u32 16, %s18
        %p337 = scmp.lt.s32.totalorder %s336, 31
        %s338 = scalar_select %p337, %s336, 31
        %s339 = smul.addr %s338, 4
        %s340 = scalar_lea.vmem %s0, %s339
        %s341 = smul.u32 16, %s18
      $region52: #{sim_info_forward.3} parent=47 // pred_fallthru
        _
      // Predicated region
      $region53: #{sim_info_forward.3} parent=47 // pred_check
        %p342 = pneg %p64
      $region54: #{sim_info_forward.3} parent=47 // pred_check_branch
        %344 = sbr.rel (%p342) target = $region56
      $region55: #{sim_info_forward.3} parent=47 // pred_region
        %s345 = smul.u32 16, %s18
        %p346 = scmp.lt.s32.totalorder %s345, 31
        %s347 = scalar_select %p346, %s345, 31
        %s348 = smul.addr %s347, 2
        %s349 = smul.addr %s348, 4
        %s350 = scalar_lea.vmem %s1, %s349
        %s351 = smul.u32 16, %s18
      $region56: #{sim_info_forward.3} parent=47 // pred_fallthru
        _
    $region48: #{sim_info_forward.3} parent=5 // pred_fallthru
      _
    %p352 = scmp.le.s32.totalorder 1, %s18
    %p353 = scmp.lt.s32.totalorder %s18, 3
    %p354 = pnand %p352, %p353
    %p355 = pneg %p354
    // Predicated region
    $region57: #{sim_info_forward.3} parent=5 // pred_check
      _
    $region58: #{sim_info_forward.3} parent=5 // pred_check_branch
      %357 = sbr.rel (%p354) target = $region60
    $region59: #{sim_info_forward.3} parent=5 // pred_region
      %s358 = ssub.s32 %s18, 1
      %s359 = smul.u32 16, %s23
      %p360 = scmp.lt.s32.totalorder %s359, 31
      %s361 = scalar_select %p360, %s359, 31
      %s362 = smul.addr %s361, 4
      %s363 = scalar_lea.vmem %s0, %s362
      %p364 = pneg %p44
      %p365 = pneg %p41
      %s366 = smul.u32 16, %s23
      %p367 = scmp.lt.s32.totalorder %s366, 31
      %s368 = scalar_select %p367, %s366, 31
      %s369 = smul.addr %s368, 2
      %s370 = smul.addr %s369, 4
      %s371 = scalar_lea.vmem %s1, %s370
      %p372 = pneg %p70
      %p373 = pneg %p67
      %p374 = pneg %p91
      %p375 = pneg %p88
      %p376 = pneg %p112
      %p377 = pneg %p109
      %p378 = pneg %p133
      %p379 = pneg %p130
      %p380 = pneg %p154
      %p381 = pneg %p151
      %p382 = pneg %p175
      %p383 = pneg %p172
      %p384 = pneg %p196
      %p385 = pneg %p193
      %p386 = pneg %p217
      %p387 = pneg %p214
      %p388 = pneg %p238
      %p389 = pneg %p235
      %p390 = pneg %p264
      %p391 = pneg %p261
      %s392 = smul.u32 16, %s23
      %p393 = scmp.lt.s32.totalorder %s392, 31
      %s394 = scalar_select %p393, %s392, 31
      %s395 = smul.addr %s394, 8
      %s396 = scalar_lea.vmem %s10, %s395
      %p397 = pneg %p290
      %p398 = pneg %p287
      %s399 = smul.u32 16, %s23
      %p400 = scmp.lt.s32.totalorder %s399, 31
      %s401 = scalar_select %p400, %s399, 31
      %s402 = smul.addr %s401, 8
      %s403 = scalar_lea.vmem %s11, %s402
      %s404 = smul.u32 16, %s23
      %p405 = scmp.lt.s32.totalorder %s404, 31
      %s406 = scalar_select %p405, %s404, 31
      %s407 = smul.addr %s406, 4
      %s408 = scalar_lea.vmem %s0, %s407
      %s409 = smul.u32 16, %s23
      %s410 = smul.u32 16, %s23
      %p411 = scmp.lt.s32.totalorder %s410, 31
      %s412 = scalar_select %p411, %s410, 31
      %s413 = smul.addr %s412, 2
      %s414 = smul.addr %s413, 4
      %s415 = scalar_lea.vmem %s1, %s414
      %s416 = smul.u32 16, %s23
      %s417 = smul.u32 16, %s23
      %p418 = scmp.lt.s32.totalorder %s417, 31
      %s419 = scalar_select %p418, %s417, 31
      %s420 = smul.addr %s419, 8
      %s421 = scalar_lea.vmem %s10, %s420
      %s422 = smul.u32 16, %s23
      %s423 = smul.u32 16, %s23
      %p424 = scmp.lt.s32.totalorder %s423, 31
      %s425 = scalar_select %p424, %s423, 31
      %s426 = smul.addr %s425, 8
      %s427 = scalar_lea.vmem %s11, %s426
      %s428 = smul.u32 16, %s23
      %v429 = vld [vmem:[%s408] sm:$0xf]
      %v430 = vld [vmem:[%s408 + $0x4] sm:$0xf]
      %v431 = vld [vmem:[%s408 + $0x8] sm:$0xf]
      %v432 = vld [vmem:[%s408 + $0xc] sm:$0xf]
      %v433 = vld [vmem:[%s408 + $0x10] sm:$0xf]
      %v434 = vld [vmem:[%s408 + $0x14] sm:$0xf]
      %v435 = vld [vmem:[%s408 + $0x18] sm:$0xf]
      %v436 = vld [vmem:[%s408 + $0x1c] sm:$0xf]
      %v437 = vld [vmem:[%s408 + $0x20] sm:$0xf]
      %v438 = vld [vmem:[%s408 + $0x24] sm:$0xf]
      %v439 = vld [vmem:[%s408 + $0x28] sm:$0xf]
      %v440 = vld [vmem:[%s408 + $0x2c] sm:$0xf]
      %v441 = vld [vmem:[%s408 + $0x30] sm:$0xf]
      %v442 = vld [vmem:[%s408 + $0x34] sm:$0xf]
      %v443 = vld [vmem:[%s408 + $0x38] sm:$0xf]
      %v444 = vld [vmem:[%s408 + $0x3c] sm:$0xf]
      %v445 = vld [vmem:[%s2] sm:$0xf]
      %v446 = vld [vmem:[%s2 + $0x4] sm:$0xf]
      %v447 = vld [vmem:[%s2 + $0x8] sm:$0xf]
      %v448 = vld [vmem:[%s2 + $0xc] sm:$0xf]
      %v449 = vld [vmem:[%s2 + $0x10] sm:$0xf]
      %v450 = vld [vmem:[%s2 + $0x14] sm:$0xf]
      %v451 = vld [vmem:[%s2 + $0x18] sm:$0xf]
      %v452 = vld [vmem:[%s2 + $0x1c] sm:$0xf]
      %v453 = vld [vmem:[%s2 + $0x20] sm:$0xf]
      %v454 = vld [vmem:[%s2 + $0x24] sm:$0xf]
      %v455 = vld [vmem:[%s2 + $0x28] sm:$0xf]
      %v456 = vld [vmem:[%s2 + $0x2c] sm:$0xf]
      %v457 = vld [vmem:[%s2 + $0x30] sm:$0xf]
      %v458 = vld [vmem:[%s2 + $0x34] sm:$0xf]
      %v459 = vld [vmem:[%s2 + $0x38] sm:$0xf]
      %v460 = vld [vmem:[%s2 + $0x3c] sm:$0xf]
      %v461 = vld [vmem:[%s3] sm:$0x1]
      %v462 = vld [vmem:[%s4] sm:$0xf]
      %v463 = vld [vmem:[%s4 + $0x4] sm:$0xf]
      %v464 = vld [vmem:[%s4 + $0x8] sm:$0xf]
      %v465 = vld [vmem:[%s4 + $0xc] sm:$0xf]
      %v466 = vld [vmem:[%s4 + $0x10] sm:$0xf]
      %v467 = vld [vmem:[%s4 + $0x14] sm:$0xf]
      %v468 = vld [vmem:[%s4 + $0x18] sm:$0xf]
      %v469 = vld [vmem:[%s4 + $0x1c] sm:$0xf]
      %v470 = vld [vmem:[%s4 + $0x20] sm:$0xf]
      %v471 = vld [vmem:[%s4 + $0x24] sm:$0xf]
      %v472 = vld [vmem:[%s4 + $0x28] sm:$0xf]
      %v473 = vld [vmem:[%s4 + $0x2c] sm:$0xf]
      %v474 = vld [vmem:[%s4 + $0x30] sm:$0xf]
      %v475 = vld [vmem:[%s4 + $0x34] sm:$0xf]
      %v476 = vld [vmem:[%s4 + $0x38] sm:$0xf]
      %v477 = vld [vmem:[%s4 + $0x3c] sm:$0xf]
      %v478 = vld [vmem:[%s5] sm:$0x1]
      %v480 = vperm.slane %v461, 0
      %v498 = vunpack.c.l.b16 %v429
      %v499 = vunpack.c.l.b16 %v430
      %v500 = vunpack.c.l.b16 %v431
      %v501 = vunpack.c.l.b16 %v432
      %v502 = vunpack.c.l.b16 %v433
      %v503 = vunpack.c.l.b16 %v434
      %v504 = vunpack.c.l.b16 %v435
      %v505 = vunpack.c.l.b16 %v436
      %v506 = vunpack.c.l.b16 %v437
      %v507 = vunpack.c.l.b16 %v438
      %v508 = vunpack.c.l.b16 %v439
      %v509 = vunpack.c.l.b16 %v440
      %v510 = vunpack.c.l.b16 %v441
      %v511 = vunpack.c.l.b16 %v442
      %v512 = vunpack.c.l.b16 %v443
      %v513 = vunpack.c.l.b16 %v444
      %v514 = vpack.c.b16 %v499, %v498
      %v515 = vpack.c.b16 %v501, %v500
      %v516 = vpack.c.b16 %v503, %v502
      %v517 = vpack.c.b16 %v505, %v504
      %v518 = vpack.c.b16 %v507, %v506
      %v519 = vpack.c.b16 %v509, %v508
      %v520 = vpack.c.b16 %v511, %v510
      %v521 = vpack.c.b16 %v513, %v512
      %v546 = vunpack.c.l.b16 %v445
      %v547 = vunpack.c.l.b16 %v446
      %v548 = vunpack.c.l.b16 %v447
      %v549 = vunpack.c.l.b16 %v448
      %v550 = vunpack.c.l.b16 %v449
      %v551 = vunpack.c.l.b16 %v450
      %v552 = vunpack.c.l.b16 %v451
      %v553 = vunpack.c.l.b16 %v452
      %v554 = vunpack.c.l.b16 %v453
      %v555 = vunpack.c.l.b16 %v454
      %v556 = vunpack.c.l.b16 %v455
      %v557 = vunpack.c.l.b16 %v456
      %v558 = vunpack.c.l.b16 %v457
      %v559 = vunpack.c.l.b16 %v458
      %v560 = vunpack.c.l.b16 %v459
      %v561 = vunpack.c.l.b16 %v460
      %v562 = vpack.c.b16 %v547, %v546
      %v563 = vpack.c.b16 %v549, %v548
      %v564 = vpack.c.b16 %v551, %v550
      %v565 = vpack.c.b16 %v553, %v552
      %v566 = vpack.c.b16 %v555, %v554
      %v567 = vpack.c.b16 %v557, %v556
      %v568 = vpack.c.b16 %v559, %v558
      %v569 = vpack.c.b16 %v561, %v560
      %578 = vmatpush.bf16.msra.mxu0 %v569
      %579 = vmatpush.bf16.msra.mxu0 %v568
      %580 = vmatpush.bf16.msra.mxu0 %v567
      %581 = vmatpush.bf16.msra.mxu0 %v566
      %582 = vmatpush.bf16.msra.mxu0 %v565
      %583 = vmatpush.bf16.msra.mxu0 %v564
      %584 = vmatpush.bf16.msra.mxu0 %v563
      %585 = vmatpush.bf16.msra.mxu0 %v562
      %586 = vmatmul.bf16.gmra.mxu0 %v514
      %v587 = vpop.f32.mrf.mxu0
      %v588 = vadd.f32 %v480, %v587
      %v589 = vpop.f32.mrf.mxu0
      %v590 = vadd.f32 %v480, %v589
      %591 = vmatmul.bf16.gmra.mxu0 %v515
      %v592 = vpop.f32.mrf.mxu0
      %v593 = vadd.f32 %v480, %v592
      %v594 = vpop.f32.mrf.mxu0
      %v595 = vadd.f32 %v480, %v594
      %596 = vmatmul.bf16.gmra.mxu0 %v516
      %v597 = vpop.f32.mrf.mxu0
      %v598 = vadd.f32 %v480, %v597
      %v599 = vpop.f32.mrf.mxu0
      %v600 = vadd.f32 %v480, %v599
      %601 = vmatmul.bf16.gmra.mxu0 %v517
      %v602 = vpop.f32.mrf.mxu0
      %v603 = vadd.f32 %v480, %v602
      %v604 = vpop.f32.mrf.mxu0
      %v605 = vadd.f32 %v480, %v604
      %606 = vmatmul.bf16.gmra.mxu0 %v518
      %v607 = vpop.f32.mrf.mxu0
      %v608 = vadd.f32 %v480, %v607
      %v609 = vpop.f32.mrf.mxu0
      %v610 = vadd.f32 %v480, %v609
      %611 = vmatmul.bf16.gmra.mxu0 %v519
      %v612 = vpop.f32.mrf.mxu0
      %v613 = vadd.f32 %v480, %v612
      %v614 = vpop.f32.mrf.mxu0
      %v615 = vadd.f32 %v480, %v614
      %616 = vmatmul.bf16.gmra.mxu0 %v520
      %v617 = vpop.f32.mrf.mxu0
      %v618 = vadd.f32 %v480, %v617
      %v619 = vpop.f32.mrf.mxu0
      %v620 = vadd.f32 %v480, %v619
      %621 = vmatmul.bf16.gmra.mxu0 %v521
      %v622 = vpop.f32.mrf.mxu0
      %v623 = vadd.f32 %v480, %v622
      %v624 = vpop.f32.mrf.mxu0
      %v625 = vadd.f32 %v480, %v624
      %626 = vdwg.mxu0
      %v627 = vtanh.pop %v588
      %v628 = vtanh.pop %v590
      %v629 = vtanh.pop %v593
      %v630 = vtanh.pop %v595
      %v631 = vtanh.pop %v598
      %v632 = vtanh.pop %v600
      %v633 = vtanh.pop %v603
      %v634 = vtanh.pop %v605
      %v635 = vtanh.pop %v608
      %v636 = vtanh.pop %v610
      %v637 = vtanh.pop %v613
      %v638 = vtanh.pop %v615
      %v639 = vtanh.pop %v618
      %v640 = vtanh.pop %v620
      %v641 = vtanh.pop %v623
      %v642 = vtanh.pop %v625
      %v643 = vpack.c.bf16 %v628, %v627
      %v644 = vpack.c.bf16 %v630, %v629
      %v645 = vpack.c.bf16 %v632, %v631
      %v646 = vpack.c.bf16 %v634, %v633
      %v647 = vpack.c.bf16 %v636, %v635
      %v648 = vpack.c.bf16 %v638, %v637
      %v649 = vpack.c.bf16 %v640, %v639
      %v650 = vpack.c.bf16 %v642, %v641
      %v652 = vperm.slane %v478, 0
      %v670 = vunpack.c.l.b16 %v462
      %v671 = vunpack.c.l.b16 %v463
      %v672 = vunpack.c.l.b16 %v464
      %v673 = vunpack.c.l.b16 %v465
      %v674 = vunpack.c.l.b16 %v466
      %v675 = vunpack.c.l.b16 %v467
      %v676 = vunpack.c.l.b16 %v468
      %v677 = vunpack.c.l.b16 %v469
      %v678 = vunpack.c.l.b16 %v470
      %v679 = vunpack.c.l.b16 %v471
      %v680 = vunpack.c.l.b16 %v472
      %v681 = vunpack.c.l.b16 %v473
      %v682 = vunpack.c.l.b16 %v474
      %v683 = vunpack.c.l.b16 %v475
      %v684 = vunpack.c.l.b16 %v476
      %v685 = vunpack.c.l.b16 %v477
      %v686 = vpack.c.b16 %v671, %v670
      %v687 = vpack.c.b16 %v673, %v672
      %v688 = vpack.c.b16 %v675, %v674
      %v689 = vpack.c.b16 %v677, %v676
      %v690 = vpack.c.b16 %v679, %v678
      %v691 = vpack.c.b16 %v681, %v680
      %v692 = vpack.c.b16 %v683, %v682
      %v693 = vpack.c.b16 %v685, %v684
      %702 = vmatpush.bf16.msra.mxu0 %v693
      %703 = vmatpush.bf16.msra.mxu0 %v692
      %704 = vmatpush.bf16.msra.mxu0 %v691
      %705 = vmatpush.bf16.msra.mxu0 %v690
      %706 = vmatpush.bf16.msra.mxu0 %v689
      %707 = vmatpush.bf16.msra.mxu0 %v688
      %708 = vmatpush.bf16.msra.mxu0 %v687
      %709 = vmatpush.bf16.msra.mxu0 %v686
      %710 = vmatmul.bf16.gmra.mxu0 %v643
      %v711 = vpop.f32.mrf.mxu0
      %v712 = vadd.f32 %v652, %v711
      %v713 = vpop.f32.mrf.mxu0
      %v714 = vadd.f32 %v652, %v713
      %715 = vmatmul.bf16.gmra.mxu0 %v644
      %v716 = vpop.f32.mrf.mxu0
      %v717 = vadd.f32 %v652, %v716
      %v718 = vpop.f32.mrf.mxu0
      %v719 = vadd.f32 %v652, %v718
      %720 = vmatmul.bf16.gmra.mxu0 %v645
      %v721 = vpop.f32.mrf.mxu0
      %v722 = vadd.f32 %v652, %v721
      %v723 = vpop.f32.mrf.mxu0
      %v724 = vadd.f32 %v652, %v723
      %725 = vmatmul.bf16.gmra.mxu0 %v646
      %v726 = vpop.f32.mrf.mxu0
      %v727 = vadd.f32 %v652, %v726
      %v728 = vpop.f32.mrf.mxu0
      %v729 = vadd.f32 %v652, %v728
      %730 = vmatmul.bf16.gmra.mxu0 %v647
      %v731 = vpop.f32.mrf.mxu0
      %v732 = vadd.f32 %v652, %v731
      %v733 = vpop.f32.mrf.mxu0
      %v734 = vadd.f32 %v652, %v733
      %735 = vmatmul.bf16.gmra.mxu0 %v648
      %v736 = vpop.f32.mrf.mxu0
      %v737 = vadd.f32 %v652, %v736
      %v738 = vpop.f32.mrf.mxu0
      %v739 = vadd.f32 %v652, %v738
      %740 = vmatmul.bf16.gmra.mxu0 %v649
      %v741 = vpop.f32.mrf.mxu0
      %v742 = vadd.f32 %v652, %v741
      %v743 = vpop.f32.mrf.mxu0
      %v744 = vadd.f32 %v652, %v743
      %745 = vmatmul.bf16.gmra.mxu0 %v650
      %v746 = vpop.f32.mrf.mxu0
      %v747 = vadd.f32 %v652, %v746
      %v748 = vpop.f32.mrf.mxu0
      %v749 = vadd.f32 %v652, %v748
      %750 = vdwg.mxu0
      %751 = vst [vmem:[%s421] sm:$0xff] %v712
      %752 = vst [vmem:[%s421 + $0x8] sm:$0xff] %v714
      %753 = vst [vmem:[%s421 + $0x10] sm:$0xff] %v717
      %754 = vst [vmem:[%s421 + $0x18] sm:$0xff] %v719
      %755 = vst [vmem:[%s421 + $0x20] sm:$0xff] %v722
      %756 = vst [vmem:[%s421 + $0x28] sm:$0xff] %v724
      %757 = vst [vmem:[%s421 + $0x30] sm:$0xff] %v727
      %758 = vst [vmem:[%s421 + $0x38] sm:$0xff] %v729
      %759 = vst [vmem:[%s421 + $0x40] sm:$0xff] %v732
      %760 = vst [vmem:[%s421 + $0x48] sm:$0xff] %v734
      %761 = vst [vmem:[%s421 + $0x50] sm:$0xff] %v737
      %762 = vst [vmem:[%s421 + $0x58] sm:$0xff] %v739
      %763 = vst [vmem:[%s421 + $0x60] sm:$0xff] %v742
      %764 = vst [vmem:[%s421 + $0x68] sm:$0xff] %v744
      %765 = vst [vmem:[%s421 + $0x70] sm:$0xff] %v747
      %766 = vst [vmem:[%s421 + $0x78] sm:$0xff] %v749
      %v767 = vld [vmem:[%s415] sm:$0xff]
      %v768 = vld [vmem:[%s415 + $0x8] sm:$0xff]
      %v769 = vld [vmem:[%s415 + $0x10] sm:$0xff]
      %v770 = vld [vmem:[%s415 + $0x18] sm:$0xff]
      %v771 = vld [vmem:[%s415 + $0x20] sm:$0xff]
      %v772 = vld [vmem:[%s415 + $0x28] sm:$0xff]
      %v773 = vld [vmem:[%s415 + $0x30] sm:$0xff]
      %v774 = vld [vmem:[%s415 + $0x38] sm:$0xff]
      %v775 = vld [vmem:[%s415 + $0x40] sm:$0xff]
      %v776 = vld [vmem:[%s415 + $0x48] sm:$0xff]
      %v777 = vld [vmem:[%s415 + $0x50] sm:$0xff]
      %v778 = vld [vmem:[%s415 + $0x58] sm:$0xff]
      %v779 = vld [vmem:[%s415 + $0x60] sm:$0xff]
      %v780 = vld [vmem:[%s415 + $0x68] sm:$0xff]
      %v781 = vld [vmem:[%s415 + $0x70] sm:$0xff]
      %v782 = vld [vmem:[%s415 + $0x78] sm:$0xff]
      %v783 = vld [vmem:[%s6] sm:$0xf]
      %v784 = vld [vmem:[%s6 + $0x4] sm:$0xf]
      %v785 = vld [vmem:[%s6 + $0x8] sm:$0xf]
      %v786 = vld [vmem:[%s6 + $0xc] sm:$0xf]
      %v787 = vld [vmem:[%s6 + $0x10] sm:$0xf]
      %v788 = vld [vmem:[%s6 + $0x14] sm:$0xf]
      %v789 = vld [vmem:[%s6 + $0x18] sm:$0xf]
      %v790 = vld [vmem:[%s6 + $0x1c] sm:$0xf]
      %v791 = vld [vmem:[%s6 + $0x20] sm:$0xf]
      %v792 = vld [vmem:[%s6 + $0x24] sm:$0xf]
      %v793 = vld [vmem:[%s6 + $0x28] sm:$0xf]
      %v794 = vld [vmem:[%s6 + $0x2c] sm:$0xf]
      %v795 = vld [vmem:[%s6 + $0x30] sm:$0xf]
      %v796 = vld [vmem:[%s6 + $0x34] sm:$0xf]
      %v797 = vld [vmem:[%s6 + $0x38] sm:$0xf]
      %v798 = vld [vmem:[%s6 + $0x3c] sm:$0xf]
      %v799 = vld [vmem:[%s6 + $0x40] sm:$0xf]
      %v800 = vld [vmem:[%s6 + $0x44] sm:$0xf]
      %v801 = vld [vmem:[%s6 + $0x48] sm:$0xf]
      %v802 = vld [vmem:[%s6 + $0x4c] sm:$0xf]
      %v803 = vld [vmem:[%s6 + $0x50] sm:$0xf]
      %v804 = vld [vmem:[%s6 + $0x54] sm:$0xf]
      %v805 = vld [vmem:[%s6 + $0x58] sm:$0xf]
      %v806 = vld [vmem:[%s6 + $0x5c] sm:$0xf]
      %v807 = vld [vmem:[%s6 + $0x60] sm:$0xf]
      %v808 = vld [vmem:[%s6 + $0x64] sm:$0xf]
      %v809 = vld [vmem:[%s6 + $0x68] sm:$0xf]
      %v810 = vld [vmem:[%s6 + $0x6c] sm:$0xf]
      %v811 = vld [vmem:[%s6 + $0x70] sm:$0xf]
      %v812 = vld [vmem:[%s6 + $0x74] sm:$0xf]
      %v813 = vld [vmem:[%s6 + $0x78] sm:$0xf]
      %v814 = vld [vmem:[%s6 + $0x7c] sm:$0xf]
      %v815 = vld [vmem:[%s7] sm:$0x1]
      %v816 = vld [vmem:[%s8] sm:$0xf]
      %v817 = vld [vmem:[%s8 + $0x4] sm:$0xf]
      %v818 = vld [vmem:[%s8 + $0x8] sm:$0xf]
      %v819 = vld [vmem:[%s8 + $0xc] sm:$0xf]
      %v820 = vld [vmem:[%s8 + $0x10] sm:$0xf]
      %v821 = vld [vmem:[%s8 + $0x14] sm:$0xf]
      %v822 = vld [vmem:[%s8 + $0x18] sm:$0xf]
      %v823 = vld [vmem:[%s8 + $0x1c] sm:$0xf]
      %v824 = vld [vmem:[%s8 + $0x20] sm:$0xf]
      %v825 = vld [vmem:[%s8 + $0x24] sm:$0xf]
      %v826 = vld [vmem:[%s8 + $0x28] sm:$0xf]
      %v827 = vld [vmem:[%s8 + $0x2c] sm:$0xf]
      %v828 = vld [vmem:[%s8 + $0x30] sm:$0xf]
      %v829 = vld [vmem:[%s8 + $0x34] sm:$0xf]
      %v830 = vld [vmem:[%s8 + $0x38] sm:$0xf]
      %v831 = vld [vmem:[%s8 + $0x3c] sm:$0xf]
      %v832 = vld [vmem:[%s9] sm:$0x1]
      %v834 = vperm.slane %v815, 0
      %v852 = vunpack.c.l.b16 %v767
      %v853 = vunpack.c.h.b16 %v767
      %v854 = vunpack.c.l.b16 %v768
      %v855 = vunpack.c.h.b16 %v768
      %v856 = vunpack.c.l.b16 %v769
      %v857 = vunpack.c.h.b16 %v769
      %v858 = vunpack.c.l.b16 %v770
      %v859 = vunpack.c.h.b16 %v770
      %v860 = vunpack.c.l.b16 %v771
      %v861 = vunpack.c.h.b16 %v771
      %v862 = vunpack.c.l.b16 %v772
      %v863 = vunpack.c.h.b16 %v772
      %v864 = vunpack.c.l.b16 %v773
      %v865 = vunpack.c.h.b16 %v773
      %v866 = vunpack.c.l.b16 %v774
      %v867 = vunpack.c.h.b16 %v774
      %v868 = vunpack.c.l.b16 %v775
      %v869 = vunpack.c.h.b16 %v775
      %v870 = vunpack.c.l.b16 %v776
      %v871 = vunpack.c.h.b16 %v776
      %v872 = vunpack.c.l.b16 %v777
      %v873 = vunpack.c.h.b16 %v777
      %v874 = vunpack.c.l.b16 %v778
      %v875 = vunpack.c.h.b16 %v778
      %v876 = vunpack.c.l.b16 %v779
      %v877 = vunpack.c.h.b16 %v779
      %v878 = vunpack.c.l.b16 %v780
      %v879 = vunpack.c.h.b16 %v780
      %v880 = vunpack.c.l.b16 %v781
      %v881 = vunpack.c.h.b16 %v781
      %v882 = vunpack.c.l.b16 %v782
      %v883 = vunpack.c.h.b16 %v782
      %v884 = vpack.c.b16 %v854, %v852
      %v885 = vpack.c.b16 %v855, %v853
      %v886 = vpack.c.b16 %v858, %v856
      %v887 = vpack.c.b16 %v859, %v857
      %v888 = vpack.c.b16 %v862, %v860
      %v889 = vpack.c.b16 %v863, %v861
      %v890 = vpack.c.b16 %v866, %v864
      %v891 = vpack.c.b16 %v867, %v865
      %v892 = vpack.c.b16 %v870, %v868
      %v893 = vpack.c.b16 %v871, %v869
      %v894 = vpack.c.b16 %v874, %v872
      %v895 = vpack.c.b16 %v875, %v873
      %v896 = vpack.c.b16 %v878, %v876
      %v897 = vpack.c.b16 %v879, %v877
      %v898 = vpack.c.b16 %v882, %v880
      %v899 = vpack.c.b16 %v883, %v881
      %v948 = vunpack.c.l.b16 %v783
      %v949 = vunpack.c.l.b16 %v784
      %v950 = vunpack.c.l.b16 %v785
      %v951 = vunpack.c.l.b16 %v786
      %v952 = vunpack.c.l.b16 %v787
      %v953 = vunpack.c.l.b16 %v788
      %v954 = vunpack.c.l.b16 %v789
      %v955 = vunpack.c.l.b16 %v790
      %v956 = vunpack.c.l.b16 %v791
      %v957 = vunpack.c.l.b16 %v792
      %v958 = vunpack.c.l.b16 %v793
      %v959 = vunpack.c.l.b16 %v794
      %v960 = vunpack.c.l.b16 %v795
      %v961 = vunpack.c.l.b16 %v796
      %v962 = vunpack.c.l.b16 %v797
      %v963 = vunpack.c.l.b16 %v798
      %v964 = vunpack.c.l.b16 %v799
      %v965 = vunpack.c.l.b16 %v800
      %v966 = vunpack.c.l.b16 %v801
      %v967 = vunpack.c.l.b16 %v802
      %v968 = vunpack.c.l.b16 %v803
      %v969 = vunpack.c.l.b16 %v804
      %v970 = vunpack.c.l.b16 %v805
      %v971 = vunpack.c.l.b16 %v806
      %v972 = vunpack.c.l.b16 %v807
      %v973 = vunpack.c.l.b16 %v808
      %v974 = vunpack.c.l.b16 %v809
      %v975 = vunpack.c.l.b16 %v810
      %v976 = vunpack.c.l.b16 %v811
      %v977 = vunpack.c.l.b16 %v812
      %v978 = vunpack.c.l.b16 %v813
      %v979 = vunpack.c.l.b16 %v814
      %v980 = vpack.c.b16 %v949, %v948
      %v981 = vpack.c.b16 %v951, %v950
      %v982 = vpack.c.b16 %v953, %v952
      %v983 = vpack.c.b16 %v955, %v954
      %v984 = vpack.c.b16 %v957, %v956
      %v985 = vpack.c.b16 %v959, %v958
      %v986 = vpack.c.b16 %v961, %v960
      %v987 = vpack.c.b16 %v963, %v962
      %v988 = vpack.c.b16 %v965, %v964
      %v989 = vpack.c.b16 %v967, %v966
      %v990 = vpack.c.b16 %v969, %v968
      %v991 = vpack.c.b16 %v971, %v970
      %v992 = vpack.c.b16 %v973, %v972
      %v993 = vpack.c.b16 %v975, %v974
      %v994 = vpack.c.b16 %v977, %v976
      %v995 = vpack.c.b16 %v979, %v978
      %1012 = vmatpush.bf16.msra.mxu0 %v987
      %1013 = vmatpush.bf16.msra.mxu0 %v986
      %1014 = vmatpush.bf16.msra.mxu0 %v985
      %1015 = vmatpush.bf16.msra.mxu0 %v984
      %1016 = vmatpush.bf16.msra.mxu0 %v983
      %1017 = vmatpush.bf16.msra.mxu0 %v982
      %1018 = vmatpush.bf16.msra.mxu0 %v981
      %1019 = vmatpush.bf16.msra.mxu0 %v980
      %1020 = vmatmul.bf16.gmra.mxu0 %v884
      %v1021 = vpop.f32.mrf.mxu0
      %v1022 = vadd.f32 %v834, %v1021
      %v1023 = vpop.f32.mrf.mxu0
      %v1024 = vadd.f32 %v834, %v1023
      %1025 = vmatmul.bf16.gmra.mxu0 %v886
      %v1026 = vpop.f32.mrf.mxu0
      %v1027 = vadd.f32 %v834, %v1026
      %v1028 = vpop.f32.mrf.mxu0
      %v1029 = vadd.f32 %v834, %v1028
      %1030 = vmatmul.bf16.gmra.mxu0 %v888
      %v1031 = vpop.f32.mrf.mxu0
      %v1032 = vadd.f32 %v834, %v1031
      %v1033 = vpop.f32.mrf.mxu0
      %v1034 = vadd.f32 %v834, %v1033
      %1035 = vmatmul.bf16.gmra.mxu0 %v890
      %v1036 = vpop.f32.mrf.mxu0
      %v1037 = vadd.f32 %v834, %v1036
      %v1038 = vpop.f32.mrf.mxu0
      %v1039 = vadd.f32 %v834, %v1038
      %1040 = vmatmul.bf16.gmra.mxu0 %v892
      %v1041 = vpop.f32.mrf.mxu0
      %v1042 = vadd.f32 %v834, %v1041
      %v1043 = vpop.f32.mrf.mxu0
      %v1044 = vadd.f32 %v834, %v1043
      %1045 = vmatmul.bf16.gmra.mxu0 %v894
      %v1046 = vpop.f32.mrf.mxu0
      %v1047 = vadd.f32 %v834, %v1046
      %v1048 = vpop.f32.mrf.mxu0
      %v1049 = vadd.f32 %v834, %v1048
      %1050 = vmatmul.bf16.gmra.mxu0 %v896
      %v1051 = vpop.f32.mrf.mxu0
      %v1052 = vadd.f32 %v834, %v1051
      %v1053 = vpop.f32.mrf.mxu0
      %v1054 = vadd.f32 %v834, %v1053
      %1055 = vmatmul.bf16.gmra.mxu0 %v898
      %v1056 = vpop.f32.mrf.mxu0
      %v1057 = vadd.f32 %v834, %v1056
      %v1058 = vpop.f32.mrf.mxu0
      %v1059 = vadd.f32 %v834, %v1058
      %1060 = vdwg.mxu0
      %1061 = vmatpush.bf16.msra.mxu0 %v995
      %1062 = vmatpush.bf16.msra.mxu0 %v994
      %1063 = vmatpush.bf16.msra.mxu0 %v993
      %1064 = vmatpush.bf16.msra.mxu0 %v992
      %1065 = vmatpush.bf16.msra.mxu0 %v991
      %1066 = vmatpush.bf16.msra.mxu0 %v990
      %1067 = vmatpush.bf16.msra.mxu0 %v989
      %1068 = vmatpush.bf16.msra.mxu0 %v988
      %1069 = vmatmul.bf16.gmra.mxu0 %v885
      %v1070 = vpop.f32.mrf.mxu0
      %v1071 = vadd.f32 %v1022, %v1070
      %v1072 = vpop.f32.mrf.mxu0
      %v1073 = vadd.f32 %v1024, %v1072
      %1074 = vmatmul.bf16.gmra.mxu0 %v887
      %v1075 = vpop.f32.mrf.mxu0
      %v1076 = vadd.f32 %v1027, %v1075
      %v1077 = vpop.f32.mrf.mxu0
      %v1078 = vadd.f32 %v1029, %v1077
      %1079 = vmatmul.bf16.gmra.mxu0 %v889
      %v1080 = vpop.f32.mrf.mxu0
      %v1081 = vadd.f32 %v1032, %v1080
      %v1082 = vpop.f32.mrf.mxu0
      %v1083 = vadd.f32 %v1034, %v1082
      %1084 = vmatmul.bf16.gmra.mxu0 %v891
      %v1085 = vpop.f32.mrf.mxu0
      %v1086 = vadd.f32 %v1037, %v1085
      %v1087 = vpop.f32.mrf.mxu0
      %v1088 = vadd.f32 %v1039, %v1087
      %1089 = vmatmul.bf16.gmra.mxu0 %v893
      %v1090 = vpop.f32.mrf.mxu0
      %v1091 = vadd.f32 %v1042, %v1090
      %v1092 = vpop.f32.mrf.mxu0
      %v1093 = vadd.f32 %v1044, %v1092
      %1094 = vmatmul.bf16.gmra.mxu0 %v895
      %v1095 = vpop.f32.mrf.mxu0
      %v1096 = vadd.f32 %v1047, %v1095
      %v1097 = vpop.f32.mrf.mxu0
      %v1098 = vadd.f32 %v1049, %v1097
      %1099 = vmatmul.bf16.gmra.mxu0 %v897
      %v1100 = vpop.f32.mrf.mxu0
      %v1101 = vadd.f32 %v1052, %v1100
      %v1102 = vpop.f32.mrf.mxu0
      %v1103 = vadd.f32 %v1054, %v1102
      %1104 = vmatmul.bf16.gmra.mxu0 %v899
      %v1105 = vpop.f32.mrf.mxu0
      %v1106 = vadd.f32 %v1057, %v1105
      %v1107 = vpop.f32.mrf.mxu0
      %v1108 = vadd.f32 %v1059, %v1107
      %1109 = vdwg.mxu0
      %v1110 = vtanh.pop %v1071
      %v1111 = vtanh.pop %v1073
      %v1112 = vtanh.pop %v1076
      %v1113 = vtanh.pop %v1078
      %v1114 = vtanh.pop %v1081
      %v1115 = vtanh.pop %v1083
      %v1116 = vtanh.pop %v1086
      %v1117 = vtanh.pop %v1088
      %v1118 = vtanh.pop %v1091
      %v1119 = vtanh.pop %v1093
      %v1120 = vtanh.pop %v1096
      %v1121 = vtanh.pop %v1098
      %v1122 = vtanh.pop %v1101
      %v1123 = vtanh.pop %v1103
      %v1124 = vtanh.pop %v1106
      %v1125 = vtanh.pop %v1108
      %v1126 = vpack.c.bf16 %v1111, %v1110
      %v1127 = vpack.c.bf16 %v1113, %v1112
      %v1128 = vpack.c.bf16 %v1115, %v1114
      %v1129 = vpack.c.bf16 %v1117, %v1116
      %v1130 = vpack.c.bf16 %v1119, %v1118
      %v1131 = vpack.c.bf16 %v1121, %v1120
      %v1132 = vpack.c.bf16 %v1123, %v1122
      %v1133 = vpack.c.bf16 %v1125, %v1124
      %v1135 = vperm.slane %v832, 0
      %v1153 = vunpack.c.l.b16 %v816
      %v1154 = vunpack.c.l.b16 %v817
      %v1155 = vunpack.c.l.b16 %v818
      %v1156 = vunpack.c.l.b16 %v819
      %v1157 = vunpack.c.l.b16 %v820
      %v1158 = vunpack.c.l.b16 %v821
      %v1159 = vunpack.c.l.b16 %v822
      %v1160 = vunpack.c.l.b16 %v823
      %v1161 = vunpack.c.l.b16 %v824
      %v1162 = vunpack.c.l.b16 %v825
      %v1163 = vunpack.c.l.b16 %v826
      %v1164 = vunpack.c.l.b16 %v827
      %v1165 = vunpack.c.l.b16 %v828
      %v1166 = vunpack.c.l.b16 %v829
      %v1167 = vunpack.c.l.b16 %v830
      %v1168 = vunpack.c.l.b16 %v831
      %v1169 = vpack.c.b16 %v1154, %v1153
      %v1170 = vpack.c.b16 %v1156, %v1155
      %v1171 = vpack.c.b16 %v1158, %v1157
      %v1172 = vpack.c.b16 %v1160, %v1159
      %v1173 = vpack.c.b16 %v1162, %v1161
      %v1174 = vpack.c.b16 %v1164, %v1163
      %v1175 = vpack.c.b16 %v1166, %v1165
      %v1176 = vpack.c.b16 %v1168, %v1167
      %1185 = vmatpush.bf16.msra.mxu0 %v1176
      %1186 = vmatpush.bf16.msra.mxu0 %v1175
      %1187 = vmatpush.bf16.msra.mxu0 %v1174
      %1188 = vmatpush.bf16.msra.mxu0 %v1173
      %1189 = vmatpush.bf16.msra.mxu0 %v1172
      %1190 = vmatpush.bf16.msra.mxu0 %v1171
      %1191 = vmatpush.bf16.msra.mxu0 %v1170
      %1192 = vmatpush.bf16.msra.mxu0 %v1169
      %1193 = vmatmul.bf16.gmra.mxu0 %v1126
      %v1194 = vpop.f32.mrf.mxu0
      %v1195 = vadd.f32 %v1135, %v1194
      %v1196 = vpop.f32.mrf.mxu0
      %v1197 = vadd.f32 %v1135, %v1196
      %1198 = vmatmul.bf16.gmra.mxu0 %v1127
      %v1199 = vpop.f32.mrf.mxu0
      %v1200 = vadd.f32 %v1135, %v1199
      %v1201 = vpop.f32.mrf.mxu0
      %v1202 = vadd.f32 %v1135, %v1201
      %1203 = vmatmul.bf16.gmra.mxu0 %v1128
      %v1204 = vpop.f32.mrf.mxu0
      %v1205 = vadd.f32 %v1135, %v1204
      %v1206 = vpop.f32.mrf.mxu0
      %v1207 = vadd.f32 %v1135, %v1206
      %1208 = vmatmul.bf16.gmra.mxu0 %v1129
      %v1209 = vpop.f32.mrf.mxu0
      %v1210 = vadd.f32 %v1135, %v1209
      %v1211 = vpop.f32.mrf.mxu0
      %v1212 = vadd.f32 %v1135, %v1211
      %1213 = vmatmul.bf16.gmra.mxu0 %v1130
      %v1214 = vpop.f32.mrf.mxu0
      %v1215 = vadd.f32 %v1135, %v1214
      %v1216 = vpop.f32.mrf.mxu0
      %v1217 = vadd.f32 %v1135, %v1216
      %1218 = vmatmul.bf16.gmra.mxu0 %v1131
      %v1219 = vpop.f32.mrf.mxu0
      %v1220 = vadd.f32 %v1135, %v1219
      %v1221 = vpop.f32.mrf.mxu0
      %v1222 = vadd.f32 %v1135, %v1221
      %1223 = vmatmul.bf16.gmra.mxu0 %v1132
      %v1224 = vpop.f32.mrf.mxu0
      %v1225 = vadd.f32 %v1135, %v1224
      %v1226 = vpop.f32.mrf.mxu0
      %v1227 = vadd.f32 %v1135, %v1226
      %1228 = vmatmul.bf16.gmra.mxu0 %v1133
      %v1229 = vpop.f32.mrf.mxu0
      %v1230 = vadd.f32 %v1135, %v1229
      %v1231 = vpop.f32.mrf.mxu0
      %v1232 = vadd.f32 %v1135, %v1231
      %1233 = vdwg.mxu0
      %1234 = vst [vmem:[%s427] sm:$0xff] %v1195
      %1235 = vst [vmem:[%s427 + $0x8] sm:$0xff] %v1197
      %1236 = vst [vmem:[%s427 + $0x10] sm:$0xff] %v1200
      %1237 = vst [vmem:[%s427 + $0x18] sm:$0xff] %v1202
      %1238 = vst [vmem:[%s427 + $0x20] sm:$0xff] %v1205
      %1239 = vst [vmem:[%s427 + $0x28] sm:$0xff] %v1207
      %1240 = vst [vmem:[%s427 + $0x30] sm:$0xff] %v1210
      %1241 = vst [vmem:[%s427 + $0x38] sm:$0xff] %v1212
      %1242 = vst [vmem:[%s427 + $0x40] sm:$0xff] %v1215
      %1243 = vst [vmem:[%s427 + $0x48] sm:$0xff] %v1217
      %1244 = vst [vmem:[%s427 + $0x50] sm:$0xff] %v1220
      %1245 = vst [vmem:[%s427 + $0x58] sm:$0xff] %v1222
      %1246 = vst [vmem:[%s427 + $0x60] sm:$0xff] %v1225
      %1247 = vst [vmem:[%s427 + $0x68] sm:$0xff] %v1227
      %1248 = vst [vmem:[%s427 + $0x70] sm:$0xff] %v1230
      %1249 = vst [vmem:[%s427 + $0x78] sm:$0xff] %v1232
      %s1250 = smul.u32 16, %s23
      %p1251 = scmp.lt.s32.totalorder %s1250, 31
      %s1252 = scalar_select %p1251, %s1250, 31
      %s1253 = smul.addr %s1252, 8
      %s1254 = scalar_lea.vmem %s10, %s1253
      %s1255 = smul.u32 16, %s23
      %p1256 = scmp.lt.s32.totalorder %s1255, 31
      %s1257 = scalar_select %p1256, %s1255, 31
      %s1258 = smul.addr %s1257, 8
      %s1259 = scalar_lea.vmem %s11, %s1258
      // Predicated region
      $region61: #{sim_info_forward.3} parent=59 // pred_check
        %p1260 = pneg %p261
      $region62: #{sim_info_forward.3} parent=59 // pred_check_branch
        %1262 = sbr.rel (%p1260) target = $region64
      $region63: #{sim_info_forward.3} parent=59 // pred_region
        %s1263 = smul.u32 16, %s23
      $region64: #{sim_info_forward.3} parent=59 // pred_fallthru
        _
      // Predicated region
      $region65: #{sim_info_forward.3} parent=59 // pred_check
        %p1264 = pneg %p287
      $region66: #{sim_info_forward.3} parent=59 // pred_check_branch
        %1266 = sbr.rel (%p1264) target = $region68
      $region67: #{sim_info_forward.3} parent=59 // pred_region
        %s1267 = smul.u32 16, %s23
      $region68: #{sim_info_forward.3} parent=59 // pred_fallthru
        _
    $region60: #{sim_info_forward.3} parent=5 // pred_fallthru
      _
    %p1268 = scmp.le.s32.totalorder 2, %s18
    // Predicated region
    $region69: #{sim_info_forward.3} parent=5 // pred_check
      %p1269 = pneg %p1268
    $region70: #{sim_info_forward.3} parent=5 // pred_check_branch
      %1271 = sbr.rel (%p1269) target = $region72
    $region71: #{sim_info_forward.3} parent=5 // pred_region
      %s1272 = ssub.s32 %s18, 2
      // Predicated region
      $region73: #{sim_info_forward.3} parent=71 // pred_check
        %p1273 = pneg %p267
      $region74: #{sim_info_forward.3} parent=71 // pred_check_branch
        %1275 = sbr.rel (%p1273) target = $region76
      $region75: #{sim_info_forward.3} parent=71 // pred_region
        %s1276 = smul.u32 16, %s24
        %p1277 = scmp.lt.s32.totalorder %s1276, 31
        %s1278 = scalar_select %p1277, %s1276, 31
        %s1279 = smul.addr %s1278, 8
        %s1280 = scalar_lea.vmem %s10, %s1279
      $region76: #{sim_info_forward.3} parent=71 // pred_fallthru
        _
      // Predicated region
      $region77: #{sim_info_forward.3} parent=71 // pred_check
        %p1281 = pneg %p293
      $region78: #{sim_info_forward.3} parent=71 // pred_check_branch
        %1283 = sbr.rel (%p1281) target = $region80
      $region79: #{sim_info_forward.3} parent=71 // pred_region
        %s1284 = smul.u32 16, %s24
        %p1285 = scmp.lt.s32.totalorder %s1284, 31
        %s1286 = scalar_select %p1285, %s1284, 31
        %s1287 = smul.addr %s1286, 8
        %s1288 = scalar_lea.vmem %s11, %s1287
      $region80: #{sim_info_forward.3} parent=71 // pred_fallthru
        _
    $region72: #{sim_info_forward.3} parent=5 // pred_fallthru
      _
  $region6: #{sim_info_forward.3} parent=0 // loop_footer
    %s22 = sadd.s32 1, %s18
  $region7: #{sim_info_forward.3} parent=0 // loop_footer_branch
    %17 = sbr.rel target = $region3
  $region8: #{sim_info_forward.3} parent=0 // loop_exit
    _

// kernel: sim_info_forward.4
$region0: #{sim_info_forward.4}
  #allocation0 [shape = 'u32[]', space=smem, size = 0x4, offset = 0x4, fixed_abs, tag = 'smem constant byte address 0x4 - core index']
  #allocation1 [shape = 'u32[72,128]{1,0:T(1,128)}', space=vmem, size = 0x9000, scoped, tag = 'internal scratch']
  %s0 = inlined_call_operand.vmem [shape: f32[256,128], index: 0, kind: input, shape index: {}]
  %s1 = inlined_call_operand.vmem [shape: f32[256,128], index: 1, kind: input, shape index: {}]
  %s2 = inlined_call_operand.vmem [shape: bf16[256,128], index: 2, kind: input, shape index: {}]
  %s3 = inlined_call_operand.vmem [shape: bf16[256,128], index: 3, kind: input, shape index: {}]
  %s4 = inlined_call_operand.hbm [shape: f32[256,128], index: 4, kind: output, shape index: {0}]
  %s5 = inlined_call_operand.hbm [shape: f32[256,128], index: 5, kind: output, shape index: {1}]
  %s6 = inlined_call_operand.vmem [shape: f32[256,256], index: 6, kind: output, shape index: {2}]
  %s7 = inlined_call_operand.vmem [shape: f32[256,256], index: 7, kind: output, shape index: {3}]
  %s8 = inlined_call_operand.vmem [shape: f32[256,1], index: 8, kind: output, shape index: {4}]
  %s9 = inlined_call_operand.vmem [shape: f32[256,1], index: 9, kind: output, shape index: {5}]
  %10 = xla_tuple %s4, %s5, %s6, %s7, %s8, %s9
  %s11 = sld [smem:[#allocation0]]
  $region89: #{sim_info_forward.4} parent=0
    _
  %s13 = ssub.s32 1, %s11
  %s14 = scalar_select 0, %s13, %s11
  $region1: #{sim_info_forward.4} parent=0
    #allocation2 [shape = 'u8[131072]{0}', space=vmem, size = 0x20000, scoped, tag = 'output window, operand 0']
    #allocation3 [shape = 's32[2]{0}', space=sflag, size = 0x8, scoped, tag = 'scoped memory for sim_info_forward.4']
    #allocation4 [shape = 'u8[131072]{0}', space=vmem, size = 0x20000, scoped, tag = 'output window, operand 1']
    #allocation5 [shape = 's32[2]{0}', space=sflag, size = 0x8, scoped, tag = 'scoped memory for sim_info_forward.4']
    %15 = vsyncpa [#allocation3], 0
    %s16 = scalar_lea.sflag [#allocation3], 1
    %17 = vsyncpa %s16, 0
    %18 = vsyncpa [#allocation5], 0
    %s19 = scalar_lea.sflag [#allocation5], 1
    %20 = vsyncpa %s19, 0
    loop: start=0, step=1, limit=4
    $region2: #{sim_info_forward.4} parent=1 // loop_pre_header
      _
    $region3: #{sim_info_forward.4} parent=1 // loop_header
      %s22 = sphi 0, %s26
      %p23 = scmp.ge.s32.totalorder %s22, 4
      %s32 = sphi 0, %s34
      %s35 = sphi 0, %s32
      %s36 = sphi 0, %s35
      %s52 = sphi 0, %s36
      %s58 = sphi 0, %s60
      %s61 = sphi 0, %s58
      %s62 = sphi 0, %s61
      %s78 = sphi 0, %s62
      %s82 = sphi 0, %s82
      %s84 = sphi 0, %s82
      %s85 = sphi 0, %s84
      %s99 = sphi 0, %s85
      %s103 = sphi 0, %s103
      %s105 = sphi 0, %s103
      %s106 = sphi 0, %s105
      %s120 = sphi 0, %s106
      %s126 = sphi 0, %s128
      %s129 = sphi 0, %s126
      %s130 = sphi 0, %s129
      %s146 = sphi 0, %s130
      %s152 = sphi 0, %s154
      %s155 = sphi 0, %s152
      %s156 = sphi 0, %s155
      %s172 = sphi 0, %s156
      %s178 = sphi 0, %s180
      %s181 = sphi 0, %s178
      %s182 = sphi 0, %s181
      %s198 = sphi 0, %s182
      %s204 = sphi 0, %s206
      %s207 = sphi 0, %s204
      %s208 = sphi 0, %s207
      %s224 = sphi 0, %s208
      %s230 = sphi 0, %s232
      %s233 = sphi 0, %s230
      %s234 = sphi 0, %s233
      %s250 = sphi 0, %s234
      %s256 = sphi 0, %s258
      %s259 = sphi 0, %s256
      %s260 = sphi 0, %s259
      %s276 = sphi 0, %s260
    $region4: #{sim_info_forward.4} parent=1 // loop_header_branch
      %25 = sbr.rel (%p23) target = $region8
    $region5: #{sim_info_forward.4} parent=1 // loop_body
      %s27 = ssub.s32 %s22, 1
      %s28 = ssub.s32 %s22, 2
      %s29 = sadd.s32 %s22, 1
      %s30 = ssub.s32 %s22, %s29
      %p31 = scmp.eq.s32.totalorder %s30, 0
      %s33 = sadd.s32 %s32, 1
      %s34 = scalar_select %p31, %s32, %s33
      %p37 = pneg %p31
      %p38 = scmp.eq.s32.totalorder %s22, 1
      %p39 = por %p37, %p38
      %p40 = scmp.ne.s32.totalorder %s32, %s35
      %p41 = scmp.eq.s32.totalorder %s22, 0
      %p42 = por %p40, %p41
      %p43 = scmp.ne.s32.totalorder %s32, %s35
      %p44 = scmp.eq.s32.totalorder %s27, 1
      %p45 = por %p43, %p44
      %p46 = scmp.ne.s32.totalorder %s35, %s36
      %p47 = scmp.eq.s32.totalorder %s27, 0
      %p48 = por %p46, %p47
      %p49 = scmp.ne.s32.totalorder %s35, %s36
      %p50 = scmp.eq.s32.totalorder %s28, 1
      %p51 = por %p49, %p50
      %p53 = scmp.ne.s32.totalorder %s36, %s52
      %p54 = scmp.eq.s32.totalorder %s28, 0
      %p55 = por %p53, %p54
      %s56 = ssub.s32 %s22, %s29
      %p57 = scmp.eq.s32.totalorder %s56, 0
      %s59 = sadd.s32 %s58, 1
      %s60 = scalar_select %p57, %s58, %s59
      %p63 = pneg %p57
      %p64 = scmp.eq.s32.totalorder %s22, 1
      %p65 = por %p63, %p64
      %p66 = scmp.ne.s32.totalorder %s58, %s61
      %p67 = scmp.eq.s32.totalorder %s22, 0
      %p68 = por %p66, %p67
      %p69 = scmp.ne.s32.totalorder %s58, %s61
      %p70 = scmp.eq.s32.totalorder %s27, 1
      %p71 = por %p69, %p70
      %p72 = scmp.ne.s32.totalorder %s61, %s62
      %p73 = scmp.eq.s32.totalorder %s27, 0
      %p74 = por %p72, %p73
      %p75 = scmp.ne.s32.totalorder %s61, %s62
      %p76 = scmp.eq.s32.totalorder %s28, 1
      %p77 = por %p75, %p76
      %p79 = scmp.ne.s32.totalorder %s62, %s78
      %p80 = scmp.eq.s32.totalorder %s28, 0
      %p81 = por %p79, %p80
      %s83 = sadd.s32 %s82, 1
      %p86 = scmp.eq.s32.totalorder %s22, 1
      %p87 = scmp.ne.s32.totalorder %s82, %s84
      %p88 = scmp.eq.s32.totalorder %s22, 0
      %p89 = por %p87, %p88
      %p90 = scmp.ne.s32.totalorder %s82, %s84
      %p91 = scmp.eq.s32.totalorder %s27, 1
      %p92 = por %p90, %p91
      %p93 = scmp.ne.s32.totalorder %s84, %s85
      %p94 = scmp.eq.s32.totalorder %s27, 0
      %p95 = por %p93, %p94
      %p96 = scmp.ne.s32.totalorder %s84, %s85
      %p97 = scmp.eq.s32.totalorder %s28, 1
      %p98 = por %p96, %p97
      %p100 = scmp.ne.s32.totalorder %s85, %s99
      %p101 = scmp.eq.s32.totalorder %s28, 0
      %p102 = por %p100, %p101
      %s104 = sadd.s32 %s103, 1
      %p107 = scmp.eq.s32.totalorder %s22, 1
      %p108 = scmp.ne.s32.totalorder %s103, %s105
      %p109 = scmp.eq.s32.totalorder %s22, 0
      %p110 = por %p108, %p109
      %p111 = scmp.ne.s32.totalorder %s103, %s105
      %p112 = scmp.eq.s32.totalorder %s27, 1
      %p113 = por %p111, %p112
      %p114 = scmp.ne.s32.totalorder %s105, %s106
      %p115 = scmp.eq.s32.totalorder %s27, 0
      %p116 = por %p114, %p115
      %p117 = scmp.ne.s32.totalorder %s105, %s106
      %p118 = scmp.eq.s32.totalorder %s28, 1
      %p119 = por %p117, %p118
      %p121 = scmp.ne.s32.totalorder %s106, %s120
      %p122 = scmp.eq.s32.totalorder %s28, 0
      %p123 = por %p121, %p122
      %s124 = ssub.s32 %s22, %s29
      %p125 = scmp.eq.s32.totalorder %s124, 0
      %s127 = sadd.s32 %s126, 1
      %s128 = scalar_select %p125, %s126, %s127
      %p131 = pneg %p125
      %p132 = scmp.eq.s32.totalorder %s22, 1
      %p133 = por %p131, %p132
      %p134 = scmp.ne.s32.totalorder %s126, %s129
      %p135 = scmp.eq.s32.totalorder %s22, 0
      %p136 = por %p134, %p135
      %p137 = scmp.ne.s32.totalorder %s126, %s129
      %p138 = scmp.eq.s32.totalorder %s27, 1
      %p139 = por %p137, %p138
      %p140 = scmp.ne.s32.totalorder %s129, %s130
      %p141 = scmp.eq.s32.totalorder %s27, 0
      %p142 = por %p140, %p141
      %p143 = scmp.ne.s32.totalorder %s129, %s130
      %p144 = scmp.eq.s32.totalorder %s28, 1
      %p145 = por %p143, %p144
      %p147 = scmp.ne.s32.totalorder %s130, %s146
      %p148 = scmp.eq.s32.totalorder %s28, 0
      %p149 = por %p147, %p148
      %s150 = ssub.s32 %s22, %s29
      %p151 = scmp.eq.s32.totalorder %s150, 0
      %s153 = sadd.s32 %s152, 1
      %s154 = scalar_select %p151, %s152, %s153
      %p157 = pneg %p151
      %p158 = scmp.eq.s32.totalorder %s22, 1
      %p159 = por %p157, %p158
      %p160 = scmp.ne.s32.totalorder %s152, %s155
      %p161 = scmp.eq.s32.totalorder %s22, 0
      %p162 = por %p160, %p161
      %p163 = scmp.ne.s32.totalorder %s152, %s155
      %p164 = scmp.eq.s32.totalorder %s27, 1
      %p165 = por %p163, %p164
      %p166 = scmp.ne.s32.totalorder %s155, %s156
      %p167 = scmp.eq.s32.totalorder %s27, 0
      %p168 = por %p166, %p167
      %p169 = scmp.ne.s32.totalorder %s155, %s156
      %p170 = scmp.eq.s32.totalorder %s28, 1
      %p171 = por %p169, %p170
      %p173 = scmp.ne.s32.totalorder %s156, %s172
      %p174 = scmp.eq.s32.totalorder %s28, 0
      %p175 = por %p173, %p174
      %s176 = ssub.s32 %s22, %s29
      %p177 = scmp.eq.s32.totalorder %s176, 0
      %s179 = sadd.s32 %s178, 1
      %s180 = scalar_select %p177, %s178, %s179
      %p183 = pneg %p177
      %p184 = scmp.eq.s32.totalorder %s22, 1
      %p185 = por %p183, %p184
      %p186 = scmp.ne.s32.totalorder %s178, %s181
      %p187 = scmp.eq.s32.totalorder %s22, 0
      %p188 = por %p186, %p187
      %p189 = scmp.ne.s32.totalorder %s178, %s181
      %p190 = scmp.eq.s32.totalorder %s27, 1
      %p191 = por %p189, %p190
      %p192 = scmp.ne.s32.totalorder %s181, %s182
      %p193 = scmp.eq.s32.totalorder %s27, 0
      %p194 = por %p192, %p193
      %p195 = scmp.ne.s32.totalorder %s181, %s182
      %p196 = scmp.eq.s32.totalorder %s28, 1
      %p197 = por %p195, %p196
      %p199 = scmp.ne.s32.totalorder %s182, %s198
      %p200 = scmp.eq.s32.totalorder %s28, 0
      %p201 = por %p199, %p200
      %s202 = ssub.s32 %s22, %s29
      %p203 = scmp.eq.s32.totalorder %s202, 0
      %s205 = sadd.s32 %s204, 1
      %s206 = scalar_select %p203, %s204, %s205
      %p209 = pneg %p203
      %p210 = scmp.eq.s32.totalorder %s22, 1
      %p211 = por %p209, %p210
      %p212 = scmp.ne.s32.totalorder %s204, %s207
      %p213 = scmp.eq.s32.totalorder %s22, 0
      %p214 = por %p212, %p213
      %p215 = scmp.ne.s32.totalorder %s204, %s207
      %p216 = scmp.eq.s32.totalorder %s27, 1
      %p217 = por %p215, %p216
      %p218 = scmp.ne.s32.totalorder %s207, %s208
      %p219 = scmp.eq.s32.totalorder %s27, 0
      %p220 = por %p218, %p219
      %p221 = scmp.ne.s32.totalorder %s207, %s208
      %p222 = scmp.eq.s32.totalorder %s28, 1
      %p223 = por %p221, %p222
      %p225 = scmp.ne.s32.totalorder %s208, %s224
      %p226 = scmp.eq.s32.totalorder %s28, 0
      %p227 = por %p225, %p226
      %s228 = ssub.s32 %s22, %s29
      %p229 = scmp.eq.s32.totalorder %s228, 0
      %s231 = sadd.s32 %s230, 1
      %s232 = scalar_select %p229, %s230, %s231
      %p235 = pneg %p229
      %p236 = scmp.eq.s32.totalorder %s22, 1
      %p237 = por %p235, %p236
      %p238 = scmp.ne.s32.totalorder %s230, %s233
      %p239 = scmp.eq.s32.totalorder %s22, 0
      %p240 = por %p238, %p239
      %p241 = scmp.ne.s32.totalorder %s230, %s233
      %p242 = scmp.eq.s32.totalorder %s27, 1
      %p243 = por %p241, %p242
      %p244 = scmp.ne.s32.totalorder %s233, %s234
      %p245 = scmp.eq.s32.totalorder %s27, 0
      %p246 = por %p244, %p245
      %p247 = scmp.ne.s32.totalorder %s233, %s234
      %p248 = scmp.eq.s32.totalorder %s28, 1
      %p249 = por %p247, %p248
      %p251 = scmp.ne.s32.totalorder %s234, %s250
      %p252 = scmp.eq.s32.totalorder %s28, 0
      %p253 = por %p251, %p252
      %s254 = ssub.s32 %s22, %s29
      %p255 = scmp.eq.s32.totalorder %s254, 0
      %s257 = sadd.s32 %s256, 1
      %s258 = scalar_select %p255, %s256, %s257
      %p261 = pneg %p255
      %p262 = scmp.eq.s32.totalorder %s22, 1
      %p263 = por %p261, %p262
      %p264 = scmp.ne.s32.totalorder %s256, %s259
      %p265 = scmp.eq.s32.totalorder %s22, 0
      %p266 = por %p264, %p265
      %p267 = scmp.ne.s32.totalorder %s256, %s259
      %p268 = scmp.eq.s32.totalorder %s27, 1
      %p269 = por %p267, %p268
      %p270 = scmp.ne.s32.totalorder %s259, %s260
      %p271 = scmp.eq.s32.totalorder %s27, 0
      %p272 = por %p270, %p271
      %p273 = scmp.ne.s32.totalorder %s259, %s260
      %p274 = scmp.eq.s32.totalorder %s28, 1
      %p275 = por %p273, %p274
      %p277 = scmp.ne.s32.totalorder %s260, %s276
      %p278 = scmp.eq.s32.totalorder %s28, 0
      %p279 = por %p277, %p278
      %p280 = scmp.le.s32.totalorder 1, %s22
      %p281 = scmp.lt.s32.totalorder %s22, 3
      %p282 = pnand %p280, %p281
      %p283 = pneg %p282
      // Predicated region
      $region9: #{sim_info_forward.4} parent=5 // pred_check
        _
      $region10: #{sim_info_forward.4} parent=5 // pred_check_branch
        %285 = sbr.rel (%p282) target = $region12
      $region11: #{sim_info_forward.4} parent=5 // pred_region
        %s286 = ssub.s32 %s22, 1
        // Predicated region
        $region13: #{sim_info_forward.4} parent=11 // pred_check
          %p287 = pneg %p95
        $region14: #{sim_info_forward.4} parent=11 // pred_check_branch
          %289 = sbr.rel (%p287) target = $region16
        $region15: #{sim_info_forward.4} parent=11 // pred_region
          _
        $region16: #{sim_info_forward.4} parent=11 // pred_fallthru
          _
        // Predicated region
        $region17: #{sim_info_forward.4} parent=11 // pred_check
          %p290 = pneg %p116
        $region18: #{sim_info_forward.4} parent=11 // pred_check_branch
          %292 = sbr.rel (%p290) target = $region20
        $region19: #{sim_info_forward.4} parent=11 // pred_region
          _
        $region20: #{sim_info_forward.4} parent=11 // pred_fallthru
          _
      $region12: #{sim_info_forward.4} parent=5 // pred_fallthru
        _
      %p293 = scmp.lt.s32.totalorder %s22, 2
      // Predicated region
      $region21: #{sim_info_forward.4} parent=5 // pred_check
        %p294 = pneg %p293
      $region22: #{sim_info_forward.4} parent=5 // pred_check_branch
        %296 = sbr.rel (%p294) target = $region24
      $region23: #{sim_info_forward.4} parent=5 // pred_region
        // Predicated region
        $region25: #{sim_info_forward.4} parent=23 // pred_check
          %p297 = pneg %p42
        $region26: #{sim_info_forward.4} parent=23 // pred_check_branch
          %299 = sbr.rel (%p297) target = $region28
        $region27: #{sim_info_forward.4} parent=23 // pred_region
          %s300 = smul.u32 16, %s22
          %p301 = scmp.lt.s32.totalorder %s300, 31
          %s302 = scalar_select %p301, %s300, 31
          %s303 = smul.addr %s302, 8
          %s304 = scalar_lea.vmem %s0, %s303
          %s305 = smul.u32 16, %s22
        $region28: #{sim_info_forward.4} parent=23 // pred_fallthru
          _
        // Predicated region
        $region29: #{sim_info_forward.4} parent=23 // pred_check
          %p306 = pneg %p68
        $region30: #{sim_info_forward.4} parent=23 // pred_check_branch
          %308 = sbr.rel (%p306) target = $region32
        $region31: #{sim_info_forward.4} parent=23 // pred_region
          %s309 = smul.u32 16, %s22
          %p310 = scmp.lt.s32.totalorder %s309, 31
          %s311 = scalar_select %p310, %s309, 31
          %s312 = smul.addr %s311, 8
          %s313 = scalar_lea.vmem %s1, %s312
          %s314 = smul.u32 16, %s22
        $region32: #{sim_info_forward.4} parent=23 // pred_fallthru
          _
      $region24: #{sim_info_forward.4} parent=5 // pred_fallthru
        _
      %p315 = scmp.le.s32.totalorder 1, %s22
      %p316 = scmp.lt.s32.totalorder %s22, 3
      %p317 = pnand %p315, %p316
      %p318 = pneg %p317
      // Predicated region
      $region33: #{sim_info_forward.4} parent=5 // pred_check
        _
      $region34: #{sim_info_forward.4} parent=5 // pred_check_branch
        %320 = sbr.rel (%p317) target = $region36
      $region35: #{sim_info_forward.4} parent=5 // pred_region
        %s321 = ssub.s32 %s22, 1
        %s322 = smul.u32 16, %s27
        %p323 = scmp.lt.s32.totalorder %s322, 31
        %s324 = scalar_select %p323, %s322, 31
        %s325 = smul.addr %s324, 8
        %s326 = scalar_lea.vmem %s0, %s325
        %p327 = pneg %p48
        %p328 = pneg %p45
        %s329 = smul.u32 16, %s27
        %p330 = scmp.lt.s32.totalorder %s329, 31
        %s331 = scalar_select %p330, %s329, 31
        %s332 = smul.addr %s331, 8
        %s333 = scalar_lea.vmem %s1, %s332
        %p334 = pneg %p74
        %p335 = pneg %p71
        %p336 = pneg %p95
        %p337 = pneg %p92
        %p338 = pneg %p116
        %p339 = pneg %p113
        %p340 = pneg %p142
        %p341 = pneg %p139
        %s342 = sand.u32 %s129, 1
        %s343 = scalar_lea.sflag [#allocation3], %s342
        %s344 = sand.u32 %s129, 1
        %s345 = smul.addr %s344, 128
        %s346 = scalar_lea.vmem [#allocation2], %s345
        %p347 = pneg %p168
        %p348 = pneg %p165
        %s349 = sand.u32 %s155, 1
        %s350 = scalar_lea.sflag [#allocation5], %s349
        %s351 = sand.u32 %s155, 1
        %s352 = smul.addr %s351, 128
        %s353 = scalar_lea.vmem [#allocation4], %s352
        %p354 = pneg %p194
        %p355 = pneg %p191
        %s356 = smul.u32 16, %s27
        %p357 = scmp.lt.s32.totalorder %s356, 31
        %s358 = scalar_select %p357, %s356, 31
        %s359 = smul.addr %s358, 2
        %s360 = smul.addr %s359, 8
        %s361 = scalar_lea.vmem %s6, %s360
        %p362 = pneg %p220
        %p363 = pneg %p217
        %s364 = smul.u32 16, %s27
        %p365 = scmp.lt.s32.totalorder %s364, 31
        %s366 = scalar_select %p365, %s364, 31
        %s367 = smul.addr %s366, 2
        %s368 = smul.addr %s367, 8
        %s369 = scalar_lea.vmem %s7, %s368
        %p370 = pneg %p246
        %p371 = pneg %p243
        %s372 = smul.u32 16, %s27
        %p373 = scmp.lt.s32.totalorder %s372, 31
        %s374 = scalar_select %p373, %s372, 31
        %s375 = smul.addr %s374, 8
        %s376 = scalar_lea.vmem %s8, %s375
        %p377 = pneg %p272
        %p378 = pneg %p269
        %s379 = smul.u32 16, %s27
        %p380 = scmp.lt.s32.totalorder %s379, 31
        %s381 = scalar_select %p380, %s379, 31
        %s382 = smul.addr %s381, 8
        %s383 = scalar_lea.vmem %s9, %s382
        %s384 = smul.u32 16, %s27
        %p385 = scmp.lt.s32.totalorder %s384, 31
        %s386 = scalar_select %p385, %s384, 31
        %s387 = smul.addr %s386, 8
        %s388 = scalar_lea.vmem %s0, %s387
        %s389 = smul.u32 16, %s27
        %s390 = smul.u32 16, %s27
        %p391 = scmp.lt.s32.totalorder %s390, 31
        %s392 = scalar_select %p391, %s390, 31
        %s393 = smul.addr %s392, 8
        %s394 = scalar_lea.vmem %s1, %s393
        %s395 = smul.u32 16, %s27
        %s396 = smul.u32 16, %s27
        %s397 = smul.u32 16, %s27
        %s398 = smul.u32 16, %s27
        %p399 = scmp.lt.s32.totalorder %s398, 31
        %s400 = scalar_select %p399, %s398, 31
        %s401 = smul.addr %s400, 2
        %s402 = smul.addr %s401, 8
        %s403 = scalar_lea.vmem %s6, %s402
        %s404 = smul.u32 16, %s27
        %s405 = smul.u32 16, %s27
        %p406 = scmp.lt.s32.totalorder %s405, 31
        %s407 = scalar_select %p406, %s405, 31
        %s408 = smul.addr %s407, 2
        %s409 = smul.addr %s408, 8
        %s410 = scalar_lea.vmem %s7, %s409
        %s411 = smul.u32 16, %s27
        %s412 = smul.u32 16, %s27
        %p413 = scmp.lt.s32.totalorder %s412, 31
        %s414 = scalar_select %p413, %s412, 31
        %s415 = smul.addr %s414, 8
        %s416 = scalar_lea.vmem %s8, %s415
        %s417 = smul.u32 16, %s27
        %s418 = smul.u32 16, %s27
        %p419 = scmp.lt.s32.totalorder %s418, 31
        %s420 = scalar_select %p419, %s418, 31
        %s421 = smul.addr %s420, 8
        %s422 = scalar_lea.vmem %s9, %s421
        %s423 = smul.u32 16, %s27
        %v424 = vld [vmem:[%s388] sm:$0xff]
        %v425 = vld [vmem:[%s388 + $0x8] sm:$0xff]
        %v426 = vld [vmem:[%s388 + $0x10] sm:$0xff]
        %v427 = vld [vmem:[%s388 + $0x18] sm:$0xff]
        %v428 = vld [vmem:[%s388 + $0x20] sm:$0xff]
        %v429 = vld [vmem:[%s388 + $0x28] sm:$0xff]
        %v430 = vld [vmem:[%s388 + $0x30] sm:$0xff]
        %v431 = vld [vmem:[%s388 + $0x38] sm:$0xff]
        %v432 = vld [vmem:[%s388 + $0x40] sm:$0xff]
        %v433 = vld [vmem:[%s388 + $0x48] sm:$0xff]
        %v434 = vld [vmem:[%s388 + $0x50] sm:$0xff]
        %v435 = vld [vmem:[%s388 + $0x58] sm:$0xff]
        %v436 = vld [vmem:[%s388 + $0x60] sm:$0xff]
        %v437 = vld [vmem:[%s388 + $0x68] sm:$0xff]
        %v438 = vld [vmem:[%s388 + $0x70] sm:$0xff]
        %v439 = vld [vmem:[%s388 + $0x78] sm:$0xff]
        %v440 = vmul.f32 %v424, %v424
        %v441 = vmul.f32 %v425, %v425
        %v442 = vmul.f32 %v426, %v426
        %v443 = vmul.f32 %v427, %v427
        %v444 = vmul.f32 %v428, %v428
        %v445 = vmul.f32 %v429, %v429
        %v446 = vmul.f32 %v430, %v430
        %v447 = vmul.f32 %v431, %v431
        %v448 = vmul.f32 %v432, %v432
        %v449 = vmul.f32 %v433, %v433
        %v450 = vmul.f32 %v434, %v434
        %v451 = vmul.f32 %v435, %v435
        %v452 = vmul.f32 %v436, %v436
        %v453 = vmul.f32 %v437, %v437
        %v454 = vmul.f32 %v438, %v438
        %v455 = vmul.f32 %v439, %v439
        %456 = vadd.xlane.f32.xlu0 %v440
        %v457 = vpop.xlane.xlu0 %456
        %458 = vadd.xlane.f32.xlu0 %v441
        %v459 = vpop.xlane.xlu0 %458
        %460 = vadd.xlane.f32.xlu0 %v442
        %v461 = vpop.xlane.xlu0 %460
        %462 = vadd.xlane.f32.xlu0 %v443
        %v463 = vpop.xlane.xlu0 %462
        %464 = vadd.xlane.f32.xlu0 %v444
        %v465 = vpop.xlane.xlu0 %464
        %466 = vadd.xlane.f32.xlu0 %v445
        %v467 = vpop.xlane.xlu0 %466
        %468 = vadd.xlane.f32.xlu0 %v446
        %v469 = vpop.xlane.xlu0 %468
        %470 = vadd.xlane.f32.xlu0 %v447
        %v471 = vpop.xlane.xlu0 %470
        %472 = vadd.xlane.f32.xlu0 %v448
        %v473 = vpop.xlane.xlu0 %472
        %474 = vadd.xlane.f32.xlu0 %v449
        %v475 = vpop.xlane.xlu0 %474
        %476 = vadd.xlane.f32.xlu0 %v450
        %v477 = vpop.xlane.xlu0 %476
        %478 = vadd.xlane.f32.xlu0 %v451
        %v479 = vpop.xlane.xlu0 %478
        %480 = vadd.xlane.f32.xlu0 %v452
        %v481 = vpop.xlane.xlu0 %480
        %482 = vadd.xlane.f32.xlu0 %v453
        %v483 = vpop.xlane.xlu0 %482
        %484 = vadd.xlane.f32.xlu0 %v454
        %v485 = vpop.xlane.xlu0 %484
        %486 = vadd.xlane.f32.xlu0 %v455
        %v487 = vpop.xlane.xlu0 %486
        %v488 = vrsqrt.pop %v457
        %v489 = vmul.f32 %v488, %v457
        %v490 = vmul.f32 %v489, %v488
        %v491 = vmul.f32 0.5, %v490
        %v492 = vsub.f32 1.5, %v491
        %v493 = vmul.f32 %v488, %v492
        %v494 = vmul.f32 %v457, %v493
        %vm495 = vcmp.eq.f32.partialorder %v457, inf
        %v496 = vsel %vm495, %v457, %v494
        %vm497 = vcmp.eq.f32.partialorder %v457, 0.0
        %v498 = vand.u32 %v457, 2147483648
        %v499 = vsel %vm497, %v498, %v496
        %v500 = vrsqrt.pop %v459
        %v501 = vmul.f32 %v500, %v459
        %v502 = vmul.f32 %v501, %v500
        %v503 = vmul.f32 0.5, %v502
        %v504 = vsub.f32 1.5, %v503
        %v505 = vmul.f32 %v500, %v504
        %v506 = vmul.f32 %v459, %v505
        %vm507 = vcmp.eq.f32.partialorder %v459, inf
        %v508 = vsel %vm507, %v459, %v506
        %vm509 = vcmp.eq.f32.partialorder %v459, 0.0
        %v510 = vand.u32 %v459, 2147483648
        %v511 = vsel %vm509, %v510, %v508
        %v512 = vrsqrt.pop %v461
        %v513 = vmul.f32 %v512, %v461
        %v514 = vmul.f32 %v513, %v512
        %v515 = vmul.f32 0.5, %v514
        %v516 = vsub.f32 1.5, %v515
        %v517 = vmul.f32 %v512, %v516
        %v518 = vmul.f32 %v461, %v517
        %vm519 = vcmp.eq.f32.partialorder %v461, inf
        %v520 = vsel %vm519, %v461, %v518
        %vm521 = vcmp.eq.f32.partialorder %v461, 0.0
        %v522 = vand.u32 %v461, 2147483648
        %v523 = vsel %vm521, %v522, %v520
        %v524 = vrsqrt.pop %v463
        %v525 = vmul.f32 %v524, %v463
        %v526 = vmul.f32 %v525, %v524
        %v527 = vmul.f32 0.5, %v526
        %v528 = vsub.f32 1.5, %v527
        %v529 = vmul.f32 %v524, %v528
        %v530 = vmul.f32 %v463, %v529
        %vm531 = vcmp.eq.f32.partialorder %v463, inf
        %v532 = vsel %vm531, %v463, %v530
        %vm533 = vcmp.eq.f32.partialorder %v463, 0.0
        %v534 = vand.u32 %v463, 2147483648
        %v535 = vsel %vm533, %v534, %v532
        %v536 = vrsqrt.pop %v465
        %v537 = vmul.f32 %v536, %v465
        %v538 = vmul.f32 %v537, %v536
        %v539 = vmul.f32 0.5, %v538
        %v540 = vsub.f32 1.5, %v539
        %v541 = vmul.f32 %v536, %v540
        %v542 = vmul.f32 %v465, %v541
        %vm543 = vcmp.eq.f32.partialorder %v465, inf
        %v544 = vsel %vm543, %v465, %v542
        %vm545 = vcmp.eq.f32.partialorder %v465, 0.0
        %v546 = vand.u32 %v465, 2147483648
        %v547 = vsel %vm545, %v546, %v544
        %v548 = vrsqrt.pop %v467
        %v549 = vmul.f32 %v548, %v467
        %v550 = vmul.f32 %v549, %v548
        %v551 = vmul.f32 0.5, %v550
        %v552 = vsub.f32 1.5, %v551
        %v553 = vmul.f32 %v548, %v552
        %v554 = vmul.f32 %v467, %v553
        %vm555 = vcmp.eq.f32.partialorder %v467, inf
        %v556 = vsel %vm555, %v467, %v554
        %vm557 = vcmp.eq.f32.partialorder %v467, 0.0
        %v558 = vand.u32 %v467, 2147483648
        %v559 = vsel %vm557, %v558, %v556
        %v560 = vrsqrt.pop %v469
        %v561 = vmul.f32 %v560, %v469
        %v562 = vmul.f32 %v561, %v560
        %v563 = vmul.f32 0.5, %v562
        %v564 = vsub.f32 1.5, %v563
        %v565 = vmul.f32 %v560, %v564
        %v566 = vmul.f32 %v469, %v565
        %vm567 = vcmp.eq.f32.partialorder %v469, inf
        %v568 = vsel %vm567, %v469, %v566
        %vm569 = vcmp.eq.f32.partialorder %v469, 0.0
        %v570 = vand.u32 %v469, 2147483648
        %v571 = vsel %vm569, %v570, %v568
        %v572 = vrsqrt.pop %v471
        %v573 = vmul.f32 %v572, %v471
        %v574 = vmul.f32 %v573, %v572
        %v575 = vmul.f32 0.5, %v574
        %v576 = vsub.f32 1.5, %v575
        %v577 = vmul.f32 %v572, %v576
        %v578 = vmul.f32 %v471, %v577
        %vm579 = vcmp.eq.f32.partialorder %v471, inf
        %v580 = vsel %vm579, %v471, %v578
        %vm581 = vcmp.eq.f32.partialorder %v471, 0.0
        %v582 = vand.u32 %v471, 2147483648
        %v583 = vsel %vm581, %v582, %v580
        %v584 = vrsqrt.pop %v473
        %v585 = vmul.f32 %v584, %v473
        %v586 = vmul.f32 %v585, %v584
        %v587 = vmul.f32 0.5, %v586
        %v588 = vsub.f32 1.5, %v587
        %v589 = vmul.f32 %v584, %v588
        %v590 = vmul.f32 %v473, %v589
        %vm591 = vcmp.eq.f32.partialorder %v473, inf
        %v592 = vsel %vm591, %v473, %v590
        %vm593 = vcmp.eq.f32.partialorder %v473, 0.0
        %v594 = vand.u32 %v473, 2147483648
        %v595 = vsel %vm593, %v594, %v592
        %v596 = vrsqrt.pop %v475
        %v597 = vmul.f32 %v596, %v475
        %v598 = vmul.f32 %v597, %v596
        %v599 = vmul.f32 0.5, %v598
        %v600 = vsub.f32 1.5, %v599
        %v601 = vmul.f32 %v596, %v600
        %v602 = vmul.f32 %v475, %v601
        %vm603 = vcmp.eq.f32.partialorder %v475, inf
        %v604 = vsel %vm603, %v475, %v602
        %vm605 = vcmp.eq.f32.partialorder %v475, 0.0
        %v606 = vand.u32 %v475, 2147483648
        %v607 = vsel %vm605, %v606, %v604
        %v608 = vrsqrt.pop %v477
        %v609 = vmul.f32 %v608, %v477
        %v610 = vmul.f32 %v609, %v608
        %v611 = vmul.f32 0.5, %v610
        %v612 = vsub.f32 1.5, %v611
        %v613 = vmul.f32 %v608, %v612
        %v614 = vmul.f32 %v477, %v613
        %vm615 = vcmp.eq.f32.partialorder %v477, inf
        %v616 = vsel %vm615, %v477, %v614
        %vm617 = vcmp.eq.f32.partialorder %v477, 0.0
        %v618 = vand.u32 %v477, 2147483648
        %v619 = vsel %vm617, %v618, %v616
        %v620 = vrsqrt.pop %v479
        %v621 = vmul.f32 %v620, %v479
        %v622 = vmul.f32 %v621, %v620
        %v623 = vmul.f32 0.5, %v622
        %v624 = vsub.f32 1.5, %v623
        %v625 = vmul.f32 %v620, %v624
        %v626 = vmul.f32 %v479, %v625
        %vm627 = vcmp.eq.f32.partialorder %v479, inf
        %v628 = vsel %vm627, %v479, %v626
        %vm629 = vcmp.eq.f32.partialorder %v479, 0.0
        %v630 = vand.u32 %v479, 2147483648
        %v631 = vsel %vm629, %v630, %v628
        %v632 = vrsqrt.pop %v481
        %v633 = vmul.f32 %v632, %v481
        %v634 = vmul.f32 %v633, %v632
        %v635 = vmul.f32 0.5, %v634
        %v636 = vsub.f32 1.5, %v635
        %v637 = vmul.f32 %v632, %v636
        %v638 = vmul.f32 %v481, %v637
        %vm639 = vcmp.eq.f32.partialorder %v481, inf
        %v640 = vsel %vm639, %v481, %v638
        %vm641 = vcmp.eq.f32.partialorder %v481, 0.0
        %v642 = vand.u32 %v481, 2147483648
        %v643 = vsel %vm641, %v642, %v640
        %v644 = vrsqrt.pop %v483
        %v645 = vmul.f32 %v644, %v483
        %v646 = vmul.f32 %v645, %v644
        %v647 = vmul.f32 0.5, %v646
        %v648 = vsub.f32 1.5, %v647
        %v649 = vmul.f32 %v644, %v648
        %v650 = vmul.f32 %v483, %v649
        %vm651 = vcmp.eq.f32.partialorder %v483, inf
        %v652 = vsel %vm651, %v483, %v650
        %vm653 = vcmp.eq.f32.partialorder %v483, 0.0
        %v654 = vand.u32 %v483, 2147483648
        %v655 = vsel %vm653, %v654, %v652
        %v656 = vrsqrt.pop %v485
        %v657 = vmul.f32 %v656, %v485
        %v658 = vmul.f32 %v657, %v656
        %v659 = vmul.f32 0.5, %v658
        %v660 = vsub.f32 1.5, %v659
        %v661 = vmul.f32 %v656, %v660
        %v662 = vmul.f32 %v485, %v661
        %vm663 = vcmp.eq.f32.partialorder %v485, inf
        %v664 = vsel %vm663, %v485, %v662
        %vm665 = vcmp.eq.f32.partialorder %v485, 0.0
        %v666 = vand.u32 %v485, 2147483648
        %v667 = vsel %vm665, %v666, %v664
        %v668 = vrsqrt.pop %v487
        %v669 = vmul.f32 %v668, %v487
        %v670 = vmul.f32 %v669, %v668
        %v671 = vmul.f32 0.5, %v670
        %v672 = vsub.f32 1.5, %v671
        %v673 = vmul.f32 %v668, %v672
        %v674 = vmul.f32 %v487, %v673
        %vm675 = vcmp.eq.f32.partialorder %v487, inf
        %v676 = vsel %vm675, %v487, %v674
        %vm677 = vcmp.eq.f32.partialorder %v487, 0.0
        %v678 = vand.u32 %v487, 2147483648
        %v679 = vsel %vm677, %v678, %v676
        %v680 = vmax.f32 %v499, 1e-12
        %v681 = vmax.f32 %v511, 1e-12
        %v682 = vmax.f32 %v523, 1e-12
        %v683 = vmax.f32 %v535, 1e-12
        %v684 = vmax.f32 %v547, 1e-12
        %v685 = vmax.f32 %v559, 1e-12
        %v686 = vmax.f32 %v571, 1e-12
        %v687 = vmax.f32 %v583, 1e-12
        %v688 = vmax.f32 %v595, 1e-12
        %v689 = vmax.f32 %v607, 1e-12
        %v690 = vmax.f32 %v619, 1e-12
        %v691 = vmax.f32 %v631, 1e-12
        %v692 = vmax.f32 %v643, 1e-12
        %v693 = vmax.f32 %v655, 1e-12
        %v694 = vmax.f32 %v667, 1e-12
        %v695 = vmax.f32 %v679, 1e-12
        %v696 = vrcp.pop %v680
        %v697 = vmul.f32 %v680, %v696
        %v698 = vsub.f32 1.0, %v697
        %v699 = vmul.f32 %v696, %v698
        %v700 = vadd.f32 %v696, %v699
        %vm701 = vweird.f32 %v680
        %vm702 = vweird.f32 %v696
        %vm703 = vmor %vm701, %vm702
        %v704 = vsel %vm703, %v696, %v700
        %v705 = vand.u32 2147483647, %v680
        %vm706 = vcmp.eq.f32.partialorder %v705, 8.507059e+37
        %v707 = vand.u32 %v680, 2147483648
        %v708 = vor.u32 1.1754944e-38, %v707
        %v709 = vsel %vm706, %v708, %v704
        %v710 = vmul.f32 %v424, %v709
        %v711 = vrcp.pop %v681
        %v712 = vmul.f32 %v681, %v711
        %v713 = vsub.f32 1.0, %v712
        %v714 = vmul.f32 %v711, %v713
        %v715 = vadd.f32 %v711, %v714
        %vm716 = vweird.f32 %v681
        %vm717 = vweird.f32 %v711
        %vm718 = vmor %vm716, %vm717
        %v719 = vsel %vm718, %v711, %v715
        %v720 = vand.u32 2147483647, %v681
        %vm721 = vcmp.eq.f32.partialorder %v720, 8.507059e+37
        %v722 = vand.u32 %v681, 2147483648
        %v723 = vor.u32 1.1754944e-38, %v722
        %v724 = vsel %vm721, %v723, %v719
        %v725 = vmul.f32 %v425, %v724
        %v726 = vrcp.pop %v682
        %v727 = vmul.f32 %v682, %v726
        %v728 = vsub.f32 1.0, %v727
        %v729 = vmul.f32 %v726, %v728
        %v730 = vadd.f32 %v726, %v729
        %vm731 = vweird.f32 %v682
        %vm732 = vweird.f32 %v726
        %vm733 = vmor %vm731, %vm732
        %v734 = vsel %vm733, %v726, %v730
        %v735 = vand.u32 2147483647, %v682
        %vm736 = vcmp.eq.f32.partialorder %v735, 8.507059e+37
        %v737 = vand.u32 %v682, 2147483648
        %v738 = vor.u32 1.1754944e-38, %v737
        %v739 = vsel %vm736, %v738, %v734
        %v740 = vmul.f32 %v426, %v739
        %v741 = vrcp.pop %v683
        %v742 = vmul.f32 %v683, %v741
        %v743 = vsub.f32 1.0, %v742
        %v744 = vmul.f32 %v741, %v743
        %v745 = vadd.f32 %v741, %v744
        %vm746 = vweird.f32 %v683
        %vm747 = vweird.f32 %v741
        %vm748 = vmor %vm746, %vm747
        %v749 = vsel %vm748, %v741, %v745
        %v750 = vand.u32 2147483647, %v683
        %vm751 = vcmp.eq.f32.partialorder %v750, 8.507059e+37
        %v752 = vand.u32 %v683, 2147483648
        %v753 = vor.u32 1.1754944e-38, %v752
        %v754 = vsel %vm751, %v753, %v749
        %v755 = vmul.f32 %v427, %v754
        %v756 = vrcp.pop %v684
        %v757 = vmul.f32 %v684, %v756
        %v758 = vsub.f32 1.0, %v757
        %v759 = vmul.f32 %v756, %v758
        %v760 = vadd.f32 %v756, %v759
        %vm761 = vweird.f32 %v684
        %vm762 = vweird.f32 %v756
        %vm763 = vmor %vm761, %vm762
        %v764 = vsel %vm763, %v756, %v760
        %v765 = vand.u32 2147483647, %v684
        %vm766 = vcmp.eq.f32.partialorder %v765, 8.507059e+37
        %v767 = vand.u32 %v684, 2147483648
        %v768 = vor.u32 1.1754944e-38, %v767
        %v769 = vsel %vm766, %v768, %v764
        %v770 = vmul.f32 %v428, %v769
        %v771 = vrcp.pop %v685
        %v772 = vmul.f32 %v685, %v771
        %v773 = vsub.f32 1.0, %v772
        %v774 = vmul.f32 %v771, %v773
        %v775 = vadd.f32 %v771, %v774
        %vm776 = vweird.f32 %v685
        %vm777 = vweird.f32 %v771
        %vm778 = vmor %vm776, %vm777
        %v779 = vsel %vm778, %v771, %v775
        %v780 = vand.u32 2147483647, %v685
        %vm781 = vcmp.eq.f32.partialorder %v780, 8.507059e+37
        %v782 = vand.u32 %v685, 2147483648
        %v783 = vor.u32 1.1754944e-38, %v782
        %v784 = vsel %vm781, %v783, %v779
        %v785 = vmul.f32 %v429, %v784
        %v786 = vrcp.pop %v686
        %v787 = vmul.f32 %v686, %v786
        %v788 = vsub.f32 1.0, %v787
        %v789 = vmul.f32 %v786, %v788
        %v790 = vadd.f32 %v786, %v789
        %vm791 = vweird.f32 %v686
        %vm792 = vweird.f32 %v786
        %vm793 = vmor %vm791, %vm792
        %v794 = vsel %vm793, %v786, %v790
        %v795 = vand.u32 2147483647, %v686
        %vm796 = vcmp.eq.f32.partialorder %v795, 8.507059e+37
        %v797 = vand.u32 %v686, 2147483648
        %v798 = vor.u32 1.1754944e-38, %v797
        %v799 = vsel %vm796, %v798, %v794
        %v800 = vmul.f32 %v430, %v799
        %v801 = vrcp.pop %v687
        %v802 = vmul.f32 %v687, %v801
        %v803 = vsub.f32 1.0, %v802
        %v804 = vmul.f32 %v801, %v803
        %v805 = vadd.f32 %v801, %v804
        %vm806 = vweird.f32 %v687
        %vm807 = vweird.f32 %v801
        %vm808 = vmor %vm806, %vm807
        %v809 = vsel %vm808, %v801, %v805
        %v810 = vand.u32 2147483647, %v687
        %vm811 = vcmp.eq.f32.partialorder %v810, 8.507059e+37
        %v812 = vand.u32 %v687, 2147483648
        %v813 = vor.u32 1.1754944e-38, %v812
        %v814 = vsel %vm811, %v813, %v809
        %v815 = vmul.f32 %v431, %v814
        %v816 = vrcp.pop %v688
        %v817 = vmul.f32 %v688, %v816
        %v818 = vsub.f32 1.0, %v817
        %v819 = vmul.f32 %v816, %v818
        %v820 = vadd.f32 %v816, %v819
        %vm821 = vweird.f32 %v688
        %vm822 = vweird.f32 %v816
        %vm823 = vmor %vm821, %vm822
        %v824 = vsel %vm823, %v816, %v820
        %v825 = vand.u32 2147483647, %v688
        %vm826 = vcmp.eq.f32.partialorder %v825, 8.507059e+37
        %v827 = vand.u32 %v688, 2147483648
        %v828 = vor.u32 1.1754944e-38, %v827
        %v829 = vsel %vm826, %v828, %v824
        %v830 = vmul.f32 %v432, %v829
        %v831 = vrcp.pop %v689
        %v832 = vmul.f32 %v689, %v831
        %v833 = vsub.f32 1.0, %v832
        %v834 = vmul.f32 %v831, %v833
        %v835 = vadd.f32 %v831, %v834
        %vm836 = vweird.f32 %v689
        %vm837 = vweird.f32 %v831
        %vm838 = vmor %vm836, %vm837
        %v839 = vsel %vm838, %v831, %v835
        %v840 = vand.u32 2147483647, %v689
        %vm841 = vcmp.eq.f32.partialorder %v840, 8.507059e+37
        %v842 = vand.u32 %v689, 2147483648
        %v843 = vor.u32 1.1754944e-38, %v842
        %v844 = vsel %vm841, %v843, %v839
        %v845 = vmul.f32 %v433, %v844
        %v846 = vrcp.pop %v690
        %v847 = vmul.f32 %v690, %v846
        %v848 = vsub.f32 1.0, %v847
        %v849 = vmul.f32 %v846, %v848
        %v850 = vadd.f32 %v846, %v849
        %vm851 = vweird.f32 %v690
        %vm852 = vweird.f32 %v846
        %vm853 = vmor %vm851, %vm852
        %v854 = vsel %vm853, %v846, %v850
        %v855 = vand.u32 2147483647, %v690
        %vm856 = vcmp.eq.f32.partialorder %v855, 8.507059e+37
        %v857 = vand.u32 %v690, 2147483648
        %v858 = vor.u32 1.1754944e-38, %v857
        %v859 = vsel %vm856, %v858, %v854
        %v860 = vmul.f32 %v434, %v859
        %v861 = vrcp.pop %v691
        %v862 = vmul.f32 %v691, %v861
        %v863 = vsub.f32 1.0, %v862
        %v864 = vmul.f32 %v861, %v863
        %v865 = vadd.f32 %v861, %v864
        %vm866 = vweird.f32 %v691
        %vm867 = vweird.f32 %v861
        %vm868 = vmor %vm866, %vm867
        %v869 = vsel %vm868, %v861, %v865
        %v870 = vand.u32 2147483647, %v691
        %vm871 = vcmp.eq.f32.partialorder %v870, 8.507059e+37
        %v872 = vand.u32 %v691, 2147483648
        %v873 = vor.u32 1.1754944e-38, %v872
        %v874 = vsel %vm871, %v873, %v869
        %v875 = vmul.f32 %v435, %v874
        %v876 = vrcp.pop %v692
        %v877 = vmul.f32 %v692, %v876
        %v878 = vsub.f32 1.0, %v877
        %v879 = vmul.f32 %v876, %v878
        %v880 = vadd.f32 %v876, %v879
        %vm881 = vweird.f32 %v692
        %vm882 = vweird.f32 %v876
        %vm883 = vmor %vm881, %vm882
        %v884 = vsel %vm883, %v876, %v880
        %v885 = vand.u32 2147483647, %v692
        %vm886 = vcmp.eq.f32.partialorder %v885, 8.507059e+37
        %v887 = vand.u32 %v692, 2147483648
        %v888 = vor.u32 1.1754944e-38, %v887
        %v889 = vsel %vm886, %v888, %v884
        %v890 = vmul.f32 %v436, %v889
        %v891 = vrcp.pop %v693
        %v892 = vmul.f32 %v693, %v891
        %v893 = vsub.f32 1.0, %v892
        %v894 = vmul.f32 %v891, %v893
        %v895 = vadd.f32 %v891, %v894
        %vm896 = vweird.f32 %v693
        %vm897 = vweird.f32 %v891
        %vm898 = vmor %vm896, %vm897
        %v899 = vsel %vm898, %v891, %v895
        %v900 = vand.u32 2147483647, %v693
        %vm901 = vcmp.eq.f32.partialorder %v900, 8.507059e+37
        %v902 = vand.u32 %v693, 2147483648
        %v903 = vor.u32 1.1754944e-38, %v902
        %v904 = vsel %vm901, %v903, %v899
        %v905 = vmul.f32 %v437, %v904
        %v906 = vrcp.pop %v694
        %v907 = vmul.f32 %v694, %v906
        %v908 = vsub.f32 1.0, %v907
        %v909 = vmul.f32 %v906, %v908
        %v910 = vadd.f32 %v906, %v909
        %vm911 = vweird.f32 %v694
        %vm912 = vweird.f32 %v906
        %vm913 = vmor %vm911, %vm912
        %v914 = vsel %vm913, %v906, %v910
        %v915 = vand.u32 2147483647, %v694
        %vm916 = vcmp.eq.f32.partialorder %v915, 8.507059e+37
        %v917 = vand.u32 %v694, 2147483648
        %v918 = vor.u32 1.1754944e-38, %v917
        %v919 = vsel %vm916, %v918, %v914
        %v920 = vmul.f32 %v438, %v919
        %v921 = vrcp.pop %v695
        %v922 = vmul.f32 %v695, %v921
        %v923 = vsub.f32 1.0, %v922
        %v924 = vmul.f32 %v921, %v923
        %v925 = vadd.f32 %v921, %v924
        %vm926 = vweird.f32 %v695
        %vm927 = vweird.f32 %v921
        %vm928 = vmor %vm926, %vm927
        %v929 = vsel %vm928, %v921, %v925
        %v930 = vand.u32 2147483647, %v695
        %vm931 = vcmp.eq.f32.partialorder %v930, 8.507059e+37
        %v932 = vand.u32 %v695, 2147483648
        %v933 = vor.u32 1.1754944e-38, %v932
        %v934 = vsel %vm931, %v933, %v929
        %v935 = vmul.f32 %v439, %v934
        %936 = vst [vmem:[%s346] sm:$0xff] %v710
        %937 = vst [vmem:[%s346 + $0x8] sm:$0xff] %v725
        %938 = vst [vmem:[%s346 + $0x10] sm:$0xff] %v740
        %939 = vst [vmem:[%s346 + $0x18] sm:$0xff] %v755
        %940 = vst [vmem:[%s346 + $0x20] sm:$0xff] %v770
        %941 = vst [vmem:[%s346 + $0x28] sm:$0xff] %v785
        %942 = vst [vmem:[%s346 + $0x30] sm:$0xff] %v800
        %943 = vst [vmem:[%s346 + $0x38] sm:$0xff] %v815
        %944 = vst [vmem:[%s346 + $0x40] sm:$0xff] %v830
        %945 = vst [vmem:[%s346 + $0x48] sm:$0xff] %v845
        %946 = vst [vmem:[%s346 + $0x50] sm:$0xff] %v860
        %947 = vst [vmem:[%s346 + $0x58] sm:$0xff] %v875
        %948 = vst [vmem:[%s346 + $0x60] sm:$0xff] %v890
        %949 = vst [vmem:[%s346 + $0x68] sm:$0xff] %v905
        %950 = vst [vmem:[%s346 + $0x70] sm:$0xff] %v920
        %951 = vst [vmem:[%s346 + $0x78] sm:$0xff] %v935
        %v952 = vpack.c.bf16 %v425, %v424
        %v953 = vpack.c.bf16 %v427, %v426
        %v954 = vpack.c.bf16 %v429, %v428
        %v955 = vpack.c.bf16 %v431, %v430
        %v956 = vpack.c.bf16 %v433, %v432
        %v957 = vpack.c.bf16 %v435, %v434
        %v958 = vpack.c.bf16 %v437, %v436
        %v959 = vpack.c.bf16 %v439, %v438
        %v960 = vld [vmem:[%s2] sm:$0xf]
        %v961 = vld [vmem:[%s2 + $0x4] sm:$0xf]
        %v962 = vld [vmem:[%s2 + $0x8] sm:$0xf]
        %v963 = vld [vmem:[%s2 + $0xc] sm:$0xf]
        %v964 = vld [vmem:[%s2 + $0x10] sm:$0xf]
        %v965 = vld [vmem:[%s2 + $0x14] sm:$0xf]
        %v966 = vld [vmem:[%s2 + $0x18] sm:$0xf]
        %v967 = vld [vmem:[%s2 + $0x1c] sm:$0xf]
        %v968 = vld [vmem:[%s2 + $0x20] sm:$0xf]
        %v969 = vld [vmem:[%s2 + $0x24] sm:$0xf]
        %v970 = vld [vmem:[%s2 + $0x28] sm:$0xf]
        %v971 = vld [vmem:[%s2 + $0x2c] sm:$0xf]
        %v972 = vld [vmem:[%s2 + $0x30] sm:$0xf]
        %v973 = vld [vmem:[%s2 + $0x34] sm:$0xf]
        %v974 = vld [vmem:[%s2 + $0x38] sm:$0xf]
        %v975 = vld [vmem:[%s2 + $0x3c] sm:$0xf]
        %v976 = vld [vmem:[%s2 + $0x40] sm:$0xf]
        %v977 = vld [vmem:[%s2 + $0x44] sm:$0xf]
        %v978 = vld [vmem:[%s2 + $0x48] sm:$0xf]
        %v979 = vld [vmem:[%s2 + $0x4c] sm:$0xf]
        %v980 = vld [vmem:[%s2 + $0x50] sm:$0xf]
        %v981 = vld [vmem:[%s2 + $0x54] sm:$0xf]
        %v982 = vld [vmem:[%s2 + $0x58] sm:$0xf]
        %v983 = vld [vmem:[%s2 + $0x5c] sm:$0xf]
        %v984 = vld [vmem:[%s2 + $0x60] sm:$0xf]
        %v985 = vld [vmem:[%s2 + $0x64] sm:$0xf]
        %v986 = vld [vmem:[%s2 + $0x68] sm:$0xf]
        %v987 = vld [vmem:[%s2 + $0x6c] sm:$0xf]
        %v988 = vld [vmem:[%s2 + $0x70] sm:$0xf]
        %v989 = vld [vmem:[%s2 + $0x74] sm:$0xf]
        %v990 = vld [vmem:[%s2 + $0x78] sm:$0xf]
        %v991 = vld [vmem:[%s2 + $0x7c] sm:$0xf]
        %v1024 = vunpack.c.l.b16 %v960
        %v1025 = vunpack.c.l.b16 %v961
        %v1026 = vunpack.c.l.b16 %v962
        %v1027 = vunpack.c.l.b16 %v963
        %v1028 = vunpack.c.l.b16 %v964
        %v1029 = vunpack.c.l.b16 %v965
        %v1030 = vunpack.c.l.b16 %v966
        %v1031 = vunpack.c.l.b16 %v967
        %v1032 = vunpack.c.l.b16 %v968
        %v1033 = vunpack.c.l.b16 %v969
        %v1034 = vunpack.c.l.b16 %v970
        %v1035 = vunpack.c.l.b16 %v971
        %v1036 = vunpack.c.l.b16 %v972
        %v1037 = vunpack.c.l.b16 %v973
        %v1038 = vunpack.c.l.b16 %v974
        %v1039 = vunpack.c.l.b16 %v975
        %v1040 = vunpack.c.l.b16 %v976
        %v1041 = vunpack.c.l.b16 %v977
        %v1042 = vunpack.c.l.b16 %v978
        %v1043 = vunpack.c.l.b16 %v979
        %v1044 = vunpack.c.l.b16 %v980
        %v1045 = vunpack.c.l.b16 %v981
        %v1046 = vunpack.c.l.b16 %v982
        %v1047 = vunpack.c.l.b16 %v983
        %v1048 = vunpack.c.l.b16 %v984
        %v1049 = vunpack.c.l.b16 %v985
        %v1050 = vunpack.c.l.b16 %v986
        %v1051 = vunpack.c.l.b16 %v987
        %v1052 = vunpack.c.l.b16 %v988
        %v1053 = vunpack.c.l.b16 %v989
        %v1054 = vunpack.c.l.b16 %v990
        %v1055 = vunpack.c.l.b16 %v991
        %v1056 = vpack.c.b16 %v1025, %v1024
        %v1057 = vpack.c.b16 %v1027, %v1026
        %v1058 = vpack.c.b16 %v1029, %v1028
        %v1059 = vpack.c.b16 %v1031, %v1030
        %v1060 = vpack.c.b16 %v1033, %v1032
        %v1061 = vpack.c.b16 %v1035, %v1034
        %v1062 = vpack.c.b16 %v1037, %v1036
        %v1063 = vpack.c.b16 %v1039, %v1038
        %v1064 = vpack.c.b16 %v1041, %v1040
        %v1065 = vpack.c.b16 %v1043, %v1042
        %v1066 = vpack.c.b16 %v1045, %v1044
        %v1067 = vpack.c.b16 %v1047, %v1046
        %v1068 = vpack.c.b16 %v1049, %v1048
        %v1069 = vpack.c.b16 %v1051, %v1050
        %v1070 = vpack.c.b16 %v1053, %v1052
        %v1071 = vpack.c.b16 %v1055, %v1054
        %1088 = vmatpush.bf16.xpose.msra.mxu0 %v1063
        %1089 = vmatpush.bf16.xpose.msra.mxu0 %v1062
        %1090 = vmatpush.bf16.xpose.msra.mxu0 %v1061
        %1091 = vmatpush.bf16.xpose.msra.mxu0 %v1060
        %1092 = vmatpush.bf16.xpose.msra.mxu0 %v1059
        %1093 = vmatpush.bf16.xpose.msra.mxu0 %v1058
        %1094 = vmatpush.bf16.xpose.msra.mxu0 %v1057
        %1095 = vmatpush.bf16.xpose.msra.mxu0 %v1056
        %1096 = vmatmul.bf16.gmra.mxu0 %v952
        %v1097 = vpop.f32.mrf.mxu0
        %v1098 = vadd.f32 0.0, %v1097
        %v1099 = vpop.f32.mrf.mxu0
        %v1100 = vadd.f32 0.0, %v1099
        %1101 = vmatmul.bf16.gmra.mxu0 %v953
        %v1102 = vpop.f32.mrf.mxu0
        %v1103 = vadd.f32 0.0, %v1102
        %v1104 = vpop.f32.mrf.mxu0
        %v1105 = vadd.f32 0.0, %v1104
        %1106 = vmatmul.bf16.gmra.mxu0 %v954
        %v1107 = vpop.f32.mrf.mxu0
        %v1108 = vadd.f32 0.0, %v1107
        %v1109 = vpop.f32.mrf.mxu0
        %v1110 = vadd.f32 0.0, %v1109
        %1111 = vmatmul.bf16.gmra.mxu0 %v955
        %v1112 = vpop.f32.mrf.mxu0
        %v1113 = vadd.f32 0.0, %v1112
        %v1114 = vpop.f32.mrf.mxu0
        %v1115 = vadd.f32 0.0, %v1114
        %1116 = vmatmul.bf16.gmra.mxu0 %v956
        %v1117 = vpop.f32.mrf.mxu0
        %v1118 = vadd.f32 0.0, %v1117
        %v1119 = vpop.f32.mrf.mxu0
        %v1120 = vadd.f32 0.0, %v1119
        %1121 = vmatmul.bf16.gmra.mxu0 %v957
        %v1122 = vpop.f32.mrf.mxu0
        %v1123 = vadd.f32 0.0, %v1122
        %v1124 = vpop.f32.mrf.mxu0
        %v1125 = vadd.f32 0.0, %v1124
        %1126 = vmatmul.bf16.gmra.mxu0 %v958
        %v1127 = vpop.f32.mrf.mxu0
        %v1128 = vadd.f32 0.0, %v1127
        %v1129 = vpop.f32.mrf.mxu0
        %v1130 = vadd.f32 0.0, %v1129
        %1131 = vmatmul.bf16.gmra.mxu0 %v959
        %v1132 = vpop.f32.mrf.mxu0
        %v1133 = vadd.f32 0.0, %v1132
        %v1134 = vpop.f32.mrf.mxu0
        %v1135 = vadd.f32 0.0, %v1134
        %1136 = vdwg.mxu0
        %1137 = vmatpush.bf16.xpose.msra.mxu0 %v1071
        %1138 = vmatpush.bf16.xpose.msra.mxu0 %v1070
        %1139 = vmatpush.bf16.xpose.msra.mxu0 %v1069
        %1140 = vmatpush.bf16.xpose.msra.mxu0 %v1068
        %1141 = vmatpush.bf16.xpose.msra.mxu0 %v1067
        %1142 = vmatpush.bf16.xpose.msra.mxu0 %v1066
        %1143 = vmatpush.bf16.xpose.msra.mxu0 %v1065
        %1144 = vmatpush.bf16.xpose.msra.mxu0 %v1064
        %1145 = vmatmul.bf16.gmra.mxu0 %v952
        %v1146 = vpop.f32.mrf.mxu0
        %v1147 = vadd.f32 0.0, %v1146
        %v1148 = vpop.f32.mrf.mxu0
        %v1149 = vadd.f32 0.0, %v1148
        %1150 = vmatmul.bf16.gmra.mxu0 %v953
        %v1151 = vpop.f32.mrf.mxu0
        %v1152 = vadd.f32 0.0, %v1151
        %v1153 = vpop.f32.mrf.mxu0
        %v1154 = vadd.f32 0.0, %v1153
        %1155 = vmatmul.bf16.gmra.mxu0 %v954
        %v1156 = vpop.f32.mrf.mxu0
        %v1157 = vadd.f32 0.0, %v1156
        %v1158 = vpop.f32.mrf.mxu0
        %v1159 = vadd.f32 0.0, %v1158
        %1160 = vmatmul.bf16.gmra.mxu0 %v955
        %v1161 = vpop.f32.mrf.mxu0
        %v1162 = vadd.f32 0.0, %v1161
        %v1163 = vpop.f32.mrf.mxu0
        %v1164 = vadd.f32 0.0, %v1163
        %1165 = vmatmul.bf16.gmra.mxu0 %v956
        %v1166 = vpop.f32.mrf.mxu0
        %v1167 = vadd.f32 0.0, %v1166
        %v1168 = vpop.f32.mrf.mxu0
        %v1169 = vadd.f32 0.0, %v1168
        %1170 = vmatmul.bf16.gmra.mxu0 %v957
        %v1171 = vpop.f32.mrf.mxu0
        %v1172 = vadd.f32 0.0, %v1171
        %v1173 = vpop.f32.mrf.mxu0
        %v1174 = vadd.f32 0.0, %v1173
        %1175 = vmatmul.bf16.gmra.mxu0 %v958
        %v1176 = vpop.f32.mrf.mxu0
        %v1177 = vadd.f32 0.0, %v1176
        %v1178 = vpop.f32.mrf.mxu0
        %v1179 = vadd.f32 0.0, %v1178
        %1180 = vmatmul.bf16.gmra.mxu0 %v959
        %v1181 = vpop.f32.mrf.mxu0
        %v1182 = vadd.f32 0.0, %v1181
        %v1183 = vpop.f32.mrf.mxu0
        %v1184 = vadd.f32 0.0, %v1183
        %1185 = vdwg.mxu0
        %1186 = vst [vmem:[%s403] sm:$0xff] %v1098
        %1187 = vst [vmem:[%s403 + $0x8] sm:$0xff] %v1147
        %1188 = vst [vmem:[%s403 + $0x10] sm:$0xff] %v1100
        %1189 = vst [vmem:[%s403 + $0x18] sm:$0xff] %v1149
        %1190 = vst [vmem:[%s403 + $0x20] sm:$0xff] %v1103
        %1191 = vst [vmem:[%s403 + $0x28] sm:$0xff] %v1152
        %1192 = vst [vmem:[%s403 + $0x30] sm:$0xff] %v1105
        %1193 = vst [vmem:[%s403 + $0x38] sm:$0xff] %v1154
        %1194 = vst [vmem:[%s403 + $0x40] sm:$0xff] %v1108
        %1195 = vst [vmem:[%s403 + $0x48] sm:$0xff] %v1157
        %1196 = vst [vmem:[%s403 + $0x50] sm:$0xff] %v1110
        %1197 = vst [vmem:[%s403 + $0x58] sm:$0xff] %v1159
        %1198 = vst [vmem:[%s403 + $0x60] sm:$0xff] %v1113
        %1199 = vst [vmem:[%s403 + $0x68] sm:$0xff] %v1162
        %1200 = vst [vmem:[%s403 + $0x70] sm:$0xff] %v1115
        %1201 = vst [vmem:[%s403 + $0x78] sm:$0xff] %v1164
        %1202 = vst [vmem:[%s403 + $0x80] sm:$0xff] %v1118
        %1203 = vst [vmem:[%s403 + $0x88] sm:$0xff] %v1167
        %1204 = vst [vmem:[%s403 + $0x90] sm:$0xff] %v1120
        %1205 = vst [vmem:[%s403 + $0x98] sm:$0xff] %v1169
        %1206 = vst [vmem:[%s403 + $0xa0] sm:$0xff] %v1123
        %1207 = vst [vmem:[%s403 + $0xa8] sm:$0xff] %v1172
        %1208 = vst [vmem:[%s403 + $0xb0] sm:$0xff] %v1125
        %1209 = vst [vmem:[%s403 + $0xb8] sm:$0xff] %v1174
        %1210 = vst [vmem:[%s403 + $0xc0] sm:$0xff] %v1128
        %1211 = vst [vmem:[%s403 + $0xc8] sm:$0xff] %v1177
        %1212 = vst [vmem:[%s403 + $0xd0] sm:$0xff] %v1130
        %1213 = vst [vmem:[%s403 + $0xd8] sm:$0xff] %v1179
        %1214 = vst [vmem:[%s403 + $0xe0] sm:$0xff] %v1133
        %1215 = vst [vmem:[%s403 + $0xe8] sm:$0xff] %v1182
        %1216 = vst [vmem:[%s403 + $0xf0] sm:$0xff] %v1135
        %1217 = vst [vmem:[%s403 + $0xf8] sm:$0xff] %v1184
        %v1218 = vmul.f32 %v1098, %v1098
        %v1219 = vmul.f32 %v1147, %v1147
        %v1220 = vmul.f32 %v1100, %v1100
        %v1221 = vmul.f32 %v1149, %v1149
        %v1222 = vmul.f32 %v1103, %v1103
        %v1223 = vmul.f32 %v1152, %v1152
        %v1224 = vmul.f32 %v1105, %v1105
        %v1225 = vmul.f32 %v1154, %v1154
        %v1226 = vmul.f32 %v1108, %v1108
        %v1227 = vmul.f32 %v1157, %v1157
        %v1228 = vmul.f32 %v1110, %v1110
        %v1229 = vmul.f32 %v1159, %v1159
        %v1230 = vmul.f32 %v1113, %v1113
        %v1231 = vmul.f32 %v1162, %v1162
        %v1232 = vmul.f32 %v1115, %v1115
        %v1233 = vmul.f32 %v1164, %v1164
        %v1234 = vmul.f32 %v1118, %v1118
        %v1235 = vmul.f32 %v1167, %v1167
        %v1236 = vmul.f32 %v1120, %v1120
        %v1237 = vmul.f32 %v1169, %v1169
        %v1238 = vmul.f32 %v1123, %v1123
        %v1239 = vmul.f32 %v1172, %v1172
        %v1240 = vmul.f32 %v1125, %v1125
        %v1241 = vmul.f32 %v1174, %v1174
        %v1242 = vmul.f32 %v1128, %v1128
        %v1243 = vmul.f32 %v1177, %v1177
        %v1244 = vmul.f32 %v1130, %v1130
        %v1245 = vmul.f32 %v1179, %v1179
        %v1246 = vmul.f32 %v1133, %v1133
        %v1247 = vmul.f32 %v1182, %v1182
        %v1248 = vmul.f32 %v1135, %v1135
        %v1249 = vmul.f32 %v1184, %v1184
        %v1250 = vadd.f32 %v1218, %v1219
        %1251 = vadd.xlane.f32.xlu0 %v1250
        %v1252 = vpop.xlane.xlu0 %1251
        %v1253 = vadd.f32 %v1220, %v1221
        %1254 = vadd.xlane.f32.xlu0 %v1253
        %v1255 = vpop.xlane.xlu0 %1254
        %v1256 = vadd.f32 %v1222, %v1223
        %1257 = vadd.xlane.f32.xlu0 %v1256
        %v1258 = vpop.xlane.xlu0 %1257
        %v1259 = vadd.f32 %v1224, %v1225
        %1260 = vadd.xlane.f32.xlu0 %v1259
        %v1261 = vpop.xlane.xlu0 %1260
        %v1262 = vadd.f32 %v1226, %v1227
        %1263 = vadd.xlane.f32.xlu0 %v1262
        %v1264 = vpop.xlane.xlu0 %1263
        %v1265 = vadd.f32 %v1228, %v1229
        %1266 = vadd.xlane.f32.xlu0 %v1265
        %v1267 = vpop.xlane.xlu0 %1266
        %v1268 = vadd.f32 %v1230, %v1231
        %1269 = vadd.xlane.f32.xlu0 %v1268
        %v1270 = vpop.xlane.xlu0 %1269
        %v1271 = vadd.f32 %v1232, %v1233
        %1272 = vadd.xlane.f32.xlu0 %v1271
        %v1273 = vpop.xlane.xlu0 %1272
        %v1274 = vadd.f32 %v1234, %v1235
        %1275 = vadd.xlane.f32.xlu0 %v1274
        %v1276 = vpop.xlane.xlu0 %1275
        %v1277 = vadd.f32 %v1236, %v1237
        %1278 = vadd.xlane.f32.xlu0 %v1277
        %v1279 = vpop.xlane.xlu0 %1278
        %v1280 = vadd.f32 %v1238, %v1239
        %1281 = vadd.xlane.f32.xlu0 %v1280
        %v1282 = vpop.xlane.xlu0 %1281
        %v1283 = vadd.f32 %v1240, %v1241
        %1284 = vadd.xlane.f32.xlu0 %v1283
        %v1285 = vpop.xlane.xlu0 %1284
        %v1286 = vadd.f32 %v1242, %v1243
        %1287 = vadd.xlane.f32.xlu0 %v1286
        %v1288 = vpop.xlane.xlu0 %1287
        %v1289 = vadd.f32 %v1244, %v1245
        %1290 = vadd.xlane.f32.xlu0 %v1289
        %v1291 = vpop.xlane.xlu0 %1290
        %v1292 = vadd.f32 %v1246, %v1247
        %1293 = vadd.xlane.f32.xlu0 %v1292
        %v1294 = vpop.xlane.xlu0 %1293
        %v1295 = vadd.f32 %v1248, %v1249
        %1296 = vadd.xlane.f32.xlu0 %v1295
        %v1297 = vpop.xlane.xlu0 %1296
        %v1298 = vrsqrt.pop %v1252
        %v1299 = vmul.f32 %v1298, %v1252
        %v1300 = vmul.f32 %v1299, %v1298
        %v1301 = vmul.f32 0.5, %v1300
        %v1302 = vsub.f32 1.5, %v1301
        %v1303 = vmul.f32 %v1298, %v1302
        %v1304 = vmul.f32 %v1252, %v1303
        %vm1305 = vcmp.eq.f32.partialorder %v1252, inf
        %v1306 = vsel %vm1305, %v1252, %v1304
        %vm1307 = vcmp.eq.f32.partialorder %v1252, 0.0
        %v1308 = vand.u32 %v1252, 2147483648
        %v1309 = vsel %vm1307, %v1308, %v1306
        %v1310 = vrsqrt.pop %v1255
        %v1311 = vmul.f32 %v1310, %v1255
        %v1312 = vmul.f32 %v1311, %v1310
        %v1313 = vmul.f32 0.5, %v1312
        %v1314 = vsub.f32 1.5, %v1313
        %v1315 = vmul.f32 %v1310, %v1314
        %v1316 = vmul.f32 %v1255, %v1315
        %vm1317 = vcmp.eq.f32.partialorder %v1255, inf
        %v1318 = vsel %vm1317, %v1255, %v1316
        %vm1319 = vcmp.eq.f32.partialorder %v1255, 0.0
        %v1320 = vand.u32 %v1255, 2147483648
        %v1321 = vsel %vm1319, %v1320, %v1318
        %v1322 = vrsqrt.pop %v1258
        %v1323 = vmul.f32 %v1322, %v1258
        %v1324 = vmul.f32 %v1323, %v1322
        %v1325 = vmul.f32 0.5, %v1324
        %v1326 = vsub.f32 1.5, %v1325
        %v1327 = vmul.f32 %v1322, %v1326
        %v1328 = vmul.f32 %v1258, %v1327
        %vm1329 = vcmp.eq.f32.partialorder %v1258, inf
        %v1330 = vsel %vm1329, %v1258, %v1328
        %vm1331 = vcmp.eq.f32.partialorder %v1258, 0.0
        %v1332 = vand.u32 %v1258, 2147483648
        %v1333 = vsel %vm1331, %v1332, %v1330
        %v1334 = vrsqrt.pop %v1261
        %v1335 = vmul.f32 %v1334, %v1261
        %v1336 = vmul.f32 %v1335, %v1334
        %v1337 = vmul.f32 0.5, %v1336
        %v1338 = vsub.f32 1.5, %v1337
        %v1339 = vmul.f32 %v1334, %v1338
        %v1340 = vmul.f32 %v1261, %v1339
        %vm1341 = vcmp.eq.f32.partialorder %v1261, inf
        %v1342 = vsel %vm1341, %v1261, %v1340
        %vm1343 = vcmp.eq.f32.partialorder %v1261, 0.0
        %v1344 = vand.u32 %v1261, 2147483648
        %v1345 = vsel %vm1343, %v1344, %v1342
        %v1346 = vrsqrt.pop %v1264
        %v1347 = vmul.f32 %v1346, %v1264
        %v1348 = vmul.f32 %v1347, %v1346
        %v1349 = vmul.f32 0.5, %v1348
        %v1350 = vsub.f32 1.5, %v1349
        %v1351 = vmul.f32 %v1346, %v1350
        %v1352 = vmul.f32 %v1264, %v1351
        %vm1353 = vcmp.eq.f32.partialorder %v1264, inf
        %v1354 = vsel %vm1353, %v1264, %v1352
        %vm1355 = vcmp.eq.f32.partialorder %v1264, 0.0
        %v1356 = vand.u32 %v1264, 2147483648
        %v1357 = vsel %vm1355, %v1356, %v1354
        %v1358 = vrsqrt.pop %v1267
        %v1359 = vmul.f32 %v1358, %v1267
        %v1360 = vmul.f32 %v1359, %v1358
        %v1361 = vmul.f32 0.5, %v1360
        %v1362 = vsub.f32 1.5, %v1361
        %v1363 = vmul.f32 %v1358, %v1362
        %v1364 = vmul.f32 %v1267, %v1363
        %vm1365 = vcmp.eq.f32.partialorder %v1267, inf
        %v1366 = vsel %vm1365, %v1267, %v1364
        %vm1367 = vcmp.eq.f32.partialorder %v1267, 0.0
        %v1368 = vand.u32 %v1267, 2147483648
        %v1369 = vsel %vm1367, %v1368, %v1366
        %v1370 = vrsqrt.pop %v1270
        %v1371 = vmul.f32 %v1370, %v1270
        %v1372 = vmul.f32 %v1371, %v1370
        %v1373 = vmul.f32 0.5, %v1372
        %v1374 = vsub.f32 1.5, %v1373
        %v1375 = vmul.f32 %v1370, %v1374
        %v1376 = vmul.f32 %v1270, %v1375
        %vm1377 = vcmp.eq.f32.partialorder %v1270, inf
        %v1378 = vsel %vm1377, %v1270, %v1376
        %vm1379 = vcmp.eq.f32.partialorder %v1270, 0.0
        %v1380 = vand.u32 %v1270, 2147483648
        %v1381 = vsel %vm1379, %v1380, %v1378
        %v1382 = vrsqrt.pop %v1273
        %v1383 = vmul.f32 %v1382, %v1273
        %v1384 = vmul.f32 %v1383, %v1382
        %v1385 = vmul.f32 0.5, %v1384
        %v1386 = vsub.f32 1.5, %v1385
        %v1387 = vmul.f32 %v1382, %v1386
        %v1388 = vmul.f32 %v1273, %v1387
        %vm1389 = vcmp.eq.f32.partialorder %v1273, inf
        %v1390 = vsel %vm1389, %v1273, %v1388
        %vm1391 = vcmp.eq.f32.partialorder %v1273, 0.0
        %v1392 = vand.u32 %v1273, 2147483648
        %v1393 = vsel %vm1391, %v1392, %v1390
        %v1394 = vrsqrt.pop %v1276
        %v1395 = vmul.f32 %v1394, %v1276
        %v1396 = vmul.f32 %v1395, %v1394
        %v1397 = vmul.f32 0.5, %v1396
        %v1398 = vsub.f32 1.5, %v1397
        %v1399 = vmul.f32 %v1394, %v1398
        %v1400 = vmul.f32 %v1276, %v1399
        %vm1401 = vcmp.eq.f32.partialorder %v1276, inf
        %v1402 = vsel %vm1401, %v1276, %v1400
        %vm1403 = vcmp.eq.f32.partialorder %v1276, 0.0
        %v1404 = vand.u32 %v1276, 2147483648
        %v1405 = vsel %vm1403, %v1404, %v1402
        %v1406 = vrsqrt.pop %v1279
        %v1407 = vmul.f32 %v1406, %v1279
        %v1408 = vmul.f32 %v1407, %v1406
        %v1409 = vmul.f32 0.5, %v1408
        %v1410 = vsub.f32 1.5, %v1409
        %v1411 = vmul.f32 %v1406, %v1410
        %v1412 = vmul.f32 %v1279, %v1411
        %vm1413 = vcmp.eq.f32.partialorder %v1279, inf
        %v1414 = vsel %vm1413, %v1279, %v1412
        %vm1415 = vcmp.eq.f32.partialorder %v1279, 0.0
        %v1416 = vand.u32 %v1279, 2147483648
        %v1417 = vsel %vm1415, %v1416, %v1414
        %v1418 = vrsqrt.pop %v1282
        %v1419 = vmul.f32 %v1418, %v1282
        %v1420 = vmul.f32 %v1419, %v1418
        %v1421 = vmul.f32 0.5, %v1420
        %v1422 = vsub.f32 1.5, %v1421
        %v1423 = vmul.f32 %v1418, %v1422
        %v1424 = vmul.f32 %v1282, %v1423
        %vm1425 = vcmp.eq.f32.partialorder %v1282, inf
        %v1426 = vsel %vm1425, %v1282, %v1424
        %vm1427 = vcmp.eq.f32.partialorder %v1282, 0.0
        %v1428 = vand.u32 %v1282, 2147483648
        %v1429 = vsel %vm1427, %v1428, %v1426
        %v1430 = vrsqrt.pop %v1285
        %v1431 = vmul.f32 %v1430, %v1285
        %v1432 = vmul.f32 %v1431, %v1430
        %v1433 = vmul.f32 0.5, %v1432
        %v1434 = vsub.f32 1.5, %v1433
        %v1435 = vmul.f32 %v1430, %v1434
        %v1436 = vmul.f32 %v1285, %v1435
        %vm1437 = vcmp.eq.f32.partialorder %v1285, inf
        %v1438 = vsel %vm1437, %v1285, %v1436
        %vm1439 = vcmp.eq.f32.partialorder %v1285, 0.0
        %v1440 = vand.u32 %v1285, 2147483648
        %v1441 = vsel %vm1439, %v1440, %v1438
        %v1442 = vrsqrt.pop %v1288
        %v1443 = vmul.f32 %v1442, %v1288
        %v1444 = vmul.f32 %v1443, %v1442
        %v1445 = vmul.f32 0.5, %v1444
        %v1446 = vsub.f32 1.5, %v1445
        %v1447 = vmul.f32 %v1442, %v1446
        %v1448 = vmul.f32 %v1288, %v1447
        %vm1449 = vcmp.eq.f32.partialorder %v1288, inf
        %v1450 = vsel %vm1449, %v1288, %v1448
        %vm1451 = vcmp.eq.f32.partialorder %v1288, 0.0
        %v1452 = vand.u32 %v1288, 2147483648
        %v1453 = vsel %vm1451, %v1452, %v1450
        %v1454 = vrsqrt.pop %v1291
        %v1455 = vmul.f32 %v1454, %v1291
        %v1456 = vmul.f32 %v1455, %v1454
        %v1457 = vmul.f32 0.5, %v1456
        %v1458 = vsub.f32 1.5, %v1457
        %v1459 = vmul.f32 %v1454, %v1458
        %v1460 = vmul.f32 %v1291, %v1459
        %vm1461 = vcmp.eq.f32.partialorder %v1291, inf
        %v1462 = vsel %vm1461, %v1291, %v1460
        %vm1463 = vcmp.eq.f32.partialorder %v1291, 0.0
        %v1464 = vand.u32 %v1291, 2147483648
        %v1465 = vsel %vm1463, %v1464, %v1462
        %v1466 = vrsqrt.pop %v1294
        %v1467 = vmul.f32 %v1466, %v1294
        %v1468 = vmul.f32 %v1467, %v1466
        %v1469 = vmul.f32 0.5, %v1468
        %v1470 = vsub.f32 1.5, %v1469
        %v1471 = vmul.f32 %v1466, %v1470
        %v1472 = vmul.f32 %v1294, %v1471
        %vm1473 = vcmp.eq.f32.partialorder %v1294, inf
        %v1474 = vsel %vm1473, %v1294, %v1472
        %vm1475 = vcmp.eq.f32.partialorder %v1294, 0.0
        %v1476 = vand.u32 %v1294, 2147483648
        %v1477 = vsel %vm1475, %v1476, %v1474
        %v1478 = vrsqrt.pop %v1297
        %v1479 = vmul.f32 %v1478, %v1297
        %v1480 = vmul.f32 %v1479, %v1478
        %v1481 = vmul.f32 0.5, %v1480
        %v1482 = vsub.f32 1.5, %v1481
        %v1483 = vmul.f32 %v1478, %v1482
        %v1484 = vmul.f32 %v1297, %v1483
        %vm1485 = vcmp.eq.f32.partialorder %v1297, inf
        %v1486 = vsel %vm1485, %v1297, %v1484
        %vm1487 = vcmp.eq.f32.partialorder %v1297, 0.0
        %v1488 = vand.u32 %v1297, 2147483648
        %v1489 = vsel %vm1487, %v1488, %v1486
        %v1490 = vmax.f32 %v1309, 1e-12
        %v1491 = vmax.f32 %v1321, 1e-12
        %v1492 = vmax.f32 %v1333, 1e-12
        %v1493 = vmax.f32 %v1345, 1e-12
        %v1494 = vmax.f32 %v1357, 1e-12
        %v1495 = vmax.f32 %v1369, 1e-12
        %v1496 = vmax.f32 %v1381, 1e-12
        %v1497 = vmax.f32 %v1393, 1e-12
        %v1498 = vmax.f32 %v1405, 1e-12
        %v1499 = vmax.f32 %v1417, 1e-12
        %v1500 = vmax.f32 %v1429, 1e-12
        %v1501 = vmax.f32 %v1441, 1e-12
        %v1502 = vmax.f32 %v1453, 1e-12
        %v1503 = vmax.f32 %v1465, 1e-12
        %v1504 = vmax.f32 %v1477, 1e-12
        %v1505 = vmax.f32 %v1489, 1e-12
        %v1506 = vrcp.pop %v1490
        %v1507 = vmul.f32 %v1490, %v1506
        %v1508 = vsub.f32 1.0, %v1507
        %v1509 = vmul.f32 %v1506, %v1508
        %v1510 = vadd.f32 %v1506, %v1509
        %vm1511 = vweird.f32 %v1490
        %vm1512 = vweird.f32 %v1506
        %vm1513 = vmor %vm1511, %vm1512
        %v1514 = vsel %vm1513, %v1506, %v1510
        %v1515 = vand.u32 2147483647, %v1490
        %vm1516 = vcmp.eq.f32.partialorder %v1515, 8.507059e+37
        %v1517 = vand.u32 %v1490, 2147483648
        %v1518 = vor.u32 1.1754944e-38, %v1517
        %v1519 = vsel %vm1516, %v1518, %v1514
        %v1520 = vmul.f32 1.0, %v1519
        %v1521 = vrcp.pop %v1491
        %v1522 = vmul.f32 %v1491, %v1521
        %v1523 = vsub.f32 1.0, %v1522
        %v1524 = vmul.f32 %v1521, %v1523
        %v1525 = vadd.f32 %v1521, %v1524
        %vm1526 = vweird.f32 %v1491
        %vm1527 = vweird.f32 %v1521
        %vm1528 = vmor %vm1526, %vm1527
        %v1529 = vsel %vm1528, %v1521, %v1525
        %v1530 = vand.u32 2147483647, %v1491
        %vm1531 = vcmp.eq.f32.partialorder %v1530, 8.507059e+37
        %v1532 = vand.u32 %v1491, 2147483648
        %v1533 = vor.u32 1.1754944e-38, %v1532
        %v1534 = vsel %vm1531, %v1533, %v1529
        %v1535 = vmul.f32 1.0, %v1534
        %v1536 = vrcp.pop %v1492
        %v1537 = vmul.f32 %v1492, %v1536
        %v1538 = vsub.f32 1.0, %v1537
        %v1539 = vmul.f32 %v1536, %v1538
        %v1540 = vadd.f32 %v1536, %v1539
        %vm1541 = vweird.f32 %v1492
        %vm1542 = vweird.f32 %v1536
        %vm1543 = vmor %vm1541, %vm1542
        %v1544 = vsel %vm1543, %v1536, %v1540
        %v1545 = vand.u32 2147483647, %v1492
        %vm1546 = vcmp.eq.f32.partialorder %v1545, 8.507059e+37
        %v1547 = vand.u32 %v1492, 2147483648
        %v1548 = vor.u32 1.1754944e-38, %v1547
        %v1549 = vsel %vm1546, %v1548, %v1544
        %v1550 = vmul.f32 1.0, %v1549
        %v1551 = vrcp.pop %v1493
        %v1552 = vmul.f32 %v1493, %v1551
        %v1553 = vsub.f32 1.0, %v1552
        %v1554 = vmul.f32 %v1551, %v1553
        %v1555 = vadd.f32 %v1551, %v1554
        %vm1556 = vweird.f32 %v1493
        %vm1557 = vweird.f32 %v1551
        %vm1558 = vmor %vm1556, %vm1557
        %v1559 = vsel %vm1558, %v1551, %v1555
        %v1560 = vand.u32 2147483647, %v1493
        %vm1561 = vcmp.eq.f32.partialorder %v1560, 8.507059e+37
        %v1562 = vand.u32 %v1493, 2147483648
        %v1563 = vor.u32 1.1754944e-38, %v1562
        %v1564 = vsel %vm1561, %v1563, %v1559
        %v1565 = vmul.f32 1.0, %v1564
        %v1566 = vrcp.pop %v1494
        %v1567 = vmul.f32 %v1494, %v1566
        %v1568 = vsub.f32 1.0, %v1567
        %v1569 = vmul.f32 %v1566, %v1568
        %v1570 = vadd.f32 %v1566, %v1569
        %vm1571 = vweird.f32 %v1494
        %vm1572 = vweird.f32 %v1566
        %vm1573 = vmor %vm1571, %vm1572
        %v1574 = vsel %vm1573, %v1566, %v1570
        %v1575 = vand.u32 2147483647, %v1494
        %vm1576 = vcmp.eq.f32.partialorder %v1575, 8.507059e+37
        %v1577 = vand.u32 %v1494, 2147483648
        %v1578 = vor.u32 1.1754944e-38, %v1577
        %v1579 = vsel %vm1576, %v1578, %v1574
        %v1580 = vmul.f32 1.0, %v1579
        %v1581 = vrcp.pop %v1495
        %v1582 = vmul.f32 %v1495, %v1581
        %v1583 = vsub.f32 1.0, %v1582
        %v1584 = vmul.f32 %v1581, %v1583
        %v1585 = vadd.f32 %v1581, %v1584
        %vm1586 = vweird.f32 %v1495
        %vm1587 = vweird.f32 %v1581
        %vm1588 = vmor %vm1586, %vm1587
        %v1589 = vsel %vm1588, %v1581, %v1585
        %v1590 = vand.u32 2147483647, %v1495
        %vm1591 = vcmp.eq.f32.partialorder %v1590, 8.507059e+37
        %v1592 = vand.u32 %v1495, 2147483648
        %v1593 = vor.u32 1.1754944e-38, %v1592
        %v1594 = vsel %vm1591, %v1593, %v1589
        %v1595 = vmul.f32 1.0, %v1594
        %v1596 = vrcp.pop %v1496
        %v1597 = vmul.f32 %v1496, %v1596
        %v1598 = vsub.f32 1.0, %v1597
        %v1599 = vmul.f32 %v1596, %v1598
        %v1600 = vadd.f32 %v1596, %v1599
        %vm1601 = vweird.f32 %v1496
        %vm1602 = vweird.f32 %v1596
        %vm1603 = vmor %vm1601, %vm1602
        %v1604 = vsel %vm1603, %v1596, %v1600
        %v1605 = vand.u32 2147483647, %v1496
        %vm1606 = vcmp.eq.f32.partialorder %v1605, 8.507059e+37
        %v1607 = vand.u32 %v1496, 2147483648
        %v1608 = vor.u32 1.1754944e-38, %v1607
        %v1609 = vsel %vm1606, %v1608, %v1604
        %v1610 = vmul.f32 1.0, %v1609
        %v1611 = vrcp.pop %v1497
        %v1612 = vmul.f32 %v1497, %v1611
        %v1613 = vsub.f32 1.0, %v1612
        %v1614 = vmul.f32 %v1611, %v1613
        %v1615 = vadd.f32 %v1611, %v1614
        %vm1616 = vweird.f32 %v1497
        %vm1617 = vweird.f32 %v1611
        %vm1618 = vmor %vm1616, %vm1617
        %v1619 = vsel %vm1618, %v1611, %v1615
        %v1620 = vand.u32 2147483647, %v1497
        %vm1621 = vcmp.eq.f32.partialorder %v1620, 8.507059e+37
        %v1622 = vand.u32 %v1497, 2147483648
        %v1623 = vor.u32 1.1754944e-38, %v1622
        %v1624 = vsel %vm1621, %v1623, %v1619
        %v1625 = vmul.f32 1.0, %v1624
        %v1626 = vrcp.pop %v1498
        %v1627 = vmul.f32 %v1498, %v1626
        %v1628 = vsub.f32 1.0, %v1627
        %v1629 = vmul.f32 %v1626, %v1628
        %v1630 = vadd.f32 %v1626, %v1629
        %vm1631 = vweird.f32 %v1498
        %vm1632 = vweird.f32 %v1626
        %vm1633 = vmor %vm1631, %vm1632
        %v1634 = vsel %vm1633, %v1626, %v1630
        %v1635 = vand.u32 2147483647, %v1498
        %vm1636 = vcmp.eq.f32.partialorder %v1635, 8.507059e+37
        %v1637 = vand.u32 %v1498, 2147483648
        %v1638 = vor.u32 1.1754944e-38, %v1637
        %v1639 = vsel %vm1636, %v1638, %v1634
        %v1640 = vmul.f32 1.0, %v1639
        %v1641 = vrcp.pop %v1499
        %v1642 = vmul.f32 %v1499, %v1641
        %v1643 = vsub.f32 1.0, %v1642
        %v1644 = vmul.f32 %v1641, %v1643
        %v1645 = vadd.f32 %v1641, %v1644
        %vm1646 = vweird.f32 %v1499
        %vm1647 = vweird.f32 %v1641
        %vm1648 = vmor %vm1646, %vm1647
        %v1649 = vsel %vm1648, %v1641, %v1645
        %v1650 = vand.u32 2147483647, %v1499
        %vm1651 = vcmp.eq.f32.partialorder %v1650, 8.507059e+37
        %v1652 = vand.u32 %v1499, 2147483648
        %v1653 = vor.u32 1.1754944e-38, %v1652
        %v1654 = vsel %vm1651, %v1653, %v1649
        %v1655 = vmul.f32 1.0, %v1654
        %v1656 = vrcp.pop %v1500
        %v1657 = vmul.f32 %v1500, %v1656
        %v1658 = vsub.f32 1.0, %v1657
        %v1659 = vmul.f32 %v1656, %v1658
        %v1660 = vadd.f32 %v1656, %v1659
        %vm1661 = vweird.f32 %v1500
        %vm1662 = vweird.f32 %v1656
        %vm1663 = vmor %vm1661, %vm1662
        %v1664 = vsel %vm1663, %v1656, %v1660
        %v1665 = vand.u32 2147483647, %v1500
        %vm1666 = vcmp.eq.f32.partialorder %v1665, 8.507059e+37
        %v1667 = vand.u32 %v1500, 2147483648
        %v1668 = vor.u32 1.1754944e-38, %v1667
        %v1669 = vsel %vm1666, %v1668, %v1664
        %v1670 = vmul.f32 1.0, %v1669
        %v1671 = vrcp.pop %v1501
        %v1672 = vmul.f32 %v1501, %v1671
        %v1673 = vsub.f32 1.0, %v1672
        %v1674 = vmul.f32 %v1671, %v1673
        %v1675 = vadd.f32 %v1671, %v1674
        %vm1676 = vweird.f32 %v1501
        %vm1677 = vweird.f32 %v1671
        %vm1678 = vmor %vm1676, %vm1677
        %v1679 = vsel %vm1678, %v1671, %v1675
        %v1680 = vand.u32 2147483647, %v1501
        %vm1681 = vcmp.eq.f32.partialorder %v1680, 8.507059e+37
        %v1682 = vand.u32 %v1501, 2147483648
        %v1683 = vor.u32 1.1754944e-38, %v1682
        %v1684 = vsel %vm1681, %v1683, %v1679
        %v1685 = vmul.f32 1.0, %v1684
        %v1686 = vrcp.pop %v1502
        %v1687 = vmul.f32 %v1502, %v1686
        %v1688 = vsub.f32 1.0, %v1687
        %v1689 = vmul.f32 %v1686, %v1688
        %v1690 = vadd.f32 %v1686, %v1689
        %vm1691 = vweird.f32 %v1502
        %vm1692 = vweird.f32 %v1686
        %vm1693 = vmor %vm1691, %vm1692
        %v1694 = vsel %vm1693, %v1686, %v1690
        %v1695 = vand.u32 2147483647, %v1502
        %vm1696 = vcmp.eq.f32.partialorder %v1695, 8.507059e+37
        %v1697 = vand.u32 %v1502, 2147483648
        %v1698 = vor.u32 1.1754944e-38, %v1697
        %v1699 = vsel %vm1696, %v1698, %v1694
        %v1700 = vmul.f32 1.0, %v1699
        %v1701 = vrcp.pop %v1503
        %v1702 = vmul.f32 %v1503, %v1701
        %v1703 = vsub.f32 1.0, %v1702
        %v1704 = vmul.f32 %v1701, %v1703
        %v1705 = vadd.f32 %v1701, %v1704
        %vm1706 = vweird.f32 %v1503
        %vm1707 = vweird.f32 %v1701
        %vm1708 = vmor %vm1706, %vm1707
        %v1709 = vsel %vm1708, %v1701, %v1705
        %v1710 = vand.u32 2147483647, %v1503
        %vm1711 = vcmp.eq.f32.partialorder %v1710, 8.507059e+37
        %v1712 = vand.u32 %v1503, 2147483648
        %v1713 = vor.u32 1.1754944e-38, %v1712
        %v1714 = vsel %vm1711, %v1713, %v1709
        %v1715 = vmul.f32 1.0, %v1714
        %v1716 = vrcp.pop %v1504
        %v1717 = vmul.f32 %v1504, %v1716
        %v1718 = vsub.f32 1.0, %v1717
        %v1719 = vmul.f32 %v1716, %v1718
        %v1720 = vadd.f32 %v1716, %v1719
        %vm1721 = vweird.f32 %v1504
        %vm1722 = vweird.f32 %v1716
        %vm1723 = vmor %vm1721, %vm1722
        %v1724 = vsel %vm1723, %v1716, %v1720
        %v1725 = vand.u32 2147483647, %v1504
        %vm1726 = vcmp.eq.f32.partialorder %v1725, 8.507059e+37
        %v1727 = vand.u32 %v1504, 2147483648
        %v1728 = vor.u32 1.1754944e-38, %v1727
        %v1729 = vsel %vm1726, %v1728, %v1724
        %v1730 = vmul.f32 1.0, %v1729
        %v1731 = vrcp.pop %v1505
        %v1732 = vmul.f32 %v1505, %v1731
        %v1733 = vsub.f32 1.0, %v1732
        %v1734 = vmul.f32 %v1731, %v1733
        %v1735 = vadd.f32 %v1731, %v1734
        %vm1736 = vweird.f32 %v1505
        %vm1737 = vweird.f32 %v1731
        %vm1738 = vmor %vm1736, %vm1737
        %v1739 = vsel %vm1738, %v1731, %v1735
        %v1740 = vand.u32 2147483647, %v1505
        %vm1741 = vcmp.eq.f32.partialorder %v1740, 8.507059e+37
        %v1742 = vand.u32 %v1505, 2147483648
        %v1743 = vor.u32 1.1754944e-38, %v1742
        %v1744 = vsel %vm1741, %v1743, %v1739
        %v1745 = vmul.f32 1.0, %v1744
        %vm1746 = vcmask 7168
        %1747 = vst.msk [vmem:[%s416] sm:$0xff] %vm1746, %v1520
        %1748 = vst.msk [vmem:[%s416 + $0x8] sm:$0xff] %vm1746, %v1535
        %1749 = vst.msk [vmem:[%s416 + $0x10] sm:$0xff] %vm1746, %v1550
        %1750 = vst.msk [vmem:[%s416 + $0x18] sm:$0xff] %vm1746, %v1565
        %1751 = vst.msk [vmem:[%s416 + $0x20] sm:$0xff] %vm1746, %v1580
        %1752 = vst.msk [vmem:[%s416 + $0x28] sm:$0xff] %vm1746, %v1595
        %1753 = vst.msk [vmem:[%s416 + $0x30] sm:$0xff] %vm1746, %v1610
        %1754 = vst.msk [vmem:[%s416 + $0x38] sm:$0xff] %vm1746, %v1625
        %1755 = vst.msk [vmem:[%s416 + $0x40] sm:$0xff] %vm1746, %v1640
        %1756 = vst.msk [vmem:[%s416 + $0x48] sm:$0xff] %vm1746, %v1655
        %1757 = vst.msk [vmem:[%s416 + $0x50] sm:$0xff] %vm1746, %v1670
        %1758 = vst.msk [vmem:[%s416 + $0x58] sm:$0xff] %vm1746, %v1685
        %1759 = vst.msk [vmem:[%s416 + $0x60] sm:$0xff] %vm1746, %v1700
        %1760 = vst.msk [vmem:[%s416 + $0x68] sm:$0xff] %vm1746, %v1715
        %1761 = vst.msk [vmem:[%s416 + $0x70] sm:$0xff] %vm1746, %v1730
        %1762 = vst.msk [vmem:[%s416 + $0x78] sm:$0xff] %vm1746, %v1745
        %v1763 = vld [vmem:[%s394] sm:$0xff]
        %v1764 = vld [vmem:[%s394 + $0x8] sm:$0xff]
        %v1765 = vld [vmem:[%s394 + $0x10] sm:$0xff]
        %v1766 = vld [vmem:[%s394 + $0x18] sm:$0xff]
        %v1767 = vld [vmem:[%s394 + $0x20] sm:$0xff]
        %v1768 = vld [vmem:[%s394 + $0x28] sm:$0xff]
        %v1769 = vld [vmem:[%s394 + $0x30] sm:$0xff]
        %v1770 = vld [vmem:[%s394 + $0x38] sm:$0xff]
        %v1771 = vld [vmem:[%s394 + $0x40] sm:$0xff]
        %v1772 = vld [vmem:[%s394 + $0x48] sm:$0xff]
        %v1773 = vld [vmem:[%s394 + $0x50] sm:$0xff]
        %v1774 = vld [vmem:[%s394 + $0x58] sm:$0xff]
        %v1775 = vld [vmem:[%s394 + $0x60] sm:$0xff]
        %v1776 = vld [vmem:[%s394 + $0x68] sm:$0xff]
        %v1777 = vld [vmem:[%s394 + $0x70] sm:$0xff]
        %v1778 = vld [vmem:[%s394 + $0x78] sm:$0xff]
        %v1779 = vmul.f32 %v1763, %v1763
        %v1780 = vmul.f32 %v1764, %v1764
        %v1781 = vmul.f32 %v1765, %v1765
        %v1782 = vmul.f32 %v1766, %v1766
        %v1783 = vmul.f32 %v1767, %v1767
        %v1784 = vmul.f32 %v1768, %v1768
        %v1785 = vmul.f32 %v1769, %v1769
        %v1786 = vmul.f32 %v1770, %v1770
        %v1787 = vmul.f32 %v1771, %v1771
        %v1788 = vmul.f32 %v1772, %v1772
        %v1789 = vmul.f32 %v1773, %v1773
        %v1790 = vmul.f32 %v1774, %v1774
        %v1791 = vmul.f32 %v1775, %v1775
        %v1792 = vmul.f32 %v1776, %v1776
        %v1793 = vmul.f32 %v1777, %v1777
        %v1794 = vmul.f32 %v1778, %v1778
        %1795 = vadd.xlane.f32.xlu0 %v1779
        %v1796 = vpop.xlane.xlu0 %1795
        %1797 = vadd.xlane.f32.xlu0 %v1780
        %v1798 = vpop.xlane.xlu0 %1797
        %1799 = vadd.xlane.f32.xlu0 %v1781
        %v1800 = vpop.xlane.xlu0 %1799
        %1801 = vadd.xlane.f32.xlu0 %v1782
        %v1802 = vpop.xlane.xlu0 %1801
        %1803 = vadd.xlane.f32.xlu0 %v1783
        %v1804 = vpop.xlane.xlu0 %1803
        %1805 = vadd.xlane.f32.xlu0 %v1784
        %v1806 = vpop.xlane.xlu0 %1805
        %1807 = vadd.xlane.f32.xlu0 %v1785
        %v1808 = vpop.xlane.xlu0 %1807
        %1809 = vadd.xlane.f32.xlu0 %v1786
        %v1810 = vpop.xlane.xlu0 %1809
        %1811 = vadd.xlane.f32.xlu0 %v1787
        %v1812 = vpop.xlane.xlu0 %1811
        %1813 = vadd.xlane.f32.xlu0 %v1788
        %v1814 = vpop.xlane.xlu0 %1813
        %1815 = vadd.xlane.f32.xlu0 %v1789
        %v1816 = vpop.xlane.xlu0 %1815
        %1817 = vadd.xlane.f32.xlu0 %v1790
        %v1818 = vpop.xlane.xlu0 %1817
        %1819 = vadd.xlane.f32.xlu0 %v1791
        %v1820 = vpop.xlane.xlu0 %1819
        %1821 = vadd.xlane.f32.xlu0 %v1792
        %v1822 = vpop.xlane.xlu0 %1821
        %1823 = vadd.xlane.f32.xlu0 %v1793
        %v1824 = vpop.xlane.xlu0 %1823
        %1825 = vadd.xlane.f32.xlu0 %v1794
        %v1826 = vpop.xlane.xlu0 %1825
        %v1827 = vrsqrt.pop %v1796
        %v1828 = vmul.f32 %v1827, %v1796
        %v1829 = vmul.f32 %v1828, %v1827
        %v1830 = vmul.f32 0.5, %v1829
        %v1831 = vsub.f32 1.5, %v1830
        %v1832 = vmul.f32 %v1827, %v1831
        %v1833 = vmul.f32 %v1796, %v1832
        %vm1834 = vcmp.eq.f32.partialorder %v1796, inf
        %v1835 = vsel %vm1834, %v1796, %v1833
        %vm1836 = vcmp.eq.f32.partialorder %v1796, 0.0
        %v1837 = vand.u32 %v1796, 2147483648
        %v1838 = vsel %vm1836, %v1837, %v1835
        %v1839 = vrsqrt.pop %v1798
        %v1840 = vmul.f32 %v1839, %v1798
        %v1841 = vmul.f32 %v1840, %v1839
        %v1842 = vmul.f32 0.5, %v1841
        %v1843 = vsub.f32 1.5, %v1842
        %v1844 = vmul.f32 %v1839, %v1843
        %v1845 = vmul.f32 %v1798, %v1844
        %vm1846 = vcmp.eq.f32.partialorder %v1798, inf
        %v1847 = vsel %vm1846, %v1798, %v1845
        %vm1848 = vcmp.eq.f32.partialorder %v1798, 0.0
        %v1849 = vand.u32 %v1798, 2147483648
        %v1850 = vsel %vm1848, %v1849, %v1847
        %v1851 = vrsqrt.pop %v1800
        %v1852 = vmul.f32 %v1851, %v1800
        %v1853 = vmul.f32 %v1852, %v1851
        %v1854 = vmul.f32 0.5, %v1853
        %v1855 = vsub.f32 1.5, %v1854
        %v1856 = vmul.f32 %v1851, %v1855
        %v1857 = vmul.f32 %v1800, %v1856
        %vm1858 = vcmp.eq.f32.partialorder %v1800, inf
        %v1859 = vsel %vm1858, %v1800, %v1857
        %vm1860 = vcmp.eq.f32.partialorder %v1800, 0.0
        %v1861 = vand.u32 %v1800, 2147483648
        %v1862 = vsel %vm1860, %v1861, %v1859
        %v1863 = vrsqrt.pop %v1802
        %v1864 = vmul.f32 %v1863, %v1802
        %v1865 = vmul.f32 %v1864, %v1863
        %v1866 = vmul.f32 0.5, %v1865
        %v1867 = vsub.f32 1.5, %v1866
        %v1868 = vmul.f32 %v1863, %v1867
        %v1869 = vmul.f32 %v1802, %v1868
        %vm1870 = vcmp.eq.f32.partialorder %v1802, inf
        %v1871 = vsel %vm1870, %v1802, %v1869
        %vm1872 = vcmp.eq.f32.partialorder %v1802, 0.0
        %v1873 = vand.u32 %v1802, 2147483648
        %v1874 = vsel %vm1872, %v1873, %v1871
        %v1875 = vrsqrt.pop %v1804
        %v1876 = vmul.f32 %v1875, %v1804
        %v1877 = vmul.f32 %v1876, %v1875
        %v1878 = vmul.f32 0.5, %v1877
        %v1879 = vsub.f32 1.5, %v1878
        %v1880 = vmul.f32 %v1875, %v1879
        %v1881 = vmul.f32 %v1804, %v1880
        %vm1882 = vcmp.eq.f32.partialorder %v1804, inf
        %v1883 = vsel %vm1882, %v1804, %v1881
        %vm1884 = vcmp.eq.f32.partialorder %v1804, 0.0
        %v1885 = vand.u32 %v1804, 2147483648
        %v1886 = vsel %vm1884, %v1885, %v1883
        %v1887 = vrsqrt.pop %v1806
        %v1888 = vmul.f32 %v1887, %v1806
        %v1889 = vmul.f32 %v1888, %v1887
        %v1890 = vmul.f32 0.5, %v1889
        %v1891 = vsub.f32 1.5, %v1890
        %v1892 = vmul.f32 %v1887, %v1891
        %v1893 = vmul.f32 %v1806, %v1892
        %vm1894 = vcmp.eq.f32.partialorder %v1806, inf
        %v1895 = vsel %vm1894, %v1806, %v1893
        %vm1896 = vcmp.eq.f32.partialorder %v1806, 0.0
        %v1897 = vand.u32 %v1806, 2147483648
        %v1898 = vsel %vm1896, %v1897, %v1895
        %v1899 = vrsqrt.pop %v1808
        %v1900 = vmul.f32 %v1899, %v1808
        %v1901 = vmul.f32 %v1900, %v1899
        %v1902 = vmul.f32 0.5, %v1901
        %v1903 = vsub.f32 1.5, %v1902
        %v1904 = vmul.f32 %v1899, %v1903
        %v1905 = vmul.f32 %v1808, %v1904
        %vm1906 = vcmp.eq.f32.partialorder %v1808, inf
        %v1907 = vsel %vm1906, %v1808, %v1905
        %vm1908 = vcmp.eq.f32.partialorder %v1808, 0.0
        %v1909 = vand.u32 %v1808, 2147483648
        %v1910 = vsel %vm1908, %v1909, %v1907
        %v1911 = vrsqrt.pop %v1810
        %v1912 = vmul.f32 %v1911, %v1810
        %v1913 = vmul.f32 %v1912, %v1911
        %v1914 = vmul.f32 0.5, %v1913
        %v1915 = vsub.f32 1.5, %v1914
        %v1916 = vmul.f32 %v1911, %v1915
        %v1917 = vmul.f32 %v1810, %v1916
        %vm1918 = vcmp.eq.f32.partialorder %v1810, inf
        %v1919 = vsel %vm1918, %v1810, %v1917
        %vm1920 = vcmp.eq.f32.partialorder %v1810, 0.0
        %v1921 = vand.u32 %v1810, 2147483648
        %v1922 = vsel %vm1920, %v1921, %v1919
        %v1923 = vrsqrt.pop %v1812
        %v1924 = vmul.f32 %v1923, %v1812
        %v1925 = vmul.f32 %v1924, %v1923
        %v1926 = vmul.f32 0.5, %v1925
        %v1927 = vsub.f32 1.5, %v1926
        %v1928 = vmul.f32 %v1923, %v1927
        %v1929 = vmul.f32 %v1812, %v1928
        %vm1930 = vcmp.eq.f32.partialorder %v1812, inf
        %v1931 = vsel %vm1930, %v1812, %v1929
        %vm1932 = vcmp.eq.f32.partialorder %v1812, 0.0
        %v1933 = vand.u32 %v1812, 2147483648
        %v1934 = vsel %vm1932, %v1933, %v1931
        %v1935 = vrsqrt.pop %v1814
        %v1936 = vmul.f32 %v1935, %v1814
        %v1937 = vmul.f32 %v1936, %v1935
        %v1938 = vmul.f32 0.5, %v1937
        %v1939 = vsub.f32 1.5, %v1938
        %v1940 = vmul.f32 %v1935, %v1939
        %v1941 = vmul.f32 %v1814, %v1940
        %vm1942 = vcmp.eq.f32.partialorder %v1814, inf
        %v1943 = vsel %vm1942, %v1814, %v1941
        %vm1944 = vcmp.eq.f32.partialorder %v1814, 0.0
        %v1945 = vand.u32 %v1814, 2147483648
        %v1946 = vsel %vm1944, %v1945, %v1943
        %v1947 = vrsqrt.pop %v1816
        %v1948 = vmul.f32 %v1947, %v1816
        %v1949 = vmul.f32 %v1948, %v1947
        %v1950 = vmul.f32 0.5, %v1949
        %v1951 = vsub.f32 1.5, %v1950
        %v1952 = vmul.f32 %v1947, %v1951
        %v1953 = vmul.f32 %v1816, %v1952
        %vm1954 = vcmp.eq.f32.partialorder %v1816, inf
        %v1955 = vsel %vm1954, %v1816, %v1953
        %vm1956 = vcmp.eq.f32.partialorder %v1816, 0.0
        %v1957 = vand.u32 %v1816, 2147483648
        %v1958 = vsel %vm1956, %v1957, %v1955
        %v1959 = vrsqrt.pop %v1818
        %v1960 = vmul.f32 %v1959, %v1818
        %v1961 = vmul.f32 %v1960, %v1959
        %v1962 = vmul.f32 0.5, %v1961
        %v1963 = vsub.f32 1.5, %v1962
        %v1964 = vmul.f32 %v1959, %v1963
        %v1965 = vmul.f32 %v1818, %v1964
        %vm1966 = vcmp.eq.f32.partialorder %v1818, inf
        %v1967 = vsel %vm1966, %v1818, %v1965
        %vm1968 = vcmp.eq.f32.partialorder %v1818, 0.0
        %v1969 = vand.u32 %v1818, 2147483648
        %v1970 = vsel %vm1968, %v1969, %v1967
        %v1971 = vrsqrt.pop %v1820
        %v1972 = vmul.f32 %v1971, %v1820
        %v1973 = vmul.f32 %v1972, %v1971
        %v1974 = vmul.f32 0.5, %v1973
        %v1975 = vsub.f32 1.5, %v1974
        %v1976 = vmul.f32 %v1971, %v1975
        %v1977 = vmul.f32 %v1820, %v1976
        %vm1978 = vcmp.eq.f32.partialorder %v1820, inf
        %v1979 = vsel %vm1978, %v1820, %v1977
        %vm1980 = vcmp.eq.f32.partialorder %v1820, 0.0
        %v1981 = vand.u32 %v1820, 2147483648
        %v1982 = vsel %vm1980, %v1981, %v1979
        %v1983 = vrsqrt.pop %v1822
        %v1984 = vmul.f32 %v1983, %v1822
        %v1985 = vmul.f32 %v1984, %v1983
        %v1986 = vmul.f32 0.5, %v1985
        %v1987 = vsub.f32 1.5, %v1986
        %v1988 = vmul.f32 %v1983, %v1987
        %v1989 = vmul.f32 %v1822, %v1988
        %vm1990 = vcmp.eq.f32.partialorder %v1822, inf
        %v1991 = vsel %vm1990, %v1822, %v1989
        %vm1992 = vcmp.eq.f32.partialorder %v1822, 0.0
        %v1993 = vand.u32 %v1822, 2147483648
        %v1994 = vsel %vm1992, %v1993, %v1991
        %v1995 = vrsqrt.pop %v1824
        %v1996 = vmul.f32 %v1995, %v1824
        %v1997 = vmul.f32 %v1996, %v1995
        %v1998 = vmul.f32 0.5, %v1997
        %v1999 = vsub.f32 1.5, %v1998
        %v2000 = vmul.f32 %v1995, %v1999
        %v2001 = vmul.f32 %v1824, %v2000
        %vm2002 = vcmp.eq.f32.partialorder %v1824, inf
        %v2003 = vsel %vm2002, %v1824, %v2001
        %vm2004 = vcmp.eq.f32.partialorder %v1824, 0.0
        %v2005 = vand.u32 %v1824, 2147483648
        %v2006 = vsel %vm2004, %v2005, %v2003
        %v2007 = vrsqrt.pop %v1826
        %v2008 = vmul.f32 %v2007, %v1826
        %v2009 = vmul.f32 %v2008, %v2007
        %v2010 = vmul.f32 0.5, %v2009
        %v2011 = vsub.f32 1.5, %v2010
        %v2012 = vmul.f32 %v2007, %v2011
        %v2013 = vmul.f32 %v1826, %v2012
        %vm2014 = vcmp.eq.f32.partialorder %v1826, inf
        %v2015 = vsel %vm2014, %v1826, %v2013
        %vm2016 = vcmp.eq.f32.partialorder %v1826, 0.0
        %v2017 = vand.u32 %v1826, 2147483648
        %v2018 = vsel %vm2016, %v2017, %v2015
        %v2019 = vmax.f32 %v1838, 1e-12
        %v2020 = vmax.f32 %v1850, 1e-12
        %v2021 = vmax.f32 %v1862, 1e-12
        %v2022 = vmax.f32 %v1874, 1e-12
        %v2023 = vmax.f32 %v1886, 1e-12
        %v2024 = vmax.f32 %v1898, 1e-12
        %v2025 = vmax.f32 %v1910, 1e-12
        %v2026 = vmax.f32 %v1922, 1e-12
        %v2027 = vmax.f32 %v1934, 1e-12
        %v2028 = vmax.f32 %v1946, 1e-12
        %v2029 = vmax.f32 %v1958, 1e-12
        %v2030 = vmax.f32 %v1970, 1e-12
        %v2031 = vmax.f32 %v1982, 1e-12
        %v2032 = vmax.f32 %v1994, 1e-12
        %v2033 = vmax.f32 %v2006, 1e-12
        %v2034 = vmax.f32 %v2018, 1e-12
        %v2035 = vrcp.pop %v2019
        %v2036 = vmul.f32 %v2019, %v2035
        %v2037 = vsub.f32 1.0, %v2036
        %v2038 = vmul.f32 %v2035, %v2037
        %v2039 = vadd.f32 %v2035, %v2038
        %vm2040 = vweird.f32 %v2019
        %vm2041 = vweird.f32 %v2035
        %vm2042 = vmor %vm2040, %vm2041
        %v2043 = vsel %vm2042, %v2035, %v2039
        %v2044 = vand.u32 2147483647, %v2019
        %vm2045 = vcmp.eq.f32.partialorder %v2044, 8.507059e+37
        %v2046 = vand.u32 %v2019, 2147483648
        %v2047 = vor.u32 1.1754944e-38, %v2046
        %v2048 = vsel %vm2045, %v2047, %v2043
        %v2049 = vmul.f32 %v1763, %v2048
        %v2050 = vrcp.pop %v2020
        %v2051 = vmul.f32 %v2020, %v2050
        %v2052 = vsub.f32 1.0, %v2051
        %v2053 = vmul.f32 %v2050, %v2052
        %v2054 = vadd.f32 %v2050, %v2053
        %vm2055 = vweird.f32 %v2020
        %vm2056 = vweird.f32 %v2050
        %vm2057 = vmor %vm2055, %vm2056
        %v2058 = vsel %vm2057, %v2050, %v2054
        %v2059 = vand.u32 2147483647, %v2020
        %vm2060 = vcmp.eq.f32.partialorder %v2059, 8.507059e+37
        %v2061 = vand.u32 %v2020, 2147483648
        %v2062 = vor.u32 1.1754944e-38, %v2061
        %v2063 = vsel %vm2060, %v2062, %v2058
        %v2064 = vmul.f32 %v1764, %v2063
        %v2065 = vrcp.pop %v2021
        %v2066 = vmul.f32 %v2021, %v2065
        %v2067 = vsub.f32 1.0, %v2066
        %v2068 = vmul.f32 %v2065, %v2067
        %v2069 = vadd.f32 %v2065, %v2068
        %vm2070 = vweird.f32 %v2021
        %vm2071 = vweird.f32 %v2065
        %vm2072 = vmor %vm2070, %vm2071
        %v2073 = vsel %vm2072, %v2065, %v2069
        %v2074 = vand.u32 2147483647, %v2021
        %vm2075 = vcmp.eq.f32.partialorder %v2074, 8.507059e+37
        %v2076 = vand.u32 %v2021, 2147483648
        %v2077 = vor.u32 1.1754944e-38, %v2076
        %v2078 = vsel %vm2075, %v2077, %v2073
        %v2079 = vmul.f32 %v1765, %v2078
        %v2080 = vrcp.pop %v2022
        %v2081 = vmul.f32 %v2022, %v2080
        %v2082 = vsub.f32 1.0, %v2081
        %v2083 = vmul.f32 %v2080, %v2082
        %v2084 = vadd.f32 %v2080, %v2083
        %vm2085 = vweird.f32 %v2022
        %vm2086 = vweird.f32 %v2080
        %vm2087 = vmor %vm2085, %vm2086
        %v2088 = vsel %vm2087, %v2080, %v2084
        %v2089 = vand.u32 2147483647, %v2022
        %vm2090 = vcmp.eq.f32.partialorder %v2089, 8.507059e+37
        %v2091 = vand.u32 %v2022, 2147483648
        %v2092 = vor.u32 1.1754944e-38, %v2091
        %v2093 = vsel %vm2090, %v2092, %v2088
        %v2094 = vmul.f32 %v1766, %v2093
        %v2095 = vrcp.pop %v2023
        %v2096 = vmul.f32 %v2023, %v2095
        %v2097 = vsub.f32 1.0, %v2096
        %v2098 = vmul.f32 %v2095, %v2097
        %v2099 = vadd.f32 %v2095, %v2098
        %vm2100 = vweird.f32 %v2023
        %vm2101 = vweird.f32 %v2095
        %vm2102 = vmor %vm2100, %vm2101
        %v2103 = vsel %vm2102, %v2095, %v2099
        %v2104 = vand.u32 2147483647, %v2023
        %vm2105 = vcmp.eq.f32.partialorder %v2104, 8.507059e+37
        %v2106 = vand.u32 %v2023, 2147483648
        %v2107 = vor.u32 1.1754944e-38, %v2106
        %v2108 = vsel %vm2105, %v2107, %v2103
        %v2109 = vmul.f32 %v1767, %v2108
        %v2110 = vrcp.pop %v2024
        %v2111 = vmul.f32 %v2024, %v2110
        %v2112 = vsub.f32 1.0, %v2111
        %v2113 = vmul.f32 %v2110, %v2112
        %v2114 = vadd.f32 %v2110, %v2113
        %vm2115 = vweird.f32 %v2024
        %vm2116 = vweird.f32 %v2110
        %vm2117 = vmor %vm2115, %vm2116
        %v2118 = vsel %vm2117, %v2110, %v2114
        %v2119 = vand.u32 2147483647, %v2024
        %vm2120 = vcmp.eq.f32.partialorder %v2119, 8.507059e+37
        %v2121 = vand.u32 %v2024, 2147483648
        %v2122 = vor.u32 1.1754944e-38, %v2121
        %v2123 = vsel %vm2120, %v2122, %v2118
        %v2124 = vmul.f32 %v1768, %v2123
        %v2125 = vrcp.pop %v2025
        %v2126 = vmul.f32 %v2025, %v2125
        %v2127 = vsub.f32 1.0, %v2126
        %v2128 = vmul.f32 %v2125, %v2127
        %v2129 = vadd.f32 %v2125, %v2128
        %vm2130 = vweird.f32 %v2025
        %vm2131 = vweird.f32 %v2125
        %vm2132 = vmor %vm2130, %vm2131
        %v2133 = vsel %vm2132, %v2125, %v2129
        %v2134 = vand.u32 2147483647, %v2025
        %vm2135 = vcmp.eq.f32.partialorder %v2134, 8.507059e+37
        %v2136 = vand.u32 %v2025, 2147483648
        %v2137 = vor.u32 1.1754944e-38, %v2136
        %v2138 = vsel %vm2135, %v2137, %v2133
        %v2139 = vmul.f32 %v1769, %v2138
        %v2140 = vrcp.pop %v2026
        %v2141 = vmul.f32 %v2026, %v2140
        %v2142 = vsub.f32 1.0, %v2141
        %v2143 = vmul.f32 %v2140, %v2142
        %v2144 = vadd.f32 %v2140, %v2143
        %vm2145 = vweird.f32 %v2026
        %vm2146 = vweird.f32 %v2140
        %vm2147 = vmor %vm2145, %vm2146
        %v2148 = vsel %vm2147, %v2140, %v2144
        %v2149 = vand.u32 2147483647, %v2026
        %vm2150 = vcmp.eq.f32.partialorder %v2149, 8.507059e+37
        %v2151 = vand.u32 %v2026, 2147483648
        %v2152 = vor.u32 1.1754944e-38, %v2151
        %v2153 = vsel %vm2150, %v2152, %v2148
        %v2154 = vmul.f32 %v1770, %v2153
        %v2155 = vrcp.pop %v2027
        %v2156 = vmul.f32 %v2027, %v2155
        %v2157 = vsub.f32 1.0, %v2156
        %v2158 = vmul.f32 %v2155, %v2157
        %v2159 = vadd.f32 %v2155, %v2158
        %vm2160 = vweird.f32 %v2027
        %vm2161 = vweird.f32 %v2155
        %vm2162 = vmor %vm2160, %vm2161
        %v2163 = vsel %vm2162, %v2155, %v2159
        %v2164 = vand.u32 2147483647, %v2027
        %vm2165 = vcmp.eq.f32.partialorder %v2164, 8.507059e+37
        %v2166 = vand.u32 %v2027, 2147483648
        %v2167 = vor.u32 1.1754944e-38, %v2166
        %v2168 = vsel %vm2165, %v2167, %v2163
        %v2169 = vmul.f32 %v1771, %v2168
        %v2170 = vrcp.pop %v2028
        %v2171 = vmul.f32 %v2028, %v2170
        %v2172 = vsub.f32 1.0, %v2171
        %v2173 = vmul.f32 %v2170, %v2172
        %v2174 = vadd.f32 %v2170, %v2173
        %vm2175 = vweird.f32 %v2028
        %vm2176 = vweird.f32 %v2170
        %vm2177 = vmor %vm2175, %vm2176
        %v2178 = vsel %vm2177, %v2170, %v2174
        %v2179 = vand.u32 2147483647, %v2028
        %vm2180 = vcmp.eq.f32.partialorder %v2179, 8.507059e+37
        %v2181 = vand.u32 %v2028, 2147483648
        %v2182 = vor.u32 1.1754944e-38, %v2181
        %v2183 = vsel %vm2180, %v2182, %v2178
        %v2184 = vmul.f32 %v1772, %v2183
        %v2185 = vrcp.pop %v2029
        %v2186 = vmul.f32 %v2029, %v2185
        %v2187 = vsub.f32 1.0, %v2186
        %v2188 = vmul.f32 %v2185, %v2187
        %v2189 = vadd.f32 %v2185, %v2188
        %vm2190 = vweird.f32 %v2029
        %vm2191 = vweird.f32 %v2185
        %vm2192 = vmor %vm2190, %vm2191
        %v2193 = vsel %vm2192, %v2185, %v2189
        %v2194 = vand.u32 2147483647, %v2029
        %vm2195 = vcmp.eq.f32.partialorder %v2194, 8.507059e+37
        %v2196 = vand.u32 %v2029, 2147483648
        %v2197 = vor.u32 1.1754944e-38, %v2196
        %v2198 = vsel %vm2195, %v2197, %v2193
        %v2199 = vmul.f32 %v1773, %v2198
        %v2200 = vrcp.pop %v2030
        %v2201 = vmul.f32 %v2030, %v2200
        %v2202 = vsub.f32 1.0, %v2201
        %v2203 = vmul.f32 %v2200, %v2202
        %v2204 = vadd.f32 %v2200, %v2203
        %vm2205 = vweird.f32 %v2030
        %vm2206 = vweird.f32 %v2200
        %vm2207 = vmor %vm2205, %vm2206
        %v2208 = vsel %vm2207, %v2200, %v2204
        %v2209 = vand.u32 2147483647, %v2030
        %vm2210 = vcmp.eq.f32.partialorder %v2209, 8.507059e+37
        %v2211 = vand.u32 %v2030, 2147483648
        %v2212 = vor.u32 1.1754944e-38, %v2211
        %v2213 = vsel %vm2210, %v2212, %v2208
        %v2214 = vmul.f32 %v1774, %v2213
        %v2215 = vrcp.pop %v2031
        %v2216 = vmul.f32 %v2031, %v2215
        %v2217 = vsub.f32 1.0, %v2216
        %v2218 = vmul.f32 %v2215, %v2217
        %v2219 = vadd.f32 %v2215, %v2218
        %vm2220 = vweird.f32 %v2031
        %vm2221 = vweird.f32 %v2215
        %vm2222 = vmor %vm2220, %vm2221
        %v2223 = vsel %vm2222, %v2215, %v2219
        %v2224 = vand.u32 2147483647, %v2031
        %vm2225 = vcmp.eq.f32.partialorder %v2224, 8.507059e+37
        %v2226 = vand.u32 %v2031, 2147483648
        %v2227 = vor.u32 1.1754944e-38, %v2226
        %v2228 = vsel %vm2225, %v2227, %v2223
        %v2229 = vmul.f32 %v1775, %v2228
        %v2230 = vrcp.pop %v2032
        %v2231 = vmul.f32 %v2032, %v2230
        %v2232 = vsub.f32 1.0, %v2231
        %v2233 = vmul.f32 %v2230, %v2232
        %v2234 = vadd.f32 %v2230, %v2233
        %vm2235 = vweird.f32 %v2032
        %vm2236 = vweird.f32 %v2230
        %vm2237 = vmor %vm2235, %vm2236
        %v2238 = vsel %vm2237, %v2230, %v2234
        %v2239 = vand.u32 2147483647, %v2032
        %vm2240 = vcmp.eq.f32.partialorder %v2239, 8.507059e+37
        %v2241 = vand.u32 %v2032, 2147483648
        %v2242 = vor.u32 1.1754944e-38, %v2241
        %v2243 = vsel %vm2240, %v2242, %v2238
        %v2244 = vmul.f32 %v1776, %v2243
        %v2245 = vrcp.pop %v2033
        %v2246 = vmul.f32 %v2033, %v2245
        %v2247 = vsub.f32 1.0, %v2246
        %v2248 = vmul.f32 %v2245, %v2247
        %v2249 = vadd.f32 %v2245, %v2248
        %vm2250 = vweird.f32 %v2033
        %vm2251 = vweird.f32 %v2245
        %vm2252 = vmor %vm2250, %vm2251
        %v2253 = vsel %vm2252, %v2245, %v2249
        %v2254 = vand.u32 2147483647, %v2033
        %vm2255 = vcmp.eq.f32.partialorder %v2254, 8.507059e+37
        %v2256 = vand.u32 %v2033, 2147483648
        %v2257 = vor.u32 1.1754944e-38, %v2256
        %v2258 = vsel %vm2255, %v2257, %v2253
        %v2259 = vmul.f32 %v1777, %v2258
        %v2260 = vrcp.pop %v2034
        %v2261 = vmul.f32 %v2034, %v2260
        %v2262 = vsub.f32 1.0, %v2261
        %v2263 = vmul.f32 %v2260, %v2262
        %v2264 = vadd.f32 %v2260, %v2263
        %vm2265 = vweird.f32 %v2034
        %vm2266 = vweird.f32 %v2260
        %vm2267 = vmor %vm2265, %vm2266
        %v2268 = vsel %vm2267, %v2260, %v2264
        %v2269 = vand.u32 2147483647, %v2034
        %vm2270 = vcmp.eq.f32.partialorder %v2269, 8.507059e+37
        %v2271 = vand.u32 %v2034, 2147483648
        %v2272 = vor.u32 1.1754944e-38, %v2271
        %v2273 = vsel %vm2270, %v2272, %v2268
        %v2274 = vmul.f32 %v1778, %v2273
        %2275 = vst [vmem:[%s353] sm:$0xff] %v2049
        %2276 = vst [vmem:[%s353 + $0x8] sm:$0xff] %v2064
        %2277 = vst [vmem:[%s353 + $0x10] sm:$0xff] %v2079
        %2278 = vst [vmem:[%s353 + $0x18] sm:$0xff] %v2094
        %2279 = vst [vmem:[%s353 + $0x20] sm:$0xff] %v2109
        %2280 = vst [vmem:[%s353 + $0x28] sm:$0xff] %v2124
        %2281 = vst [vmem:[%s353 + $0x30] sm:$0xff] %v2139
        %2282 = vst [vmem:[%s353 + $0x38] sm:$0xff] %v2154
        %2283 = vst [vmem:[%s353 + $0x40] sm:$0xff] %v2169
        %2284 = vst [vmem:[%s353 + $0x48] sm:$0xff] %v2184
        %2285 = vst [vmem:[%s353 + $0x50] sm:$0xff] %v2199
        %2286 = vst [vmem:[%s353 + $0x58] sm:$0xff] %v2214
        %2287 = vst [vmem:[%s353 + $0x60] sm:$0xff] %v2229
        %2288 = vst [vmem:[%s353 + $0x68] sm:$0xff] %v2244
        %2289 = vst [vmem:[%s353 + $0x70] sm:$0xff] %v2259
        %2290 = vst [vmem:[%s353 + $0x78] sm:$0xff] %v2274
        %v2291 = vpack.c.bf16 %v1764, %v1763
        %v2292 = vpack.c.bf16 %v1766, %v1765
        %v2293 = vpack.c.bf16 %v1768, %v1767
        %v2294 = vpack.c.bf16 %v1770, %v1769
        %v2295 = vpack.c.bf16 %v1772, %v1771
        %v2296 = vpack.c.bf16 %v1774, %v1773
        %v2297 = vpack.c.bf16 %v1776, %v1775
        %v2298 = vpack.c.bf16 %v1778, %v1777
        %v2299 = vld [vmem:[%s3] sm:$0xf]
        %v2300 = vld [vmem:[%s3 + $0x4] sm:$0xf]
        %v2301 = vld [vmem:[%s3 + $0x8] sm:$0xf]
        %v2302 = vld [vmem:[%s3 + $0xc] sm:$0xf]
        %v2303 = vld [vmem:[%s3 + $0x10] sm:$0xf]
        %v2304 = vld [vmem:[%s3 + $0x14] sm:$0xf]
        %v2305 = vld [vmem:[%s3 + $0x18] sm:$0xf]
        %v2306 = vld [vmem:[%s3 + $0x1c] sm:$0xf]
        %v2307 = vld [vmem:[%s3 + $0x20] sm:$0xf]
        %v2308 = vld [vmem:[%s3 + $0x24] sm:$0xf]
        %v2309 = vld [vmem:[%s3 + $0x28] sm:$0xf]
        %v2310 = vld [vmem:[%s3 + $0x2c] sm:$0xf]
        %v2311 = vld [vmem:[%s3 + $0x30] sm:$0xf]
        %v2312 = vld [vmem:[%s3 + $0x34] sm:$0xf]
        %v2313 = vld [vmem:[%s3 + $0x38] sm:$0xf]
        %v2314 = vld [vmem:[%s3 + $0x3c] sm:$0xf]
        %v2315 = vld [vmem:[%s3 + $0x40] sm:$0xf]
        %v2316 = vld [vmem:[%s3 + $0x44] sm:$0xf]
        %v2317 = vld [vmem:[%s3 + $0x48] sm:$0xf]
        %v2318 = vld [vmem:[%s3 + $0x4c] sm:$0xf]
        %v2319 = vld [vmem:[%s3 + $0x50] sm:$0xf]
        %v2320 = vld [vmem:[%s3 + $0x54] sm:$0xf]
        %v2321 = vld [vmem:[%s3 + $0x58] sm:$0xf]
        %v2322 = vld [vmem:[%s3 + $0x5c] sm:$0xf]
        %v2323 = vld [vmem:[%s3 + $0x60] sm:$0xf]
        %v2324 = vld [vmem:[%s3 + $0x64] sm:$0xf]
        %v2325 = vld [vmem:[%s3 + $0x68] sm:$0xf]
        %v2326 = vld [vmem:[%s3 + $0x6c] sm:$0xf]
        %v2327 = vld [vmem:[%s3 + $0x70] sm:$0xf]
        %v2328 = vld [vmem:[%s3 + $0x74] sm:$0xf]
        %v2329 = vld [vmem:[%s3 + $0x78] sm:$0xf]
        %v2330 = vld [vmem:[%s3 + $0x7c] sm:$0xf]
        %v2363 = vunpack.c.l.b16 %v2299
        %v2364 = vunpack.c.l.b16 %v2300
        %v2365 = vunpack.c.l.b16 %v2301
        %v2366 = vunpack.c.l.b16 %v2302
        %v2367 = vunpack.c.l.b16 %v2303
        %v2368 = vunpack.c.l.b16 %v2304
        %v2369 = vunpack.c.l.b16 %v2305
        %v2370 = vunpack.c.l.b16 %v2306
        %v2371 = vunpack.c.l.b16 %v2307
        %v2372 = vunpack.c.l.b16 %v2308
        %v2373 = vunpack.c.l.b16 %v2309
        %v2374 = vunpack.c.l.b16 %v2310
        %v2375 = vunpack.c.l.b16 %v2311
        %v2376 = vunpack.c.l.b16 %v2312
        %v2377 = vunpack.c.l.b16 %v2313
        %v2378 = vunpack.c.l.b16 %v2314
        %v2379 = vunpack.c.l.b16 %v2315
        %v2380 = vunpack.c.l.b16 %v2316
        %v2381 = vunpack.c.l.b16 %v2317
        %v2382 = vunpack.c.l.b16 %v2318
        %v2383 = vunpack.c.l.b16 %v2319
        %v2384 = vunpack.c.l.b16 %v2320
        %v2385 = vunpack.c.l.b16 %v2321
        %v2386 = vunpack.c.l.b16 %v2322
        %v2387 = vunpack.c.l.b16 %v2323
        %v2388 = vunpack.c.l.b16 %v2324
        %v2389 = vunpack.c.l.b16 %v2325
        %v2390 = vunpack.c.l.b16 %v2326
        %v2391 = vunpack.c.l.b16 %v2327
        %v2392 = vunpack.c.l.b16 %v2328
        %v2393 = vunpack.c.l.b16 %v2329
        %v2394 = vunpack.c.l.b16 %v2330
        %v2395 = vpack.c.b16 %v2364, %v2363
        %v2396 = vpack.c.b16 %v2366, %v2365
        %v2397 = vpack.c.b16 %v2368, %v2367
        %v2398 = vpack.c.b16 %v2370, %v2369
        %v2399 = vpack.c.b16 %v2372, %v2371
        %v2400 = vpack.c.b16 %v2374, %v2373
        %v2401 = vpack.c.b16 %v2376, %v2375
        %v2402 = vpack.c.b16 %v2378, %v2377
        %v2403 = vpack.c.b16 %v2380, %v2379
        %v2404 = vpack.c.b16 %v2382, %v2381
        %v2405 = vpack.c.b16 %v2384, %v2383
        %v2406 = vpack.c.b16 %v2386, %v2385
        %v2407 = vpack.c.b16 %v2388, %v2387
        %v2408 = vpack.c.b16 %v2390, %v2389
        %v2409 = vpack.c.b16 %v2392, %v2391
        %v2410 = vpack.c.b16 %v2394, %v2393
        %2427 = vmatpush.bf16.xpose.msra.mxu0 %v2402
        %2428 = vmatpush.bf16.xpose.msra.mxu0 %v2401
        %2429 = vmatpush.bf16.xpose.msra.mxu0 %v2400
        %2430 = vmatpush.bf16.xpose.msra.mxu0 %v2399
        %2431 = vmatpush.bf16.xpose.msra.mxu0 %v2398
        %2432 = vmatpush.bf16.xpose.msra.mxu0 %v2397
        %2433 = vmatpush.bf16.xpose.msra.mxu0 %v2396
        %2434 = vmatpush.bf16.xpose.msra.mxu0 %v2395
        %2435 = vmatmul.bf16.gmra.mxu0 %v2291
        %v2436 = vpop.f32.mrf.mxu0
        %v2437 = vadd.f32 0.0, %v2436
        %v2438 = vpop.f32.mrf.mxu0
        %v2439 = vadd.f32 0.0, %v2438
        %2440 = vmatmul.bf16.gmra.mxu0 %v2292
        %v2441 = vpop.f32.mrf.mxu0
        %v2442 = vadd.f32 0.0, %v2441
        %v2443 = vpop.f32.mrf.mxu0
        %v2444 = vadd.f32 0.0, %v2443
        %2445 = vmatmul.bf16.gmra.mxu0 %v2293
        %v2446 = vpop.f32.mrf.mxu0
        %v2447 = vadd.f32 0.0, %v2446
        %v2448 = vpop.f32.mrf.mxu0
        %v2449 = vadd.f32 0.0, %v2448
        %2450 = vmatmul.bf16.gmra.mxu0 %v2294
        %v2451 = vpop.f32.mrf.mxu0
        %v2452 = vadd.f32 0.0, %v2451
        %v2453 = vpop.f32.mrf.mxu0
        %v2454 = vadd.f32 0.0, %v2453
        %2455 = vmatmul.bf16.gmra.mxu0 %v2295
        %v2456 = vpop.f32.mrf.mxu0
        %v2457 = vadd.f32 0.0, %v2456
        %v2458 = vpop.f32.mrf.mxu0
        %v2459 = vadd.f32 0.0, %v2458
        %2460 = vmatmul.bf16.gmra.mxu0 %v2296
        %v2461 = vpop.f32.mrf.mxu0
        %v2462 = vadd.f32 0.0, %v2461
        %v2463 = vpop.f32.mrf.mxu0
        %v2464 = vadd.f32 0.0, %v2463
        %2465 = vmatmul.bf16.gmra.mxu0 %v2297
        %v2466 = vpop.f32.mrf.mxu0
        %v2467 = vadd.f32 0.0, %v2466
        %v2468 = vpop.f32.mrf.mxu0
        %v2469 = vadd.f32 0.0, %v2468
        %2470 = vmatmul.bf16.gmra.mxu0 %v2298
        %v2471 = vpop.f32.mrf.mxu0
        %v2472 = vadd.f32 0.0, %v2471
        %v2473 = vpop.f32.mrf.mxu0
        %v2474 = vadd.f32 0.0, %v2473
        %2475 = vdwg.mxu0
        %2476 = vmatpush.bf16.xpose.msra.mxu0 %v2410
        %2477 = vmatpush.bf16.xpose.msra.mxu0 %v2409
        %2478 = vmatpush.bf16.xpose.msra.mxu0 %v2408
        %2479 = vmatpush.bf16.xpose.msra.mxu0 %v2407
        %2480 = vmatpush.bf16.xpose.msra.mxu0 %v2406
        %2481 = vmatpush.bf16.xpose.msra.mxu0 %v2405
        %2482 = vmatpush.bf16.xpose.msra.mxu0 %v2404
        %2483 = vmatpush.bf16.xpose.msra.mxu0 %v2403
        %2484 = vmatmul.bf16.gmra.mxu0 %v2291
        %v2485 = vpop.f32.mrf.mxu0
        %v2486 = vadd.f32 0.0, %v2485
        %v2487 = vpop.f32.mrf.mxu0
        %v2488 = vadd.f32 0.0, %v2487
        %2489 = vmatmul.bf16.gmra.mxu0 %v2292
        %v2490 = vpop.f32.mrf.mxu0
        %v2491 = vadd.f32 0.0, %v2490
        %v2492 = vpop.f32.mrf.mxu0
        %v2493 = vadd.f32 0.0, %v2492
        %2494 = vmatmul.bf16.gmra.mxu0 %v2293
        %v2495 = vpop.f32.mrf.mxu0
        %v2496 = vadd.f32 0.0, %v2495
        %v2497 = vpop.f32.mrf.mxu0
        %v2498 = vadd.f32 0.0, %v2497
        %2499 = vmatmul.bf16.gmra.mxu0 %v2294
        %v2500 = vpop.f32.mrf.mxu0
        %v2501 = vadd.f32 0.0, %v2500
        %v2502 = vpop.f32.mrf.mxu0
        %v2503 = vadd.f32 0.0, %v2502
        %2504 = vmatmul.bf16.gmra.mxu0 %v2295
        %v2505 = vpop.f32.mrf.mxu0
        %v2506 = vadd.f32 0.0, %v2505
        %v2507 = vpop.f32.mrf.mxu0
        %v2508 = vadd.f32 0.0, %v2507
        %2509 = vmatmul.bf16.gmra.mxu0 %v2296
        %v2510 = vpop.f32.mrf.mxu0
        %v2511 = vadd.f32 0.0, %v2510
        %v2512 = vpop.f32.mrf.mxu0
        %v2513 = vadd.f32 0.0, %v2512
        %2514 = vmatmul.bf16.gmra.mxu0 %v2297
        %v2515 = vpop.f32.mrf.mxu0
        %v2516 = vadd.f32 0.0, %v2515
        %v2517 = vpop.f32.mrf.mxu0
        %v2518 = vadd.f32 0.0, %v2517
        %2519 = vmatmul.bf16.gmra.mxu0 %v2298
        %v2520 = vpop.f32.mrf.mxu0
        %v2521 = vadd.f32 0.0, %v2520
        %v2522 = vpop.f32.mrf.mxu0
        %v2523 = vadd.f32 0.0, %v2522
        %2524 = vdwg.mxu0
        %2525 = vst [vmem:[%s410] sm:$0xff] %v2437
        %2526 = vst [vmem:[%s410 + $0x8] sm:$0xff] %v2486
        %2527 = vst [vmem:[%s410 + $0x10] sm:$0xff] %v2439
        %2528 = vst [vmem:[%s410 + $0x18] sm:$0xff] %v2488
        %2529 = vst [vmem:[%s410 + $0x20] sm:$0xff] %v2442
        %2530 = vst [vmem:[%s410 + $0x28] sm:$0xff] %v2491
        %2531 = vst [vmem:[%s410 + $0x30] sm:$0xff] %v2444
        %2532 = vst [vmem:[%s410 + $0x38] sm:$0xff] %v2493
        %2533 = vst [vmem:[%s410 + $0x40] sm:$0xff] %v2447
        %2534 = vst [vmem:[%s410 + $0x48] sm:$0xff] %v2496
        %2535 = vst [vmem:[%s410 + $0x50] sm:$0xff] %v2449
        %2536 = vst [vmem:[%s410 + $0x58] sm:$0xff] %v2498
        %2537 = vst [vmem:[%s410 + $0x60] sm:$0xff] %v2452
        %2538 = vst [vmem:[%s410 + $0x68] sm:$0xff] %v2501
        %2539 = vst [vmem:[%s410 + $0x70] sm:$0xff] %v2454
        %2540 = vst [vmem:[%s410 + $0x78] sm:$0xff] %v2503
        %2541 = vst [vmem:[%s410 + $0x80] sm:$0xff] %v2457
        %2542 = vst [vmem:[%s410 + $0x88] sm:$0xff] %v2506
        %2543 = vst [vmem:[%s410 + $0x90] sm:$0xff] %v2459
        %2544 = vst [vmem:[%s410 + $0x98] sm:$0xff] %v2508
        %2545 = vst [vmem:[%s410 + $0xa0] sm:$0xff] %v2462
        %2546 = vst [vmem:[%s410 + $0xa8] sm:$0xff] %v2511
        %2547 = vst [vmem:[%s410 + $0xb0] sm:$0xff] %v2464
        %2548 = vst [vmem:[%s410 + $0xb8] sm:$0xff] %v2513
        %2549 = vst [vmem:[%s410 + $0xc0] sm:$0xff] %v2467
        %2550 = vst [vmem:[%s410 + $0xc8] sm:$0xff] %v2516
        %2551 = vst [vmem:[%s410 + $0xd0] sm:$0xff] %v2469
        %2552 = vst [vmem:[%s410 + $0xd8] sm:$0xff] %v2518
        %2553 = vst [vmem:[%s410 + $0xe0] sm:$0xff] %v2472
        %2554 = vst [vmem:[%s410 + $0xe8] sm:$0xff] %v2521
        %2555 = vst [vmem:[%s410 + $0xf0] sm:$0xff] %v2474
        %2556 = vst [vmem:[%s410 + $0xf8] sm:$0xff] %v2523
        %v2557 = vmul.f32 %v2437, %v2437
        %v2558 = vmul.f32 %v2486, %v2486
        %v2559 = vmul.f32 %v2439, %v2439
        %v2560 = vmul.f32 %v2488, %v2488
        %v2561 = vmul.f32 %v2442, %v2442
        %v2562 = vmul.f32 %v2491, %v2491
        %v2563 = vmul.f32 %v2444, %v2444
        %v2564 = vmul.f32 %v2493, %v2493
        %v2565 = vmul.f32 %v2447, %v2447
        %v2566 = vmul.f32 %v2496, %v2496
        %v2567 = vmul.f32 %v2449, %v2449
        %v2568 = vmul.f32 %v2498, %v2498
        %v2569 = vmul.f32 %v2452, %v2452
        %v2570 = vmul.f32 %v2501, %v2501
        %v2571 = vmul.f32 %v2454, %v2454
        %v2572 = vmul.f32 %v2503, %v2503
        %v2573 = vmul.f32 %v2457, %v2457
        %v2574 = vmul.f32 %v2506, %v2506
        %v2575 = vmul.f32 %v2459, %v2459
        %v2576 = vmul.f32 %v2508, %v2508
        %v2577 = vmul.f32 %v2462, %v2462
        %v2578 = vmul.f32 %v2511, %v2511
        %v2579 = vmul.f32 %v2464, %v2464
        %v2580 = vmul.f32 %v2513, %v2513
        %v2581 = vmul.f32 %v2467, %v2467
        %v2582 = vmul.f32 %v2516, %v2516
        %v2583 = vmul.f32 %v2469, %v2469
        %v2584 = vmul.f32 %v2518, %v2518
        %v2585 = vmul.f32 %v2472, %v2472
        %v2586 = vmul.f32 %v2521, %v2521
        %v2587 = vmul.f32 %v2474, %v2474
        %v2588 = vmul.f32 %v2523, %v2523
        %v2589 = vadd.f32 %v2557, %v2558
        %2590 = vadd.xlane.f32.xlu0 %v2589
        %v2591 = vpop.xlane.xlu0 %2590
        %v2592 = vadd.f32 %v2559, %v2560
        %2593 = vadd.xlane.f32.xlu0 %v2592
        %v2594 = vpop.xlane.xlu0 %2593
        %v2595 = vadd.f32 %v2561, %v2562
        %2596 = vadd.xlane.f32.xlu0 %v2595
        %v2597 = vpop.xlane.xlu0 %2596
        %v2598 = vadd.f32 %v2563, %v2564
        %2599 = vadd.xlane.f32.xlu0 %v2598
        %v2600 = vpop.xlane.xlu0 %2599
        %v2601 = vadd.f32 %v2565, %v2566
        %2602 = vadd.xlane.f32.xlu0 %v2601
        %v2603 = vpop.xlane.xlu0 %2602
        %v2604 = vadd.f32 %v2567, %v2568
        %2605 = vadd.xlane.f32.xlu0 %v2604
        %v2606 = vpop.xlane.xlu0 %2605
        %v2607 = vadd.f32 %v2569, %v2570
        %2608 = vadd.xlane.f32.xlu0 %v2607
        %v2609 = vpop.xlane.xlu0 %2608
        %v2610 = vadd.f32 %v2571, %v2572
        %2611 = vadd.xlane.f32.xlu0 %v2610
        %v2612 = vpop.xlane.xlu0 %2611
        %v2613 = vadd.f32 %v2573, %v2574
        %2614 = vadd.xlane.f32.xlu0 %v2613
        %v2615 = vpop.xlane.xlu0 %2614
        %v2616 = vadd.f32 %v2575, %v2576
        %2617 = vadd.xlane.f32.xlu0 %v2616
        %v2618 = vpop.xlane.xlu0 %2617
        %v2619 = vadd.f32 %v2577, %v2578
        %2620 = vadd.xlane.f32.xlu0 %v2619
        %v2621 = vpop.xlane.xlu0 %2620
        %v2622 = vadd.f32 %v2579, %v2580
        %2623 = vadd.xlane.f32.xlu0 %v2622
        %v2624 = vpop.xlane.xlu0 %2623
        %v2625 = vadd.f32 %v2581, %v2582
        %2626 = vadd.xlane.f32.xlu0 %v2625
        %v2627 = vpop.xlane.xlu0 %2626
        %v2628 = vadd.f32 %v2583, %v2584
        %2629 = vadd.xlane.f32.xlu0 %v2628
        %v2630 = vpop.xlane.xlu0 %2629
        %v2631 = vadd.f32 %v2585, %v2586
        %2632 = vadd.xlane.f32.xlu0 %v2631
        %v2633 = vpop.xlane.xlu0 %2632
        %v2634 = vadd.f32 %v2587, %v2588
        %2635 = vadd.xlane.f32.xlu0 %v2634
        %v2636 = vpop.xlane.xlu0 %2635
        %v2637 = vrsqrt.pop %v2591
        %v2638 = vmul.f32 %v2637, %v2591
        %v2639 = vmul.f32 %v2638, %v2637
        %v2640 = vmul.f32 0.5, %v2639
        %v2641 = vsub.f32 1.5, %v2640
        %v2642 = vmul.f32 %v2637, %v2641
        %v2643 = vmul.f32 %v2591, %v2642
        %vm2644 = vcmp.eq.f32.partialorder %v2591, inf
        %v2645 = vsel %vm2644, %v2591, %v2643
        %vm2646 = vcmp.eq.f32.partialorder %v2591, 0.0
        %v2647 = vand.u32 %v2591, 2147483648
        %v2648 = vsel %vm2646, %v2647, %v2645
        %v2649 = vrsqrt.pop %v2594
        %v2650 = vmul.f32 %v2649, %v2594
        %v2651 = vmul.f32 %v2650, %v2649
        %v2652 = vmul.f32 0.5, %v2651
        %v2653 = vsub.f32 1.5, %v2652
        %v2654 = vmul.f32 %v2649, %v2653
        %v2655 = vmul.f32 %v2594, %v2654
        %vm2656 = vcmp.eq.f32.partialorder %v2594, inf
        %v2657 = vsel %vm2656, %v2594, %v2655
        %vm2658 = vcmp.eq.f32.partialorder %v2594, 0.0
        %v2659 = vand.u32 %v2594, 2147483648
        %v2660 = vsel %vm2658, %v2659, %v2657
        %v2661 = vrsqrt.pop %v2597
        %v2662 = vmul.f32 %v2661, %v2597
        %v2663 = vmul.f32 %v2662, %v2661
        %v2664 = vmul.f32 0.5, %v2663
        %v2665 = vsub.f32 1.5, %v2664
        %v2666 = vmul.f32 %v2661, %v2665
        %v2667 = vmul.f32 %v2597, %v2666
        %vm2668 = vcmp.eq.f32.partialorder %v2597, inf
        %v2669 = vsel %vm2668, %v2597, %v2667
        %vm2670 = vcmp.eq.f32.partialorder %v2597, 0.0
        %v2671 = vand.u32 %v2597, 2147483648
        %v2672 = vsel %vm2670, %v2671, %v2669
        %v2673 = vrsqrt.pop %v2600
        %v2674 = vmul.f32 %v2673, %v2600
        %v2675 = vmul.f32 %v2674, %v2673
        %v2676 = vmul.f32 0.5, %v2675
        %v2677 = vsub.f32 1.5, %v2676
        %v2678 = vmul.f32 %v2673, %v2677
        %v2679 = vmul.f32 %v2600, %v2678
        %vm2680 = vcmp.eq.f32.partialorder %v2600, inf
        %v2681 = vsel %vm2680, %v2600, %v2679
        %vm2682 = vcmp.eq.f32.partialorder %v2600, 0.0
        %v2683 = vand.u32 %v2600, 2147483648
        %v2684 = vsel %vm2682, %v2683, %v2681
        %v2685 = vrsqrt.pop %v2603
        %v2686 = vmul.f32 %v2685, %v2603
        %v2687 = vmul.f32 %v2686, %v2685
        %v2688 = vmul.f32 0.5, %v2687
        %v2689 = vsub.f32 1.5, %v2688
        %v2690 = vmul.f32 %v2685, %v2689
        %v2691 = vmul.f32 %v2603, %v2690
        %vm2692 = vcmp.eq.f32.partialorder %v2603, inf
        %v2693 = vsel %vm2692, %v2603, %v2691
        %vm2694 = vcmp.eq.f32.partialorder %v2603, 0.0
        %v2695 = vand.u32 %v2603, 2147483648
        %v2696 = vsel %vm2694, %v2695, %v2693
        %v2697 = vrsqrt.pop %v2606
        %v2698 = vmul.f32 %v2697, %v2606
        %v2699 = vmul.f32 %v2698, %v2697
        %v2700 = vmul.f32 0.5, %v2699
        %v2701 = vsub.f32 1.5, %v2700
        %v2702 = vmul.f32 %v2697, %v2701
        %v2703 = vmul.f32 %v2606, %v2702
        %vm2704 = vcmp.eq.f32.partialorder %v2606, inf
        %v2705 = vsel %vm2704, %v2606, %v2703
        %vm2706 = vcmp.eq.f32.partialorder %v2606, 0.0
        %v2707 = vand.u32 %v2606, 2147483648
        %v2708 = vsel %vm2706, %v2707, %v2705
        %v2709 = vrsqrt.pop %v2609
        %v2710 = vmul.f32 %v2709, %v2609
        %v2711 = vmul.f32 %v2710, %v2709
        %v2712 = vmul.f32 0.5, %v2711
        %v2713 = vsub.f32 1.5, %v2712
        %v2714 = vmul.f32 %v2709, %v2713
        %v2715 = vmul.f32 %v2609, %v2714
        %vm2716 = vcmp.eq.f32.partialorder %v2609, inf
        %v2717 = vsel %vm2716, %v2609, %v2715
        %vm2718 = vcmp.eq.f32.partialorder %v2609, 0.0
        %v2719 = vand.u32 %v2609, 2147483648
        %v2720 = vsel %vm2718, %v2719, %v2717
        %v2721 = vrsqrt.pop %v2612
        %v2722 = vmul.f32 %v2721, %v2612
        %v2723 = vmul.f32 %v2722, %v2721
        %v2724 = vmul.f32 0.5, %v2723
        %v2725 = vsub.f32 1.5, %v2724
        %v2726 = vmul.f32 %v2721, %v2725
        %v2727 = vmul.f32 %v2612, %v2726
        %vm2728 = vcmp.eq.f32.partialorder %v2612, inf
        %v2729 = vsel %vm2728, %v2612, %v2727
        %vm2730 = vcmp.eq.f32.partialorder %v2612, 0.0
        %v2731 = vand.u32 %v2612, 2147483648
        %v2732 = vsel %vm2730, %v2731, %v2729
        %v2733 = vrsqrt.pop %v2615
        %v2734 = vmul.f32 %v2733, %v2615
        %v2735 = vmul.f32 %v2734, %v2733
        %v2736 = vmul.f32 0.5, %v2735
        %v2737 = vsub.f32 1.5, %v2736
        %v2738 = vmul.f32 %v2733, %v2737
        %v2739 = vmul.f32 %v2615, %v2738
        %vm2740 = vcmp.eq.f32.partialorder %v2615, inf
        %v2741 = vsel %vm2740, %v2615, %v2739
        %vm2742 = vcmp.eq.f32.partialorder %v2615, 0.0
        %v2743 = vand.u32 %v2615, 2147483648
        %v2744 = vsel %vm2742, %v2743, %v2741
        %v2745 = vrsqrt.pop %v2618
        %v2746 = vmul.f32 %v2745, %v2618
        %v2747 = vmul.f32 %v2746, %v2745
        %v2748 = vmul.f32 0.5, %v2747
        %v2749 = vsub.f32 1.5, %v2748
        %v2750 = vmul.f32 %v2745, %v2749
        %v2751 = vmul.f32 %v2618, %v2750
        %vm2752 = vcmp.eq.f32.partialorder %v2618, inf
        %v2753 = vsel %vm2752, %v2618, %v2751
        %vm2754 = vcmp.eq.f32.partialorder %v2618, 0.0
        %v2755 = vand.u32 %v2618, 2147483648
        %v2756 = vsel %vm2754, %v2755, %v2753
        %v2757 = vrsqrt.pop %v2621
        %v2758 = vmul.f32 %v2757, %v2621
        %v2759 = vmul.f32 %v2758, %v2757
        %v2760 = vmul.f32 0.5, %v2759
        %v2761 = vsub.f32 1.5, %v2760
        %v2762 = vmul.f32 %v2757, %v2761
        %v2763 = vmul.f32 %v2621, %v2762
        %vm2764 = vcmp.eq.f32.partialorder %v2621, inf
        %v2765 = vsel %vm2764, %v2621, %v2763
        %vm2766 = vcmp.eq.f32.partialorder %v2621, 0.0
        %v2767 = vand.u32 %v2621, 2147483648
        %v2768 = vsel %vm2766, %v2767, %v2765
        %v2769 = vrsqrt.pop %v2624
        %v2770 = vmul.f32 %v2769, %v2624
        %v2771 = vmul.f32 %v2770, %v2769
        %v2772 = vmul.f32 0.5, %v2771
        %v2773 = vsub.f32 1.5, %v2772
        %v2774 = vmul.f32 %v2769, %v2773
        %v2775 = vmul.f32 %v2624, %v2774
        %vm2776 = vcmp.eq.f32.partialorder %v2624, inf
        %v2777 = vsel %vm2776, %v2624, %v2775
        %vm2778 = vcmp.eq.f32.partialorder %v2624, 0.0
        %v2779 = vand.u32 %v2624, 2147483648
        %v2780 = vsel %vm2778, %v2779, %v2777
        %v2781 = vrsqrt.pop %v2627
        %v2782 = vmul.f32 %v2781, %v2627
        %v2783 = vmul.f32 %v2782, %v2781
        %v2784 = vmul.f32 0.5, %v2783
        %v2785 = vsub.f32 1.5, %v2784
        %v2786 = vmul.f32 %v2781, %v2785
        %v2787 = vmul.f32 %v2627, %v2786
        %vm2788 = vcmp.eq.f32.partialorder %v2627, inf
        %v2789 = vsel %vm2788, %v2627, %v2787
        %vm2790 = vcmp.eq.f32.partialorder %v2627, 0.0
        %v2791 = vand.u32 %v2627, 2147483648
        %v2792 = vsel %vm2790, %v2791, %v2789
        %v2793 = vrsqrt.pop %v2630
        %v2794 = vmul.f32 %v2793, %v2630
        %v2795 = vmul.f32 %v2794, %v2793
        %v2796 = vmul.f32 0.5, %v2795
        %v2797 = vsub.f32 1.5, %v2796
        %v2798 = vmul.f32 %v2793, %v2797
        %v2799 = vmul.f32 %v2630, %v2798
        %vm2800 = vcmp.eq.f32.partialorder %v2630, inf
        %v2801 = vsel %vm2800, %v2630, %v2799
        %vm2802 = vcmp.eq.f32.partialorder %v2630, 0.0
        %v2803 = vand.u32 %v2630, 2147483648
        %v2804 = vsel %vm2802, %v2803, %v2801
        %v2805 = vrsqrt.pop %v2633
        %v2806 = vmul.f32 %v2805, %v2633
        %v2807 = vmul.f32 %v2806, %v2805
        %v2808 = vmul.f32 0.5, %v2807
        %v2809 = vsub.f32 1.5, %v2808
        %v2810 = vmul.f32 %v2805, %v2809
        %v2811 = vmul.f32 %v2633, %v2810
        %vm2812 = vcmp.eq.f32.partialorder %v2633, inf
        %v2813 = vsel %vm2812, %v2633, %v2811
        %vm2814 = vcmp.eq.f32.partialorder %v2633, 0.0
        %v2815 = vand.u32 %v2633, 2147483648
        %v2816 = vsel %vm2814, %v2815, %v2813
        %v2817 = vrsqrt.pop %v2636
        %v2818 = vmul.f32 %v2817, %v2636
        %v2819 = vmul.f32 %v2818, %v2817
        %v2820 = vmul.f32 0.5, %v2819
        %v2821 = vsub.f32 1.5, %v2820
        %v2822 = vmul.f32 %v2817, %v2821
        %v2823 = vmul.f32 %v2636, %v2822
        %vm2824 = vcmp.eq.f32.partialorder %v2636, inf
        %v2825 = vsel %vm2824, %v2636, %v2823
        %vm2826 = vcmp.eq.f32.partialorder %v2636, 0.0
        %v2827 = vand.u32 %v2636, 2147483648
        %v2828 = vsel %vm2826, %v2827, %v2825
        %v2829 = vmax.f32 %v2648, 1e-12
        %v2830 = vmax.f32 %v2660, 1e-12
        %v2831 = vmax.f32 %v2672, 1e-12
        %v2832 = vmax.f32 %v2684, 1e-12
        %v2833 = vmax.f32 %v2696, 1e-12
        %v2834 = vmax.f32 %v2708, 1e-12
        %v2835 = vmax.f32 %v2720, 1e-12
        %v2836 = vmax.f32 %v2732, 1e-12
        %v2837 = vmax.f32 %v2744, 1e-12
        %v2838 = vmax.f32 %v2756, 1e-12
        %v2839 = vmax.f32 %v2768, 1e-12
        %v2840 = vmax.f32 %v2780, 1e-12
        %v2841 = vmax.f32 %v2792, 1e-12
        %v2842 = vmax.f32 %v2804, 1e-12
        %v2843 = vmax.f32 %v2816, 1e-12
        %v2844 = vmax.f32 %v2828, 1e-12
        %v2845 = vrcp.pop %v2829
        %v2846 = vmul.f32 %v2829, %v2845
        %v2847 = vsub.f32 1.0, %v2846
        %v2848 = vmul.f32 %v2845, %v2847
        %v2849 = vadd.f32 %v2845, %v2848
        %vm2850 = vweird.f32 %v2829
        %vm2851 = vweird.f32 %v2845
        %vm2852 = vmor %vm2850, %vm2851
        %v2853 = vsel %vm2852, %v2845, %v2849
        %v2854 = vand.u32 2147483647, %v2829
        %vm2855 = vcmp.eq.f32.partialorder %v2854, 8.507059e+37
        %v2856 = vand.u32 %v2829, 2147483648
        %v2857 = vor.u32 1.1754944e-38, %v2856
        %v2858 = vsel %vm2855, %v2857, %v2853
        %v2859 = vmul.f32 1.0, %v2858
        %v2860 = vrcp.pop %v2830
        %v2861 = vmul.f32 %v2830, %v2860
        %v2862 = vsub.f32 1.0, %v2861
        %v2863 = vmul.f32 %v2860, %v2862
        %v2864 = vadd.f32 %v2860, %v2863
        %vm2865 = vweird.f32 %v2830
        %vm2866 = vweird.f32 %v2860
        %vm2867 = vmor %vm2865, %vm2866
        %v2868 = vsel %vm2867, %v2860, %v2864
        %v2869 = vand.u32 2147483647, %v2830
        %vm2870 = vcmp.eq.f32.partialorder %v2869, 8.507059e+37
        %v2871 = vand.u32 %v2830, 2147483648
        %v2872 = vor.u32 1.1754944e-38, %v2871
        %v2873 = vsel %vm2870, %v2872, %v2868
        %v2874 = vmul.f32 1.0, %v2873
        %v2875 = vrcp.pop %v2831
        %v2876 = vmul.f32 %v2831, %v2875
        %v2877 = vsub.f32 1.0, %v2876
        %v2878 = vmul.f32 %v2875, %v2877
        %v2879 = vadd.f32 %v2875, %v2878
        %vm2880 = vweird.f32 %v2831
        %vm2881 = vweird.f32 %v2875
        %vm2882 = vmor %vm2880, %vm2881
        %v2883 = vsel %vm2882, %v2875, %v2879
        %v2884 = vand.u32 2147483647, %v2831
        %vm2885 = vcmp.eq.f32.partialorder %v2884, 8.507059e+37
        %v2886 = vand.u32 %v2831, 2147483648
        %v2887 = vor.u32 1.1754944e-38, %v2886
        %v2888 = vsel %vm2885, %v2887, %v2883
        %v2889 = vmul.f32 1.0, %v2888
        %v2890 = vrcp.pop %v2832
        %v2891 = vmul.f32 %v2832, %v2890
        %v2892 = vsub.f32 1.0, %v2891
        %v2893 = vmul.f32 %v2890, %v2892
        %v2894 = vadd.f32 %v2890, %v2893
        %vm2895 = vweird.f32 %v2832
        %vm2896 = vweird.f32 %v2890
        %vm2897 = vmor %vm2895, %vm2896
        %v2898 = vsel %vm2897, %v2890, %v2894
        %v2899 = vand.u32 2147483647, %v2832
        %vm2900 = vcmp.eq.f32.partialorder %v2899, 8.507059e+37
        %v2901 = vand.u32 %v2832, 2147483648
        %v2902 = vor.u32 1.1754944e-38, %v2901
        %v2903 = vsel %vm2900, %v2902, %v2898
        %v2904 = vmul.f32 1.0, %v2903
        %v2905 = vrcp.pop %v2833
        %v2906 = vmul.f32 %v2833, %v2905
        %v2907 = vsub.f32 1.0, %v2906
        %v2908 = vmul.f32 %v2905, %v2907
        %v2909 = vadd.f32 %v2905, %v2908
        %vm2910 = vweird.f32 %v2833
        %vm2911 = vweird.f32 %v2905
        %vm2912 = vmor %vm2910, %vm2911
        %v2913 = vsel %vm2912, %v2905, %v2909
        %v2914 = vand.u32 2147483647, %v2833
        %vm2915 = vcmp.eq.f32.partialorder %v2914, 8.507059e+37
        %v2916 = vand.u32 %v2833, 2147483648
        %v2917 = vor.u32 1.1754944e-38, %v2916
        %v2918 = vsel %vm2915, %v2917, %v2913
        %v2919 = vmul.f32 1.0, %v2918
        %v2920 = vrcp.pop %v2834
        %v2921 = vmul.f32 %v2834, %v2920
        %v2922 = vsub.f32 1.0, %v2921
        %v2923 = vmul.f32 %v2920, %v2922
        %v2924 = vadd.f32 %v2920, %v2923
        %vm2925 = vweird.f32 %v2834
        %vm2926 = vweird.f32 %v2920
        %vm2927 = vmor %vm2925, %vm2926
        %v2928 = vsel %vm2927, %v2920, %v2924
        %v2929 = vand.u32 2147483647, %v2834
        %vm2930 = vcmp.eq.f32.partialorder %v2929, 8.507059e+37
        %v2931 = vand.u32 %v2834, 2147483648
        %v2932 = vor.u32 1.1754944e-38, %v2931
        %v2933 = vsel %vm2930, %v2932, %v2928
        %v2934 = vmul.f32 1.0, %v2933
        %v2935 = vrcp.pop %v2835
        %v2936 = vmul.f32 %v2835, %v2935
        %v2937 = vsub.f32 1.0, %v2936
        %v2938 = vmul.f32 %v2935, %v2937
        %v2939 = vadd.f32 %v2935, %v2938
        %vm2940 = vweird.f32 %v2835
        %vm2941 = vweird.f32 %v2935
        %vm2942 = vmor %vm2940, %vm2941
        %v2943 = vsel %vm2942, %v2935, %v2939
        %v2944 = vand.u32 2147483647, %v2835
        %vm2945 = vcmp.eq.f32.partialorder %v2944, 8.507059e+37
        %v2946 = vand.u32 %v2835, 2147483648
        %v2947 = vor.u32 1.1754944e-38, %v2946
        %v2948 = vsel %vm2945, %v2947, %v2943
        %v2949 = vmul.f32 1.0, %v2948
        %v2950 = vrcp.pop %v2836
        %v2951 = vmul.f32 %v2836, %v2950
        %v2952 = vsub.f32 1.0, %v2951
        %v2953 = vmul.f32 %v2950, %v2952
        %v2954 = vadd.f32 %v2950, %v2953
        %vm2955 = vweird.f32 %v2836
        %vm2956 = vweird.f32 %v2950
        %vm2957 = vmor %vm2955, %vm2956
        %v2958 = vsel %vm2957, %v2950, %v2954
        %v2959 = vand.u32 2147483647, %v2836
        %vm2960 = vcmp.eq.f32.partialorder %v2959, 8.507059e+37
        %v2961 = vand.u32 %v2836, 2147483648
        %v2962 = vor.u32 1.1754944e-38, %v2961
        %v2963 = vsel %vm2960, %v2962, %v2958
        %v2964 = vmul.f32 1.0, %v2963
        %v2965 = vrcp.pop %v2837
        %v2966 = vmul.f32 %v2837, %v2965
        %v2967 = vsub.f32 1.0, %v2966
        %v2968 = vmul.f32 %v2965, %v2967
        %v2969 = vadd.f32 %v2965, %v2968
        %vm2970 = vweird.f32 %v2837
        %vm2971 = vweird.f32 %v2965
        %vm2972 = vmor %vm2970, %vm2971
        %v2973 = vsel %vm2972, %v2965, %v2969
        %v2974 = vand.u32 2147483647, %v2837
        %vm2975 = vcmp.eq.f32.partialorder %v2974, 8.507059e+37
        %v2976 = vand.u32 %v2837, 2147483648
        %v2977 = vor.u32 1.1754944e-38, %v2976
        %v2978 = vsel %vm2975, %v2977, %v2973
        %v2979 = vmul.f32 1.0, %v2978
        %v2980 = vrcp.pop %v2838
        %v2981 = vmul.f32 %v2838, %v2980
        %v2982 = vsub.f32 1.0, %v2981
        %v2983 = vmul.f32 %v2980, %v2982
        %v2984 = vadd.f32 %v2980, %v2983
        %vm2985 = vweird.f32 %v2838
        %vm2986 = vweird.f32 %v2980
        %vm2987 = vmor %vm2985, %vm2986
        %v2988 = vsel %vm2987, %v2980, %v2984
        %v2989 = vand.u32 2147483647, %v2838
        %vm2990 = vcmp.eq.f32.partialorder %v2989, 8.507059e+37
        %v2991 = vand.u32 %v2838, 2147483648
        %v2992 = vor.u32 1.1754944e-38, %v2991
        %v2993 = vsel %vm2990, %v2992, %v2988
        %v2994 = vmul.f32 1.0, %v2993
        %v2995 = vrcp.pop %v2839
        %v2996 = vmul.f32 %v2839, %v2995
        %v2997 = vsub.f32 1.0, %v2996
        %v2998 = vmul.f32 %v2995, %v2997
        %v2999 = vadd.f32 %v2995, %v2998
        %vm3000 = vweird.f32 %v2839
        %vm3001 = vweird.f32 %v2995
        %vm3002 = vmor %vm3000, %vm3001
        %v3003 = vsel %vm3002, %v2995, %v2999
        %v3004 = vand.u32 2147483647, %v2839
        %vm3005 = vcmp.eq.f32.partialorder %v3004, 8.507059e+37
        %v3006 = vand.u32 %v2839, 2147483648
        %v3007 = vor.u32 1.1754944e-38, %v3006
        %v3008 = vsel %vm3005, %v3007, %v3003
        %v3009 = vmul.f32 1.0, %v3008
        %v3010 = vrcp.pop %v2840
        %v3011 = vmul.f32 %v2840, %v3010
        %v3012 = vsub.f32 1.0, %v3011
        %v3013 = vmul.f32 %v3010, %v3012
        %v3014 = vadd.f32 %v3010, %v3013
        %vm3015 = vweird.f32 %v2840
        %vm3016 = vweird.f32 %v3010
        %vm3017 = vmor %vm3015, %vm3016
        %v3018 = vsel %vm3017, %v3010, %v3014
        %v3019 = vand.u32 2147483647, %v2840
        %vm3020 = vcmp.eq.f32.partialorder %v3019, 8.507059e+37
        %v3021 = vand.u32 %v2840, 2147483648
        %v3022 = vor.u32 1.1754944e-38, %v3021
        %v3023 = vsel %vm3020, %v3022, %v3018
        %v3024 = vmul.f32 1.0, %v3023
        %v3025 = vrcp.pop %v2841
        %v3026 = vmul.f32 %v2841, %v3025
        %v3027 = vsub.f32 1.0, %v3026
        %v3028 = vmul.f32 %v3025, %v3027
        %v3029 = vadd.f32 %v3025, %v3028
        %vm3030 = vweird.f32 %v2841
        %vm3031 = vweird.f32 %v3025
        %vm3032 = vmor %vm3030, %vm3031
        %v3033 = vsel %vm3032, %v3025, %v3029
        %v3034 = vand.u32 2147483647, %v2841
        %vm3035 = vcmp.eq.f32.partialorder %v3034, 8.507059e+37
        %v3036 = vand.u32 %v2841, 2147483648
        %v3037 = vor.u32 1.1754944e-38, %v3036
        %v3038 = vsel %vm3035, %v3037, %v3033
        %v3039 = vmul.f32 1.0, %v3038
        %v3040 = vrcp.pop %v2842
        %v3041 = vmul.f32 %v2842, %v3040
        %v3042 = vsub.f32 1.0, %v3041
        %v3043 = vmul.f32 %v3040, %v3042
        %v3044 = vadd.f32 %v3040, %v3043
        %vm3045 = vweird.f32 %v2842
        %vm3046 = vweird.f32 %v3040
        %vm3047 = vmor %vm3045, %vm3046
        %v3048 = vsel %vm3047, %v3040, %v3044
        %v3049 = vand.u32 2147483647, %v2842
        %vm3050 = vcmp.eq.f32.partialorder %v3049, 8.507059e+37
        %v3051 = vand.u32 %v2842, 2147483648
        %v3052 = vor.u32 1.1754944e-38, %v3051
        %v3053 = vsel %vm3050, %v3052, %v3048
        %v3054 = vmul.f32 1.0, %v3053
        %v3055 = vrcp.pop %v2843
        %v3056 = vmul.f32 %v2843, %v3055
        %v3057 = vsub.f32 1.0, %v3056
        %v3058 = vmul.f32 %v3055, %v3057
        %v3059 = vadd.f32 %v3055, %v3058
        %vm3060 = vweird.f32 %v2843
        %vm3061 = vweird.f32 %v3055
        %vm3062 = vmor %vm3060, %vm3061
        %v3063 = vsel %vm3062, %v3055, %v3059
        %v3064 = vand.u32 2147483647, %v2843
        %vm3065 = vcmp.eq.f32.partialorder %v3064, 8.507059e+37
        %v3066 = vand.u32 %v2843, 2147483648
        %v3067 = vor.u32 1.1754944e-38, %v3066
        %v3068 = vsel %vm3065, %v3067, %v3063
        %v3069 = vmul.f32 1.0, %v3068
        %v3070 = vrcp.pop %v2844
        %v3071 = vmul.f32 %v2844, %v3070
        %v3072 = vsub.f32 1.0, %v3071
        %v3073 = vmul.f32 %v3070, %v3072
        %v3074 = vadd.f32 %v3070, %v3073
        %vm3075 = vweird.f32 %v2844
        %vm3076 = vweird.f32 %v3070
        %vm3077 = vmor %vm3075, %vm3076
        %v3078 = vsel %vm3077, %v3070, %v3074
        %v3079 = vand.u32 2147483647, %v2844
        %vm3080 = vcmp.eq.f32.partialorder %v3079, 8.507059e+37
        %v3081 = vand.u32 %v2844, 2147483648
        %v3082 = vor.u32 1.1754944e-38, %v3081
        %v3083 = vsel %vm3080, %v3082, %v3078
        %v3084 = vmul.f32 1.0, %v3083
        %3085 = vst.msk [vmem:[%s422] sm:$0xff] %vm1746, %v2859
        %3086 = vst.msk [vmem:[%s422 + $0x8] sm:$0xff] %vm1746, %v2874
        %3087 = vst.msk [vmem:[%s422 + $0x10] sm:$0xff] %vm1746, %v2889
        %3088 = vst.msk [vmem:[%s422 + $0x18] sm:$0xff] %vm1746, %v2904
        %3089 = vst.msk [vmem:[%s422 + $0x20] sm:$0xff] %vm1746, %v2919
        %3090 = vst.msk [vmem:[%s422 + $0x28] sm:$0xff] %vm1746, %v2934
        %3091 = vst.msk [vmem:[%s422 + $0x30] sm:$0xff] %vm1746, %v2949
        %3092 = vst.msk [vmem:[%s422 + $0x38] sm:$0xff] %vm1746, %v2964
        %3093 = vst.msk [vmem:[%s422 + $0x40] sm:$0xff] %vm1746, %v2979
        %3094 = vst.msk [vmem:[%s422 + $0x48] sm:$0xff] %vm1746, %v2994
        %3095 = vst.msk [vmem:[%s422 + $0x50] sm:$0xff] %vm1746, %v3009
        %3096 = vst.msk [vmem:[%s422 + $0x58] sm:$0xff] %vm1746, %v3024
        %3097 = vst.msk [vmem:[%s422 + $0x60] sm:$0xff] %vm1746, %v3039
        %3098 = vst.msk [vmem:[%s422 + $0x68] sm:$0xff] %vm1746, %v3054
        %3099 = vst.msk [vmem:[%s422 + $0x70] sm:$0xff] %vm1746, %v3069
        %3100 = vst.msk [vmem:[%s422 + $0x78] sm:$0xff] %vm1746, %v3084
        %s3101 = sand.u32 %s129, 1
        %s3102 = scalar_lea.sflag [#allocation3], %s3101
        %s3103 = sand.u32 %s129, 1
        %s3104 = smul.addr %s3103, 128
        %s3105 = scalar_lea.vmem [#allocation2], %s3104
        %s3106 = sand.u32 %s155, 1
        %s3107 = scalar_lea.sflag [#allocation5], %s3106
        %s3108 = sand.u32 %s155, 1
        %s3109 = smul.addr %s3108, 128
        %s3110 = scalar_lea.vmem [#allocation4], %s3109
        %s3111 = smul.u32 16, %s27
        %p3112 = scmp.lt.s32.totalorder %s3111, 31
        %s3113 = scalar_select %p3112, %s3111, 31
        %s3114 = smul.addr %s3113, 2
        %s3115 = smul.addr %s3114, 8
        %s3116 = scalar_lea.vmem %s6, %s3115
        %s3117 = smul.u32 16, %s27
        %p3118 = scmp.lt.s32.totalorder %s3117, 31
        %s3119 = scalar_select %p3118, %s3117, 31
        %s3120 = smul.addr %s3119, 2
        %s3121 = smul.addr %s3120, 8
        %s3122 = scalar_lea.vmem %s7, %s3121
        %s3123 = smul.u32 16, %s27
        %p3124 = scmp.lt.s32.totalorder %s3123, 31
        %s3125 = scalar_select %p3124, %s3123, 31
        %s3126 = smul.addr %s3125, 8
        %s3127 = scalar_lea.vmem %s8, %s3126
        %s3128 = smul.u32 16, %s27
        %p3129 = scmp.lt.s32.totalorder %s3128, 31
        %s3130 = scalar_select %p3129, %s3128, 31
        %s3131 = smul.addr %s3130, 8
        %s3132 = scalar_lea.vmem %s9, %s3131
        // Predicated region
        $region37: #{sim_info_forward.4} parent=35 // pred_check
          %p3133 = pneg %p139
        $region38: #{sim_info_forward.4} parent=35 // pred_check_branch
          %3135 = sbr.rel (%p3133) target = $region40
        $region39: #{sim_info_forward.4} parent=35 // pred_region
          %s3136 = smul.u32 16, %s27
          %3138 = vsyncadd %s3102, 0
          %s3139 = smul.addr %s3136, 8
          %s3140 = scalar_lea.hbm %s4, %s3139
          %s3141 = sshll.u32 %s3105, 4
          %s3142 = int_to_ptr.vmem [resolvable:$true] %s3141
          %s3143 = sshll.u32 %s3140, 4
          %s3144 = int_to_ptr.hbm [resolvable:$true] %s3143
          %3149 = dma.vmem_to_hbm [thread:$0]  %s3142, 2048, %s3144, %s3102, 128, 128, 8
        $region40: #{sim_info_forward.4} parent=35 // pred_fallthru
          _
        // Predicated region
        $region41: #{sim_info_forward.4} parent=35 // pred_check
          %p3150 = pneg %p165
        $region42: #{sim_info_forward.4} parent=35 // pred_check_branch
          %3152 = sbr.rel (%p3150) target = $region44
        $region43: #{sim_info_forward.4} parent=35 // pred_region
          %s3153 = smul.u32 16, %s27
          %3155 = vsyncadd %s3107, 0
          %s3156 = smul.addr %s3153, 8
          %s3157 = scalar_lea.hbm %s5, %s3156
          %s3158 = sshll.u32 %s3110, 4
          %s3159 = int_to_ptr.vmem [resolvable:$true] %s3158
          %s3160 = sshll.u32 %s3157, 4
          %s3161 = int_to_ptr.hbm [resolvable:$true] %s3160
          %3166 = dma.vmem_to_hbm [thread:$0]  %s3159, 2048, %s3161, %s3107, 128, 128, 8
        $region44: #{sim_info_forward.4} parent=35 // pred_fallthru
          _
        // Predicated region
        $region45: #{sim_info_forward.4} parent=35 // pred_check
          %p3167 = pneg %p191
        $region46: #{sim_info_forward.4} parent=35 // pred_check_branch
          %3169 = sbr.rel (%p3167) target = $region48
        $region47: #{sim_info_forward.4} parent=35 // pred_region
          %s3170 = smul.u32 16, %s27
        $region48: #{sim_info_forward.4} parent=35 // pred_fallthru
          _
        // Predicated region
        $region49: #{sim_info_forward.4} parent=35 // pred_check
          %p3171 = pneg %p217
        $region50: #{sim_info_forward.4} parent=35 // pred_check_branch
          %3173 = sbr.rel (%p3171) target = $region52
        $region51: #{sim_info_forward.4} parent=35 // pred_region
          %s3174 = smul.u32 16, %s27
        $region52: #{sim_info_forward.4} parent=35 // pred_fallthru
          _
        // Predicated region
        $region53: #{sim_info_forward.4} parent=35 // pred_check
          %p3175 = pneg %p243
        $region54: #{sim_info_forward.4} parent=35 // pred_check_branch
          %3177 = sbr.rel (%p3175) target = $region56
        $region55: #{sim_info_forward.4} parent=35 // pred_region
          %s3178 = smul.u32 16, %s27
        $region56: #{sim_info_forward.4} parent=35 // pred_fallthru
          _
        // Predicated region
        $region57: #{sim_info_forward.4} parent=35 // pred_check
          %p3179 = pneg %p269
        $region58: #{sim_info_forward.4} parent=35 // pred_check_branch
          %3181 = sbr.rel (%p3179) target = $region60
        $region59: #{sim_info_forward.4} parent=35 // pred_region
          %s3182 = smul.u32 16, %s27
        $region60: #{sim_info_forward.4} parent=35 // pred_fallthru
          _
      $region36: #{sim_info_forward.4} parent=5 // pred_fallthru
        _
      %p3183 = scmp.le.s32.totalorder 2, %s22
      // Predicated region
      $region61: #{sim_info_forward.4} parent=5 // pred_check
        %p3184 = pneg %p3183
      $region62: #{sim_info_forward.4} parent=5 // pred_check_branch
        %3186 = sbr.rel (%p3184) target = $region64
      $region63: #{sim_info_forward.4} parent=5 // pred_region
        %s3187 = ssub.s32 %s22, 2
        // Predicated region
        $region65: #{sim_info_forward.4} parent=63 // pred_check
          %p3188 = pneg %p145
        $region66: #{sim_info_forward.4} parent=63 // pred_check_branch
          %3190 = sbr.rel (%p3188) target = $region68
        $region67: #{sim_info_forward.4} parent=63 // pred_region
          %s3191 = sand.u32 %s130, 1
          %s3192 = scalar_lea.sflag [#allocation3], %s3191
          %s3193 = sand.u32 %s130, 1
          %s3194 = smul.addr %s3193, 128
          %s3195 = scalar_lea.vmem [#allocation2], %s3194
          %3197 = dma.done %s3192, 2048
        $region68: #{sim_info_forward.4} parent=63 // pred_fallthru
          _
        // Predicated region
        $region69: #{sim_info_forward.4} parent=63 // pred_check
          %p3198 = pneg %p171
        $region70: #{sim_info_forward.4} parent=63 // pred_check_branch
          %3200 = sbr.rel (%p3198) target = $region72
        $region71: #{sim_info_forward.4} parent=63 // pred_region
          %s3201 = sand.u32 %s156, 1
          %s3202 = scalar_lea.sflag [#allocation5], %s3201
          %s3203 = sand.u32 %s156, 1
          %s3204 = smul.addr %s3203, 128
          %s3205 = scalar_lea.vmem [#allocation4], %s3204
          %3207 = dma.done %s3202, 2048
        $region72: #{sim_info_forward.4} parent=63 // pred_fallthru
          _
        // Predicated region
        $region73: #{sim_info_forward.4} parent=63 // pred_check
          %p3208 = pneg %p197
        $region74: #{sim_info_forward.4} parent=63 // pred_check_branch
          %3210 = sbr.rel (%p3208) target = $region76
        $region75: #{sim_info_forward.4} parent=63 // pred_region
          %s3211 = smul.u32 16, %s28
          %p3212 = scmp.lt.s32.totalorder %s3211, 31
          %s3213 = scalar_select %p3212, %s3211, 31
          %s3214 = smul.addr %s3213, 2
          %s3215 = smul.addr %s3214, 8
          %s3216 = scalar_lea.vmem %s6, %s3215
        $region76: #{sim_info_forward.4} parent=63 // pred_fallthru
          _
        // Predicated region
        $region77: #{sim_info_forward.4} parent=63 // pred_check
          %p3217 = pneg %p223
        $region78: #{sim_info_forward.4} parent=63 // pred_check_branch
          %3219 = sbr.rel (%p3217) target = $region80
        $region79: #{sim_info_forward.4} parent=63 // pred_region
          %s3220 = smul.u32 16, %s28
          %p3221 = scmp.lt.s32.totalorder %s3220, 31
          %s3222 = scalar_select %p3221, %s3220, 31
          %s3223 = smul.addr %s3222, 2
          %s3224 = smul.addr %s3223, 8
          %s3225 = scalar_lea.vmem %s7, %s3224
        $region80: #{sim_info_forward.4} parent=63 // pred_fallthru
          _
        // Predicated region
        $region81: #{sim_info_forward.4} parent=63 // pred_check
          %p3226 = pneg %p249
        $region82: #{sim_info_forward.4} parent=63 // pred_check_branch
          %3228 = sbr.rel (%p3226) target = $region84
        $region83: #{sim_info_forward.4} parent=63 // pred_region
          %s3229 = smul.u32 16, %s28
          %p3230 = scmp.lt.s32.totalorder %s3229, 31
          %s3231 = scalar_select %p3230, %s3229, 31
          %s3232 = smul.addr %s3231, 8
          %s3233 = scalar_lea.vmem %s8, %s3232
        $region84: #{sim_info_forward.4} parent=63 // pred_fallthru
          _
        // Predicated region
        $region85: #{sim_info_forward.4} parent=63 // pred_check
          %p3234 = pneg %p275
        $region86: #{sim_info_forward.4} parent=63 // pred_check_branch
          %3236 = sbr.rel (%p3234) target = $region88
        $region87: #{sim_info_forward.4} parent=63 // pred_region
          %s3237 = smul.u32 16, %s28
          %p3238 = scmp.lt.s32.totalorder %s3237, 31
          %s3239 = scalar_select %p3238, %s3237, 31
          %s3240 = smul.addr %s3239, 8
          %s3241 = scalar_lea.vmem %s9, %s3240
        $region88: #{sim_info_forward.4} parent=63 // pred_fallthru
          _
      $region64: #{sim_info_forward.4} parent=5 // pred_fallthru
        _
    $region6: #{sim_info_forward.4} parent=1 // loop_footer
      %s26 = sadd.s32 1, %s22
    $region7: #{sim_info_forward.4} parent=1 // loop_footer_branch
      %21 = sbr.rel target = $region3
    $region8: #{sim_info_forward.4} parent=1 // loop_exit
      _
    %3242 = vsyncpa [#allocation3], 1
    %s3243 = scalar_lea.sflag [#allocation3], 1
    %3244 = vsyncpa %s3243, 1
    %3245 = vsyncpa [#allocation5], 1
    %s3246 = scalar_lea.sflag [#allocation5], 1
    %3247 = vsyncpa %s3246, 1

// kernel: sim_info_forward.5
$region0: #{sim_info_forward.5}
  #allocation0 [shape = 'u32[]', space=smem, size = 0x4, offset = 0x4, fixed_abs, tag = 'smem constant byte address 0x4 - core index']
  #allocation1 [shape = 'u32[72,128]{1,0:T(1,128)}', space=vmem, size = 0x9000, scoped, tag = 'internal scratch']
  %s0 = inlined_call_operand.vmem [shape: f32[256,256], index: 0, kind: input, shape index: {}]
  %s1 = inlined_call_operand.vmem [shape: f32[256,1], index: 1, kind: input, shape index: {}]
  %s2 = inlined_call_operand.vmem [shape: f32[256,256], index: 2, kind: input, shape index: {}]
  %s3 = inlined_call_operand.vmem [shape: f32[256,1], index: 3, kind: input, shape index: {}]
  %s4 = inlined_call_operand.hbm [shape: f32[256,256], index: 4, kind: output, shape index: {}]
  %s5 = sld [smem:[#allocation0]]
  $region49: #{sim_info_forward.5} parent=0
    _
  %s7 = ssub.s32 1, %s5
  %s8 = scalar_select 0, %s7, %s5
  $region1: #{sim_info_forward.5} parent=0
    #allocation2 [shape = 'u8[262144]{0}', space=vmem, size = 0x40000, scoped, tag = 'output window, operand 0']
    #allocation3 [shape = 's32[2]{0}', space=sflag, size = 0x8, scoped, tag = 'scoped memory for sim_info_forward.5']
    %9 = vsyncpa [#allocation3], 0
    %s10 = scalar_lea.sflag [#allocation3], 1
    %11 = vsyncpa %s10, 0
    loop: start=0, step=1, limit=4
    $region2: #{sim_info_forward.5} parent=1 // loop_pre_header
      _
    $region3: #{sim_info_forward.5} parent=1 // loop_header
      %s13 = sphi 0, %s17
      %p14 = scmp.ge.s32.totalorder %s13, 4
      %s23 = sphi 0, %s25
      %s26 = sphi 0, %s23
      %s27 = sphi 0, %s26
      %s43 = sphi 0, %s27
      %s49 = sphi 0, %s51
      %s52 = sphi 0, %s49
      %s53 = sphi 0, %s52
      %s69 = sphi 0, %s53
      %s75 = sphi 0, %s77
      %s78 = sphi 0, %s75
      %s79 = sphi 0, %s78
      %s95 = sphi 0, %s79
      %s101 = sphi 0, %s103
      %s104 = sphi 0, %s101
      %s105 = sphi 0, %s104
      %s121 = sphi 0, %s105
      %s127 = sphi 0, %s129
      %s130 = sphi 0, %s127
      %s131 = sphi 0, %s130
      %s147 = sphi 0, %s131
    $region4: #{sim_info_forward.5} parent=1 // loop_header_branch
      %16 = sbr.rel (%p14) target = $region8
    $region5: #{sim_info_forward.5} parent=1 // loop_body
      %s18 = ssub.s32 %s13, 1
      %s19 = ssub.s32 %s13, 2
      %s20 = sadd.s32 %s13, 1
      %s21 = ssub.s32 %s13, %s20
      %p22 = scmp.eq.s32.totalorder %s21, 0
      %s24 = sadd.s32 %s23, 1
      %s25 = scalar_select %p22, %s23, %s24
      %p28 = pneg %p22
      %p29 = scmp.eq.s32.totalorder %s13, 1
      %p30 = por %p28, %p29
      %p31 = scmp.ne.s32.totalorder %s23, %s26
      %p32 = scmp.eq.s32.totalorder %s13, 0
      %p33 = por %p31, %p32
      %p34 = scmp.ne.s32.totalorder %s23, %s26
      %p35 = scmp.eq.s32.totalorder %s18, 1
      %p36 = por %p34, %p35
      %p37 = scmp.ne.s32.totalorder %s26, %s27
      %p38 = scmp.eq.s32.totalorder %s18, 0
      %p39 = por %p37, %p38
      %p40 = scmp.ne.s32.totalorder %s26, %s27
      %p41 = scmp.eq.s32.totalorder %s19, 1
      %p42 = por %p40, %p41
      %p44 = scmp.ne.s32.totalorder %s27, %s43
      %p45 = scmp.eq.s32.totalorder %s19, 0
      %p46 = por %p44, %p45
      %s47 = ssub.s32 %s13, %s20
      %p48 = scmp.eq.s32.totalorder %s47, 0
      %s50 = sadd.s32 %s49, 1
      %s51 = scalar_select %p48, %s49, %s50
      %p54 = pneg %p48
      %p55 = scmp.eq.s32.totalorder %s13, 1
      %p56 = por %p54, %p55
      %p57 = scmp.ne.s32.totalorder %s49, %s52
      %p58 = scmp.eq.s32.totalorder %s13, 0
      %p59 = por %p57, %p58
      %p60 = scmp.ne.s32.totalorder %s49, %s52
      %p61 = scmp.eq.s32.totalorder %s18, 1
      %p62 = por %p60, %p61
      %p63 = scmp.ne.s32.totalorder %s52, %s53
      %p64 = scmp.eq.s32.totalorder %s18, 0
      %p65 = por %p63, %p64
      %p66 = scmp.ne.s32.totalorder %s52, %s53
      %p67 = scmp.eq.s32.totalorder %s19, 1
      %p68 = por %p66, %p67
      %p70 = scmp.ne.s32.totalorder %s53, %s69
      %p71 = scmp.eq.s32.totalorder %s19, 0
      %p72 = por %p70, %p71
      %s73 = ssub.s32 %s13, %s20
      %p74 = scmp.eq.s32.totalorder %s73, 0
      %s76 = sadd.s32 %s75, 1
      %s77 = scalar_select %p74, %s75, %s76
      %p80 = pneg %p74
      %p81 = scmp.eq.s32.totalorder %s13, 1
      %p82 = por %p80, %p81
      %p83 = scmp.ne.s32.totalorder %s75, %s78
      %p84 = scmp.eq.s32.totalorder %s13, 0
      %p85 = por %p83, %p84
      %p86 = scmp.ne.s32.totalorder %s75, %s78
      %p87 = scmp.eq.s32.totalorder %s18, 1
      %p88 = por %p86, %p87
      %p89 = scmp.ne.s32.totalorder %s78, %s79
      %p90 = scmp.eq.s32.totalorder %s18, 0
      %p91 = por %p89, %p90
      %p92 = scmp.ne.s32.totalorder %s78, %s79
      %p93 = scmp.eq.s32.totalorder %s19, 1
      %p94 = por %p92, %p93
      %p96 = scmp.ne.s32.totalorder %s79, %s95
      %p97 = scmp.eq.s32.totalorder %s19, 0
      %p98 = por %p96, %p97
      %s99 = ssub.s32 %s13, %s20
      %p100 = scmp.eq.s32.totalorder %s99, 0
      %s102 = sadd.s32 %s101, 1
      %s103 = scalar_select %p100, %s101, %s102
      %p106 = pneg %p100
      %p107 = scmp.eq.s32.totalorder %s13, 1
      %p108 = por %p106, %p107
      %p109 = scmp.ne.s32.totalorder %s101, %s104
      %p110 = scmp.eq.s32.totalorder %s13, 0
      %p111 = por %p109, %p110
      %p112 = scmp.ne.s32.totalorder %s101, %s104
      %p113 = scmp.eq.s32.totalorder %s18, 1
      %p114 = por %p112, %p113
      %p115 = scmp.ne.s32.totalorder %s104, %s105
      %p116 = scmp.eq.s32.totalorder %s18, 0
      %p117 = por %p115, %p116
      %p118 = scmp.ne.s32.totalorder %s104, %s105
      %p119 = scmp.eq.s32.totalorder %s19, 1
      %p120 = por %p118, %p119
      %p122 = scmp.ne.s32.totalorder %s105, %s121
      %p123 = scmp.eq.s32.totalorder %s19, 0
      %p124 = por %p122, %p123
      %s125 = ssub.s32 %s13, %s20
      %p126 = scmp.eq.s32.totalorder %s125, 0
      %s128 = sadd.s32 %s127, 1
      %s129 = scalar_select %p126, %s127, %s128
      %p132 = pneg %p126
      %p133 = scmp.eq.s32.totalorder %s13, 1
      %p134 = por %p132, %p133
      %p135 = scmp.ne.s32.totalorder %s127, %s130
      %p136 = scmp.eq.s32.totalorder %s13, 0
      %p137 = por %p135, %p136
      %p138 = scmp.ne.s32.totalorder %s127, %s130
      %p139 = scmp.eq.s32.totalorder %s18, 1
      %p140 = por %p138, %p139
      %p141 = scmp.ne.s32.totalorder %s130, %s131
      %p142 = scmp.eq.s32.totalorder %s18, 0
      %p143 = por %p141, %p142
      %p144 = scmp.ne.s32.totalorder %s130, %s131
      %p145 = scmp.eq.s32.totalorder %s19, 1
      %p146 = por %p144, %p145
      %p148 = scmp.ne.s32.totalorder %s131, %s147
      %p149 = scmp.eq.s32.totalorder %s19, 0
      %p150 = por %p148, %p149
      %p151 = scmp.le.s32.totalorder 1, %s13
      %p152 = scmp.lt.s32.totalorder %s13, 3
      %p153 = pnand %p151, %p152
      %p154 = pneg %p153
      // Predicated region
      $region9: #{sim_info_forward.5} parent=5 // pred_check
        _
      $region10: #{sim_info_forward.5} parent=5 // pred_check_branch
        %156 = sbr.rel (%p153) target = $region12
      $region11: #{sim_info_forward.5} parent=5 // pred_region
        %s157 = ssub.s32 %s13, 1
      $region12: #{sim_info_forward.5} parent=5 // pred_fallthru
        _
      %p158 = scmp.lt.s32.totalorder %s13, 2
      // Predicated region
      $region13: #{sim_info_forward.5} parent=5 // pred_check
        %p159 = pneg %p158
      $region14: #{sim_info_forward.5} parent=5 // pred_check_branch
        %161 = sbr.rel (%p159) target = $region16
      $region15: #{sim_info_forward.5} parent=5 // pred_region
        // Predicated region
        $region17: #{sim_info_forward.5} parent=15 // pred_check
          %p162 = pneg %p33
        $region18: #{sim_info_forward.5} parent=15 // pred_check_branch
          %164 = sbr.rel (%p162) target = $region20
        $region19: #{sim_info_forward.5} parent=15 // pred_region
          %s165 = smul.u32 16, %s13
          %p166 = scmp.lt.s32.totalorder %s165, 31
          %s167 = scalar_select %p166, %s165, 31
          %s168 = smul.addr %s167, 2
          %s169 = smul.addr %s168, 8
          %s170 = scalar_lea.vmem %s0, %s169
          %s171 = smul.u32 16, %s13
        $region20: #{sim_info_forward.5} parent=15 // pred_fallthru
          _
        // Predicated region
        $region21: #{sim_info_forward.5} parent=15 // pred_check
          %p172 = pneg %p59
        $region22: #{sim_info_forward.5} parent=15 // pred_check_branch
          %174 = sbr.rel (%p172) target = $region24
        $region23: #{sim_info_forward.5} parent=15 // pred_region
          %s175 = smul.u32 16, %s13
          %p176 = scmp.lt.s32.totalorder %s175, 31
          %s177 = scalar_select %p176, %s175, 31
          %s178 = smul.addr %s177, 8
          %s179 = scalar_lea.vmem %s1, %s178
          %s180 = smul.u32 16, %s13
        $region24: #{sim_info_forward.5} parent=15 // pred_fallthru
          _
        // Predicated region
        $region25: #{sim_info_forward.5} parent=15 // pred_check
          %p181 = pneg %p85
        $region26: #{sim_info_forward.5} parent=15 // pred_check_branch
          %183 = sbr.rel (%p181) target = $region28
        $region27: #{sim_info_forward.5} parent=15 // pred_region
          %s184 = smul.u32 16, %s13
          %p185 = scmp.lt.s32.totalorder %s184, 31
          %s186 = scalar_select %p185, %s184, 31
          %s187 = smul.addr %s186, 2
          %s188 = smul.addr %s187, 8
          %s189 = scalar_lea.vmem %s2, %s188
          %s190 = smul.u32 16, %s13
        $region28: #{sim_info_forward.5} parent=15 // pred_fallthru
          _
        // Predicated region
        $region29: #{sim_info_forward.5} parent=15 // pred_check
          %p191 = pneg %p111
        $region30: #{sim_info_forward.5} parent=15 // pred_check_branch
          %193 = sbr.rel (%p191) target = $region32
        $region31: #{sim_info_forward.5} parent=15 // pred_region
          %s194 = smul.u32 16, %s13
          %p195 = scmp.lt.s32.totalorder %s194, 31
          %s196 = scalar_select %p195, %s194, 31
          %s197 = smul.addr %s196, 8
          %s198 = scalar_lea.vmem %s3, %s197
          %s199 = smul.u32 16, %s13
        $region32: #{sim_info_forward.5} parent=15 // pred_fallthru
          _
      $region16: #{sim_info_forward.5} parent=5 // pred_fallthru
        _
      %p200 = scmp.le.s32.totalorder 1, %s13
      %p201 = scmp.lt.s32.totalorder %s13, 3
      %p202 = pnand %p200, %p201
      %p203 = pneg %p202
      // Predicated region
      $region33: #{sim_info_forward.5} parent=5 // pred_check
        _
      $region34: #{sim_info_forward.5} parent=5 // pred_check_branch
        %205 = sbr.rel (%p202) target = $region36
      $region35: #{sim_info_forward.5} parent=5 // pred_region
        %s206 = ssub.s32 %s13, 1
        %s207 = smul.u32 16, %s18
        %p208 = scmp.lt.s32.totalorder %s207, 31
        %s209 = scalar_select %p208, %s207, 31
        %s210 = smul.addr %s209, 2
        %s211 = smul.addr %s210, 8
        %s212 = scalar_lea.vmem %s0, %s211
        %p213 = pneg %p39
        %p214 = pneg %p36
        %s215 = smul.u32 16, %s18
        %p216 = scmp.lt.s32.totalorder %s215, 31
        %s217 = scalar_select %p216, %s215, 31
        %s218 = smul.addr %s217, 8
        %s219 = scalar_lea.vmem %s1, %s218
        %p220 = pneg %p65
        %p221 = pneg %p62
        %s222 = smul.u32 16, %s18
        %p223 = scmp.lt.s32.totalorder %s222, 31
        %s224 = scalar_select %p223, %s222, 31
        %s225 = smul.addr %s224, 2
        %s226 = smul.addr %s225, 8
        %s227 = scalar_lea.vmem %s2, %s226
        %p228 = pneg %p91
        %p229 = pneg %p88
        %s230 = smul.u32 16, %s18
        %p231 = scmp.lt.s32.totalorder %s230, 31
        %s232 = scalar_select %p231, %s230, 31
        %s233 = smul.addr %s232, 8
        %s234 = scalar_lea.vmem %s3, %s233
        %p235 = pneg %p117
        %p236 = pneg %p114
        %p237 = pneg %p143
        %p238 = pneg %p140
        %s239 = sand.u32 %s130, 1
        %s240 = scalar_lea.sflag [#allocation3], %s239
        %s241 = sand.u32 %s130, 1
        %s242 = smul.addr %s241, 256
        %s243 = scalar_lea.vmem [#allocation2], %s242
        %s244 = smul.u32 16, %s18
        %p245 = scmp.lt.s32.totalorder %s244, 31
        %s246 = scalar_select %p245, %s244, 31
        %s247 = smul.addr %s246, 2
        %s248 = smul.addr %s247, 8
        %s249 = scalar_lea.vmem %s0, %s248
        %s250 = smul.u32 16, %s18
        %s251 = smul.u32 16, %s18
        %p252 = scmp.lt.s32.totalorder %s251, 31
        %s253 = scalar_select %p252, %s251, 31
        %s254 = smul.addr %s253, 8
        %s255 = scalar_lea.vmem %s1, %s254
        %s256 = smul.u32 16, %s18
        %s257 = smul.u32 16, %s18
        %p258 = scmp.lt.s32.totalorder %s257, 31
        %s259 = scalar_select %p258, %s257, 31
        %s260 = smul.addr %s259, 2
        %s261 = smul.addr %s260, 8
        %s262 = scalar_lea.vmem %s2, %s261
        %s263 = smul.u32 16, %s18
        %s264 = smul.u32 16, %s18
        %p265 = scmp.lt.s32.totalorder %s264, 31
        %s266 = scalar_select %p265, %s264, 31
        %s267 = smul.addr %s266, 8
        %s268 = scalar_lea.vmem %s3, %s267
        %s269 = smul.u32 16, %s18
        %s270 = smul.u32 16, %s18
        %v271 = vld [vmem:[%s249] sm:$0xff]
        %v272 = vld [vmem:[%s249 + $0x8] sm:$0xff]
        %v273 = vld [vmem:[%s249 + $0x10] sm:$0xff]
        %v274 = vld [vmem:[%s249 + $0x18] sm:$0xff]
        %v275 = vld [vmem:[%s249 + $0x20] sm:$0xff]
        %v276 = vld [vmem:[%s249 + $0x28] sm:$0xff]
        %v277 = vld [vmem:[%s249 + $0x30] sm:$0xff]
        %v278 = vld [vmem:[%s249 + $0x38] sm:$0xff]
        %v279 = vld [vmem:[%s249 + $0x40] sm:$0xff]
        %v280 = vld [vmem:[%s249 + $0x48] sm:$0xff]
        %v281 = vld [vmem:[%s249 + $0x50] sm:$0xff]
        %v282 = vld [vmem:[%s249 + $0x58] sm:$0xff]
        %v283 = vld [vmem:[%s249 + $0x60] sm:$0xff]
        %v284 = vld [vmem:[%s249 + $0x68] sm:$0xff]
        %v285 = vld [vmem:[%s249 + $0x70] sm:$0xff]
        %v286 = vld [vmem:[%s249 + $0x78] sm:$0xff]
        %v287 = vld [vmem:[%s249 + $0x80] sm:$0xff]
        %v288 = vld [vmem:[%s249 + $0x88] sm:$0xff]
        %v289 = vld [vmem:[%s249 + $0x90] sm:$0xff]
        %v290 = vld [vmem:[%s249 + $0x98] sm:$0xff]
        %v291 = vld [vmem:[%s249 + $0xa0] sm:$0xff]
        %v292 = vld [vmem:[%s249 + $0xa8] sm:$0xff]
        %v293 = vld [vmem:[%s249 + $0xb0] sm:$0xff]
        %v294 = vld [vmem:[%s249 + $0xb8] sm:$0xff]
        %v295 = vld [vmem:[%s249 + $0xc0] sm:$0xff]
        %v296 = vld [vmem:[%s249 + $0xc8] sm:$0xff]
        %v297 = vld [vmem:[%s249 + $0xd0] sm:$0xff]
        %v298 = vld [vmem:[%s249 + $0xd8] sm:$0xff]
        %v299 = vld [vmem:[%s249 + $0xe0] sm:$0xff]
        %v300 = vld [vmem:[%s249 + $0xe8] sm:$0xff]
        %v301 = vld [vmem:[%s249 + $0xf0] sm:$0xff]
        %v302 = vld [vmem:[%s249 + $0xf8] sm:$0xff]
        %v303 = vld [vmem:[%s255] sm:$0xff]
        %v304 = vld [vmem:[%s255 + $0x8] sm:$0xff]
        %v305 = vld [vmem:[%s255 + $0x10] sm:$0xff]
        %v306 = vld [vmem:[%s255 + $0x18] sm:$0xff]
        %v307 = vld [vmem:[%s255 + $0x20] sm:$0xff]
        %v308 = vld [vmem:[%s255 + $0x28] sm:$0xff]
        %v309 = vld [vmem:[%s255 + $0x30] sm:$0xff]
        %v310 = vld [vmem:[%s255 + $0x38] sm:$0xff]
        %v311 = vld [vmem:[%s255 + $0x40] sm:$0xff]
        %v312 = vld [vmem:[%s255 + $0x48] sm:$0xff]
        %v313 = vld [vmem:[%s255 + $0x50] sm:$0xff]
        %v314 = vld [vmem:[%s255 + $0x58] sm:$0xff]
        %v315 = vld [vmem:[%s255 + $0x60] sm:$0xff]
        %v316 = vld [vmem:[%s255 + $0x68] sm:$0xff]
        %v317 = vld [vmem:[%s255 + $0x70] sm:$0xff]
        %v318 = vld [vmem:[%s255 + $0x78] sm:$0xff]
        %320 = vset.pattern.permute.xlu0 0
        %321 = vperm.xlu0 %320, %v303
        %v322 = vpop.permute.xlu0 %321
        %325 = vset.pattern.permute.xlu0 0
        %326 = vperm.xlu0 %325, %v304
        %v327 = vpop.permute.xlu0 %326
        %330 = vset.pattern.permute.xlu0 0
        %331 = vperm.xlu0 %330, %v305
        %v332 = vpop.permute.xlu0 %331
        %335 = vset.pattern.permute.xlu0 0
        %336 = vperm.xlu0 %335, %v306
        %v337 = vpop.permute.xlu0 %336
        %340 = vset.pattern.permute.xlu0 0
        %341 = vperm.xlu0 %340, %v307
        %v342 = vpop.permute.xlu0 %341
        %345 = vset.pattern.permute.xlu0 0
        %346 = vperm.xlu0 %345, %v308
        %v347 = vpop.permute.xlu0 %346
        %350 = vset.pattern.permute.xlu0 0
        %351 = vperm.xlu0 %350, %v309
        %v352 = vpop.permute.xlu0 %351
        %355 = vset.pattern.permute.xlu0 0
        %356 = vperm.xlu0 %355, %v310
        %v357 = vpop.permute.xlu0 %356
        %360 = vset.pattern.permute.xlu0 0
        %361 = vperm.xlu0 %360, %v311
        %v362 = vpop.permute.xlu0 %361
        %365 = vset.pattern.permute.xlu0 0
        %366 = vperm.xlu0 %365, %v312
        %v367 = vpop.permute.xlu0 %366
        %370 = vset.pattern.permute.xlu0 0
        %371 = vperm.xlu0 %370, %v313
        %v372 = vpop.permute.xlu0 %371
        %375 = vset.pattern.permute.xlu0 0
        %376 = vperm.xlu0 %375, %v314
        %v377 = vpop.permute.xlu0 %376
        %380 = vset.pattern.permute.xlu0 0
        %381 = vperm.xlu0 %380, %v315
        %v382 = vpop.permute.xlu0 %381
        %385 = vset.pattern.permute.xlu0 0
        %386 = vperm.xlu0 %385, %v316
        %v387 = vpop.permute.xlu0 %386
        %390 = vset.pattern.permute.xlu0 0
        %391 = vperm.xlu0 %390, %v317
        %v392 = vpop.permute.xlu0 %391
        %395 = vset.pattern.permute.xlu0 0
        %396 = vperm.xlu0 %395, %v318
        %v397 = vpop.permute.xlu0 %396
        %v399 = vmul.f32 %v271, %v322
        %v400 = vmul.f32 %v272, %v322
        %v401 = vmul.f32 %v273, %v327
        %v402 = vmul.f32 %v274, %v327
        %v403 = vmul.f32 %v275, %v332
        %v404 = vmul.f32 %v276, %v332
        %v405 = vmul.f32 %v277, %v337
        %v406 = vmul.f32 %v278, %v337
        %v407 = vmul.f32 %v279, %v342
        %v408 = vmul.f32 %v280, %v342
        %v409 = vmul.f32 %v281, %v347
        %v410 = vmul.f32 %v282, %v347
        %v411 = vmul.f32 %v283, %v352
        %v412 = vmul.f32 %v284, %v352
        %v413 = vmul.f32 %v285, %v357
        %v414 = vmul.f32 %v286, %v357
        %v415 = vmul.f32 %v287, %v362
        %v416 = vmul.f32 %v288, %v362
        %v417 = vmul.f32 %v289, %v367
        %v418 = vmul.f32 %v290, %v367
        %v419 = vmul.f32 %v291, %v372
        %v420 = vmul.f32 %v292, %v372
        %v421 = vmul.f32 %v293, %v377
        %v422 = vmul.f32 %v294, %v377
        %v423 = vmul.f32 %v295, %v382
        %v424 = vmul.f32 %v296, %v382
        %v425 = vmul.f32 %v297, %v387
        %v426 = vmul.f32 %v298, %v387
        %v427 = vmul.f32 %v299, %v392
        %v428 = vmul.f32 %v300, %v392
        %v429 = vmul.f32 %v301, %v397
        %v430 = vmul.f32 %v302, %v397
        %v431 = vld [vmem:[%s262] sm:$0xff]
        %v432 = vld [vmem:[%s262 + $0x8] sm:$0xff]
        %v433 = vld [vmem:[%s262 + $0x10] sm:$0xff]
        %v434 = vld [vmem:[%s262 + $0x18] sm:$0xff]
        %v435 = vld [vmem:[%s262 + $0x20] sm:$0xff]
        %v436 = vld [vmem:[%s262 + $0x28] sm:$0xff]
        %v437 = vld [vmem:[%s262 + $0x30] sm:$0xff]
        %v438 = vld [vmem:[%s262 + $0x38] sm:$0xff]
        %v439 = vld [vmem:[%s262 + $0x40] sm:$0xff]
        %v440 = vld [vmem:[%s262 + $0x48] sm:$0xff]
        %v441 = vld [vmem:[%s262 + $0x50] sm:$0xff]
        %v442 = vld [vmem:[%s262 + $0x58] sm:$0xff]
        %v443 = vld [vmem:[%s262 + $0x60] sm:$0xff]
        %v444 = vld [vmem:[%s262 + $0x68] sm:$0xff]
        %v445 = vld [vmem:[%s262 + $0x70] sm:$0xff]
        %v446 = vld [vmem:[%s262 + $0x78] sm:$0xff]
        %v447 = vld [vmem:[%s262 + $0x80] sm:$0xff]
        %v448 = vld [vmem:[%s262 + $0x88] sm:$0xff]
        %v449 = vld [vmem:[%s262 + $0x90] sm:$0xff]
        %v450 = vld [vmem:[%s262 + $0x98] sm:$0xff]
        %v451 = vld [vmem:[%s262 + $0xa0] sm:$0xff]
        %v452 = vld [vmem:[%s262 + $0xa8] sm:$0xff]
        %v453 = vld [vmem:[%s262 + $0xb0] sm:$0xff]
        %v454 = vld [vmem:[%s262 + $0xb8] sm:$0xff]
        %v455 = vld [vmem:[%s262 + $0xc0] sm:$0xff]
        %v456 = vld [vmem:[%s262 + $0xc8] sm:$0xff]
        %v457 = vld [vmem:[%s262 + $0xd0] sm:$0xff]
        %v458 = vld [vmem:[%s262 + $0xd8] sm:$0xff]
        %v459 = vld [vmem:[%s262 + $0xe0] sm:$0xff]
        %v460 = vld [vmem:[%s262 + $0xe8] sm:$0xff]
        %v461 = vld [vmem:[%s262 + $0xf0] sm:$0xff]
        %v462 = vld [vmem:[%s262 + $0xf8] sm:$0xff]
        %v463 = vld [vmem:[%s268] sm:$0xff]
        %v464 = vld [vmem:[%s268 + $0x8] sm:$0xff]
        %v465 = vld [vmem:[%s268 + $0x10] sm:$0xff]
        %v466 = vld [vmem:[%s268 + $0x18] sm:$0xff]
        %v467 = vld [vmem:[%s268 + $0x20] sm:$0xff]
        %v468 = vld [vmem:[%s268 + $0x28] sm:$0xff]
        %v469 = vld [vmem:[%s268 + $0x30] sm:$0xff]
        %v470 = vld [vmem:[%s268 + $0x38] sm:$0xff]
        %v471 = vld [vmem:[%s268 + $0x40] sm:$0xff]
        %v472 = vld [vmem:[%s268 + $0x48] sm:$0xff]
        %v473 = vld [vmem:[%s268 + $0x50] sm:$0xff]
        %v474 = vld [vmem:[%s268 + $0x58] sm:$0xff]
        %v475 = vld [vmem:[%s268 + $0x60] sm:$0xff]
        %v476 = vld [vmem:[%s268 + $0x68] sm:$0xff]
        %v477 = vld [vmem:[%s268 + $0x70] sm:$0xff]
        %v478 = vld [vmem:[%s268 + $0x78] sm:$0xff]
        %480 = vset.pattern.permute.xlu0 0
        %481 = vperm.xlu0 %480, %v463
        %v482 = vpop.permute.xlu0 %481
        %485 = vset.pattern.permute.xlu0 0
        %486 = vperm.xlu0 %485, %v464
        %v487 = vpop.permute.xlu0 %486
        %490 = vset.pattern.permute.xlu0 0
        %491 = vperm.xlu0 %490, %v465
        %v492 = vpop.permute.xlu0 %491
        %495 = vset.pattern.permute.xlu0 0
        %496 = vperm.xlu0 %495, %v466
        %v497 = vpop.permute.xlu0 %496
        %500 = vset.pattern.permute.xlu0 0
        %501 = vperm.xlu0 %500, %v467
        %v502 = vpop.permute.xlu0 %501
        %505 = vset.pattern.permute.xlu0 0
        %506 = vperm.xlu0 %505, %v468
        %v507 = vpop.permute.xlu0 %506
        %510 = vset.pattern.permute.xlu0 0
        %511 = vperm.xlu0 %510, %v469
        %v512 = vpop.permute.xlu0 %511
        %515 = vset.pattern.permute.xlu0 0
        %516 = vperm.xlu0 %515, %v470
        %v517 = vpop.permute.xlu0 %516
        %520 = vset.pattern.permute.xlu0 0
        %521 = vperm.xlu0 %520, %v471
        %v522 = vpop.permute.xlu0 %521
        %525 = vset.pattern.permute.xlu0 0
        %526 = vperm.xlu0 %525, %v472
        %v527 = vpop.permute.xlu0 %526
        %530 = vset.pattern.permute.xlu0 0
        %531 = vperm.xlu0 %530, %v473
        %v532 = vpop.permute.xlu0 %531
        %535 = vset.pattern.permute.xlu0 0
        %536 = vperm.xlu0 %535, %v474
        %v537 = vpop.permute.xlu0 %536
        %540 = vset.pattern.permute.xlu0 0
        %541 = vperm.xlu0 %540, %v475
        %v542 = vpop.permute.xlu0 %541
        %545 = vset.pattern.permute.xlu0 0
        %546 = vperm.xlu0 %545, %v476
        %v547 = vpop.permute.xlu0 %546
        %550 = vset.pattern.permute.xlu0 0
        %551 = vperm.xlu0 %550, %v477
        %v552 = vpop.permute.xlu0 %551
        %555 = vset.pattern.permute.xlu0 0
        %556 = vperm.xlu0 %555, %v478
        %v557 = vpop.permute.xlu0 %556
        %v559 = vmul.f32 %v431, %v482
        %v560 = vmul.f32 %v432, %v482
        %v561 = vmul.f32 %v433, %v487
        %v562 = vmul.f32 %v434, %v487
        %v563 = vmul.f32 %v435, %v492
        %v564 = vmul.f32 %v436, %v492
        %v565 = vmul.f32 %v437, %v497
        %v566 = vmul.f32 %v438, %v497
        %v567 = vmul.f32 %v439, %v502
        %v568 = vmul.f32 %v440, %v502
        %v569 = vmul.f32 %v441, %v507
        %v570 = vmul.f32 %v442, %v507
        %v571 = vmul.f32 %v443, %v512
        %v572 = vmul.f32 %v444, %v512
        %v573 = vmul.f32 %v445, %v517
        %v574 = vmul.f32 %v446, %v517
        %v575 = vmul.f32 %v447, %v522
        %v576 = vmul.f32 %v448, %v522
        %v577 = vmul.f32 %v449, %v527
        %v578 = vmul.f32 %v450, %v527
        %v579 = vmul.f32 %v451, %v532
        %v580 = vmul.f32 %v452, %v532
        %v581 = vmul.f32 %v453, %v537
        %v582 = vmul.f32 %v454, %v537
        %v583 = vmul.f32 %v455, %v542
        %v584 = vmul.f32 %v456, %v542
        %v585 = vmul.f32 %v457, %v547
        %v586 = vmul.f32 %v458, %v547
        %v587 = vmul.f32 %v459, %v552
        %v588 = vmul.f32 %v460, %v552
        %v589 = vmul.f32 %v461, %v557
        %v590 = vmul.f32 %v462, %v557
        %v591 = vadd.f32 %v399, %v559
        %v592 = vadd.f32 %v400, %v560
        %v593 = vadd.f32 %v401, %v561
        %v594 = vadd.f32 %v402, %v562
        %v595 = vadd.f32 %v403, %v563
        %v596 = vadd.f32 %v404, %v564
        %v597 = vadd.f32 %v405, %v565
        %v598 = vadd.f32 %v406, %v566
        %v599 = vadd.f32 %v407, %v567
        %v600 = vadd.f32 %v408, %v568
        %v601 = vadd.f32 %v409, %v569
        %v602 = vadd.f32 %v410, %v570
        %v603 = vadd.f32 %v411, %v571
        %v604 = vadd.f32 %v412, %v572
        %v605 = vadd.f32 %v413, %v573
        %v606 = vadd.f32 %v414, %v574
        %v607 = vadd.f32 %v415, %v575
        %v608 = vadd.f32 %v416, %v576
        %v609 = vadd.f32 %v417, %v577
        %v610 = vadd.f32 %v418, %v578
        %v611 = vadd.f32 %v419, %v579
        %v612 = vadd.f32 %v420, %v580
        %v613 = vadd.f32 %v421, %v581
        %v614 = vadd.f32 %v422, %v582
        %v615 = vadd.f32 %v423, %v583
        %v616 = vadd.f32 %v424, %v584
        %v617 = vadd.f32 %v425, %v585
        %v618 = vadd.f32 %v426, %v586
        %v619 = vadd.f32 %v427, %v587
        %v620 = vadd.f32 %v428, %v588
        %v621 = vadd.f32 %v429, %v589
        %v622 = vadd.f32 %v430, %v590
        %v623 = vmax.f32 %v591, %v592
        %624 = vmax.xlane.f32.xlu0 %v623
        %v625 = vpop.xlane.xlu0 %624
        %v626 = vmax.f32 %v593, %v594
        %627 = vmax.xlane.f32.xlu0 %v626
        %v628 = vpop.xlane.xlu0 %627
        %v629 = vmax.f32 %v595, %v596
        %630 = vmax.xlane.f32.xlu0 %v629
        %v631 = vpop.xlane.xlu0 %630
        %v632 = vmax.f32 %v597, %v598
        %633 = vmax.xlane.f32.xlu0 %v632
        %v634 = vpop.xlane.xlu0 %633
        %v635 = vmax.f32 %v599, %v600
        %636 = vmax.xlane.f32.xlu0 %v635
        %v637 = vpop.xlane.xlu0 %636
        %v638 = vmax.f32 %v601, %v602
        %639 = vmax.xlane.f32.xlu0 %v638
        %v640 = vpop.xlane.xlu0 %639
        %v641 = vmax.f32 %v603, %v604
        %642 = vmax.xlane.f32.xlu0 %v641
        %v643 = vpop.xlane.xlu0 %642
        %v644 = vmax.f32 %v605, %v606
        %645 = vmax.xlane.f32.xlu0 %v644
        %v646 = vpop.xlane.xlu0 %645
        %v647 = vmax.f32 %v607, %v608
        %648 = vmax.xlane.f32.xlu0 %v647
        %v649 = vpop.xlane.xlu0 %648
        %v650 = vmax.f32 %v609, %v610
        %651 = vmax.xlane.f32.xlu0 %v650
        %v652 = vpop.xlane.xlu0 %651
        %v653 = vmax.f32 %v611, %v612
        %654 = vmax.xlane.f32.xlu0 %v653
        %v655 = vpop.xlane.xlu0 %654
        %v656 = vmax.f32 %v613, %v614
        %657 = vmax.xlane.f32.xlu0 %v656
        %v658 = vpop.xlane.xlu0 %657
        %v659 = vmax.f32 %v615, %v616
        %660 = vmax.xlane.f32.xlu0 %v659
        %v661 = vpop.xlane.xlu0 %660
        %v662 = vmax.f32 %v617, %v618
        %663 = vmax.xlane.f32.xlu0 %v662
        %v664 = vpop.xlane.xlu0 %663
        %v665 = vmax.f32 %v619, %v620
        %666 = vmax.xlane.f32.xlu0 %v665
        %v667 = vpop.xlane.xlu0 %666
        %v668 = vmax.f32 %v621, %v622
        %669 = vmax.xlane.f32.xlu0 %v668
        %v670 = vpop.xlane.xlu0 %669
        %vm671 = vcmp.ge.f32.partialorder %v591, %v625
        %vm672 = vcmp.ge.f32.partialorder %v592, %v625
        %vm673 = vcmp.ge.f32.partialorder %v593, %v628
        %vm674 = vcmp.ge.f32.partialorder %v594, %v628
        %vm675 = vcmp.ge.f32.partialorder %v595, %v631
        %vm676 = vcmp.ge.f32.partialorder %v596, %v631
        %vm677 = vcmp.ge.f32.partialorder %v597, %v634
        %vm678 = vcmp.ge.f32.partialorder %v598, %v634
        %vm679 = vcmp.ge.f32.partialorder %v599, %v637
        %vm680 = vcmp.ge.f32.partialorder %v600, %v637
        %vm681 = vcmp.ge.f32.partialorder %v601, %v640
        %vm682 = vcmp.ge.f32.partialorder %v602, %v640
        %vm683 = vcmp.ge.f32.partialorder %v603, %v643
        %vm684 = vcmp.ge.f32.partialorder %v604, %v643
        %vm685 = vcmp.ge.f32.partialorder %v605, %v646
        %vm686 = vcmp.ge.f32.partialorder %v606, %v646
        %vm687 = vcmp.ge.f32.partialorder %v607, %v649
        %vm688 = vcmp.ge.f32.partialorder %v608, %v649
        %vm689 = vcmp.ge.f32.partialorder %v609, %v652
        %vm690 = vcmp.ge.f32.partialorder %v610, %v652
        %vm691 = vcmp.ge.f32.partialorder %v611, %v655
        %vm692 = vcmp.ge.f32.partialorder %v612, %v655
        %vm693 = vcmp.ge.f32.partialorder %v613, %v658
        %vm694 = vcmp.ge.f32.partialorder %v614, %v658
        %vm695 = vcmp.ge.f32.partialorder %v615, %v661
        %vm696 = vcmp.ge.f32.partialorder %v616, %v661
        %vm697 = vcmp.ge.f32.partialorder %v617, %v664
        %vm698 = vcmp.ge.f32.partialorder %v618, %v664
        %vm699 = vcmp.ge.f32.partialorder %v619, %v667
        %vm700 = vcmp.ge.f32.partialorder %v620, %v667
        %vm701 = vcmp.ge.f32.partialorder %v621, %v670
        %vm702 = vcmp.ge.f32.partialorder %v622, %v670
        %v703 = vsel %vm671, -inf, %v591
        %v704 = vsel %vm672, -inf, %v592
        %v705 = vsel %vm673, -inf, %v593
        %v706 = vsel %vm674, -inf, %v594
        %v707 = vsel %vm675, -inf, %v595
        %v708 = vsel %vm676, -inf, %v596
        %v709 = vsel %vm677, -inf, %v597
        %v710 = vsel %vm678, -inf, %v598
        %v711 = vsel %vm679, -inf, %v599
        %v712 = vsel %vm680, -inf, %v600
        %v713 = vsel %vm681, -inf, %v601
        %v714 = vsel %vm682, -inf, %v602
        %v715 = vsel %vm683, -inf, %v603
        %v716 = vsel %vm684, -inf, %v604
        %v717 = vsel %vm685, -inf, %v605
        %v718 = vsel %vm686, -inf, %v606
        %v719 = vsel %vm687, -inf, %v607
        %v720 = vsel %vm688, -inf, %v608
        %v721 = vsel %vm689, -inf, %v609
        %v722 = vsel %vm690, -inf, %v610
        %v723 = vsel %vm691, -inf, %v611
        %v724 = vsel %vm692, -inf, %v612
        %v725 = vsel %vm693, -inf, %v613
        %v726 = vsel %vm694, -inf, %v614
        %v727 = vsel %vm695, -inf, %v615
        %v728 = vsel %vm696, -inf, %v616
        %v729 = vsel %vm697, -inf, %v617
        %v730 = vsel %vm698, -inf, %v618
        %v731 = vsel %vm699, -inf, %v619
        %v732 = vsel %vm700, -inf, %v620
        %v733 = vsel %vm701, -inf, %v621
        %v734 = vsel %vm702, -inf, %v622
        %v735 = vmax.f32 %v703, %v704
        %736 = vmax.xlane.f32.xlu0 %v735
        %v737 = vpop.xlane.xlu0 %736
        %v738 = vmax.f32 %v705, %v706
        %739 = vmax.xlane.f32.xlu0 %v738
        %v740 = vpop.xlane.xlu0 %739
        %v741 = vmax.f32 %v707, %v708
        %742 = vmax.xlane.f32.xlu0 %v741
        %v743 = vpop.xlane.xlu0 %742
        %v744 = vmax.f32 %v709, %v710
        %745 = vmax.xlane.f32.xlu0 %v744
        %v746 = vpop.xlane.xlu0 %745
        %v747 = vmax.f32 %v711, %v712
        %748 = vmax.xlane.f32.xlu0 %v747
        %v749 = vpop.xlane.xlu0 %748
        %v750 = vmax.f32 %v713, %v714
        %751 = vmax.xlane.f32.xlu0 %v750
        %v752 = vpop.xlane.xlu0 %751
        %v753 = vmax.f32 %v715, %v716
        %754 = vmax.xlane.f32.xlu0 %v753
        %v755 = vpop.xlane.xlu0 %754
        %v756 = vmax.f32 %v717, %v718
        %757 = vmax.xlane.f32.xlu0 %v756
        %v758 = vpop.xlane.xlu0 %757
        %v759 = vmax.f32 %v719, %v720
        %760 = vmax.xlane.f32.xlu0 %v759
        %v761 = vpop.xlane.xlu0 %760
        %v762 = vmax.f32 %v721, %v722
        %763 = vmax.xlane.f32.xlu0 %v762
        %v764 = vpop.xlane.xlu0 %763
        %v765 = vmax.f32 %v723, %v724
        %766 = vmax.xlane.f32.xlu0 %v765
        %v767 = vpop.xlane.xlu0 %766
        %v768 = vmax.f32 %v725, %v726
        %769 = vmax.xlane.f32.xlu0 %v768
        %v770 = vpop.xlane.xlu0 %769
        %v771 = vmax.f32 %v727, %v728
        %772 = vmax.xlane.f32.xlu0 %v771
        %v773 = vpop.xlane.xlu0 %772
        %v774 = vmax.f32 %v729, %v730
        %775 = vmax.xlane.f32.xlu0 %v774
        %v776 = vpop.xlane.xlu0 %775
        %v777 = vmax.f32 %v731, %v732
        %778 = vmax.xlane.f32.xlu0 %v777
        %v779 = vpop.xlane.xlu0 %778
        %v780 = vmax.f32 %v733, %v734
        %781 = vmax.xlane.f32.xlu0 %v780
        %v782 = vpop.xlane.xlu0 %781
        %vm783 = vcmp.ge.f32.partialorder %v703, %v737
        %vm784 = vcmp.ge.f32.partialorder %v704, %v737
        %vm785 = vcmp.ge.f32.partialorder %v705, %v740
        %vm786 = vcmp.ge.f32.partialorder %v706, %v740
        %vm787 = vcmp.ge.f32.partialorder %v707, %v743
        %vm788 = vcmp.ge.f32.partialorder %v708, %v743
        %vm789 = vcmp.ge.f32.partialorder %v709, %v746
        %vm790 = vcmp.ge.f32.partialorder %v710, %v746
        %vm791 = vcmp.ge.f32.partialorder %v711, %v749
        %vm792 = vcmp.ge.f32.partialorder %v712, %v749
        %vm793 = vcmp.ge.f32.partialorder %v713, %v752
        %vm794 = vcmp.ge.f32.partialorder %v714, %v752
        %vm795 = vcmp.ge.f32.partialorder %v715, %v755
        %vm796 = vcmp.ge.f32.partialorder %v716, %v755
        %vm797 = vcmp.ge.f32.partialorder %v717, %v758
        %vm798 = vcmp.ge.f32.partialorder %v718, %v758
        %vm799 = vcmp.ge.f32.partialorder %v719, %v761
        %vm800 = vcmp.ge.f32.partialorder %v720, %v761
        %vm801 = vcmp.ge.f32.partialorder %v721, %v764
        %vm802 = vcmp.ge.f32.partialorder %v722, %v764
        %vm803 = vcmp.ge.f32.partialorder %v723, %v767
        %vm804 = vcmp.ge.f32.partialorder %v724, %v767
        %vm805 = vcmp.ge.f32.partialorder %v725, %v770
        %vm806 = vcmp.ge.f32.partialorder %v726, %v770
        %vm807 = vcmp.ge.f32.partialorder %v727, %v773
        %vm808 = vcmp.ge.f32.partialorder %v728, %v773
        %vm809 = vcmp.ge.f32.partialorder %v729, %v776
        %vm810 = vcmp.ge.f32.partialorder %v730, %v776
        %vm811 = vcmp.ge.f32.partialorder %v731, %v779
        %vm812 = vcmp.ge.f32.partialorder %v732, %v779
        %vm813 = vcmp.ge.f32.partialorder %v733, %v782
        %vm814 = vcmp.ge.f32.partialorder %v734, %v782
        %v815 = vsel %vm783, -inf, %v703
        %v816 = vsel %vm784, -inf, %v704
        %v817 = vsel %vm785, -inf, %v705
        %v818 = vsel %vm786, -inf, %v706
        %v819 = vsel %vm787, -inf, %v707
        %v820 = vsel %vm788, -inf, %v708
        %v821 = vsel %vm789, -inf, %v709
        %v822 = vsel %vm790, -inf, %v710
        %v823 = vsel %vm791, -inf, %v711
        %v824 = vsel %vm792, -inf, %v712
        %v825 = vsel %vm793, -inf, %v713
        %v826 = vsel %vm794, -inf, %v714
        %v827 = vsel %vm795, -inf, %v715
        %v828 = vsel %vm796, -inf, %v716
        %v829 = vsel %vm797, -inf, %v717
        %v830 = vsel %vm798, -inf, %v718
        %v831 = vsel %vm799, -inf, %v719
        %v832 = vsel %vm800, -inf, %v720
        %v833 = vsel %vm801, -inf, %v721
        %v834 = vsel %vm802, -inf, %v722
        %v835 = vsel %vm803, -inf, %v723
        %v836 = vsel %vm804, -inf, %v724
        %v837 = vsel %vm805, -inf, %v725
        %v838 = vsel %vm806, -inf, %v726
        %v839 = vsel %vm807, -inf, %v727
        %v840 = vsel %vm808, -inf, %v728
        %v841 = vsel %vm809, -inf, %v729
        %v842 = vsel %vm810, -inf, %v730
        %v843 = vsel %vm811, -inf, %v731
        %v844 = vsel %vm812, -inf, %v732
        %v845 = vsel %vm813, -inf, %v733
        %v846 = vsel %vm814, -inf, %v734
        %v847 = vmax.f32 %v815, %v816
        %848 = vmax.xlane.f32.xlu0 %v847
        %v849 = vpop.xlane.xlu0 %848
        %v850 = vmax.f32 %v817, %v818
        %851 = vmax.xlane.f32.xlu0 %v850
        %v852 = vpop.xlane.xlu0 %851
        %v853 = vmax.f32 %v819, %v820
        %854 = vmax.xlane.f32.xlu0 %v853
        %v855 = vpop.xlane.xlu0 %854
        %v856 = vmax.f32 %v821, %v822
        %857 = vmax.xlane.f32.xlu0 %v856
        %v858 = vpop.xlane.xlu0 %857
        %v859 = vmax.f32 %v823, %v824
        %860 = vmax.xlane.f32.xlu0 %v859
        %v861 = vpop.xlane.xlu0 %860
        %v862 = vmax.f32 %v825, %v826
        %863 = vmax.xlane.f32.xlu0 %v862
        %v864 = vpop.xlane.xlu0 %863
        %v865 = vmax.f32 %v827, %v828
        %866 = vmax.xlane.f32.xlu0 %v865
        %v867 = vpop.xlane.xlu0 %866
        %v868 = vmax.f32 %v829, %v830
        %869 = vmax.xlane.f32.xlu0 %v868
        %v870 = vpop.xlane.xlu0 %869
        %v871 = vmax.f32 %v831, %v832
        %872 = vmax.xlane.f32.xlu0 %v871
        %v873 = vpop.xlane.xlu0 %872
        %v874 = vmax.f32 %v833, %v834
        %875 = vmax.xlane.f32.xlu0 %v874
        %v876 = vpop.xlane.xlu0 %875
        %v877 = vmax.f32 %v835, %v836
        %878 = vmax.xlane.f32.xlu0 %v877
        %v879 = vpop.xlane.xlu0 %878
        %v880 = vmax.f32 %v837, %v838
        %881 = vmax.xlane.f32.xlu0 %v880
        %v882 = vpop.xlane.xlu0 %881
        %v883 = vmax.f32 %v839, %v840
        %884 = vmax.xlane.f32.xlu0 %v883
        %v885 = vpop.xlane.xlu0 %884
        %v886 = vmax.f32 %v841, %v842
        %887 = vmax.xlane.f32.xlu0 %v886
        %v888 = vpop.xlane.xlu0 %887
        %v889 = vmax.f32 %v843, %v844
        %890 = vmax.xlane.f32.xlu0 %v889
        %v891 = vpop.xlane.xlu0 %890
        %v892 = vmax.f32 %v845, %v846
        %893 = vmax.xlane.f32.xlu0 %v892
        %v894 = vpop.xlane.xlu0 %893
        %vm895 = vcmp.ge.f32.partialorder %v815, %v849
        %vm896 = vcmp.ge.f32.partialorder %v816, %v849
        %vm897 = vcmp.ge.f32.partialorder %v817, %v852
        %vm898 = vcmp.ge.f32.partialorder %v818, %v852
        %vm899 = vcmp.ge.f32.partialorder %v819, %v855
        %vm900 = vcmp.ge.f32.partialorder %v820, %v855
        %vm901 = vcmp.ge.f32.partialorder %v821, %v858
        %vm902 = vcmp.ge.f32.partialorder %v822, %v858
        %vm903 = vcmp.ge.f32.partialorder %v823, %v861
        %vm904 = vcmp.ge.f32.partialorder %v824, %v861
        %vm905 = vcmp.ge.f32.partialorder %v825, %v864
        %vm906 = vcmp.ge.f32.partialorder %v826, %v864
        %vm907 = vcmp.ge.f32.partialorder %v827, %v867
        %vm908 = vcmp.ge.f32.partialorder %v828, %v867
        %vm909 = vcmp.ge.f32.partialorder %v829, %v870
        %vm910 = vcmp.ge.f32.partialorder %v830, %v870
        %vm911 = vcmp.ge.f32.partialorder %v831, %v873
        %vm912 = vcmp.ge.f32.partialorder %v832, %v873
        %vm913 = vcmp.ge.f32.partialorder %v833, %v876
        %vm914 = vcmp.ge.f32.partialorder %v834, %v876
        %vm915 = vcmp.ge.f32.partialorder %v835, %v879
        %vm916 = vcmp.ge.f32.partialorder %v836, %v879
        %vm917 = vcmp.ge.f32.partialorder %v837, %v882
        %vm918 = vcmp.ge.f32.partialorder %v838, %v882
        %vm919 = vcmp.ge.f32.partialorder %v839, %v885
        %vm920 = vcmp.ge.f32.partialorder %v840, %v885
        %vm921 = vcmp.ge.f32.partialorder %v841, %v888
        %vm922 = vcmp.ge.f32.partialorder %v842, %v888
        %vm923 = vcmp.ge.f32.partialorder %v843, %v891
        %vm924 = vcmp.ge.f32.partialorder %v844, %v891
        %vm925 = vcmp.ge.f32.partialorder %v845, %v894
        %vm926 = vcmp.ge.f32.partialorder %v846, %v894
        %v927 = vsel %vm895, -inf, %v815
        %v928 = vsel %vm896, -inf, %v816
        %v929 = vsel %vm897, -inf, %v817
        %v930 = vsel %vm898, -inf, %v818
        %v931 = vsel %vm899, -inf, %v819
        %v932 = vsel %vm900, -inf, %v820
        %v933 = vsel %vm901, -inf, %v821
        %v934 = vsel %vm902, -inf, %v822
        %v935 = vsel %vm903, -inf, %v823
        %v936 = vsel %vm904, -inf, %v824
        %v937 = vsel %vm905, -inf, %v825
        %v938 = vsel %vm906, -inf, %v826
        %v939 = vsel %vm907, -inf, %v827
        %v940 = vsel %vm908, -inf, %v828
        %v941 = vsel %vm909, -inf, %v829
        %v942 = vsel %vm910, -inf, %v830
        %v943 = vsel %vm911, -inf, %v831
        %v944 = vsel %vm912, -inf, %v832
        %v945 = vsel %vm913, -inf, %v833
        %v946 = vsel %vm914, -inf, %v834
        %v947 = vsel %vm915, -inf, %v835
        %v948 = vsel %vm916, -inf, %v836
        %v949 = vsel %vm917, -inf, %v837
        %v950 = vsel %vm918, -inf, %v838
        %v951 = vsel %vm919, -inf, %v839
        %v952 = vsel %vm920, -inf, %v840
        %v953 = vsel %vm921, -inf, %v841
        %v954 = vsel %vm922, -inf, %v842
        %v955 = vsel %vm923, -inf, %v843
        %v956 = vsel %vm924, -inf, %v844
        %v957 = vsel %vm925, -inf, %v845
        %v958 = vsel %vm926, -inf, %v846
        %v959 = vmax.f32 %v927, %v928
        %960 = vmax.xlane.f32.xlu0 %v959
        %v961 = vpop.xlane.xlu0 %960
        %v962 = vmax.f32 %v929, %v930
        %963 = vmax.xlane.f32.xlu0 %v962
        %v964 = vpop.xlane.xlu0 %963
        %v965 = vmax.f32 %v931, %v932
        %966 = vmax.xlane.f32.xlu0 %v965
        %v967 = vpop.xlane.xlu0 %966
        %v968 = vmax.f32 %v933, %v934
        %969 = vmax.xlane.f32.xlu0 %v968
        %v970 = vpop.xlane.xlu0 %969
        %v971 = vmax.f32 %v935, %v936
        %972 = vmax.xlane.f32.xlu0 %v971
        %v973 = vpop.xlane.xlu0 %972
        %v974 = vmax.f32 %v937, %v938
        %975 = vmax.xlane.f32.xlu0 %v974
        %v976 = vpop.xlane.xlu0 %975
        %v977 = vmax.f32 %v939, %v940
        %978 = vmax.xlane.f32.xlu0 %v977
        %v979 = vpop.xlane.xlu0 %978
        %v980 = vmax.f32 %v941, %v942
        %981 = vmax.xlane.f32.xlu0 %v980
        %v982 = vpop.xlane.xlu0 %981
        %v983 = vmax.f32 %v943, %v944
        %984 = vmax.xlane.f32.xlu0 %v983
        %v985 = vpop.xlane.xlu0 %984
        %v986 = vmax.f32 %v945, %v946
        %987 = vmax.xlane.f32.xlu0 %v986
        %v988 = vpop.xlane.xlu0 %987
        %v989 = vmax.f32 %v947, %v948
        %990 = vmax.xlane.f32.xlu0 %v989
        %v991 = vpop.xlane.xlu0 %990
        %v992 = vmax.f32 %v949, %v950
        %993 = vmax.xlane.f32.xlu0 %v992
        %v994 = vpop.xlane.xlu0 %993
        %v995 = vmax.f32 %v951, %v952
        %996 = vmax.xlane.f32.xlu0 %v995
        %v997 = vpop.xlane.xlu0 %996
        %v998 = vmax.f32 %v953, %v954
        %999 = vmax.xlane.f32.xlu0 %v998
        %v1000 = vpop.xlane.xlu0 %999
        %v1001 = vmax.f32 %v955, %v956
        %1002 = vmax.xlane.f32.xlu0 %v1001
        %v1003 = vpop.xlane.xlu0 %1002
        %v1004 = vmax.f32 %v957, %v958
        %1005 = vmax.xlane.f32.xlu0 %v1004
        %v1006 = vpop.xlane.xlu0 %1005
        %vm1007 = vcmp.ge.f32.partialorder %v927, %v961
        %vm1008 = vcmp.ge.f32.partialorder %v928, %v961
        %vm1009 = vcmp.ge.f32.partialorder %v929, %v964
        %vm1010 = vcmp.ge.f32.partialorder %v930, %v964
        %vm1011 = vcmp.ge.f32.partialorder %v931, %v967
        %vm1012 = vcmp.ge.f32.partialorder %v932, %v967
        %vm1013 = vcmp.ge.f32.partialorder %v933, %v970
        %vm1014 = vcmp.ge.f32.partialorder %v934, %v970
        %vm1015 = vcmp.ge.f32.partialorder %v935, %v973
        %vm1016 = vcmp.ge.f32.partialorder %v936, %v973
        %vm1017 = vcmp.ge.f32.partialorder %v937, %v976
        %vm1018 = vcmp.ge.f32.partialorder %v938, %v976
        %vm1019 = vcmp.ge.f32.partialorder %v939, %v979
        %vm1020 = vcmp.ge.f32.partialorder %v940, %v979
        %vm1021 = vcmp.ge.f32.partialorder %v941, %v982
        %vm1022 = vcmp.ge.f32.partialorder %v942, %v982
        %vm1023 = vcmp.ge.f32.partialorder %v943, %v985
        %vm1024 = vcmp.ge.f32.partialorder %v944, %v985
        %vm1025 = vcmp.ge.f32.partialorder %v945, %v988
        %vm1026 = vcmp.ge.f32.partialorder %v946, %v988
        %vm1027 = vcmp.ge.f32.partialorder %v947, %v991
        %vm1028 = vcmp.ge.f32.partialorder %v948, %v991
        %vm1029 = vcmp.ge.f32.partialorder %v949, %v994
        %vm1030 = vcmp.ge.f32.partialorder %v950, %v994
        %vm1031 = vcmp.ge.f32.partialorder %v951, %v997
        %vm1032 = vcmp.ge.f32.partialorder %v952, %v997
        %vm1033 = vcmp.ge.f32.partialorder %v953, %v1000
        %vm1034 = vcmp.ge.f32.partialorder %v954, %v1000
        %vm1035 = vcmp.ge.f32.partialorder %v955, %v1003
        %vm1036 = vcmp.ge.f32.partialorder %v956, %v1003
        %vm1037 = vcmp.ge.f32.partialorder %v957, %v1006
        %vm1038 = vcmp.ge.f32.partialorder %v958, %v1006
        %v1039 = vsel %vm1007, -inf, %v927
        %v1040 = vsel %vm1008, -inf, %v928
        %v1041 = vsel %vm1009, -inf, %v929
        %v1042 = vsel %vm1010, -inf, %v930
        %v1043 = vsel %vm1011, -inf, %v931
        %v1044 = vsel %vm1012, -inf, %v932
        %v1045 = vsel %vm1013, -inf, %v933
        %v1046 = vsel %vm1014, -inf, %v934
        %v1047 = vsel %vm1015, -inf, %v935
        %v1048 = vsel %vm1016, -inf, %v936
        %v1049 = vsel %vm1017, -inf, %v937
        %v1050 = vsel %vm1018, -inf, %v938
        %v1051 = vsel %vm1019, -inf, %v939
        %v1052 = vsel %vm1020, -inf, %v940
        %v1053 = vsel %vm1021, -inf, %v941
        %v1054 = vsel %vm1022, -inf, %v942
        %v1055 = vsel %vm1023, -inf, %v943
        %v1056 = vsel %vm1024, -inf, %v944
        %v1057 = vsel %vm1025, -inf, %v945
        %v1058 = vsel %vm1026, -inf, %v946
        %v1059 = vsel %vm1027, -inf, %v947
        %v1060 = vsel %vm1028, -inf, %v948
        %v1061 = vsel %vm1029, -inf, %v949
        %v1062 = vsel %vm1030, -inf, %v950
        %v1063 = vsel %vm1031, -inf, %v951
        %v1064 = vsel %vm1032, -inf, %v952
        %v1065 = vsel %vm1033, -inf, %v953
        %v1066 = vsel %vm1034, -inf, %v954
        %v1067 = vsel %vm1035, -inf, %v955
        %v1068 = vsel %vm1036, -inf, %v956
        %v1069 = vsel %vm1037, -inf, %v957
        %v1070 = vsel %vm1038, -inf, %v958
        %v1071 = vmax.f32 %v1039, %v1040
        %1072 = vmax.xlane.f32.xlu0 %v1071
        %v1073 = vpop.xlane.xlu0 %1072
        %v1074 = vmax.f32 %v1041, %v1042
        %1075 = vmax.xlane.f32.xlu0 %v1074
        %v1076 = vpop.xlane.xlu0 %1075
        %v1077 = vmax.f32 %v1043, %v1044
        %1078 = vmax.xlane.f32.xlu0 %v1077
        %v1079 = vpop.xlane.xlu0 %1078
        %v1080 = vmax.f32 %v1045, %v1046
        %1081 = vmax.xlane.f32.xlu0 %v1080
        %v1082 = vpop.xlane.xlu0 %1081
        %v1083 = vmax.f32 %v1047, %v1048
        %1084 = vmax.xlane.f32.xlu0 %v1083
        %v1085 = vpop.xlane.xlu0 %1084
        %v1086 = vmax.f32 %v1049, %v1050
        %1087 = vmax.xlane.f32.xlu0 %v1086
        %v1088 = vpop.xlane.xlu0 %1087
        %v1089 = vmax.f32 %v1051, %v1052
        %1090 = vmax.xlane.f32.xlu0 %v1089
        %v1091 = vpop.xlane.xlu0 %1090
        %v1092 = vmax.f32 %v1053, %v1054
        %1093 = vmax.xlane.f32.xlu0 %v1092
        %v1094 = vpop.xlane.xlu0 %1093
        %v1095 = vmax.f32 %v1055, %v1056
        %1096 = vmax.xlane.f32.xlu0 %v1095
        %v1097 = vpop.xlane.xlu0 %1096
        %v1098 = vmax.f32 %v1057, %v1058
        %1099 = vmax.xlane.f32.xlu0 %v1098
        %v1100 = vpop.xlane.xlu0 %1099
        %v1101 = vmax.f32 %v1059, %v1060
        %1102 = vmax.xlane.f32.xlu0 %v1101
        %v1103 = vpop.xlane.xlu0 %1102
        %v1104 = vmax.f32 %v1061, %v1062
        %1105 = vmax.xlane.f32.xlu0 %v1104
        %v1106 = vpop.xlane.xlu0 %1105
        %v1107 = vmax.f32 %v1063, %v1064
        %1108 = vmax.xlane.f32.xlu0 %v1107
        %v1109 = vpop.xlane.xlu0 %1108
        %v1110 = vmax.f32 %v1065, %v1066
        %1111 = vmax.xlane.f32.xlu0 %v1110
        %v1112 = vpop.xlane.xlu0 %1111
        %v1113 = vmax.f32 %v1067, %v1068
        %1114 = vmax.xlane.f32.xlu0 %v1113
        %v1115 = vpop.xlane.xlu0 %1114
        %v1116 = vmax.f32 %v1069, %v1070
        %1117 = vmax.xlane.f32.xlu0 %v1116
        %v1118 = vpop.xlane.xlu0 %1117
        %vm1119 = vcmp.ge.f32.partialorder %v1039, %v1073
        %vm1120 = vcmp.ge.f32.partialorder %v1040, %v1073
        %vm1121 = vcmp.ge.f32.partialorder %v1041, %v1076
        %vm1122 = vcmp.ge.f32.partialorder %v1042, %v1076
        %vm1123 = vcmp.ge.f32.partialorder %v1043, %v1079
        %vm1124 = vcmp.ge.f32.partialorder %v1044, %v1079
        %vm1125 = vcmp.ge.f32.partialorder %v1045, %v1082
        %vm1126 = vcmp.ge.f32.partialorder %v1046, %v1082
        %vm1127 = vcmp.ge.f32.partialorder %v1047, %v1085
        %vm1128 = vcmp.ge.f32.partialorder %v1048, %v1085
        %vm1129 = vcmp.ge.f32.partialorder %v1049, %v1088
        %vm1130 = vcmp.ge.f32.partialorder %v1050, %v1088
        %vm1131 = vcmp.ge.f32.partialorder %v1051, %v1091
        %vm1132 = vcmp.ge.f32.partialorder %v1052, %v1091
        %vm1133 = vcmp.ge.f32.partialorder %v1053, %v1094
        %vm1134 = vcmp.ge.f32.partialorder %v1054, %v1094
        %vm1135 = vcmp.ge.f32.partialorder %v1055, %v1097
        %vm1136 = vcmp.ge.f32.partialorder %v1056, %v1097
        %vm1137 = vcmp.ge.f32.partialorder %v1057, %v1100
        %vm1138 = vcmp.ge.f32.partialorder %v1058, %v1100
        %vm1139 = vcmp.ge.f32.partialorder %v1059, %v1103
        %vm1140 = vcmp.ge.f32.partialorder %v1060, %v1103
        %vm1141 = vcmp.ge.f32.partialorder %v1061, %v1106
        %vm1142 = vcmp.ge.f32.partialorder %v1062, %v1106
        %vm1143 = vcmp.ge.f32.partialorder %v1063, %v1109
        %vm1144 = vcmp.ge.f32.partialorder %v1064, %v1109
        %vm1145 = vcmp.ge.f32.partialorder %v1065, %v1112
        %vm1146 = vcmp.ge.f32.partialorder %v1066, %v1112
        %vm1147 = vcmp.ge.f32.partialorder %v1067, %v1115
        %vm1148 = vcmp.ge.f32.partialorder %v1068, %v1115
        %vm1149 = vcmp.ge.f32.partialorder %v1069, %v1118
        %vm1150 = vcmp.ge.f32.partialorder %v1070, %v1118
        %v1151 = vsel %vm1119, -inf, %v1039
        %v1152 = vsel %vm1120, -inf, %v1040
        %v1153 = vsel %vm1121, -inf, %v1041
        %v1154 = vsel %vm1122, -inf, %v1042
        %v1155 = vsel %vm1123, -inf, %v1043
        %v1156 = vsel %vm1124, -inf, %v1044
        %v1157 = vsel %vm1125, -inf, %v1045
        %v1158 = vsel %vm1126, -inf, %v1046
        %v1159 = vsel %vm1127, -inf, %v1047
        %v1160 = vsel %vm1128, -inf, %v1048
        %v1161 = vsel %vm1129, -inf, %v1049
        %v1162 = vsel %vm1130, -inf, %v1050
        %v1163 = vsel %vm1131, -inf, %v1051
        %v1164 = vsel %vm1132, -inf, %v1052
        %v1165 = vsel %vm1133, -inf, %v1053
        %v1166 = vsel %vm1134, -inf, %v1054
        %v1167 = vsel %vm1135, -inf, %v1055
        %v1168 = vsel %vm1136, -inf, %v1056
        %v1169 = vsel %vm1137, -inf, %v1057
        %v1170 = vsel %vm1138, -inf, %v1058
        %v1171 = vsel %vm1139, -inf, %v1059
        %v1172 = vsel %vm1140, -inf, %v1060
        %v1173 = vsel %vm1141, -inf, %v1061
        %v1174 = vsel %vm1142, -inf, %v1062
        %v1175 = vsel %vm1143, -inf, %v1063
        %v1176 = vsel %vm1144, -inf, %v1064
        %v1177 = vsel %vm1145, -inf, %v1065
        %v1178 = vsel %vm1146, -inf, %v1066
        %v1179 = vsel %vm1147, -inf, %v1067
        %v1180 = vsel %vm1148, -inf, %v1068
        %v1181 = vsel %vm1149, -inf, %v1069
        %v1182 = vsel %vm1150, -inf, %v1070
        %v1183 = vmax.f32 %v1151, %v1152
        %1184 = vmax.xlane.f32.xlu0 %v1183
        %v1185 = vpop.xlane.xlu0 %1184
        %v1186 = vmax.f32 %v1153, %v1154
        %1187 = vmax.xlane.f32.xlu0 %v1186
        %v1188 = vpop.xlane.xlu0 %1187
        %v1189 = vmax.f32 %v1155, %v1156
        %1190 = vmax.xlane.f32.xlu0 %v1189
        %v1191 = vpop.xlane.xlu0 %1190
        %v1192 = vmax.f32 %v1157, %v1158
        %1193 = vmax.xlane.f32.xlu0 %v1192
        %v1194 = vpop.xlane.xlu0 %1193
        %v1195 = vmax.f32 %v1159, %v1160
        %1196 = vmax.xlane.f32.xlu0 %v1195
        %v1197 = vpop.xlane.xlu0 %1196
        %v1198 = vmax.f32 %v1161, %v1162
        %1199 = vmax.xlane.f32.xlu0 %v1198
        %v1200 = vpop.xlane.xlu0 %1199
        %v1201 = vmax.f32 %v1163, %v1164
        %1202 = vmax.xlane.f32.xlu0 %v1201
        %v1203 = vpop.xlane.xlu0 %1202
        %v1204 = vmax.f32 %v1165, %v1166
        %1205 = vmax.xlane.f32.xlu0 %v1204
        %v1206 = vpop.xlane.xlu0 %1205
        %v1207 = vmax.f32 %v1167, %v1168
        %1208 = vmax.xlane.f32.xlu0 %v1207
        %v1209 = vpop.xlane.xlu0 %1208
        %v1210 = vmax.f32 %v1169, %v1170
        %1211 = vmax.xlane.f32.xlu0 %v1210
        %v1212 = vpop.xlane.xlu0 %1211
        %v1213 = vmax.f32 %v1171, %v1172
        %1214 = vmax.xlane.f32.xlu0 %v1213
        %v1215 = vpop.xlane.xlu0 %1214
        %v1216 = vmax.f32 %v1173, %v1174
        %1217 = vmax.xlane.f32.xlu0 %v1216
        %v1218 = vpop.xlane.xlu0 %1217
        %v1219 = vmax.f32 %v1175, %v1176
        %1220 = vmax.xlane.f32.xlu0 %v1219
        %v1221 = vpop.xlane.xlu0 %1220
        %v1222 = vmax.f32 %v1177, %v1178
        %1223 = vmax.xlane.f32.xlu0 %v1222
        %v1224 = vpop.xlane.xlu0 %1223
        %v1225 = vmax.f32 %v1179, %v1180
        %1226 = vmax.xlane.f32.xlu0 %v1225
        %v1227 = vpop.xlane.xlu0 %1226
        %v1228 = vmax.f32 %v1181, %v1182
        %1229 = vmax.xlane.f32.xlu0 %v1228
        %v1230 = vpop.xlane.xlu0 %1229
        %vm1231 = vcmp.ge.f32.partialorder %v1151, %v1185
        %vm1232 = vcmp.ge.f32.partialorder %v1152, %v1185
        %vm1233 = vcmp.ge.f32.partialorder %v1153, %v1188
        %vm1234 = vcmp.ge.f32.partialorder %v1154, %v1188
        %vm1235 = vcmp.ge.f32.partialorder %v1155, %v1191
        %vm1236 = vcmp.ge.f32.partialorder %v1156, %v1191
        %vm1237 = vcmp.ge.f32.partialorder %v1157, %v1194
        %vm1238 = vcmp.ge.f32.partialorder %v1158, %v1194
        %vm1239 = vcmp.ge.f32.partialorder %v1159, %v1197
        %vm1240 = vcmp.ge.f32.partialorder %v1160, %v1197
        %vm1241 = vcmp.ge.f32.partialorder %v1161, %v1200
        %vm1242 = vcmp.ge.f32.partialorder %v1162, %v1200
        %vm1243 = vcmp.ge.f32.partialorder %v1163, %v1203
        %vm1244 = vcmp.ge.f32.partialorder %v1164, %v1203
        %vm1245 = vcmp.ge.f32.partialorder %v1165, %v1206
        %vm1246 = vcmp.ge.f32.partialorder %v1166, %v1206
        %vm1247 = vcmp.ge.f32.partialorder %v1167, %v1209
        %vm1248 = vcmp.ge.f32.partialorder %v1168, %v1209
        %vm1249 = vcmp.ge.f32.partialorder %v1169, %v1212
        %vm1250 = vcmp.ge.f32.partialorder %v1170, %v1212
        %vm1251 = vcmp.ge.f32.partialorder %v1171, %v1215
        %vm1252 = vcmp.ge.f32.partialorder %v1172, %v1215
        %vm1253 = vcmp.ge.f32.partialorder %v1173, %v1218
        %vm1254 = vcmp.ge.f32.partialorder %v1174, %v1218
        %vm1255 = vcmp.ge.f32.partialorder %v1175, %v1221
        %vm1256 = vcmp.ge.f32.partialorder %v1176, %v1221
        %vm1257 = vcmp.ge.f32.partialorder %v1177, %v1224
        %vm1258 = vcmp.ge.f32.partialorder %v1178, %v1224
        %vm1259 = vcmp.ge.f32.partialorder %v1179, %v1227
        %vm1260 = vcmp.ge.f32.partialorder %v1180, %v1227
        %vm1261 = vcmp.ge.f32.partialorder %v1181, %v1230
        %vm1262 = vcmp.ge.f32.partialorder %v1182, %v1230
        %v1263 = vsel %vm1231, -inf, %v1151
        %v1264 = vsel %vm1232, -inf, %v1152
        %v1265 = vsel %vm1233, -inf, %v1153
        %v1266 = vsel %vm1234, -inf, %v1154
        %v1267 = vsel %vm1235, -inf, %v1155
        %v1268 = vsel %vm1236, -inf, %v1156
        %v1269 = vsel %vm1237, -inf, %v1157
        %v1270 = vsel %vm1238, -inf, %v1158
        %v1271 = vsel %vm1239, -inf, %v1159
        %v1272 = vsel %vm1240, -inf, %v1160
        %v1273 = vsel %vm1241, -inf, %v1161
        %v1274 = vsel %vm1242, -inf, %v1162
        %v1275 = vsel %vm1243, -inf, %v1163
        %v1276 = vsel %vm1244, -inf, %v1164
        %v1277 = vsel %vm1245, -inf, %v1165
        %v1278 = vsel %vm1246, -inf, %v1166
        %v1279 = vsel %vm1247, -inf, %v1167
        %v1280 = vsel %vm1248, -inf, %v1168
        %v1281 = vsel %vm1249, -inf, %v1169
        %v1282 = vsel %vm1250, -inf, %v1170
        %v1283 = vsel %vm1251, -inf, %v1171
        %v1284 = vsel %vm1252, -inf, %v1172
        %v1285 = vsel %vm1253, -inf, %v1173
        %v1286 = vsel %vm1254, -inf, %v1174
        %v1287 = vsel %vm1255, -inf, %v1175
        %v1288 = vsel %vm1256, -inf, %v1176
        %v1289 = vsel %vm1257, -inf, %v1177
        %v1290 = vsel %vm1258, -inf, %v1178
        %v1291 = vsel %vm1259, -inf, %v1179
        %v1292 = vsel %vm1260, -inf, %v1180
        %v1293 = vsel %vm1261, -inf, %v1181
        %v1294 = vsel %vm1262, -inf, %v1182
        %v1295 = vmax.f32 %v1263, %v1264
        %1296 = vmax.xlane.f32.xlu0 %v1295
        %v1297 = vpop.xlane.xlu0 %1296
        %v1298 = vmax.f32 %v1265, %v1266
        %1299 = vmax.xlane.f32.xlu0 %v1298
        %v1300 = vpop.xlane.xlu0 %1299
        %v1301 = vmax.f32 %v1267, %v1268
        %1302 = vmax.xlane.f32.xlu0 %v1301
        %v1303 = vpop.xlane.xlu0 %1302
        %v1304 = vmax.f32 %v1269, %v1270
        %1305 = vmax.xlane.f32.xlu0 %v1304
        %v1306 = vpop.xlane.xlu0 %1305
        %v1307 = vmax.f32 %v1271, %v1272
        %1308 = vmax.xlane.f32.xlu0 %v1307
        %v1309 = vpop.xlane.xlu0 %1308
        %v1310 = vmax.f32 %v1273, %v1274
        %1311 = vmax.xlane.f32.xlu0 %v1310
        %v1312 = vpop.xlane.xlu0 %1311
        %v1313 = vmax.f32 %v1275, %v1276
        %1314 = vmax.xlane.f32.xlu0 %v1313
        %v1315 = vpop.xlane.xlu0 %1314
        %v1316 = vmax.f32 %v1277, %v1278
        %1317 = vmax.xlane.f32.xlu0 %v1316
        %v1318 = vpop.xlane.xlu0 %1317
        %v1319 = vmax.f32 %v1279, %v1280
        %1320 = vmax.xlane.f32.xlu0 %v1319
        %v1321 = vpop.xlane.xlu0 %1320
        %v1322 = vmax.f32 %v1281, %v1282
        %1323 = vmax.xlane.f32.xlu0 %v1322
        %v1324 = vpop.xlane.xlu0 %1323
        %v1325 = vmax.f32 %v1283, %v1284
        %1326 = vmax.xlane.f32.xlu0 %v1325
        %v1327 = vpop.xlane.xlu0 %1326
        %v1328 = vmax.f32 %v1285, %v1286
        %1329 = vmax.xlane.f32.xlu0 %v1328
        %v1330 = vpop.xlane.xlu0 %1329
        %v1331 = vmax.f32 %v1287, %v1288
        %1332 = vmax.xlane.f32.xlu0 %v1331
        %v1333 = vpop.xlane.xlu0 %1332
        %v1334 = vmax.f32 %v1289, %v1290
        %1335 = vmax.xlane.f32.xlu0 %v1334
        %v1336 = vpop.xlane.xlu0 %1335
        %v1337 = vmax.f32 %v1291, %v1292
        %1338 = vmax.xlane.f32.xlu0 %v1337
        %v1339 = vpop.xlane.xlu0 %1338
        %v1340 = vmax.f32 %v1293, %v1294
        %1341 = vmax.xlane.f32.xlu0 %v1340
        %v1342 = vpop.xlane.xlu0 %1341
        %vm1343 = vcmp.ge.f32.partialorder %v1263, %v1297
        %vm1344 = vcmp.ge.f32.partialorder %v1264, %v1297
        %vm1345 = vcmp.ge.f32.partialorder %v1265, %v1300
        %vm1346 = vcmp.ge.f32.partialorder %v1266, %v1300
        %vm1347 = vcmp.ge.f32.partialorder %v1267, %v1303
        %vm1348 = vcmp.ge.f32.partialorder %v1268, %v1303
        %vm1349 = vcmp.ge.f32.partialorder %v1269, %v1306
        %vm1350 = vcmp.ge.f32.partialorder %v1270, %v1306
        %vm1351 = vcmp.ge.f32.partialorder %v1271, %v1309
        %vm1352 = vcmp.ge.f32.partialorder %v1272, %v1309
        %vm1353 = vcmp.ge.f32.partialorder %v1273, %v1312
        %vm1354 = vcmp.ge.f32.partialorder %v1274, %v1312
        %vm1355 = vcmp.ge.f32.partialorder %v1275, %v1315
        %vm1356 = vcmp.ge.f32.partialorder %v1276, %v1315
        %vm1357 = vcmp.ge.f32.partialorder %v1277, %v1318
        %vm1358 = vcmp.ge.f32.partialorder %v1278, %v1318
        %vm1359 = vcmp.ge.f32.partialorder %v1279, %v1321
        %vm1360 = vcmp.ge.f32.partialorder %v1280, %v1321
        %vm1361 = vcmp.ge.f32.partialorder %v1281, %v1324
        %vm1362 = vcmp.ge.f32.partialorder %v1282, %v1324
        %vm1363 = vcmp.ge.f32.partialorder %v1283, %v1327
        %vm1364 = vcmp.ge.f32.partialorder %v1284, %v1327
        %vm1365 = vcmp.ge.f32.partialorder %v1285, %v1330
        %vm1366 = vcmp.ge.f32.partialorder %v1286, %v1330
        %vm1367 = vcmp.ge.f32.partialorder %v1287, %v1333
        %vm1368 = vcmp.ge.f32.partialorder %v1288, %v1333
        %vm1369 = vcmp.ge.f32.partialorder %v1289, %v1336
        %vm1370 = vcmp.ge.f32.partialorder %v1290, %v1336
        %vm1371 = vcmp.ge.f32.partialorder %v1291, %v1339
        %vm1372 = vcmp.ge.f32.partialorder %v1292, %v1339
        %vm1373 = vcmp.ge.f32.partialorder %v1293, %v1342
        %vm1374 = vcmp.ge.f32.partialorder %v1294, %v1342
        %v1375 = vsel %vm1343, -inf, %v1263
        %v1376 = vsel %vm1344, -inf, %v1264
        %v1377 = vsel %vm1345, -inf, %v1265
        %v1378 = vsel %vm1346, -inf, %v1266
        %v1379 = vsel %vm1347, -inf, %v1267
        %v1380 = vsel %vm1348, -inf, %v1268
        %v1381 = vsel %vm1349, -inf, %v1269
        %v1382 = vsel %vm1350, -inf, %v1270
        %v1383 = vsel %vm1351, -inf, %v1271
        %v1384 = vsel %vm1352, -inf, %v1272
        %v1385 = vsel %vm1353, -inf, %v1273
        %v1386 = vsel %vm1354, -inf, %v1274
        %v1387 = vsel %vm1355, -inf, %v1275
        %v1388 = vsel %vm1356, -inf, %v1276
        %v1389 = vsel %vm1357, -inf, %v1277
        %v1390 = vsel %vm1358, -inf, %v1278
        %v1391 = vsel %vm1359, -inf, %v1279
        %v1392 = vsel %vm1360, -inf, %v1280
        %v1393 = vsel %vm1361, -inf, %v1281
        %v1394 = vsel %vm1362, -inf, %v1282
        %v1395 = vsel %vm1363, -inf, %v1283
        %v1396 = vsel %vm1364, -inf, %v1284
        %v1397 = vsel %vm1365, -inf, %v1285
        %v1398 = vsel %vm1366, -inf, %v1286
        %v1399 = vsel %vm1367, -inf, %v1287
        %v1400 = vsel %vm1368, -inf, %v1288
        %v1401 = vsel %vm1369, -inf, %v1289
        %v1402 = vsel %vm1370, -inf, %v1290
        %v1403 = vsel %vm1371, -inf, %v1291
        %v1404 = vsel %vm1372, -inf, %v1292
        %v1405 = vsel %vm1373, -inf, %v1293
        %v1406 = vsel %vm1374, -inf, %v1294
        %v1407 = vmax.f32 %v1375, %v1376
        %1408 = vmax.xlane.f32.xlu0 %v1407
        %v1409 = vpop.xlane.xlu0 %1408
        %v1410 = vmax.f32 %v1377, %v1378
        %1411 = vmax.xlane.f32.xlu0 %v1410
        %v1412 = vpop.xlane.xlu0 %1411
        %v1413 = vmax.f32 %v1379, %v1380
        %1414 = vmax.xlane.f32.xlu0 %v1413
        %v1415 = vpop.xlane.xlu0 %1414
        %v1416 = vmax.f32 %v1381, %v1382
        %1417 = vmax.xlane.f32.xlu0 %v1416
        %v1418 = vpop.xlane.xlu0 %1417
        %v1419 = vmax.f32 %v1383, %v1384
        %1420 = vmax.xlane.f32.xlu0 %v1419
        %v1421 = vpop.xlane.xlu0 %1420
        %v1422 = vmax.f32 %v1385, %v1386
        %1423 = vmax.xlane.f32.xlu0 %v1422
        %v1424 = vpop.xlane.xlu0 %1423
        %v1425 = vmax.f32 %v1387, %v1388
        %1426 = vmax.xlane.f32.xlu0 %v1425
        %v1427 = vpop.xlane.xlu0 %1426
        %v1428 = vmax.f32 %v1389, %v1390
        %1429 = vmax.xlane.f32.xlu0 %v1428
        %v1430 = vpop.xlane.xlu0 %1429
        %v1431 = vmax.f32 %v1391, %v1392
        %1432 = vmax.xlane.f32.xlu0 %v1431
        %v1433 = vpop.xlane.xlu0 %1432
        %v1434 = vmax.f32 %v1393, %v1394
        %1435 = vmax.xlane.f32.xlu0 %v1434
        %v1436 = vpop.xlane.xlu0 %1435
        %v1437 = vmax.f32 %v1395, %v1396
        %1438 = vmax.xlane.f32.xlu0 %v1437
        %v1439 = vpop.xlane.xlu0 %1438
        %v1440 = vmax.f32 %v1397, %v1398
        %1441 = vmax.xlane.f32.xlu0 %v1440
        %v1442 = vpop.xlane.xlu0 %1441
        %v1443 = vmax.f32 %v1399, %v1400
        %1444 = vmax.xlane.f32.xlu0 %v1443
        %v1445 = vpop.xlane.xlu0 %1444
        %v1446 = vmax.f32 %v1401, %v1402
        %1447 = vmax.xlane.f32.xlu0 %v1446
        %v1448 = vpop.xlane.xlu0 %1447
        %v1449 = vmax.f32 %v1403, %v1404
        %1450 = vmax.xlane.f32.xlu0 %v1449
        %v1451 = vpop.xlane.xlu0 %1450
        %v1452 = vmax.f32 %v1405, %v1406
        %1453 = vmax.xlane.f32.xlu0 %v1452
        %v1454 = vpop.xlane.xlu0 %1453
        %vm1455 = vcmp.ge.f32.partialorder %v1375, %v1409
        %vm1456 = vcmp.ge.f32.partialorder %v1376, %v1409
        %vm1457 = vcmp.ge.f32.partialorder %v1377, %v1412
        %vm1458 = vcmp.ge.f32.partialorder %v1378, %v1412
        %vm1459 = vcmp.ge.f32.partialorder %v1379, %v1415
        %vm1460 = vcmp.ge.f32.partialorder %v1380, %v1415
        %vm1461 = vcmp.ge.f32.partialorder %v1381, %v1418
        %vm1462 = vcmp.ge.f32.partialorder %v1382, %v1418
        %vm1463 = vcmp.ge.f32.partialorder %v1383, %v1421
        %vm1464 = vcmp.ge.f32.partialorder %v1384, %v1421
        %vm1465 = vcmp.ge.f32.partialorder %v1385, %v1424
        %vm1466 = vcmp.ge.f32.partialorder %v1386, %v1424
        %vm1467 = vcmp.ge.f32.partialorder %v1387, %v1427
        %vm1468 = vcmp.ge.f32.partialorder %v1388, %v1427
        %vm1469 = vcmp.ge.f32.partialorder %v1389, %v1430
        %vm1470 = vcmp.ge.f32.partialorder %v1390, %v1430
        %vm1471 = vcmp.ge.f32.partialorder %v1391, %v1433
        %vm1472 = vcmp.ge.f32.partialorder %v1392, %v1433
        %vm1473 = vcmp.ge.f32.partialorder %v1393, %v1436
        %vm1474 = vcmp.ge.f32.partialorder %v1394, %v1436
        %vm1475 = vcmp.ge.f32.partialorder %v1395, %v1439
        %vm1476 = vcmp.ge.f32.partialorder %v1396, %v1439
        %vm1477 = vcmp.ge.f32.partialorder %v1397, %v1442
        %vm1478 = vcmp.ge.f32.partialorder %v1398, %v1442
        %vm1479 = vcmp.ge.f32.partialorder %v1399, %v1445
        %vm1480 = vcmp.ge.f32.partialorder %v1400, %v1445
        %vm1481 = vcmp.ge.f32.partialorder %v1401, %v1448
        %vm1482 = vcmp.ge.f32.partialorder %v1402, %v1448
        %vm1483 = vcmp.ge.f32.partialorder %v1403, %v1451
        %vm1484 = vcmp.ge.f32.partialorder %v1404, %v1451
        %vm1485 = vcmp.ge.f32.partialorder %v1405, %v1454
        %vm1486 = vcmp.ge.f32.partialorder %v1406, %v1454
        %v1487 = vsel %vm1455, -inf, %v1375
        %v1488 = vsel %vm1456, -inf, %v1376
        %v1489 = vsel %vm1457, -inf, %v1377
        %v1490 = vsel %vm1458, -inf, %v1378
        %v1491 = vsel %vm1459, -inf, %v1379
        %v1492 = vsel %vm1460, -inf, %v1380
        %v1493 = vsel %vm1461, -inf, %v1381
        %v1494 = vsel %vm1462, -inf, %v1382
        %v1495 = vsel %vm1463, -inf, %v1383
        %v1496 = vsel %vm1464, -inf, %v1384
        %v1497 = vsel %vm1465, -inf, %v1385
        %v1498 = vsel %vm1466, -inf, %v1386
        %v1499 = vsel %vm1467, -inf, %v1387
        %v1500 = vsel %vm1468, -inf, %v1388
        %v1501 = vsel %vm1469, -inf, %v1389
        %v1502 = vsel %vm1470, -inf, %v1390
        %v1503 = vsel %vm1471, -inf, %v1391
        %v1504 = vsel %vm1472, -inf, %v1392
        %v1505 = vsel %vm1473, -inf, %v1393
        %v1506 = vsel %vm1474, -inf, %v1394
        %v1507 = vsel %vm1475, -inf, %v1395
        %v1508 = vsel %vm1476, -inf, %v1396
        %v1509 = vsel %vm1477, -inf, %v1397
        %v1510 = vsel %vm1478, -inf, %v1398
        %v1511 = vsel %vm1479, -inf, %v1399
        %v1512 = vsel %vm1480, -inf, %v1400
        %v1513 = vsel %vm1481, -inf, %v1401
        %v1514 = vsel %vm1482, -inf, %v1402
        %v1515 = vsel %vm1483, -inf, %v1403
        %v1516 = vsel %vm1484, -inf, %v1404
        %v1517 = vsel %vm1485, -inf, %v1405
        %v1518 = vsel %vm1486, -inf, %v1406
        %v1519 = vmax.f32 %v1487, %v1488
        %1520 = vmax.xlane.f32.xlu0 %v1519
        %v1521 = vpop.xlane.xlu0 %1520
        %v1522 = vmax.f32 %v1489, %v1490
        %1523 = vmax.xlane.f32.xlu0 %v1522
        %v1524 = vpop.xlane.xlu0 %1523
        %v1525 = vmax.f32 %v1491, %v1492
        %1526 = vmax.xlane.f32.xlu0 %v1525
        %v1527 = vpop.xlane.xlu0 %1526
        %v1528 = vmax.f32 %v1493, %v1494
        %1529 = vmax.xlane.f32.xlu0 %v1528
        %v1530 = vpop.xlane.xlu0 %1529
        %v1531 = vmax.f32 %v1495, %v1496
        %1532 = vmax.xlane.f32.xlu0 %v1531
        %v1533 = vpop.xlane.xlu0 %1532
        %v1534 = vmax.f32 %v1497, %v1498
        %1535 = vmax.xlane.f32.xlu0 %v1534
        %v1536 = vpop.xlane.xlu0 %1535
        %v1537 = vmax.f32 %v1499, %v1500
        %1538 = vmax.xlane.f32.xlu0 %v1537
        %v1539 = vpop.xlane.xlu0 %1538
        %v1540 = vmax.f32 %v1501, %v1502
        %1541 = vmax.xlane.f32.xlu0 %v1540
        %v1542 = vpop.xlane.xlu0 %1541
        %v1543 = vmax.f32 %v1503, %v1504
        %1544 = vmax.xlane.f32.xlu0 %v1543
        %v1545 = vpop.xlane.xlu0 %1544
        %v1546 = vmax.f32 %v1505, %v1506
        %1547 = vmax.xlane.f32.xlu0 %v1546
        %v1548 = vpop.xlane.xlu0 %1547
        %v1549 = vmax.f32 %v1507, %v1508
        %1550 = vmax.xlane.f32.xlu0 %v1549
        %v1551 = vpop.xlane.xlu0 %1550
        %v1552 = vmax.f32 %v1509, %v1510
        %1553 = vmax.xlane.f32.xlu0 %v1552
        %v1554 = vpop.xlane.xlu0 %1553
        %v1555 = vmax.f32 %v1511, %v1512
        %1556 = vmax.xlane.f32.xlu0 %v1555
        %v1557 = vpop.xlane.xlu0 %1556
        %v1558 = vmax.f32 %v1513, %v1514
        %1559 = vmax.xlane.f32.xlu0 %v1558
        %v1560 = vpop.xlane.xlu0 %1559
        %v1561 = vmax.f32 %v1515, %v1516
        %1562 = vmax.xlane.f32.xlu0 %v1561
        %v1563 = vpop.xlane.xlu0 %1562
        %v1564 = vmax.f32 %v1517, %v1518
        %1565 = vmax.xlane.f32.xlu0 %v1564
        %v1566 = vpop.xlane.xlu0 %1565
        %vm1567 = vcmp.ge.f32.partialorder %v1487, %v1521
        %vm1568 = vcmp.ge.f32.partialorder %v1488, %v1521
        %vm1569 = vcmp.ge.f32.partialorder %v1489, %v1524
        %vm1570 = vcmp.ge.f32.partialorder %v1490, %v1524
        %vm1571 = vcmp.ge.f32.partialorder %v1491, %v1527
        %vm1572 = vcmp.ge.f32.partialorder %v1492, %v1527
        %vm1573 = vcmp.ge.f32.partialorder %v1493, %v1530
        %vm1574 = vcmp.ge.f32.partialorder %v1494, %v1530
        %vm1575 = vcmp.ge.f32.partialorder %v1495, %v1533
        %vm1576 = vcmp.ge.f32.partialorder %v1496, %v1533
        %vm1577 = vcmp.ge.f32.partialorder %v1497, %v1536
        %vm1578 = vcmp.ge.f32.partialorder %v1498, %v1536
        %vm1579 = vcmp.ge.f32.partialorder %v1499, %v1539
        %vm1580 = vcmp.ge.f32.partialorder %v1500, %v1539
        %vm1581 = vcmp.ge.f32.partialorder %v1501, %v1542
        %vm1582 = vcmp.ge.f32.partialorder %v1502, %v1542
        %vm1583 = vcmp.ge.f32.partialorder %v1503, %v1545
        %vm1584 = vcmp.ge.f32.partialorder %v1504, %v1545
        %vm1585 = vcmp.ge.f32.partialorder %v1505, %v1548
        %vm1586 = vcmp.ge.f32.partialorder %v1506, %v1548
        %vm1587 = vcmp.ge.f32.partialorder %v1507, %v1551
        %vm1588 = vcmp.ge.f32.partialorder %v1508, %v1551
        %vm1589 = vcmp.ge.f32.partialorder %v1509, %v1554
        %vm1590 = vcmp.ge.f32.partialorder %v1510, %v1554
        %vm1591 = vcmp.ge.f32.partialorder %v1511, %v1557
        %vm1592 = vcmp.ge.f32.partialorder %v1512, %v1557
        %vm1593 = vcmp.ge.f32.partialorder %v1513, %v1560
        %vm1594 = vcmp.ge.f32.partialorder %v1514, %v1560
        %vm1595 = vcmp.ge.f32.partialorder %v1515, %v1563
        %vm1596 = vcmp.ge.f32.partialorder %v1516, %v1563
        %vm1597 = vcmp.ge.f32.partialorder %v1517, %v1566
        %vm1598 = vcmp.ge.f32.partialorder %v1518, %v1566
        %v1599 = vsel %vm1567, -inf, %v1487
        %v1600 = vsel %vm1568, -inf, %v1488
        %v1601 = vsel %vm1569, -inf, %v1489
        %v1602 = vsel %vm1570, -inf, %v1490
        %v1603 = vsel %vm1571, -inf, %v1491
        %v1604 = vsel %vm1572, -inf, %v1492
        %v1605 = vsel %vm1573, -inf, %v1493
        %v1606 = vsel %vm1574, -inf, %v1494
        %v1607 = vsel %vm1575, -inf, %v1495
        %v1608 = vsel %vm1576, -inf, %v1496
        %v1609 = vsel %vm1577, -inf, %v1497
        %v1610 = vsel %vm1578, -inf, %v1498
        %v1611 = vsel %vm1579, -inf, %v1499
        %v1612 = vsel %vm1580, -inf, %v1500
        %v1613 = vsel %vm1581, -inf, %v1501
        %v1614 = vsel %vm1582, -inf, %v1502
        %v1615 = vsel %vm1583, -inf, %v1503
        %v1616 = vsel %vm1584, -inf, %v1504
        %v1617 = vsel %vm1585, -inf, %v1505
        %v1618 = vsel %vm1586, -inf, %v1506
        %v1619 = vsel %vm1587, -inf, %v1507
        %v1620 = vsel %vm1588, -inf, %v1508
        %v1621 = vsel %vm1589, -inf, %v1509
        %v1622 = vsel %vm1590, -inf, %v1510
        %v1623 = vsel %vm1591, -inf, %v1511
        %v1624 = vsel %vm1592, -inf, %v1512
        %v1625 = vsel %vm1593, -inf, %v1513
        %v1626 = vsel %vm1594, -inf, %v1514
        %v1627 = vsel %vm1595, -inf, %v1515
        %v1628 = vsel %vm1596, -inf, %v1516
        %v1629 = vsel %vm1597, -inf, %v1517
        %v1630 = vsel %vm1598, -inf, %v1518
        %v1631 = vmax.f32 %v1599, %v1600
        %1632 = vmax.xlane.f32.xlu0 %v1631
        %v1633 = vpop.xlane.xlu0 %1632
        %v1634 = vmax.f32 %v1601, %v1602
        %1635 = vmax.xlane.f32.xlu0 %v1634
        %v1636 = vpop.xlane.xlu0 %1635
        %v1637 = vmax.f32 %v1603, %v1604
        %1638 = vmax.xlane.f32.xlu0 %v1637
        %v1639 = vpop.xlane.xlu0 %1638
        %v1640 = vmax.f32 %v1605, %v1606
        %1641 = vmax.xlane.f32.xlu0 %v1640
        %v1642 = vpop.xlane.xlu0 %1641
        %v1643 = vmax.f32 %v1607, %v1608
        %1644 = vmax.xlane.f32.xlu0 %v1643
        %v1645 = vpop.xlane.xlu0 %1644
        %v1646 = vmax.f32 %v1609, %v1610
        %1647 = vmax.xlane.f32.xlu0 %v1646
        %v1648 = vpop.xlane.xlu0 %1647
        %v1649 = vmax.f32 %v1611, %v1612
        %1650 = vmax.xlane.f32.xlu0 %v1649
        %v1651 = vpop.xlane.xlu0 %1650
        %v1652 = vmax.f32 %v1613, %v1614
        %1653 = vmax.xlane.f32.xlu0 %v1652
        %v1654 = vpop.xlane.xlu0 %1653
        %v1655 = vmax.f32 %v1615, %v1616
        %1656 = vmax.xlane.f32.xlu0 %v1655
        %v1657 = vpop.xlane.xlu0 %1656
        %v1658 = vmax.f32 %v1617, %v1618
        %1659 = vmax.xlane.f32.xlu0 %v1658
        %v1660 = vpop.xlane.xlu0 %1659
        %v1661 = vmax.f32 %v1619, %v1620
        %1662 = vmax.xlane.f32.xlu0 %v1661
        %v1663 = vpop.xlane.xlu0 %1662
        %v1664 = vmax.f32 %v1621, %v1622
        %1665 = vmax.xlane.f32.xlu0 %v1664
        %v1666 = vpop.xlane.xlu0 %1665
        %v1667 = vmax.f32 %v1623, %v1624
        %1668 = vmax.xlane.f32.xlu0 %v1667
        %v1669 = vpop.xlane.xlu0 %1668
        %v1670 = vmax.f32 %v1625, %v1626
        %1671 = vmax.xlane.f32.xlu0 %v1670
        %v1672 = vpop.xlane.xlu0 %1671
        %v1673 = vmax.f32 %v1627, %v1628
        %1674 = vmax.xlane.f32.xlu0 %v1673
        %v1675 = vpop.xlane.xlu0 %1674
        %v1676 = vmax.f32 %v1629, %v1630
        %1677 = vmax.xlane.f32.xlu0 %v1676
        %v1678 = vpop.xlane.xlu0 %1677
        %vm1679 = vcmp.ge.f32.partialorder %v591, %v1633
        %vm1680 = vcmp.ge.f32.partialorder %v592, %v1633
        %vm1681 = vcmp.ge.f32.partialorder %v593, %v1636
        %vm1682 = vcmp.ge.f32.partialorder %v594, %v1636
        %vm1683 = vcmp.ge.f32.partialorder %v595, %v1639
        %vm1684 = vcmp.ge.f32.partialorder %v596, %v1639
        %vm1685 = vcmp.ge.f32.partialorder %v597, %v1642
        %vm1686 = vcmp.ge.f32.partialorder %v598, %v1642
        %vm1687 = vcmp.ge.f32.partialorder %v599, %v1645
        %vm1688 = vcmp.ge.f32.partialorder %v600, %v1645
        %vm1689 = vcmp.ge.f32.partialorder %v601, %v1648
        %vm1690 = vcmp.ge.f32.partialorder %v602, %v1648
        %vm1691 = vcmp.ge.f32.partialorder %v603, %v1651
        %vm1692 = vcmp.ge.f32.partialorder %v604, %v1651
        %vm1693 = vcmp.ge.f32.partialorder %v605, %v1654
        %vm1694 = vcmp.ge.f32.partialorder %v606, %v1654
        %vm1695 = vcmp.ge.f32.partialorder %v607, %v1657
        %vm1696 = vcmp.ge.f32.partialorder %v608, %v1657
        %vm1697 = vcmp.ge.f32.partialorder %v609, %v1660
        %vm1698 = vcmp.ge.f32.partialorder %v610, %v1660
        %vm1699 = vcmp.ge.f32.partialorder %v611, %v1663
        %vm1700 = vcmp.ge.f32.partialorder %v612, %v1663
        %vm1701 = vcmp.ge.f32.partialorder %v613, %v1666
        %vm1702 = vcmp.ge.f32.partialorder %v614, %v1666
        %vm1703 = vcmp.ge.f32.partialorder %v615, %v1669
        %vm1704 = vcmp.ge.f32.partialorder %v616, %v1669
        %vm1705 = vcmp.ge.f32.partialorder %v617, %v1672
        %vm1706 = vcmp.ge.f32.partialorder %v618, %v1672
        %vm1707 = vcmp.ge.f32.partialorder %v619, %v1675
        %vm1708 = vcmp.ge.f32.partialorder %v620, %v1675
        %vm1709 = vcmp.ge.f32.partialorder %v621, %v1678
        %vm1710 = vcmp.ge.f32.partialorder %v622, %v1678
        %v1711 = vsel %vm1679, 1, 0
        %v1712 = vsel %vm1680, 1, 0
        %v1713 = vsel %vm1681, 1, 0
        %v1714 = vsel %vm1682, 1, 0
        %v1715 = vsel %vm1683, 1, 0
        %v1716 = vsel %vm1684, 1, 0
        %v1717 = vsel %vm1685, 1, 0
        %v1718 = vsel %vm1686, 1, 0
        %v1719 = vsel %vm1687, 1, 0
        %v1720 = vsel %vm1688, 1, 0
        %v1721 = vsel %vm1689, 1, 0
        %v1722 = vsel %vm1690, 1, 0
        %v1723 = vsel %vm1691, 1, 0
        %v1724 = vsel %vm1692, 1, 0
        %v1725 = vsel %vm1693, 1, 0
        %v1726 = vsel %vm1694, 1, 0
        %v1727 = vsel %vm1695, 1, 0
        %v1728 = vsel %vm1696, 1, 0
        %v1729 = vsel %vm1697, 1, 0
        %v1730 = vsel %vm1698, 1, 0
        %v1731 = vsel %vm1699, 1, 0
        %v1732 = vsel %vm1700, 1, 0
        %v1733 = vsel %vm1701, 1, 0
        %v1734 = vsel %vm1702, 1, 0
        %v1735 = vsel %vm1703, 1, 0
        %v1736 = vsel %vm1704, 1, 0
        %v1737 = vsel %vm1705, 1, 0
        %v1738 = vsel %vm1706, 1, 0
        %v1739 = vsel %vm1707, 1, 0
        %v1740 = vsel %vm1708, 1, 0
        %v1741 = vsel %vm1709, 1, 0
        %v1742 = vsel %vm1710, 1, 0
        %v1743 = vcvt.s32.f32 %v1711
        %v1744 = vcvt.s32.f32 %v1712
        %v1745 = vcvt.s32.f32 %v1713
        %v1746 = vcvt.s32.f32 %v1714
        %v1747 = vcvt.s32.f32 %v1715
        %v1748 = vcvt.s32.f32 %v1716
        %v1749 = vcvt.s32.f32 %v1717
        %v1750 = vcvt.s32.f32 %v1718
        %v1751 = vcvt.s32.f32 %v1719
        %v1752 = vcvt.s32.f32 %v1720
        %v1753 = vcvt.s32.f32 %v1721
        %v1754 = vcvt.s32.f32 %v1722
        %v1755 = vcvt.s32.f32 %v1723
        %v1756 = vcvt.s32.f32 %v1724
        %v1757 = vcvt.s32.f32 %v1725
        %v1758 = vcvt.s32.f32 %v1726
        %v1759 = vcvt.s32.f32 %v1727
        %v1760 = vcvt.s32.f32 %v1728
        %v1761 = vcvt.s32.f32 %v1729
        %v1762 = vcvt.s32.f32 %v1730
        %v1763 = vcvt.s32.f32 %v1731
        %v1764 = vcvt.s32.f32 %v1732
        %v1765 = vcvt.s32.f32 %v1733
        %v1766 = vcvt.s32.f32 %v1734
        %v1767 = vcvt.s32.f32 %v1735
        %v1768 = vcvt.s32.f32 %v1736
        %v1769 = vcvt.s32.f32 %v1737
        %v1770 = vcvt.s32.f32 %v1738
        %v1771 = vcvt.s32.f32 %v1739
        %v1772 = vcvt.s32.f32 %v1740
        %v1773 = vcvt.s32.f32 %v1741
        %v1774 = vcvt.s32.f32 %v1742
        %v1775 = vlaneseq
        %v1776 = vshrl.u32 %v1775, 7
        %v1777 = vadd.s32 %v1776, 8
        %v1778 = vadd.s32 %v1776, 16
        %v1779 = vadd.s32 %v1776, 24
        %v1780 = vadd.s32 %v1776, 32
        %v1781 = vadd.s32 %v1776, 40
        %v1782 = vadd.s32 %v1776, 48
        %v1783 = vadd.s32 %v1776, 56
        %v1784 = vadd.s32 %v1776, 64
        %v1785 = vadd.s32 %v1776, 72
        %v1786 = vadd.s32 %v1776, 80
        %v1787 = vadd.s32 %v1776, 88
        %v1788 = vadd.s32 %v1776, 96
        %v1789 = vadd.s32 %v1776, 104
        %v1790 = vadd.s32 %v1776, 112
        %v1791 = vadd.s32 %v1776, 120
        %s1792 = smul.u32 %s18, 128
        %v1793 = vstv %s1792
        %v1794 = vadd.s32 %v1776, %v1793
        %v1795 = vadd.s32 %v1777, %v1793
        %v1796 = vadd.s32 %v1778, %v1793
        %v1797 = vadd.s32 %v1779, %v1793
        %v1798 = vadd.s32 %v1780, %v1793
        %v1799 = vadd.s32 %v1781, %v1793
        %v1800 = vadd.s32 %v1782, %v1793
        %v1801 = vadd.s32 %v1783, %v1793
        %v1802 = vadd.s32 %v1784, %v1793
        %v1803 = vadd.s32 %v1785, %v1793
        %v1804 = vadd.s32 %v1786, %v1793
        %v1805 = vadd.s32 %v1787, %v1793
        %v1806 = vadd.s32 %v1788, %v1793
        %v1807 = vadd.s32 %v1789, %v1793
        %v1808 = vadd.s32 %v1790, %v1793
        %v1809 = vadd.s32 %v1791, %v1793
        %v1810 = vlaneseq
        %v1811 = vand.u32 %v1810, 127
        %v1812 = vadd.s32 %v1811, 128
        %vm1813 = vcmp.eq.s32.totalorder %v1811, %v1794
        %vm1814 = vcmp.eq.s32.totalorder %v1812, %v1794
        %vm1815 = vcmp.eq.s32.totalorder %v1811, %v1795
        %vm1816 = vcmp.eq.s32.totalorder %v1812, %v1795
        %vm1817 = vcmp.eq.s32.totalorder %v1811, %v1796
        %vm1818 = vcmp.eq.s32.totalorder %v1812, %v1796
        %vm1819 = vcmp.eq.s32.totalorder %v1811, %v1797
        %vm1820 = vcmp.eq.s32.totalorder %v1812, %v1797
        %vm1821 = vcmp.eq.s32.totalorder %v1811, %v1798
        %vm1822 = vcmp.eq.s32.totalorder %v1812, %v1798
        %vm1823 = vcmp.eq.s32.totalorder %v1811, %v1799
        %vm1824 = vcmp.eq.s32.totalorder %v1812, %v1799
        %vm1825 = vcmp.eq.s32.totalorder %v1811, %v1800
        %vm1826 = vcmp.eq.s32.totalorder %v1812, %v1800
        %vm1827 = vcmp.eq.s32.totalorder %v1811, %v1801
        %vm1828 = vcmp.eq.s32.totalorder %v1812, %v1801
        %vm1829 = vcmp.eq.s32.totalorder %v1811, %v1802
        %vm1830 = vcmp.eq.s32.totalorder %v1812, %v1802
        %vm1831 = vcmp.eq.s32.totalorder %v1811, %v1803
        %vm1832 = vcmp.eq.s32.totalorder %v1812, %v1803
        %vm1833 = vcmp.eq.s32.totalorder %v1811, %v1804
        %vm1834 = vcmp.eq.s32.totalorder %v1812, %v1804
        %vm1835 = vcmp.eq.s32.totalorder %v1811, %v1805
        %vm1836 = vcmp.eq.s32.totalorder %v1812, %v1805
        %vm1837 = vcmp.eq.s32.totalorder %v1811, %v1806
        %vm1838 = vcmp.eq.s32.totalorder %v1812, %v1806
        %vm1839 = vcmp.eq.s32.totalorder %v1811, %v1807
        %vm1840 = vcmp.eq.s32.totalorder %v1812, %v1807
        %vm1841 = vcmp.eq.s32.totalorder %v1811, %v1808
        %vm1842 = vcmp.eq.s32.totalorder %v1812, %v1808
        %vm1843 = vcmp.eq.s32.totalorder %v1811, %v1809
        %vm1844 = vcmp.eq.s32.totalorder %v1812, %v1809
        %v1845 = vadd.f32 %v1743, 1.0
        %v1846 = vadd.f32 %v1744, 1.0
        %v1847 = vadd.f32 %v1745, 1.0
        %v1848 = vadd.f32 %v1746, 1.0
        %v1849 = vadd.f32 %v1747, 1.0
        %v1850 = vadd.f32 %v1748, 1.0
        %v1851 = vadd.f32 %v1749, 1.0
        %v1852 = vadd.f32 %v1750, 1.0
        %v1853 = vadd.f32 %v1751, 1.0
        %v1854 = vadd.f32 %v1752, 1.0
        %v1855 = vadd.f32 %v1753, 1.0
        %v1856 = vadd.f32 %v1754, 1.0
        %v1857 = vadd.f32 %v1755, 1.0
        %v1858 = vadd.f32 %v1756, 1.0
        %v1859 = vadd.f32 %v1757, 1.0
        %v1860 = vadd.f32 %v1758, 1.0
        %v1861 = vadd.f32 %v1759, 1.0
        %v1862 = vadd.f32 %v1760, 1.0
        %v1863 = vadd.f32 %v1761, 1.0
        %v1864 = vadd.f32 %v1762, 1.0
        %v1865 = vadd.f32 %v1763, 1.0
        %v1866 = vadd.f32 %v1764, 1.0
        %v1867 = vadd.f32 %v1765, 1.0
        %v1868 = vadd.f32 %v1766, 1.0
        %v1869 = vadd.f32 %v1767, 1.0
        %v1870 = vadd.f32 %v1768, 1.0
        %v1871 = vadd.f32 %v1769, 1.0
        %v1872 = vadd.f32 %v1770, 1.0
        %v1873 = vadd.f32 %v1771, 1.0
        %v1874 = vadd.f32 %v1772, 1.0
        %v1875 = vadd.f32 %v1773, 1.0
        %v1876 = vadd.f32 %v1774, 1.0
        %v1877 = vsel %vm1813, %v1845, %v1743
        %v1878 = vsel %vm1814, %v1846, %v1744
        %v1879 = vsel %vm1815, %v1847, %v1745
        %v1880 = vsel %vm1816, %v1848, %v1746
        %v1881 = vsel %vm1817, %v1849, %v1747
        %v1882 = vsel %vm1818, %v1850, %v1748
        %v1883 = vsel %vm1819, %v1851, %v1749
        %v1884 = vsel %vm1820, %v1852, %v1750
        %v1885 = vsel %vm1821, %v1853, %v1751
        %v1886 = vsel %vm1822, %v1854, %v1752
        %v1887 = vsel %vm1823, %v1855, %v1753
        %v1888 = vsel %vm1824, %v1856, %v1754
        %v1889 = vsel %vm1825, %v1857, %v1755
        %v1890 = vsel %vm1826, %v1858, %v1756
        %v1891 = vsel %vm1827, %v1859, %v1757
        %v1892 = vsel %vm1828, %v1860, %v1758
        %v1893 = vsel %vm1829, %v1861, %v1759
        %v1894 = vsel %vm1830, %v1862, %v1760
        %v1895 = vsel %vm1831, %v1863, %v1761
        %v1896 = vsel %vm1832, %v1864, %v1762
        %v1897 = vsel %vm1833, %v1865, %v1763
        %v1898 = vsel %vm1834, %v1866, %v1764
        %v1899 = vsel %vm1835, %v1867, %v1765
        %v1900 = vsel %vm1836, %v1868, %v1766
        %v1901 = vsel %vm1837, %v1869, %v1767
        %v1902 = vsel %vm1838, %v1870, %v1768
        %v1903 = vsel %vm1839, %v1871, %v1769
        %v1904 = vsel %vm1840, %v1872, %v1770
        %v1905 = vsel %vm1841, %v1873, %v1771
        %v1906 = vsel %vm1842, %v1874, %v1772
        %v1907 = vsel %vm1843, %v1875, %v1773
        %v1908 = vsel %vm1844, %v1876, %v1774
        %1909 = vst [vmem:[%s243] sm:$0xff] %v1877
        %1910 = vst [vmem:[%s243 + $0x8] sm:$0xff] %v1878
        %1911 = vst [vmem:[%s243 + $0x10] sm:$0xff] %v1879
        %1912 = vst [vmem:[%s243 + $0x18] sm:$0xff] %v1880
        %1913 = vst [vmem:[%s243 + $0x20] sm:$0xff] %v1881
        %1914 = vst [vmem:[%s243 + $0x28] sm:$0xff] %v1882
        %1915 = vst [vmem:[%s243 + $0x30] sm:$0xff] %v1883
        %1916 = vst [vmem:[%s243 + $0x38] sm:$0xff] %v1884
        %1917 = vst [vmem:[%s243 + $0x40] sm:$0xff] %v1885
        %1918 = vst [vmem:[%s243 + $0x48] sm:$0xff] %v1886
        %1919 = vst [vmem:[%s243 + $0x50] sm:$0xff] %v1887
        %1920 = vst [vmem:[%s243 + $0x58] sm:$0xff] %v1888
        %1921 = vst [vmem:[%s243 + $0x60] sm:$0xff] %v1889
        %1922 = vst [vmem:[%s243 + $0x68] sm:$0xff] %v1890
        %1923 = vst [vmem:[%s243 + $0x70] sm:$0xff] %v1891
        %1924 = vst [vmem:[%s243 + $0x78] sm:$0xff] %v1892
        %1925 = vst [vmem:[%s243 + $0x80] sm:$0xff] %v1893
        %1926 = vst [vmem:[%s243 + $0x88] sm:$0xff] %v1894
        %1927 = vst [vmem:[%s243 + $0x90] sm:$0xff] %v1895
        %1928 = vst [vmem:[%s243 + $0x98] sm:$0xff] %v1896
        %1929 = vst [vmem:[%s243 + $0xa0] sm:$0xff] %v1897
        %1930 = vst [vmem:[%s243 + $0xa8] sm:$0xff] %v1898
        %1931 = vst [vmem:[%s243 + $0xb0] sm:$0xff] %v1899
        %1932 = vst [vmem:[%s243 + $0xb8] sm:$0xff] %v1900
        %1933 = vst [vmem:[%s243 + $0xc0] sm:$0xff] %v1901
        %1934 = vst [vmem:[%s243 + $0xc8] sm:$0xff] %v1902
        %1935 = vst [vmem:[%s243 + $0xd0] sm:$0xff] %v1903
        %1936 = vst [vmem:[%s243 + $0xd8] sm:$0xff] %v1904
        %1937 = vst [vmem:[%s243 + $0xe0] sm:$0xff] %v1905
        %1938 = vst [vmem:[%s243 + $0xe8] sm:$0xff] %v1906
        %1939 = vst [vmem:[%s243 + $0xf0] sm:$0xff] %v1907
        %1940 = vst [vmem:[%s243 + $0xf8] sm:$0xff] %v1908
        %s1941 = sand.u32 %s130, 1
        %s1942 = scalar_lea.sflag [#allocation3], %s1941
        %s1943 = sand.u32 %s130, 1
        %s1944 = smul.addr %s1943, 256
        %s1945 = scalar_lea.vmem [#allocation2], %s1944
        // Predicated region
        $region37: #{sim_info_forward.5} parent=35 // pred_check
          %p1946 = pneg %p140
        $region38: #{sim_info_forward.5} parent=35 // pred_check_branch
          %1948 = sbr.rel (%p1946) target = $region40
        $region39: #{sim_info_forward.5} parent=35 // pred_region
          %s1949 = smul.u32 16, %s18
          %1951 = vsyncadd %s1942, 0
          %s1952 = smul.addr %s1949, 2
          %s1953 = smul.addr %s1952, 8
          %s1954 = scalar_lea.hbm %s4, %s1953
          %s1955 = sshll.u32 %s1945, 4
          %s1956 = int_to_ptr.vmem [resolvable:$true] %s1955
          %s1957 = sshll.u32 %s1954, 4
          %s1958 = int_to_ptr.hbm [resolvable:$true] %s1957
          %1963 = dma.vmem_to_hbm [thread:$0]  %s1956, 4096, %s1958, %s1942, 256, 256, 16
        $region40: #{sim_info_forward.5} parent=35 // pred_fallthru
          _
      $region36: #{sim_info_forward.5} parent=5 // pred_fallthru
        _
      %p1964 = scmp.le.s32.totalorder 2, %s13
      // Predicated region
      $region41: #{sim_info_forward.5} parent=5 // pred_check
        %p1965 = pneg %p1964
      $region42: #{sim_info_forward.5} parent=5 // pred_check_branch
        %1967 = sbr.rel (%p1965) target = $region44
      $region43: #{sim_info_forward.5} parent=5 // pred_region
        %s1968 = ssub.s32 %s13, 2
        // Predicated region
        $region45: #{sim_info_forward.5} parent=43 // pred_check
          %p1969 = pneg %p146
        $region46: #{sim_info_forward.5} parent=43 // pred_check_branch
          %1971 = sbr.rel (%p1969) target = $region48
        $region47: #{sim_info_forward.5} parent=43 // pred_region
          %s1972 = sand.u32 %s131, 1
          %s1973 = scalar_lea.sflag [#allocation3], %s1972
          %s1974 = sand.u32 %s131, 1
          %s1975 = smul.addr %s1974, 256
          %s1976 = scalar_lea.vmem [#allocation2], %s1975
          %1978 = dma.done %s1973, 4096
        $region48: #{sim_info_forward.5} parent=43 // pred_fallthru
          _
      $region44: #{sim_info_forward.5} parent=5 // pred_fallthru
        _
    $region6: #{sim_info_forward.5} parent=1 // loop_footer
      %s17 = sadd.s32 1, %s13
    $region7: #{sim_info_forward.5} parent=1 // loop_footer_branch
      %12 = sbr.rel target = $region3
    $region8: #{sim_info_forward.5} parent=1 // loop_exit
      _
    %1979 = vsyncpa [#allocation3], 1
    %s1980 = scalar_lea.sflag [#allocation3], 1
    %1981 = vsyncpa %s1980, 1

</llo_original>
